<compile_context>
chip_gen: v7x
topology: tpu7x:2x2x1
jax: 0.10.0
libtpu: 0.0.40
codegen_flags: <defaults>
</compile_context>

<pallas_src>
import functools

import jax
import jax.numpy as jnp
from jax.experimental import pallas as pl
from jax.experimental.pallas import tpu as pltpu


# ----------------------------- Pallas kernels -----------------------------

def _conv3x3_kernel(apply_relu, x_ref, w_ref, b_ref, o_ref):
    """3x3 same-padding conv for one batch element, single K=9*Cin MXU dot.

    x_ref: (1, H+2, W+2, Cin) bf16 zero-padded input tile
    w_ref: (9*Cin, Cout)      bf16 (dy-major, dx-next, cin-minor)
    b_ref: (1, Cout)          f32
    o_ref: (1, H*W, Cout)     f32
    """
    _, Hp, Wp, Cin = x_ref.shape
    H, W = Hp - 2, Wp - 2
    # In-VMEM im2col: 9 shifted windows concatenated along the lane axis.
    # (The dx=1,2 slices are sublane-unaligned -> Mosaic relayout; acceptable
    # here, and avoids ever materializing an im2col tensor in HBM.)
    cols = []
    for dy in range(3):
        for dx in range(3):
            xs = x_ref[0, pl.ds(dy, H), pl.ds(dx, W), :]        # (H, W, Cin) bf16
            cols.append(xs.reshape(H * W, Cin))
    patches = jnp.concatenate(cols, axis=-1)                    # (H*W, 9*Cin) bf16
    y = jnp.dot(patches, w_ref[...],
                preferred_element_type=jnp.float32) + b_ref[...]
    if apply_relu:
        y = jnp.maximum(y, 0.0)
    # TODO(synk): emit a lane-packed / bf16 output layout to avoid masked
    # vst.msk stores for Cout < 128 (left f32 (H*W, Cout) to match torch).
    o_ref[0] = y


def _relu_maxpool2x2_kernel(x_ref, o_ref):
    """Fused ReLU + 2x2 / stride-2 max-pool for one batch element.

    x_ref: (1, H, W//2, 2*C) f32  (adjacent W pixels packed along lanes)
    o_ref: (1, H//2, W//2, C) f32
    """
    _, H, W2, C2 = x_ref.shape
    C = C2 // 2
    x = x_ref[0]                                     # (H, W2, 2C)
    # W-direction pair max: the two C-wide lane halves are the even/odd pixels.
    m = jnp.maximum(x[:, :, :C], x[:, :, C:])        # (H, W2, C)
    m = jnp.maximum(m, 0.0)                          # fused ReLU (monotone -> order-safe)
    # H-direction pair max via a leading-dim split (layout no-op).
    m = m.reshape(H // 2, 2, W2, C)
    o_ref[0] = jnp.maximum(m[:, 0], m[:, 1])


def _layer_loss_kernel(xf_ref, gf_ref, p_ref, s_ref, gx_acc, gg_acc):
    """Fused per-layer loss: perceptual |x-g| sum + Gram-matrix |Gx-Gg| sum.

    xf_ref/gf_ref: (1, tc, C) f32 chunk of one batch element's features.
    p_ref, s_ref : (1, 1, 1) f32 per-batch-element accumulators (resident
                   across the chunk axis; raw sums, normalized in wrapper).
    gx_acc/gg_acc: (C, C) f32 VMEM scratch Gram accumulators.
    """
    t = pl.program_id(1)
    nt = pl.num_programs(1)

    @pl.when(t == 0)
    def _():
        p_ref[...] = jnp.zeros_like(p_ref)
        s_ref[...] = jnp.zeros_like(s_ref)
        gx_acc[...] = jnp.zeros_like(gx_acc)
        gg_acc[...] = jnp.zeros_like(gg_acc)

    fx = xf_ref[0]                                   # (tc, C) f32
    fg = gf_ref[0]

    # Perceptual L1 partial sum (f32, shares the single HBM read with the Gram).
    p_ref[...] = p_ref[...] + jnp.sum(jnp.abs(fx - fg))

    # Gram partial accumulation: bf16 MXU operands, f32 accumulate.
    fxb = fx.astype(jnp.bfloat16)
    fgb = fg.astype(jnp.bfloat16)
    gx_acc[...] = gx_acc[...] + jax.lax.dot_general(
        fxb, fxb, (((0,), (0,)), ((), ())), preferred_element_type=jnp.float32)
    gg_acc[...] = gg_acc[...] + jax.lax.dot_general(
        fgb, fgb, (((0,), (0,)), ((), ())), preferred_element_type=jnp.float32)

    @pl.when(t == nt - 1)
    def _():
        s_ref[...] = s_ref[...] + jnp.sum(jnp.abs(gx_acc[...] - gg_acc[...]))


# ----------------------------- wrappers ------------------------------------

def conv3x3(x, w, b, apply_relu):
    """x: (N,H,W,Cin) f32, w: (3,3,Cin,Cout), b: (Cout,) -> (N,H,W,Cout), pad=1."""
    N, H, W, Cin = x.shape
    Cout = w.shape[-1]
    # bf16 padded input: halves input DMA bytes + VMEM, MXU-native operands.
    xp = jnp.pad(x.astype(jnp.bfloat16), ((0, 0), (1, 1), (1, 1), (0, 0)))
    wmat = w.reshape(9 * Cin, Cout).astype(jnp.bfloat16)   # (dy, dx, cin) row-major
    b2 = b.reshape(1, Cout).astype(jnp.float32)
    # TODO(synk): for large images, add halo-tiled spatial blocking (grid over
    # H tiles, per-generation tile size, explicit vmem_limit_bytes) so blocks
    # fit v7x's 64 MiB VMEM and pipeline; one whole image per block is fine at
    # these demo sizes.
    out = pl.pallas_call(
        functools.partial(_conv3x3_kernel, apply_relu),
        out_shape=jax.ShapeDtypeStruct((N, H * W, Cout), jnp.float32),
        grid=(N,),
        in_specs=[
            pl.BlockSpec((1, H + 2, W + 2, Cin), lambda n: (n, 0, 0, 0)),
            pl.BlockSpec((9 * Cin, Cout), lambda n: (0, 0)),
            pl.BlockSpec((1, Cout), lambda n: (0, 0)),
        ],
        out_specs=pl.BlockSpec((1, H * W, Cout), lambda n: (n, 0, 0)),
        compiler_params=pltpu.CompilerParams(dimension_semantics=("parallel",)),
    )(xp, wmat, b2)
    return out.reshape(N, H, W, Cout)


def relu_maxpool2x2(x):
    """ReLU followed by 2x2 stride-2 max pool (NHWC), one fused Pallas kernel."""
    N, H, W, C = x.shape
    assert H % 2 == 0 and W % 2 == 0, \
        "TODO(synk): odd spatial sizes (torch floor-pool) not handled"
    xv = x.reshape(N, H, W // 2, 2 * C)   # flat-order-preserving reshape (bitcast)
    return pl.pallas_call(
        _relu_maxpool2x2_kernel,
        out_shape=jax.ShapeDtypeStruct((N, H // 2, W // 2, C), jnp.float32),
        grid=(N,),
        in_specs=[pl.BlockSpec((1, H, W // 2, 2 * C), lambda n: (n, 0, 0, 0))],
        out_specs=pl.BlockSpec((1, H // 2, W // 2, C), lambda n: (n, 0, 0, 0)),
        compiler_params=pltpu.CompilerParams(dimension_semantics=("parallel",)),
    )(xv)


_LOSS_HW_CHUNK = 2048   # rows per chunk; (2048, C) f32 x2 inputs x2 bufs << VMEM


def fused_layer_losses(xf, gf):
    """One pallas_call per layer computing BOTH:
       - mean |xf - gf|                      (torch.nn.L1Loss)
       - mean |gram(xf) - gram(gf)|          (gram = f f^T / (C*H*W))
    Features are read from HBM exactly once."""
    N, H, W, C = xf.shape
    HW = H * W
    xf2 = xf.reshape(N, HW, C)
    gf2 = gf.reshape(N, HW, C)
    tc = min(HW, _LOSS_HW_CHUNK)
    T = -(-HW // tc)
    hw_p = T * tc
    if hw_p != HW:   # zero rows contribute 0 to the L1 sum and 0 to the Grams
        xf2 = jnp.pad(xf2, ((0, 0), (0, hw_p - HW), (0, 0)))
        gf2 = jnp.pad(gf2, ((0, 0), (0, hw_p - HW), (0, 0)))

    p, s = pl.pallas_call(
        _layer_loss_kernel,
        out_shape=(jax.ShapeDtypeStruct((N, 1, 1), jnp.float32),
                   jax.ShapeDtypeStruct((N, 1, 1), jnp.float32)),
        grid=(N, T),
        in_specs=[pl.BlockSpec((1, tc, C), lambda n, t: (n, t, 0)),
                  pl.BlockSpec((1, tc, C), lambda n, t: (n, t, 0))],
        out_specs=(pl.BlockSpec((1, 1, 1), lambda n, t: (n, 0, 0)),
                   pl.BlockSpec((1, 1, 1), lambda n, t: (n, 0, 0))),
        scratch_shapes=[pltpu.VMEM((C, C), jnp.float32),
                        pltpu.VMEM((C, C), jnp.float32)],
        compiler_params=pltpu.CompilerParams(
            dimension_semantics=("parallel", "arbitrary")),
    )(xf2, gf2)

    percep = jnp.sum(p) / (N * HW * C)                 # L1Loss mean over N*HW*C
    style = jnp.sum(s) / ((C * HW) * (N * C * C))      # gram scale + mean over N*C*C
    return percep, style


# ------------------------ synthetic VGG feature extractor -----------------

_VGG_MEAN = jnp.array([0.485, 0.456, 0.406], jnp.float32)
_VGG_STD = jnp.array([0.229, 0.224, 0.225], jnp.float32)

_LAYER_CFG = [("conv1_1", 3, 16), ("conv1_2", 16, 16),
              ("conv2_1", 16, 32), ("conv2_2", 32, 32)]


def init_vgg_params(key):
    # TODO(synk): real vgg19 pretrained weights are not loadable here; use
    # deterministic He-style synthetic weights of the right shapes instead.
    params = {}
    for name, cin, cout in _LAYER_CFG:
        key, wk = jax.random.split(key)
        w = jax.random.normal(wk, (3, 3, cin, cout), jnp.float32) * (2.0 / (9 * cin)) ** 0.5
        params[name] = (w, jnp.zeros((cout,), jnp.float32))
    return params


def vgg_features(x_nhwc, params, use_input_norm=True, range_norm=False):
    x = x_nhwc
    if range_norm:
        x = (x + 1.0) / 2.0
    if use_input_norm:
        x = (x - _VGG_MEAN.reshape(1, 1, 1, 3)) / _VGG_STD.reshape(1, 1, 1, 3)
    feats = {}
    h = conv3x3(x, *params["conv1_1"], apply_relu=True)
    f12 = conv3x3(h, *params["conv1_2"], apply_relu=False)     # 'conv1_2' (pre-relu)
    feats["conv1_2"] = f12
    h = relu_maxpool2x2(f12)                                   # fused relu + 2x2 max-pool
    h = conv3x3(h, *params["conv2_1"], apply_relu=True)
    f22 = conv3x3(h, *params["conv2_2"], apply_relu=False)     # 'conv2_2' (pre-relu)
    feats["conv2_2"] = f22
    return feats


# ------------------------------ PerceptualLoss ----------------------------

LAYER_WEIGHTS = {"conv1_2": 1.0, "conv2_2": 1.0}
PERCEPTUAL_WEIGHT = 1.0
STYLE_WEIGHT = 0.5          # > 0 so the Gram-matrix style path is exercised
# criterion = 'l1' (default); 'l2'/'fro' variants not exercised in this config.


def perceptual_loss(x_nchw, gt_nchw, params):
    """Mirrors PerceptualLoss.forward: returns (percep_loss, style_loss)."""
    # PyTorch conv inputs are NCHW; convert to the kernels' NHWC layout here.
    x = jnp.transpose(x_nchw, (0, 2, 3, 1)).astype(jnp.float32)
    gt = jnp.transpose(gt_nchw, (0, 2, 3, 1)).astype(jnp.float32)
    n = x.shape[0]

    # Run x and gt.detach() through the VGG trunk as one batch (halves launches).
    both = jnp.concatenate([x, jax.lax.stop_gradient(gt)], axis=0)
    feats = vgg_features(both, params)

    # Both weights are > 0 in this config, so the fused per-layer kernel
    # computes the perceptual and style contributions from a single HBM read.
    percep_sum = jnp.float32(0.0)
    style_sum = jnp.float32(0.0)
    for k, wgt in LAYER_WEIGHTS.items():
        p, s = fused_layer_losses(feats[k][:n], feats[k][n:])
        percep_sum = percep_sum + p * wgt
        style_sum = style_sum + s * wgt

    percep_loss = percep_sum * PERCEPTUAL_WEIGHT if PERCEPTUAL_WEIGHT > 0 else None
    style_loss = style_sum * STYLE_WEIGHT if STYLE_WEIGHT > 0 else None
    return percep_loss, style_loss


if __name__ == "__main__":
    key = jax.random.PRNGKey(0)
    kx, kg = jax.random.split(key)
    x = jax.random.uniform(kx, (2, 3, 16, 16), jnp.float32)    # NCHW, like torch
    gt = jax.random.uniform(kg, (2, 3, 16, 16), jnp.float32)
    params = init_vgg_params(jax.random.PRNGKey(42))

    percep, style = jax.jit(perceptual_loss)(x, gt, params)
    jax.block_until_ready((percep, style))

    assert percep.shape == () and style.shape == ()
    assert bool(jnp.isfinite(percep)) and bool(jnp.isfinite(style))
    print("KERNEL_OK")
</pallas_src>

<mosaic_0001>
module attributes {stable_mosaic.version = 11 : i64} {
  func.func @_conv3x3_kernel(%arg0: i32, %arg1: memref<1x18x18x3xbf16, #tpu.memory_space<vmem>>, %arg2: memref<27x16xbf16, #tpu.memory_space<vmem>>, %arg3: memref<1x16xf32, #tpu.memory_space<vmem>>, %arg4: memref<1x256x16xf32, #tpu.memory_space<vmem>>) attributes {dimension_semantics = [#tpu.dimension_semantics<parallel>], iteration_bounds = array<i64: 4>, scalar_prefetch = 0 : i64, scratch_operands = 0 : i64, tpu.core_type = #tpu.core_type<tc>, window_params = [{transform_indices = @transform_0, window_bounds = array<i64: 1, 18, 18, 3>}, {pipeline_mode = #tpu.pipeline_mode<synchronous>, transform_indices = @transform_1, window_bounds = array<i64: 27, 16>}, {pipeline_mode = #tpu.pipeline_mode<synchronous>, transform_indices = @transform_2, window_bounds = array<i64: 1, 16>}, {transform_indices = @transform_3, window_bounds = array<i64: 1, 256, 16>}]} {
    %c0 = arith.constant 0 : index
    %c0_0 = arith.constant 0 : index
    %c0_1 = arith.constant 0 : index
    %c0_2 = arith.constant 0 : index
    %0 = vector.load %arg1[%c0, %c0_0, %c0_1, %c0_2] : memref<1x18x18x3xbf16, #tpu.memory_space<vmem>>, vector<1x16x16x3xbf16>
    %1 = vector.shape_cast %0 : vector<1x16x16x3xbf16> to vector<16x16x3xbf16>
    %2 = vector.shape_cast %1 : vector<16x16x3xbf16> to vector<256x3xbf16>
    %c0_3 = arith.constant 0 : index
    %c0_4 = arith.constant 0 : index
    %c1 = arith.constant 1 : index
    %c0_5 = arith.constant 0 : index
    %3 = vector.load %arg1[%c0_3, %c0_4, %c1, %c0_5] : memref<1x18x18x3xbf16, #tpu.memory_space<vmem>>, vector<1x16x16x3xbf16>
    %4 = vector.shape_cast %3 : vector<1x16x16x3xbf16> to vector<16x16x3xbf16>
    %5 = vector.shape_cast %4 : vector<16x16x3xbf16> to vector<256x3xbf16>
    %c0_6 = arith.constant 0 : index
    %c0_7 = arith.constant 0 : index
    %c2 = arith.constant 2 : index
    %c0_8 = arith.constant 0 : index
    %6 = vector.load %arg1[%c0_6, %c0_7, %c2, %c0_8] : memref<1x18x18x3xbf16, #tpu.memory_space<vmem>>, vector<1x16x16x3xbf16>
    %7 = vector.shape_cast %6 : vector<1x16x16x3xbf16> to vector<16x16x3xbf16>
    %8 = vector.shape_cast %7 : vector<16x16x3xbf16> to vector<256x3xbf16>
    %c0_9 = arith.constant 0 : index
    %c1_10 = arith.constant 1 : index
    %c0_11 = arith.constant 0 : index
    %c0_12 = arith.constant 0 : index
    %9 = vector.load %arg1[%c0_9, %c1_10, %c0_11, %c0_12] : memref<1x18x18x3xbf16, #tpu.memory_space<vmem>>, vector<1x16x16x3xbf16>
    %10 = vector.shape_cast %9 : vector<1x16x16x3xbf16> to vector<16x16x3xbf16>
    %11 = vector.shape_cast %10 : vector<16x16x3xbf16> to vector<256x3xbf16>
    %c0_13 = arith.constant 0 : index
    %c1_14 = arith.constant 1 : index
    %c1_15 = arith.constant 1 : index
    %c0_16 = arith.constant 0 : index
    %12 = vector.load %arg1[%c0_13, %c1_14, %c1_15, %c0_16] : memref<1x18x18x3xbf16, #tpu.memory_space<vmem>>, vector<1x16x16x3xbf16>
    %13 = vector.shape_cast %12 : vector<1x16x16x3xbf16> to vector<16x16x3xbf16>
    %14 = vector.shape_cast %13 : vector<16x16x3xbf16> to vector<256x3xbf16>
    %c0_17 = arith.constant 0 : index
    %c1_18 = arith.constant 1 : index
    %c2_19 = arith.constant 2 : index
    %c0_20 = arith.constant 0 : index
    %15 = vector.load %arg1[%c0_17, %c1_18, %c2_19, %c0_20] : memref<1x18x18x3xbf16, #tpu.memory_space<vmem>>, vector<1x16x16x3xbf16>
    %16 = vector.shape_cast %15 : vector<1x16x16x3xbf16> to vector<16x16x3xbf16>
    %17 = vector.shape_cast %16 : vector<16x16x3xbf16> to vector<256x3xbf16>
    %c0_21 = arith.constant 0 : index
    %c2_22 = arith.constant 2 : index
    %c0_23 = arith.constant 0 : index
    %c0_24 = arith.constant 0 : index
    %18 = vector.load %arg1[%c0_21, %c2_22, %c0_23, %c0_24] : memref<1x18x18x3xbf16, #tpu.memory_space<vmem>>, vector<1x16x16x3xbf16>
    %19 = vector.shape_cast %18 : vector<1x16x16x3xbf16> to vector<16x16x3xbf16>
    %20 = vector.shape_cast %19 : vector<16x16x3xbf16> to vector<256x3xbf16>
    %c0_25 = arith.constant 0 : index
    %c2_26 = arith.constant 2 : index
    %c1_27 = arith.constant 1 : index
    %c0_28 = arith.constant 0 : index
    %21 = vector.load %arg1[%c0_25, %c2_26, %c1_27, %c0_28] : memref<1x18x18x3xbf16, #tpu.memory_space<vmem>>, vector<1x16x16x3xbf16>
    %22 = vector.shape_cast %21 : vector<1x16x16x3xbf16> to vector<16x16x3xbf16>
    %23 = vector.shape_cast %22 : vector<16x16x3xbf16> to vector<256x3xbf16>
    %c0_29 = arith.constant 0 : index
    %c2_30 = arith.constant 2 : index
    %c2_31 = arith.constant 2 : index
    %c0_32 = arith.constant 0 : index
    %24 = vector.load %arg1[%c0_29, %c2_30, %c2_31, %c0_32] : memref<1x18x18x3xbf16, #tpu.memory_space<vmem>>, vector<1x16x16x3xbf16>
    %25 = vector.shape_cast %24 : vector<1x16x16x3xbf16> to vector<16x16x3xbf16>
    %26 = vector.shape_cast %25 : vector<16x16x3xbf16> to vector<256x3xbf16>
    %27 = tpu.concatenate %2, %5, %8, %11, %14, %17, %20, %23, %26 in 1 : vector<256x3xbf16>, vector<256x3xbf16>, vector<256x3xbf16>, vector<256x3xbf16>, vector<256x3xbf16>, vector<256x3xbf16>, vector<256x3xbf16>, vector<256x3xbf16>, vector<256x3xbf16> -> vector<256x27xbf16>
    %c0_33 = arith.constant 0 : index
    %c0_34 = arith.constant 0 : index
    %28 = vector.load %arg2[%c0_33, %c0_34] : memref<27x16xbf16, #tpu.memory_space<vmem>>, vector<27x16xbf16>
    %cst = arith.constant dense<0.000000e+00> : vector<256x16xf32>
    %29 = tpu.matmul %27, %28, %cst {dimension_numbers = #tpu.dot_dimension_numbers<[1], [0], [0], [1], [0, 0, 1, 1], [], []>} : vector<256x27xbf16>, vector<27x16xbf16>, vector<256x16xf32> -> vector<256x16xf32>
    %c0_35 = arith.constant 0 : index
    %c0_36 = arith.constant 0 : index
    %30 = vector.load %arg3[%c0_35, %c0_36] : memref<1x16xf32, #tpu.memory_space<vmem>>, vector<1x16xf32>
    %31 = vector.broadcast %30 : vector<1x16xf32> to vector<256x16xf32>
    %32 = arith.addf %29, %31 : vector<256x16xf32>
    %cst_37 = arith.constant 0.000000e+00 : f32
    %33 = vector.broadcast %cst_37 : f32 to vector<256x16xf32>
    %34 = arith.maximumf %32, %33 : vector<256x16xf32>
    %c0_38 = arith.constant 0 : index
    %c0_39 = arith.constant 0 : index
    %c0_40 = arith.constant 0 : index
    %35 = vector.load %arg4[%c0_38, %c0_39, %c0_40] : memref<1x256x16xf32, #tpu.memory_space<vmem>>, vector<1x256x16xf32>
    %36 = vector.shape_cast %35 : vector<1x256x16xf32> to vector<256x16xf32>
    %37 = vector.shape_cast %34 : vector<256x16xf32> to vector<1x256x16xf32>
    tpu.vector_store %arg4[%c0_38, %c0_39, %c0_40], %37 {strides = array<i32>} : memref<1x256x16xf32, #tpu.memory_space<vmem>>, vector<1x256x16xf32>,
    return
  }
  func.func @transform_0(%arg0: i32) -> (i32, i32, i32, i32) {
    %c0_i32 = arith.constant 0 : i32
    %c0_i32_0 = arith.constant 0 : i32
    %c0_i32_1 = arith.constant 0 : i32
    %c0_i32_2 = arith.constant 0 : i32
    return %arg0, %c0_i32, %c0_i32_0, %c0_i32_1 : i32, i32, i32, i32
  }
  func.func @transform_1(%arg0: i32) -> (i32, i32) {
    %c0_i32 = arith.constant 0 : i32
    %c0_i32_0 = arith.constant 0 : i32
    %c0_i32_1 = arith.constant 0 : i32
    return %c0_i32, %c0_i32_0 : i32, i32
  }
  func.func @transform_2(%arg0: i32) -> (i32, i32) {
    %c0_i32 = arith.constant 0 : i32
    %c0_i32_0 = arith.constant 0 : i32
    %c0_i32_1 = arith.constant 0 : i32
    return %c0_i32, %c0_i32_0 : i32, i32
  }
  func.func @transform_3(%arg0: i32) -> (i32, i32, i32) {
    %c0_i32 = arith.constant 0 : i32
    %c0_i32_0 = arith.constant 0 : i32
    %c0_i32_1 = arith.constant 0 : i32
    return %arg0, %c0_i32, %c0_i32_0 : i32, i32, i32
  }
}

module attributes {stable_mosaic.version = 11 : i64} {
  func.func @_conv3x3_kernel(%arg0: i32, %arg1: memref<1x18x18x16xbf16, #tpu.memory_space<vmem>>, %arg2: memref<144x16xbf16, #tpu.memory_space<vmem>>, %arg3: memref<1x16xf32, #tpu.memory_space<vmem>>, %arg4: memref<1x256x16xf32, #tpu.memory_space<vmem>>) attributes {dimension_semantics = [#tpu.dimension_semantics<parallel>], iteration_bounds = array<i64: 4>, scalar_prefetch = 0 : i64, scratch_operands = 0 : i64, tpu.core_type = #tpu.core_type<tc>, window_params = [{transform_indices = @transform_0, window_bounds = array<i64: 1, 18, 18, 16>}, {pipeline_mode = #tpu.pipeline_mode<synchronous>, transform_indices = @transform_1, window_bounds = array<i64: 144, 16>}, {pipeline_mode = #tpu.pipeline_mode<synchronous>, transform_indices = @transform_2, window_bounds = array<i64: 1, 16>}, {transform_indices = @transform_3, window_bounds = array<i64: 1, 256, 16>}]} {
    %c0 = arith.constant 0 : index
    %c0_0 = arith.constant 0 : index
    %c0_1 = arith.constant 0 : index
    %c0_2 = arith.constant 0 : index
    %0 = vector.load %arg1[%c0, %c0_0, %c0_1, %c0_2] : memref<1x18x18x16xbf16, #tpu.memory_space<vmem>>, vector<1x16x16x16xbf16>
    %1 = vector.shape_cast %0 : vector<1x16x16x16xbf16> to vector<16x16x16xbf16>
    %2 = vector.shape_cast %1 : vector<16x16x16xbf16> to vector<256x16xbf16>
    %c0_3 = arith.constant 0 : index
    %c0_4 = arith.constant 0 : index
    %c1 = arith.constant 1 : index
    %c0_5 = arith.constant 0 : index
    %3 = vector.load %arg1[%c0_3, %c0_4, %c1, %c0_5] : memref<1x18x18x16xbf16, #tpu.memory_space<vmem>>, vector<1x16x16x16xbf16>
    %4 = vector.shape_cast %3 : vector<1x16x16x16xbf16> to vector<16x16x16xbf16>
    %5 = vector.shape_cast %4 : vector<16x16x16xbf16> to vector<256x16xbf16>
    %c0_6 = arith.constant 0 : index
    %c0_7 = arith.constant 0 : index
    %c2 = arith.constant 2 : index
    %c0_8 = arith.constant 0 : index
    %6 = vector.load %arg1[%c0_6, %c0_7, %c2, %c0_8] : memref<1x18x18x16xbf16, #tpu.memory_space<vmem>>, vector<1x16x16x16xbf16>
    %7 = vector.shape_cast %6 : vector<1x16x16x16xbf16> to vector<16x16x16xbf16>
    %8 = vector.shape_cast %7 : vector<16x16x16xbf16> to vector<256x16xbf16>
    %c0_9 = arith.constant 0 : index
    %c1_10 = arith.constant 1 : index
    %c0_11 = arith.constant 0 : index
    %c0_12 = arith.constant 0 : index
    %9 = vector.load %arg1[%c0_9, %c1_10, %c0_11, %c0_12] : memref<1x18x18x16xbf16, #tpu.memory_space<vmem>>, vector<1x16x16x16xbf16>
    %10 = vector.shape_cast %9 : vector<1x16x16x16xbf16> to vector<16x16x16xbf16>
    %11 = vector.shape_cast %10 : vector<16x16x16xbf16> to vector<256x16xbf16>
    %c0_13 = arith.constant 0 : index
    %c1_14 = arith.constant 1 : index
    %c1_15 = arith.constant 1 : index
    %c0_16 = arith.constant 0 : index
    %12 = vector.load %arg1[%c0_13, %c1_14, %c1_15, %c0_16] : memref<1x18x18x16xbf16, #tpu.memory_space<vmem>>, vector<1x16x16x16xbf16>
    %13 = vector.shape_cast %12 : vector<1x16x16x16xbf16> to vector<16x16x16xbf16>
    %14 = vector.shape_cast %13 : vector<16x16x16xbf16> to vector<256x16xbf16>
    %c0_17 = arith.constant 0 : index
    %c1_18 = arith.constant 1 : index
    %c2_19 = arith.constant 2 : index
    %c0_20 = arith.constant 0 : index
    %15 = vector.load %arg1[%c0_17, %c1_18, %c2_19, %c0_20] : memref<1x18x18x16xbf16, #tpu.memory_space<vmem>>, vector<1x16x16x16xbf16>
    %16 = vector.shape_cast %15 : vector<1x16x16x16xbf16> to vector<16x16x16xbf16>
    %17 = vector.shape_cast %16 : vector<16x16x16xbf16> to vector<256x16xbf16>
    %c0_21 = arith.constant 0 : index
    %c2_22 = arith.constant 2 : index
    %c0_23 = arith.constant 0 : index
    %c0_24 = arith.constant 0 : index
    %18 = vector.load %arg1[%c0_21, %c2_22, %c0_23, %c0_24] : memref<1x18x18x16xbf16, #tpu.memory_space<vmem>>, vector<1x16x16x16xbf16>
    %19 = vector.shape_cast %18 : vector<1x16x16x16xbf16> to vector<16x16x16xbf16>
    %20 = vector.shape_cast %19 : vector<16x16x16xbf16> to vector<256x16xbf16>
    %c0_25 = arith.constant 0 : index
    %c2_26 = arith.constant 2 : index
    %c1_27 = arith.constant 1 : index
    %c0_28 = arith.constant 0 : index
    %21 = vector.load %arg1[%c0_25, %c2_26, %c1_27, %c0_28] : memref<1x18x18x16xbf16, #tpu.memory_space<vmem>>, vector<1x16x16x16xbf16>
    %22 = vector.shape_cast %21 : vector<1x16x16x16xbf16> to vector<16x16x16xbf16>
    %23 = vector.shape_cast %22 : vector<16x16x16xbf16> to vector<256x16xbf16>
    %c0_29 = arith.constant 0 : index
    %c2_30 = arith.constant 2 : index
    %c2_31 = arith.constant 2 : index
    %c0_32 = arith.constant 0 : index
    %24 = vector.load %arg1[%c0_29, %c2_30, %c2_31, %c0_32] : memref<1x18x18x16xbf16, #tpu.memory_space<vmem>>, vector<1x16x16x16xbf16>
    %25 = vector.shape_cast %24 : vector<1x16x16x16xbf16> to vector<16x16x16xbf16>
    %26 = vector.shape_cast %25 : vector<16x16x16xbf16> to vector<256x16xbf16>
    %27 = tpu.concatenate %2, %5, %8, %11, %14, %17, %20, %23, %26 in 1 : vector<256x16xbf16>, vector<256x16xbf16>, vector<256x16xbf16>, vector<256x16xbf16>, vector<256x16xbf16>, vector<256x16xbf16>, vector<256x16xbf16>, vector<256x16xbf16>, vector<256x16xbf16> -> vector<256x144xbf16>
    %c0_33 = arith.constant 0 : index
    %c0_34 = arith.constant 0 : index
    %28 = vector.load %arg2[%c0_33, %c0_34] : memref<144x16xbf16, #tpu.memory_space<vmem>>, vector<144x16xbf16>
    %cst = arith.constant dense<0.000000e+00> : vector<256x16xf32>
    %29 = tpu.matmul %27, %28, %cst {dimension_numbers = #tpu.dot_dimension_numbers<[1], [0], [0], [1], [0, 0, 1, 1], [], []>} : vector<256x144xbf16>, vector<144x16xbf16>, vector<256x16xf32> -> vector<256x16xf32>
    %c0_35 = arith.constant 0 : index
    %c0_36 = arith.constant 0 : index
    %30 = vector.load %arg3[%c0_35, %c0_36] : memref<1x16xf32, #tpu.memory_space<vmem>>, vector<1x16xf32>
    %31 = vector.broadcast %30 : vector<1x16xf32> to vector<256x16xf32>
    %32 = arith.addf %29, %31 : vector<256x16xf32>
    %c0_37 = arith.constant 0 : index
    %c0_38 = arith.constant 0 : index
    %c0_39 = arith.constant 0 : index
    %33 = vector.load %arg4[%c0_37, %c0_38, %c0_39] : memref<1x256x16xf32, #tpu.memory_space<vmem>>, vector<1x256x16xf32>
    %34 = vector.shape_cast %33 : vector<1x256x16xf32> to vector<256x16xf32>
    %35 = vector.shape_cast %32 : vector<256x16xf32> to vector<1x256x16xf32>
    tpu.vector_store %arg4[%c0_37, %c0_38, %c0_39], %35 {strides = array<i32>} : memref<1x256x16xf32, #tpu.memory_space<vmem>>, vector<1x256x16xf32>,
    return
  }
  func.func @transform_0(%arg0: i32) -> (i32, i32, i32, i32) {
    %c0_i32 = arith.constant 0 : i32
    %c0_i32_0 = arith.constant 0 : i32
    %c0_i32_1 = arith.constant 0 : i32
    %c0_i32_2 = arith.constant 0 : i32
    return %arg0, %c0_i32, %c0_i32_0, %c0_i32_1 : i32, i32, i32, i32
  }
  func.func @transform_1(%arg0: i32) -> (i32, i32) {
    %c0_i32 = arith.constant 0 : i32
    %c0_i32_0 = arith.constant 0 : i32
    %c0_i32_1 = arith.constant 0 : i32
    return %c0_i32, %c0_i32_0 : i32, i32
  }
  func.func @transform_2(%arg0: i32) -> (i32, i32) {
    %c0_i32 = arith.constant 0 : i32
    %c0_i32_0 = arith.constant 0 : i32
    %c0_i32_1 = arith.constant 0 : i32
    return %c0_i32, %c0_i32_0 : i32, i32
  }
  func.func @transform_3(%arg0: i32) -> (i32, i32, i32) {
    %c0_i32 = arith.constant 0 : i32
    %c0_i32_0 = arith.constant 0 : i32
    %c0_i32_1 = arith.constant 0 : i32
    return %arg0, %c0_i32, %c0_i32_0 : i32, i32, i32
  }
}

module attributes {stable_mosaic.version = 11 : i64} {
  func.func @_relu_maxpool2x2_kernel(%arg0: i32, %arg1: memref<1x16x8x32xf32, #tpu.memory_space<vmem>>, %arg2: memref<1x8x8x16xf32, #tpu.memory_space<vmem>>) attributes {dimension_semantics = [#tpu.dimension_semantics<parallel>], iteration_bounds = array<i64: 4>, scalar_prefetch = 0 : i64, scratch_operands = 0 : i64, tpu.core_type = #tpu.core_type<tc>, window_params = [{transform_indices = @transform_0, window_bounds = array<i64: 1, 16, 8, 32>}, {transform_indices = @transform_1, window_bounds = array<i64: 1, 8, 8, 16>}]} {
    %c0 = arith.constant 0 : index
    %c0_0 = arith.constant 0 : index
    %c0_1 = arith.constant 0 : index
    %c0_2 = arith.constant 0 : index
    %0 = vector.load %arg1[%c0, %c0_0, %c0_1, %c0_2] : memref<1x16x8x32xf32, #tpu.memory_space<vmem>>, vector<1x16x8x32xf32>
    %1 = vector.shape_cast %0 : vector<1x16x8x32xf32> to vector<16x8x32xf32>
    %2 = vector.extract_strided_slice %1 {offsets = [0, 0, 0], sizes = [16, 8, 16], strides = [1, 1, 1]} : vector<16x8x32xf32> to vector<16x8x16xf32>
    %3 = vector.extract_strided_slice %1 {offsets = [0, 0, 16], sizes = [16, 8, 16], strides = [1, 1, 1]} : vector<16x8x32xf32> to vector<16x8x16xf32>
    %4 = arith.maximumf %2, %3 : vector<16x8x16xf32>
    %cst = arith.constant 0.000000e+00 : f32
    %5 = vector.broadcast %cst : f32 to vector<16x8x16xf32>
    %6 = arith.maximumf %4, %5 : vector<16x8x16xf32>
    %7 = vector.shape_cast %6 : vector<16x8x16xf32> to vector<8x2x8x16xf32>
    %8 = vector.extract_strided_slice %7 {offsets = [0, 0, 0, 0], sizes = [8, 1, 8, 16], strides = [1, 1, 1, 1]} : vector<8x2x8x16xf32> to vector<8x1x8x16xf32>
    %9 = vector.shape_cast %8 : vector<8x1x8x16xf32> to vector<8x8x16xf32>
    %10 = vector.extract_strided_slice %7 {offsets = [0, 1, 0, 0], sizes = [8, 1, 8, 16], strides = [1, 1, 1, 1]} : vector<8x2x8x16xf32> to vector<8x1x8x16xf32>
    %11 = vector.shape_cast %10 : vector<8x1x8x16xf32> to vector<8x8x16xf32>
    %12 = arith.maximumf %9, %11 : vector<8x8x16xf32>
    %c0_3 = arith.constant 0 : index
    %c0_4 = arith.constant 0 : index
    %c0_5 = arith.constant 0 : index
    %c0_6 = arith.constant 0 : index
    %13 = vector.load %arg2[%c0_3, %c0_4, %c0_5, %c0_6] : memref<1x8x8x16xf32, #tpu.memory_space<vmem>>, vector<1x8x8x16xf32>
    %14 = vector.shape_cast %13 : vector<1x8x8x16xf32> to vector<8x8x16xf32>
    %15 = vector.shape_cast %12 : vector<8x8x16xf32> to vector<1x8x8x16xf32>
    tpu.vector_store %arg2[%c0_3, %c0_4, %c0_5, %c0_6], %15 {strides = array<i32>} : memref<1x8x8x16xf32, #tpu.memory_space<vmem>>, vector<1x8x8x16xf32>,
    return
  }
  func.func @transform_0(%arg0: i32) -> (i32, i32, i32, i32) {
    %c0_i32 = arith.constant 0 : i32
    %c0_i32_0 = arith.constant 0 : i32
    %c0_i32_1 = arith.constant 0 : i32
    %c0_i32_2 = arith.constant 0 : i32
    return %arg0, %c0_i32, %c0_i32_0, %c0_i32_1 : i32, i32, i32, i32
  }
  func.func @transform_1(%arg0: i32) -> (i32, i32, i32, i32) {
    %c0_i32 = arith.constant 0 : i32
    %c0_i32_0 = arith.constant 0 : i32
    %c0_i32_1 = arith.constant 0 : i32
    %c0_i32_2 = arith.constant 0 : i32
    return %arg0, %c0_i32, %c0_i32_0, %c0_i32_1 : i32, i32, i32, i32
  }
}

module attributes {stable_mosaic.version = 11 : i64} {
  func.func @_conv3x3_kernel(%arg0: i32, %arg1: memref<1x10x10x16xbf16, #tpu.memory_space<vmem>>, %arg2: memref<144x32xbf16, #tpu.memory_space<vmem>>, %arg3: memref<1x32xf32, #tpu.memory_space<vmem>>, %arg4: memref<1x64x32xf32, #tpu.memory_space<vmem>>) attributes {dimension_semantics = [#tpu.dimension_semantics<parallel>], iteration_bounds = array<i64: 4>, scalar_prefetch = 0 : i64, scratch_operands = 0 : i64, tpu.core_type = #tpu.core_type<tc>, window_params = [{transform_indices = @transform_0, window_bounds = array<i64: 1, 10, 10, 16>}, {pipeline_mode = #tpu.pipeline_mode<synchronous>, transform_indices = @transform_1, window_bounds = array<i64: 144, 32>}, {pipeline_mode = #tpu.pipeline_mode<synchronous>, transform_indices = @transform_2, window_bounds = array<i64: 1, 32>}, {transform_indices = @transform_3, window_bounds = array<i64: 1, 64, 32>}]} {
    %c0 = arith.constant 0 : index
    %c0_0 = arith.constant 0 : index
    %c0_1 = arith.constant 0 : index
    %c0_2 = arith.constant 0 : index
    %0 = vector.load %arg1[%c0, %c0_0, %c0_1, %c0_2] : memref<1x10x10x16xbf16, #tpu.memory_space<vmem>>, vector<1x8x8x16xbf16>
    %1 = vector.shape_cast %0 : vector<1x8x8x16xbf16> to vector<8x8x16xbf16>
    %2 = vector.shape_cast %1 : vector<8x8x16xbf16> to vector<64x16xbf16>
    %c0_3 = arith.constant 0 : index
    %c0_4 = arith.constant 0 : index
    %c1 = arith.constant 1 : index
    %c0_5 = arith.constant 0 : index
    %3 = vector.load %arg1[%c0_3, %c0_4, %c1, %c0_5] : memref<1x10x10x16xbf16, #tpu.memory_space<vmem>>, vector<1x8x8x16xbf16>
    %4 = vector.shape_cast %3 : vector<1x8x8x16xbf16> to vector<8x8x16xbf16>
    %5 = vector.shape_cast %4 : vector<8x8x16xbf16> to vector<64x16xbf16>
    %c0_6 = arith.constant 0 : index
    %c0_7 = arith.constant 0 : index
    %c2 = arith.constant 2 : index
    %c0_8 = arith.constant 0 : index
    %6 = vector.load %arg1[%c0_6, %c0_7, %c2, %c0_8] : memref<1x10x10x16xbf16, #tpu.memory_space<vmem>>, vector<1x8x8x16xbf16>
    %7 = vector.shape_cast %6 : vector<1x8x8x16xbf16> to vector<8x8x16xbf16>
    %8 = vector.shape_cast %7 : vector<8x8x16xbf16> to vector<64x16xbf16>
    %c0_9 = arith.constant 0 : index
    %c1_10 = arith.constant 1 : index
    %c0_11 = arith.constant 0 : index
    %c0_12 = arith.constant 0 : index
    %9 = vector.load %arg1[%c0_9, %c1_10, %c0_11, %c0_12] : memref<1x10x10x16xbf16, #tpu.memory_space<vmem>>, vector<1x8x8x16xbf16>
    %10 = vector.shape_cast %9 : vector<1x8x8x16xbf16> to vector<8x8x16xbf16>
    %11 = vector.shape_cast %10 : vector<8x8x16xbf16> to vector<64x16xbf16>
    %c0_13 = arith.constant 0 : index
    %c1_14 = arith.constant 1 : index
    %c1_15 = arith.constant 1 : index
    %c0_16 = arith.constant 0 : index
    %12 = vector.load %arg1[%c0_13, %c1_14, %c1_15, %c0_16] : memref<1x10x10x16xbf16, #tpu.memory_space<vmem>>, vector<1x8x8x16xbf16>
    %13 = vector.shape_cast %12 : vector<1x8x8x16xbf16> to vector<8x8x16xbf16>
    %14 = vector.shape_cast %13 : vector<8x8x16xbf16> to vector<64x16xbf16>
    %c0_17 = arith.constant 0 : index
    %c1_18 = arith.constant 1 : index
    %c2_19 = arith.constant 2 : index
    %c0_20 = arith.constant 0 : index
    %15 = vector.load %arg1[%c0_17, %c1_18, %c2_19, %c0_20] : memref<1x10x10x16xbf16, #tpu.memory_space<vmem>>, vector<1x8x8x16xbf16>
    %16 = vector.shape_cast %15 : vector<1x8x8x16xbf16> to vector<8x8x16xbf16>
    %17 = vector.shape_cast %16 : vector<8x8x16xbf16> to vector<64x16xbf16>
    %c0_21 = arith.constant 0 : index
    %c2_22 = arith.constant 2 : index
    %c0_23 = arith.constant 0 : index
    %c0_24 = arith.constant 0 : index
    %18 = vector.load %arg1[%c0_21, %c2_22, %c0_23, %c0_24] : memref<1x10x10x16xbf16, #tpu.memory_space<vmem>>, vector<1x8x8x16xbf16>
    %19 = vector.shape_cast %18 : vector<1x8x8x16xbf16> to vector<8x8x16xbf16>
    %20 = vector.shape_cast %19 : vector<8x8x16xbf16> to vector<64x16xbf16>
    %c0_25 = arith.constant 0 : index
    %c2_26 = arith.constant 2 : index
    %c1_27 = arith.constant 1 : index
    %c0_28 = arith.constant 0 : index
    %21 = vector.load %arg1[%c0_25, %c2_26, %c1_27, %c0_28] : memref<1x10x10x16xbf16, #tpu.memory_space<vmem>>, vector<1x8x8x16xbf16>
    %22 = vector.shape_cast %21 : vector<1x8x8x16xbf16> to vector<8x8x16xbf16>
    %23 = vector.shape_cast %22 : vector<8x8x16xbf16> to vector<64x16xbf16>
    %c0_29 = arith.constant 0 : index
    %c2_30 = arith.constant 2 : index
    %c2_31 = arith.constant 2 : index
    %c0_32 = arith.constant 0 : index
    %24 = vector.load %arg1[%c0_29, %c2_30, %c2_31, %c0_32] : memref<1x10x10x16xbf16, #tpu.memory_space<vmem>>, vector<1x8x8x16xbf16>
    %25 = vector.shape_cast %24 : vector<1x8x8x16xbf16> to vector<8x8x16xbf16>
    %26 = vector.shape_cast %25 : vector<8x8x16xbf16> to vector<64x16xbf16>
    %27 = tpu.concatenate %2, %5, %8, %11, %14, %17, %20, %23, %26 in 1 : vector<64x16xbf16>, vector<64x16xbf16>, vector<64x16xbf16>, vector<64x16xbf16>, vector<64x16xbf16>, vector<64x16xbf16>, vector<64x16xbf16>, vector<64x16xbf16>, vector<64x16xbf16> -> vector<64x144xbf16>
    %c0_33 = arith.constant 0 : index
    %c0_34 = arith.constant 0 : index
    %28 = vector.load %arg2[%c0_33, %c0_34] : memref<144x32xbf16, #tpu.memory_space<vmem>>, vector<144x32xbf16>
    %cst = arith.constant dense<0.000000e+00> : vector<64x32xf32>
    %29 = tpu.matmul %27, %28, %cst {dimension_numbers = #tpu.dot_dimension_numbers<[1], [0], [0], [1], [0, 0, 1, 1], [], []>} : vector<64x144xbf16>, vector<144x32xbf16>, vector<64x32xf32> -> vector<64x32xf32>
    %c0_35 = arith.constant 0 : index
    %c0_36 = arith.constant 0 : index
    %30 = vector.load %arg3[%c0_35, %c0_36] : memref<1x32xf32, #tpu.memory_space<vmem>>, vector<1x32xf32>
    %31 = vector.broadcast %30 : vector<1x32xf32> to vector<64x32xf32>
    %32 = arith.addf %29, %31 : vector<64x32xf32>
    %cst_37 = arith.constant 0.000000e+00 : f32
    %33 = vector.broadcast %cst_37 : f32 to vector<64x32xf32>
    %34 = arith.maximumf %32, %33 : vector<64x32xf32>
    %c0_38 = arith.constant 0 : index
    %c0_39 = arith.constant 0 : index
    %c0_40 = arith.constant 0 : index
    %35 = vector.load %arg4[%c0_38, %c0_39, %c0_40] : memref<1x64x32xf32, #tpu.memory_space<vmem>>, vector<1x64x32xf32>
    %36 = vector.shape_cast %35 : vector<1x64x32xf32> to vector<64x32xf32>
    %37 = vector.shape_cast %34 : vector<64x32xf32> to vector<1x64x32xf32>
    tpu.vector_store %arg4[%c0_38, %c0_39, %c0_40], %37 {strides = array<i32>} : memref<1x64x32xf32, #tpu.memory_space<vmem>>, vector<1x64x32xf32>,
    return
  }
  func.func @transform_0(%arg0: i32) -> (i32, i32, i32, i32) {
    %c0_i32 = arith.constant 0 : i32
    %c0_i32_0 = arith.constant 0 : i32
    %c0_i32_1 = arith.constant 0 : i32
    %c0_i32_2 = arith.constant 0 : i32
    return %arg0, %c0_i32, %c0_i32_0, %c0_i32_1 : i32, i32, i32, i32
  }
  func.func @transform_1(%arg0: i32) -> (i32, i32) {
    %c0_i32 = arith.constant 0 : i32
    %c0_i32_0 = arith.constant 0 : i32
    %c0_i32_1 = arith.constant 0 : i32
    return %c0_i32, %c0_i32_0 : i32, i32
  }
  func.func @transform_2(%arg0: i32) -> (i32, i32) {
    %c0_i32 = arith.constant 0 : i32
    %c0_i32_0 = arith.constant 0 : i32
    %c0_i32_1 = arith.constant 0 : i32
    return %c0_i32, %c0_i32_0 : i32, i32
  }
  func.func @transform_3(%arg0: i32) -> (i32, i32, i32) {
    %c0_i32 = arith.constant 0 : i32
    %c0_i32_0 = arith.constant 0 : i32
    %c0_i32_1 = arith.constant 0 : i32
    return %arg0, %c0_i32, %c0_i32_0 : i32, i32, i32
  }
}

module attributes {stable_mosaic.version = 11 : i64} {
  func.func @_conv3x3_kernel(%arg0: i32, %arg1: memref<1x10x10x32xbf16, #tpu.memory_space<vmem>>, %arg2: memref<288x32xbf16, #tpu.memory_space<vmem>>, %arg3: memref<1x32xf32, #tpu.memory_space<vmem>>, %arg4: memref<1x64x32xf32, #tpu.memory_space<vmem>>) attributes {dimension_semantics = [#tpu.dimension_semantics<parallel>], iteration_bounds = array<i64: 4>, scalar_prefetch = 0 : i64, scratch_operands = 0 : i64, tpu.core_type = #tpu.core_type<tc>, window_params = [{transform_indices = @transform_0, window_bounds = array<i64: 1, 10, 10, 32>}, {pipeline_mode = #tpu.pipeline_mode<synchronous>, transform_indices = @transform_1, window_bounds = array<i64: 288, 32>}, {pipeline_mode = #tpu.pipeline_mode<synchronous>, transform_indices = @transform_2, window_bounds = array<i64: 1, 32>}, {transform_indices = @transform_3, window_bounds = array<i64: 1, 64, 32>}]} {
    %c0 = arith.constant 0 : index
    %c0_0 = arith.constant 0 : index
    %c0_1 = arith.constant 0 : index
    %c0_2 = arith.constant 0 : index
    %0 = vector.load %arg1[%c0, %c0_0, %c0_1, %c0_2] : memref<1x10x10x32xbf16, #tpu.memory_space<vmem>>, vector<1x8x8x32xbf16>
    %1 = vector.shape_cast %0 : vector<1x8x8x32xbf16> to vector<8x8x32xbf16>
    %2 = vector.shape_cast %1 : vector<8x8x32xbf16> to vector<64x32xbf16>
    %c0_3 = arith.constant 0 : index
    %c0_4 = arith.constant 0 : index
    %c1 = arith.constant 1 : index
    %c0_5 = arith.constant 0 : index
    %3 = vector.load %arg1[%c0_3, %c0_4, %c1, %c0_5] : memref<1x10x10x32xbf16, #tpu.memory_space<vmem>>, vector<1x8x8x32xbf16>
    %4 = vector.shape_cast %3 : vector<1x8x8x32xbf16> to vector<8x8x32xbf16>
    %5 = vector.shape_cast %4 : vector<8x8x32xbf16> to vector<64x32xbf16>
    %c0_6 = arith.constant 0 : index
    %c0_7 = arith.constant 0 : index
    %c2 = arith.constant 2 : index
    %c0_8 = arith.constant 0 : index
    %6 = vector.load %arg1[%c0_6, %c0_7, %c2, %c0_8] : memref<1x10x10x32xbf16, #tpu.memory_space<vmem>>, vector<1x8x8x32xbf16>
    %7 = vector.shape_cast %6 : vector<1x8x8x32xbf16> to vector<8x8x32xbf16>
    %8 = vector.shape_cast %7 : vector<8x8x32xbf16> to vector<64x32xbf16>
    %c0_9 = arith.constant 0 : index
    %c1_10 = arith.constant 1 : index
    %c0_11 = arith.constant 0 : index
    %c0_12 = arith.constant 0 : index
    %9 = vector.load %arg1[%c0_9, %c1_10, %c0_11, %c0_12] : memref<1x10x10x32xbf16, #tpu.memory_space<vmem>>, vector<1x8x8x32xbf16>
    %10 = vector.shape_cast %9 : vector<1x8x8x32xbf16> to vector<8x8x32xbf16>
    %11 = vector.shape_cast %10 : vector<8x8x32xbf16> to vector<64x32xbf16>
    %c0_13 = arith.constant 0 : index
    %c1_14 = arith.constant 1 : index
    %c1_15 = arith.constant 1 : index
    %c0_16 = arith.constant 0 : index
    %12 = vector.load %arg1[%c0_13, %c1_14, %c1_15, %c0_16] : memref<1x10x10x32xbf16, #tpu.memory_space<vmem>>, vector<1x8x8x32xbf16>
    %13 = vector.shape_cast %12 : vector<1x8x8x32xbf16> to vector<8x8x32xbf16>
    %14 = vector.shape_cast %13 : vector<8x8x32xbf16> to vector<64x32xbf16>
    %c0_17 = arith.constant 0 : index
    %c1_18 = arith.constant 1 : index
    %c2_19 = arith.constant 2 : index
    %c0_20 = arith.constant 0 : index
    %15 = vector.load %arg1[%c0_17, %c1_18, %c2_19, %c0_20] : memref<1x10x10x32xbf16, #tpu.memory_space<vmem>>, vector<1x8x8x32xbf16>
    %16 = vector.shape_cast %15 : vector<1x8x8x32xbf16> to vector<8x8x32xbf16>
    %17 = vector.shape_cast %16 : vector<8x8x32xbf16> to vector<64x32xbf16>
    %c0_21 = arith.constant 0 : index
    %c2_22 = arith.constant 2 : index
    %c0_23 = arith.constant 0 : index
    %c0_24 = arith.constant 0 : index
    %18 = vector.load %arg1[%c0_21, %c2_22, %c0_23, %c0_24] : memref<1x10x10x32xbf16, #tpu.memory_space<vmem>>, vector<1x8x8x32xbf16>
    %19 = vector.shape_cast %18 : vector<1x8x8x32xbf16> to vector<8x8x32xbf16>
    %20 = vector.shape_cast %19 : vector<8x8x32xbf16> to vector<64x32xbf16>
    %c0_25 = arith.constant 0 : index
    %c2_26 = arith.constant 2 : index
    %c1_27 = arith.constant 1 : index
    %c0_28 = arith.constant 0 : index
    %21 = vector.load %arg1[%c0_25, %c2_26, %c1_27, %c0_28] : memref<1x10x10x32xbf16, #tpu.memory_space<vmem>>, vector<1x8x8x32xbf16>
    %22 = vector.shape_cast %21 : vector<1x8x8x32xbf16> to vector<8x8x32xbf16>
    %23 = vector.shape_cast %22 : vector<8x8x32xbf16> to vector<64x32xbf16>
    %c0_29 = arith.constant 0 : index
    %c2_30 = arith.constant 2 : index
    %c2_31 = arith.constant 2 : index
    %c0_32 = arith.constant 0 : index
    %24 = vector.load %arg1[%c0_29, %c2_30, %c2_31, %c0_32] : memref<1x10x10x32xbf16, #tpu.memory_space<vmem>>, vector<1x8x8x32xbf16>
    %25 = vector.shape_cast %24 : vector<1x8x8x32xbf16> to vector<8x8x32xbf16>
    %26 = vector.shape_cast %25 : vector<8x8x32xbf16> to vector<64x32xbf16>
    %27 = tpu.concatenate %2, %5, %8, %11, %14, %17, %20, %23, %26 in 1 : vector<64x32xbf16>, vector<64x32xbf16>, vector<64x32xbf16>, vector<64x32xbf16>, vector<64x32xbf16>, vector<64x32xbf16>, vector<64x32xbf16>, vector<64x32xbf16>, vector<64x32xbf16> -> vector<64x288xbf16>
    %c0_33 = arith.constant 0 : index
    %c0_34 = arith.constant 0 : index
    %28 = vector.load %arg2[%c0_33, %c0_34] : memref<288x32xbf16, #tpu.memory_space<vmem>>, vector<288x32xbf16>
    %cst = arith.constant dense<0.000000e+00> : vector<64x32xf32>
    %29 = tpu.matmul %27, %28, %cst {dimension_numbers = #tpu.dot_dimension_numbers<[1], [0], [0], [1], [0, 0, 1, 1], [], []>} : vector<64x288xbf16>, vector<288x32xbf16>, vector<64x32xf32> -> vector<64x32xf32>
    %c0_35 = arith.constant 0 : index
    %c0_36 = arith.constant 0 : index
    %30 = vector.load %arg3[%c0_35, %c0_36] : memref<1x32xf32, #tpu.memory_space<vmem>>, vector<1x32xf32>
    %31 = vector.broadcast %30 : vector<1x32xf32> to vector<64x32xf32>
    %32 = arith.addf %29, %31 : vector<64x32xf32>
    %c0_37 = arith.constant 0 : index
    %c0_38 = arith.constant 0 : index
    %c0_39 = arith.constant 0 : index
    %33 = vector.load %arg4[%c0_37, %c0_38, %c0_39] : memref<1x64x32xf32, #tpu.memory_space<vmem>>, vector<1x64x32xf32>
    %34 = vector.shape_cast %33 : vector<1x64x32xf32> to vector<64x32xf32>
    %35 = vector.shape_cast %32 : vector<64x32xf32> to vector<1x64x32xf32>
    tpu.vector_store %arg4[%c0_37, %c0_38, %c0_39], %35 {strides = array<i32>} : memref<1x64x32xf32, #tpu.memory_space<vmem>>, vector<1x64x32xf32>,
    return
  }
  func.func @transform_0(%arg0: i32) -> (i32, i32, i32, i32) {
    %c0_i32 = arith.constant 0 : i32
    %c0_i32_0 = arith.constant 0 : i32
    %c0_i32_1 = arith.constant 0 : i32
    %c0_i32_2 = arith.constant 0 : i32
    return %arg0, %c0_i32, %c0_i32_0, %c0_i32_1 : i32, i32, i32, i32
  }
  func.func @transform_1(%arg0: i32) -> (i32, i32) {
    %c0_i32 = arith.constant 0 : i32
    %c0_i32_0 = arith.constant 0 : i32
    %c0_i32_1 = arith.constant 0 : i32
    return %c0_i32, %c0_i32_0 : i32, i32
  }
  func.func @transform_2(%arg0: i32) -> (i32, i32) {
    %c0_i32 = arith.constant 0 : i32
    %c0_i32_0 = arith.constant 0 : i32
    %c0_i32_1 = arith.constant 0 : i32
    return %c0_i32, %c0_i32_0 : i32, i32
  }
  func.func @transform_3(%arg0: i32) -> (i32, i32, i32) {
    %c0_i32 = arith.constant 0 : i32
    %c0_i32_0 = arith.constant 0 : i32
    %c0_i32_1 = arith.constant 0 : i32
    return %arg0, %c0_i32, %c0_i32_0 : i32, i32, i32
  }
}

module attributes {stable_mosaic.version = 11 : i64} {
  func.func @_layer_loss_kernel(%arg0: i32, %arg1: i32, %arg2: memref<1x64x32xf32, #tpu.memory_space<vmem>>, %arg3: memref<1x64x32xf32, #tpu.memory_space<vmem>>, %arg4: memref<1x1x1xf32, #tpu.memory_space<vmem>>, %arg5: memref<1x1x1xf32, #tpu.memory_space<vmem>>, %arg6: memref<32x32xf32, #tpu.memory_space<vmem>>, %arg7: memref<32x32xf32, #tpu.memory_space<vmem>>) attributes {dimension_semantics = [#tpu.dimension_semantics<parallel>, #tpu.dimension_semantics<arbitrary>], iteration_bounds = array<i64: 2, 1>, scalar_prefetch = 0 : i64, scratch_operands = 2 : i64, tpu.core_type = #tpu.core_type<tc>, window_params = [{transform_indices = @transform_0, window_bounds = array<i64: 1, 64, 32>}, {transform_indices = @transform_1, window_bounds = array<i64: 1, 64, 32>}, {transform_indices = @transform_2, window_bounds = array<i64: 1, 1, 1>}, {transform_indices = @transform_3, window_bounds = array<i64: 1, 1, 1>}]} {
    %c0_i32 = arith.constant 0 : i32
    %0 = arith.cmpi eq, %arg1, %c0_i32 : i32
    %1 = arith.extui %0 : i1 to i32
    %c0_i32_0 = arith.constant 0 : i32
    %2 = arith.cmpi ne, %1, %c0_i32_0 : i32
    scf.if %2 {
      %cst_24 = arith.constant 0.000000e+00 : f32
      %30 = vector.broadcast %cst_24 : f32 to vector<1x1x1xf32>
      %c0_25 = arith.constant 0 : index
      %c0_26 = arith.constant 0 : index
      %c0_27 = arith.constant 0 : index
      %31 = vector.load %arg4[%c0_25, %c0_26, %c0_27] : memref<1x1x1xf32, #tpu.memory_space<vmem>>, vector<1x1x1xf32>
      tpu.vector_store %arg4[%c0_25, %c0_26, %c0_27], %30 {strides = array<i32>} : memref<1x1x1xf32, #tpu.memory_space<vmem>>, vector<1x1x1xf32>,
      %cst_28 = arith.constant 0.000000e+00 : f32
      %32 = vector.broadcast %cst_28 : f32 to vector<1x1x1xf32>
      %c0_29 = arith.constant 0 : index
      %c0_30 = arith.constant 0 : index
      %c0_31 = arith.constant 0 : index
      %33 = vector.load %arg5[%c0_29, %c0_30, %c0_31] : memref<1x1x1xf32, #tpu.memory_space<vmem>>, vector<1x1x1xf32>
      tpu.vector_store %arg5[%c0_29, %c0_30, %c0_31], %32 {strides = array<i32>} : memref<1x1x1xf32, #tpu.memory_space<vmem>>, vector<1x1x1xf32>,
      %cst_32 = arith.constant 0.000000e+00 : f32
      %34 = vector.broadcast %cst_32 : f32 to vector<32x32xf32>
      %c0_33 = arith.constant 0 : index
      %c0_34 = arith.constant 0 : index
      %35 = vector.load %arg6[%c0_33, %c0_34] : memref<32x32xf32, #tpu.memory_space<vmem>>, vector<32x32xf32>
      tpu.vector_store %arg6[%c0_33, %c0_34], %34 {strides = array<i32>} : memref<32x32xf32, #tpu.memory_space<vmem>>, vector<32x32xf32>,
      %cst_35 = arith.constant 0.000000e+00 : f32
      %36 = vector.broadcast %cst_35 : f32 to vector<32x32xf32>
      %c0_36 = arith.constant 0 : index
      %c0_37 = arith.constant 0 : index
      %37 = vector.load %arg7[%c0_36, %c0_37] : memref<32x32xf32, #tpu.memory_space<vmem>>, vector<32x32xf32>
      tpu.vector_store %arg7[%c0_36, %c0_37], %36 {strides = array<i32>} : memref<32x32xf32, #tpu.memory_space<vmem>>, vector<32x32xf32>,
    } else {
    }
    %c0 = arith.constant 0 : index
    %c0_1 = arith.constant 0 : index
    %c0_2 = arith.constant 0 : index
    %3 = vector.load %arg2[%c0, %c0_1, %c0_2] : memref<1x64x32xf32, #tpu.memory_space<vmem>>, vector<1x64x32xf32>
    %4 = vector.shape_cast %3 : vector<1x64x32xf32> to vector<64x32xf32>
    %c0_3 = arith.constant 0 : index
    %c0_4 = arith.constant 0 : index
    %c0_5 = arith.constant 0 : index
    %5 = vector.load %arg3[%c0_3, %c0_4, %c0_5] : memref<1x64x32xf32, #tpu.memory_space<vmem>>, vector<1x64x32xf32>
    %6 = vector.shape_cast %5 : vector<1x64x32xf32> to vector<64x32xf32>
    %c0_6 = arith.constant 0 : index
    %c0_7 = arith.constant 0 : index
    %c0_8 = arith.constant 0 : index
    %7 = vector.load %arg4[%c0_6, %c0_7, %c0_8] : memref<1x1x1xf32, #tpu.memory_space<vmem>>, vector<1x1x1xf32>
    %8 = arith.subf %4, %6 : vector<64x32xf32>
    %9 = math.absf %8 : vector<64x32xf32>
    %10 = vector.shape_cast %9 : vector<64x32xf32> to vector<1x64x32xf32>
    %cst = arith.constant dense<0.000000e+00> : vector<1xf32>
    %11 = vector.multi_reduction <add>, %10, %cst [1, 2] : vector<1x64x32xf32> to vector<1xf32>
    %12 = vector.shape_cast %11 : vector<1xf32> to vector<1x1x1xf32>
    %13 = vector.extract %12[0, 0, 0] : f32 from vector<1x1x1xf32>
    %14 = vector.broadcast %13 : f32 to vector<1x1x1xf32>
    %15 = arith.addf %7, %14 : vector<1x1x1xf32>
    %c0_9 = arith.constant 0 : index
    %c0_10 = arith.constant 0 : index
    %c0_11 = arith.constant 0 : index
    %16 = vector.load %arg4[%c0_9, %c0_10, %c0_11] : memref<1x1x1xf32, #tpu.memory_space<vmem>>, vector<1x1x1xf32>
    tpu.vector_store %arg4[%c0_9, %c0_10, %c0_11], %15 {strides = array<i32>} : memref<1x1x1xf32, #tpu.memory_space<vmem>>, vector<1x1x1xf32>,
    %17 = arith.truncf %4 : vector<64x32xf32> to vector<64x32xbf16>
    %18 = arith.truncf %6 : vector<64x32xf32> to vector<64x32xbf16>
    %c0_12 = arith.constant 0 : index
    %c0_13 = arith.constant 0 : index
    %19 = vector.load %arg6[%c0_12, %c0_13] : memref<32x32xf32, #tpu.memory_space<vmem>>, vector<32x32xf32>
    %cst_14 = arith.constant dense<0.000000e+00> : vector<32x32xf32>
    %20 = tpu.matmul %17, %17, %cst_14 {dimension_numbers = #tpu.dot_dimension_numbers<[0], [0], [1], [1], [0, 1, 1, 1], [], []>} : vector<64x32xbf16>, vector<64x32xbf16>, vector<32x32xf32> -> vector<32x32xf32>
    %21 = arith.addf %19, %20 : vector<32x32xf32>
    %c0_15 = arith.constant 0 : index
    %c0_16 = arith.constant 0 : index
    %22 = vector.load %arg6[%c0_15, %c0_16] : memref<32x32xf32, #tpu.memory_space<vmem>>, vector<32x32xf32>
    tpu.vector_store %arg6[%c0_15, %c0_16], %21 {strides = array<i32>} : memref<32x32xf32, #tpu.memory_space<vmem>>, vector<32x32xf32>,
    %c0_17 = arith.constant 0 : index
    %c0_18 = arith.constant 0 : index
    %23 = vector.load %arg7[%c0_17, %c0_18] : memref<32x32xf32, #tpu.memory_space<vmem>>, vector<32x32xf32>
    %cst_19 = arith.constant dense<0.000000e+00> : vector<32x32xf32>
    %24 = tpu.matmul %18, %18, %cst_19 {dimension_numbers = #tpu.dot_dimension_numbers<[0], [0], [1], [1], [0, 1, 1, 1], [], []>} : vector<64x32xbf16>, vector<64x32xbf16>, vector<32x32xf32> -> vector<32x32xf32>
    %25 = arith.addf %23, %24 : vector<32x32xf32>
    %c0_20 = arith.constant 0 : index
    %c0_21 = arith.constant 0 : index
    %26 = vector.load %arg7[%c0_20, %c0_21] : memref<32x32xf32, #tpu.memory_space<vmem>>, vector<32x32xf32>
    tpu.vector_store %arg7[%c0_20, %c0_21], %25 {strides = array<i32>} : memref<32x32xf32, #tpu.memory_space<vmem>>, vector<32x32xf32>,
    %c0_i32_22 = arith.constant 0 : i32
    %27 = arith.cmpi eq, %arg1, %c0_i32_22 : i32
    %28 = arith.extui %27 : i1 to i32
    %c0_i32_23 = arith.constant 0 : i32
    %29 = arith.cmpi ne, %28, %c0_i32_23 : i32
    scf.if %29 {
      %c0_24 = arith.constant 0 : index
      %c0_25 = arith.constant 0 : index
      %c0_26 = arith.constant 0 : index
      %30 = vector.load %arg5[%c0_24, %c0_25, %c0_26] : memref<1x1x1xf32, #tpu.memory_space<vmem>>, vector<1x1x1xf32>
      %c0_27 = arith.constant 0 : index
      %c0_28 = arith.constant 0 : index
      %31 = vector.load %arg6[%c0_27, %c0_28] : memref<32x32xf32, #tpu.memory_space<vmem>>, vector<32x32xf32>
      %c0_29 = arith.constant 0 : index
      %c0_30 = arith.constant 0 : index
      %32 = vector.load %arg7[%c0_29, %c0_30] : memref<32x32xf32, #tpu.memory_space<vmem>>, vector<32x32xf32>
      %33 = arith.subf %31, %32 : vector<32x32xf32>
      %34 = math.absf %33 : vector<32x32xf32>
      %35 = vector.shape_cast %34 : vector<32x32xf32> to vector<1x32x32xf32>
      %cst_31 = arith.constant dense<0.000000e+00> : vector<1xf32>
      %36 = vector.multi_reduction <add>, %35, %cst_31 [1, 2] : vector<1x32x32xf32> to vector<1xf32>
      %37 = vector.shape_cast %36 : vector<1xf32> to vector<1x1x1xf32>
      %38 = vector.extract %37[0, 0, 0] : f32 from vector<1x1x1xf32>
      %39 = vector.broadcast %38 : f32 to vector<1x1x1xf32>
      %40 = arith.addf %30, %39 : vector<1x1x1xf32>
      %c0_32 = arith.constant 0 : index
      %c0_33 = arith.constant 0 : index
      %c0_34 = arith.constant 0 : index
      %41 = vector.load %arg5[%c0_32, %c0_33, %c0_34] : memref<1x1x1xf32, #tpu.memory_space<vmem>>, vector<1x1x1xf32>
      tpu.vector_store %arg5[%c0_32, %c0_33, %c0_34], %40 {strides = array<i32>} : memref<1x1x1xf32, #tpu.memory_space<vmem>>, vector<1x1x1xf32>,
    } else {
    }
    return
  }
  func.func @transform_0(%arg0: i32, %arg1: i32) -> (i32, i32, i32) {
    %c0_i32 = arith.constant 0 : i32
    %c0_i32_0 = arith.constant 0 : i32
    return %arg0, %arg1, %c0_i32 : i32, i32, i32
  }
  func.func @transform_1(%arg0: i32, %arg1: i32) -> (i32, i32, i32) {
    %c0_i32 = arith.constant 0 : i32
    %c0_i32_0 = arith.constant 0 : i32
    return %arg0, %arg1, %c0_i32 : i32, i32, i32
  }
  func.func @transform_2(%arg0: i32, %arg1: i32) -> (i32, i32, i32) {
    %c0_i32 = arith.constant 0 : i32
    %c0_i32_0 = arith.constant 0 : i32
    %c0_i32_1 = arith.constant 0 : i32
    return %arg0, %c0_i32, %c0_i32_0 : i32, i32, i32
  }
  func.func @transform_3(%arg0: i32, %arg1: i32) -> (i32, i32, i32) {
    %c0_i32 = arith.constant 0 : i32
    %c0_i32_0 = arith.constant 0 : i32
    %c0_i32_1 = arith.constant 0 : i32
    return %arg0, %c0_i32, %c0_i32_0 : i32, i32, i32
  }
}

module attributes {stable_mosaic.version = 11 : i64} {
  func.func @_layer_loss_kernel(%arg0: i32, %arg1: i32, %arg2: memref<1x256x16xf32, #tpu.memory_space<vmem>>, %arg3: memref<1x256x16xf32, #tpu.memory_space<vmem>>, %arg4: memref<1x1x1xf32, #tpu.memory_space<vmem>>, %arg5: memref<1x1x1xf32, #tpu.memory_space<vmem>>, %arg6: memref<16x16xf32, #tpu.memory_space<vmem>>, %arg7: memref<16x16xf32, #tpu.memory_space<vmem>>) attributes {dimension_semantics = [#tpu.dimension_semantics<parallel>, #tpu.dimension_semantics<arbitrary>], iteration_bounds = array<i64: 2, 1>, scalar_prefetch = 0 : i64, scratch_operands = 2 : i64, tpu.core_type = #tpu.core_type<tc>, window_params = [{transform_indices = @transform_0, window_bounds = array<i64: 1, 256, 16>}, {transform_indices = @transform_1, window_bounds = array<i64: 1, 256, 16>}, {transform_indices = @transform_2, window_bounds = array<i64: 1, 1, 1>}, {transform_indices = @transform_3, window_bounds = array<i64: 1, 1, 1>}]} {
    %c0_i32 = arith.constant 0 : i32
    %0 = arith.cmpi eq, %arg1, %c0_i32 : i32
    %1 = arith.extui %0 : i1 to i32
    %c0_i32_0 = arith.constant 0 : i32
    %2 = arith.cmpi ne, %1, %c0_i32_0 : i32
    scf.if %2 {
      %cst_24 = arith.constant 0.000000e+00 : f32
      %30 = vector.broadcast %cst_24 : f32 to vector<1x1x1xf32>
      %c0_25 = arith.constant 0 : index
      %c0_26 = arith.constant 0 : index
      %c0_27 = arith.constant 0 : index
      %31 = vector.load %arg4[%c0_25, %c0_26, %c0_27] : memref<1x1x1xf32, #tpu.memory_space<vmem>>, vector<1x1x1xf32>
      tpu.vector_store %arg4[%c0_25, %c0_26, %c0_27], %30 {strides = array<i32>} : memref<1x1x1xf32, #tpu.memory_space<vmem>>, vector<1x1x1xf32>,
      %cst_28 = arith.constant 0.000000e+00 : f32
      %32 = vector.broadcast %cst_28 : f32 to vector<1x1x1xf32>
      %c0_29 = arith.constant 0 : index
      %c0_30 = arith.constant 0 : index
      %c0_31 = arith.constant 0 : index
      %33 = vector.load %arg5[%c0_29, %c0_30, %c0_31] : memref<1x1x1xf32, #tpu.memory_space<vmem>>, vector<1x1x1xf32>
      tpu.vector_store %arg5[%c0_29, %c0_30, %c0_31], %32 {strides = array<i32>} : memref<1x1x1xf32, #tpu.memory_space<vmem>>, vector<1x1x1xf32>,
      %cst_32 = arith.constant 0.000000e+00 : f32
      %34 = vector.broadcast %cst_32 : f32 to vector<16x16xf32>
      %c0_33 = arith.constant 0 : index
      %c0_34 = arith.constant 0 : index
      %35 = vector.load %arg6[%c0_33, %c0_34] : memref<16x16xf32, #tpu.memory_space<vmem>>, vector<16x16xf32>
      tpu.vector_store %arg6[%c0_33, %c0_34], %34 {strides = array<i32>} : memref<16x16xf32, #tpu.memory_space<vmem>>, vector<16x16xf32>,
      %cst_35 = arith.constant 0.000000e+00 : f32
      %36 = vector.broadcast %cst_35 : f32 to vector<16x16xf32>
      %c0_36 = arith.constant 0 : index
      %c0_37 = arith.constant 0 : index
      %37 = vector.load %arg7[%c0_36, %c0_37] : memref<16x16xf32, #tpu.memory_space<vmem>>, vector<16x16xf32>
      tpu.vector_store %arg7[%c0_36, %c0_37], %36 {strides = array<i32>} : memref<16x16xf32, #tpu.memory_space<vmem>>, vector<16x16xf32>,
    } else {
    }
    %c0 = arith.constant 0 : index
    %c0_1 = arith.constant 0 : index
    %c0_2 = arith.constant 0 : index
    %3 = vector.load %arg2[%c0, %c0_1, %c0_2] : memref<1x256x16xf32, #tpu.memory_space<vmem>>, vector<1x256x16xf32>
    %4 = vector.shape_cast %3 : vector<1x256x16xf32> to vector<256x16xf32>
    %c0_3 = arith.constant 0 : index
    %c0_4 = arith.constant 0 : index
    %c0_5 = arith.constant 0 : index
    %5 = vector.load %arg3[%c0_3, %c0_4, %c0_5] : memref<1x256x16xf32, #tpu.memory_space<vmem>>, vector<1x256x16xf32>
    %6 = vector.shape_cast %5 : vector<1x256x16xf32> to vector<256x16xf32>
    %c0_6 = arith.constant 0 : index
    %c0_7 = arith.constant 0 : index
    %c0_8 = arith.constant 0 : index
    %7 = vector.load %arg4[%c0_6, %c0_7, %c0_8] : memref<1x1x1xf32, #tpu.memory_space<vmem>>, vector<1x1x1xf32>
    %8 = arith.subf %4, %6 : vector<256x16xf32>
    %9 = math.absf %8 : vector<256x16xf32>
    %10 = vector.shape_cast %9 : vector<256x16xf32> to vector<1x256x16xf32>
    %cst = arith.constant dense<0.000000e+00> : vector<1xf32>
    %11 = vector.multi_reduction <add>, %10, %cst [1, 2] : vector<1x256x16xf32> to vector<1xf32>
    %12 = vector.shape_cast %11 : vector<1xf32> to vector<1x1x1xf32>
    %13 = vector.extract %12[0, 0, 0] : f32 from vector<1x1x1xf32>
    %14 = vector.broadcast %13 : f32 to vector<1x1x1xf32>
    %15 = arith.addf %7, %14 : vector<1x1x1xf32>
    %c0_9 = arith.constant 0 : index
    %c0_10 = arith.constant 0 : index
    %c0_11 = arith.constant 0 : index
    %16 = vector.load %arg4[%c0_9, %c0_10, %c0_11] : memref<1x1x1xf32, #tpu.memory_space<vmem>>, vector<1x1x1xf32>
    tpu.vector_store %arg4[%c0_9, %c0_10, %c0_11], %15 {strides = array<i32>} : memref<1x1x1xf32, #tpu.memory_space<vmem>>, vector<1x1x1xf32>,
    %17 = arith.truncf %4 : vector<256x16xf32> to vector<256x16xbf16>
    %18 = arith.truncf %6 : vector<256x16xf32> to vector<256x16xbf16>
    %c0_12 = arith.constant 0 : index
    %c0_13 = arith.constant 0 : index
    %19 = vector.load %arg6[%c0_12, %c0_13] : memref<16x16xf32, #tpu.memory_space<vmem>>, vector<16x16xf32>
    %cst_14 = arith.constant dense<0.000000e+00> : vector<16x16xf32>
    %20 = tpu.matmul %17, %17, %cst_14 {dimension_numbers = #tpu.dot_dimension_numbers<[0], [0], [1], [1], [0, 1, 1, 1], [], []>} : vector<256x16xbf16>, vector<256x16xbf16>, vector<16x16xf32> -> vector<16x16xf32>
    %21 = arith.addf %19, %20 : vector<16x16xf32>
    %c0_15 = arith.constant 0 : index
    %c0_16 = arith.constant 0 : index
    %22 = vector.load %arg6[%c0_15, %c0_16] : memref<16x16xf32, #tpu.memory_space<vmem>>, vector<16x16xf32>
    tpu.vector_store %arg6[%c0_15, %c0_16], %21 {strides = array<i32>} : memref<16x16xf32, #tpu.memory_space<vmem>>, vector<16x16xf32>,
    %c0_17 = arith.constant 0 : index
    %c0_18 = arith.constant 0 : index
    %23 = vector.load %arg7[%c0_17, %c0_18] : memref<16x16xf32, #tpu.memory_space<vmem>>, vector<16x16xf32>
    %cst_19 = arith.constant dense<0.000000e+00> : vector<16x16xf32>
    %24 = tpu.matmul %18, %18, %cst_19 {dimension_numbers = #tpu.dot_dimension_numbers<[0], [0], [1], [1], [0, 1, 1, 1], [], []>} : vector<256x16xbf16>, vector<256x16xbf16>, vector<16x16xf32> -> vector<16x16xf32>
    %25 = arith.addf %23, %24 : vector<16x16xf32>
    %c0_20 = arith.constant 0 : index
    %c0_21 = arith.constant 0 : index
    %26 = vector.load %arg7[%c0_20, %c0_21] : memref<16x16xf32, #tpu.memory_space<vmem>>, vector<16x16xf32>
    tpu.vector_store %arg7[%c0_20, %c0_21], %25 {strides = array<i32>} : memref<16x16xf32, #tpu.memory_space<vmem>>, vector<16x16xf32>,
    %c0_i32_22 = arith.constant 0 : i32
    %27 = arith.cmpi eq, %arg1, %c0_i32_22 : i32
    %28 = arith.extui %27 : i1 to i32
    %c0_i32_23 = arith.constant 0 : i32
    %29 = arith.cmpi ne, %28, %c0_i32_23 : i32
    scf.if %29 {
      %c0_24 = arith.constant 0 : index
      %c0_25 = arith.constant 0 : index
      %c0_26 = arith.constant 0 : index
      %30 = vector.load %arg5[%c0_24, %c0_25, %c0_26] : memref<1x1x1xf32, #tpu.memory_space<vmem>>, vector<1x1x1xf32>
      %c0_27 = arith.constant 0 : index
      %c0_28 = arith.constant 0 : index
      %31 = vector.load %arg6[%c0_27, %c0_28] : memref<16x16xf32, #tpu.memory_space<vmem>>, vector<16x16xf32>
      %c0_29 = arith.constant 0 : index
      %c0_30 = arith.constant 0 : index
      %32 = vector.load %arg7[%c0_29, %c0_30] : memref<16x16xf32, #tpu.memory_space<vmem>>, vector<16x16xf32>
      %33 = arith.subf %31, %32 : vector<16x16xf32>
      %34 = math.absf %33 : vector<16x16xf32>
      %35 = vector.shape_cast %34 : vector<16x16xf32> to vector<1x16x16xf32>
      %cst_31 = arith.constant dense<0.000000e+00> : vector<1xf32>
      %36 = vector.multi_reduction <add>, %35, %cst_31 [1, 2] : vector<1x16x16xf32> to vector<1xf32>
      %37 = vector.shape_cast %36 : vector<1xf32> to vector<1x1x1xf32>
      %38 = vector.extract %37[0, 0, 0] : f32 from vector<1x1x1xf32>
      %39 = vector.broadcast %38 : f32 to vector<1x1x1xf32>
      %40 = arith.addf %30, %39 : vector<1x1x1xf32>
      %c0_32 = arith.constant 0 : index
      %c0_33 = arith.constant 0 : index
      %c0_34 = arith.constant 0 : index
      %41 = vector.load %arg5[%c0_32, %c0_33, %c0_34] : memref<1x1x1xf32, #tpu.memory_space<vmem>>, vector<1x1x1xf32>
      tpu.vector_store %arg5[%c0_32, %c0_33, %c0_34], %40 {strides = array<i32>} : memref<1x1x1xf32, #tpu.memory_space<vmem>>, vector<1x1x1xf32>,
    } else {
    }
    return
  }
  func.func @transform_0(%arg0: i32, %arg1: i32) -> (i32, i32, i32) {
    %c0_i32 = arith.constant 0 : i32
    %c0_i32_0 = arith.constant 0 : i32
    return %arg0, %arg1, %c0_i32 : i32, i32, i32
  }
  func.func @transform_1(%arg0: i32, %arg1: i32) -> (i32, i32, i32) {
    %c0_i32 = arith.constant 0 : i32
    %c0_i32_0 = arith.constant 0 : i32
    return %arg0, %arg1, %c0_i32 : i32, i32, i32
  }
  func.func @transform_2(%arg0: i32, %arg1: i32) -> (i32, i32, i32) {
    %c0_i32 = arith.constant 0 : i32
    %c0_i32_0 = arith.constant 0 : i32
    %c0_i32_1 = arith.constant 0 : i32
    return %arg0, %c0_i32, %c0_i32_0 : i32, i32, i32
  }
  func.func @transform_3(%arg0: i32, %arg1: i32) -> (i32, i32, i32) {
    %c0_i32 = arith.constant 0 : i32
    %c0_i32_0 = arith.constant 0 : i32
    %c0_i32_1 = arith.constant 0 : i32
    return %arg0, %c0_i32, %c0_i32_0 : i32, i32, i32
  }
}

</mosaic_0001>

<llo_original>
// kernel: perceptual_loss.9
$region0: #{perceptual_loss.9}
  #allocation0 [shape = 'u32[]', space=smem, size = 0x4, offset = 0x4, fixed_abs, tag = 'smem constant byte address 0x4 - core index']
  #allocation1 [shape = 'u32[144,128]{1,0:T(1,128)}', space=vmem, size = 0x12000, scoped, tag = 'internal scratch']
  %s0 = inlined_call_operand.vmem [shape: f32[4,16,8,32], index: 0, kind: input, shape index: {}]
  %s1 = inlined_call_operand.vmem [shape: f32[4,8,8,16], index: 1, kind: output, shape index: {}]
  %s2 = sld [smem:[#allocation0]]
  $region37: #{perceptual_loss.9} parent=0
    _
  %s4 = ssub.s32 1, %s2
  %s5 = scalar_select 0, %s4, %s2
  loop: start=0, step=1, limit=6
  $region2: #{perceptual_loss.9} parent=0 // loop_pre_header
    _
  $region3: #{perceptual_loss.9} parent=0 // loop_header
    %s7 = sphi 0, %s11
    %p8 = scmp.ge.s32.totalorder %s7, 6
    %s17 = sphi 0, %s19
    %s20 = sphi 0, %s17
    %s21 = sphi 0, %s20
    %s37 = sphi 0, %s21
    %s43 = sphi 0, %s45
    %s46 = sphi 0, %s43
    %s47 = sphi 0, %s46
    %s63 = sphi 0, %s47
  $region4: #{perceptual_loss.9} parent=0 // loop_header_branch
    %10 = sbr.rel (%p8) target = $region8
  $region5: #{perceptual_loss.9} parent=0 // loop_body
    %s12 = ssub.s32 %s7, 1
    %s13 = ssub.s32 %s7, 2
    %s14 = sadd.s32 %s7, 1
    %s15 = ssub.s32 %s7, %s14
    %p16 = scmp.eq.s32.totalorder %s15, 0
    %s18 = sadd.s32 %s17, 1
    %s19 = scalar_select %p16, %s17, %s18
    %p22 = pneg %p16
    %p23 = scmp.eq.s32.totalorder %s7, 3
    %p24 = por %p22, %p23
    %p25 = scmp.ne.s32.totalorder %s17, %s20
    %p26 = scmp.eq.s32.totalorder %s7, 0
    %p27 = por %p25, %p26
    %p28 = scmp.ne.s32.totalorder %s17, %s20
    %p29 = scmp.eq.s32.totalorder %s12, 3
    %p30 = por %p28, %p29
    %p31 = scmp.ne.s32.totalorder %s20, %s21
    %p32 = scmp.eq.s32.totalorder %s12, 0
    %p33 = por %p31, %p32
    %p34 = scmp.ne.s32.totalorder %s20, %s21
    %p35 = scmp.eq.s32.totalorder %s13, 3
    %p36 = por %p34, %p35
    %p38 = scmp.ne.s32.totalorder %s21, %s37
    %p39 = scmp.eq.s32.totalorder %s13, 0
    %p40 = por %p38, %p39
    %s41 = ssub.s32 %s7, %s14
    %p42 = scmp.eq.s32.totalorder %s41, 0
    %s44 = sadd.s32 %s43, 1
    %s45 = scalar_select %p42, %s43, %s44
    %p48 = pneg %p42
    %p49 = scmp.eq.s32.totalorder %s7, 3
    %p50 = por %p48, %p49
    %p51 = scmp.ne.s32.totalorder %s43, %s46
    %p52 = scmp.eq.s32.totalorder %s7, 0
    %p53 = por %p51, %p52
    %p54 = scmp.ne.s32.totalorder %s43, %s46
    %p55 = scmp.eq.s32.totalorder %s12, 3
    %p56 = por %p54, %p55
    %p57 = scmp.ne.s32.totalorder %s46, %s47
    %p58 = scmp.eq.s32.totalorder %s12, 0
    %p59 = por %p57, %p58
    %p60 = scmp.ne.s32.totalorder %s46, %s47
    %p61 = scmp.eq.s32.totalorder %s13, 3
    %p62 = por %p60, %p61
    %p64 = scmp.ne.s32.totalorder %s47, %s63
    %p65 = scmp.eq.s32.totalorder %s13, 0
    %p66 = por %p64, %p65
    %p67 = scmp.le.s32.totalorder 1, %s7
    %p68 = scmp.lt.s32.totalorder %s7, 5
    %p69 = pnand %p67, %p68
    %p70 = pneg %p69
    // Predicated region
    $region9: #{perceptual_loss.9} parent=5 // pred_check
      _
    $region10: #{perceptual_loss.9} parent=5 // pred_check_branch
      %72 = sbr.rel (%p69) target = $region12
    $region11: #{perceptual_loss.9} parent=5 // pred_region
      %s73 = ssub.s32 %s7, 1
    $region12: #{perceptual_loss.9} parent=5 // pred_fallthru
      _
    %p74 = scmp.lt.s32.totalorder %s7, 4
    // Predicated region
    $region13: #{perceptual_loss.9} parent=5 // pred_check
      %p75 = pneg %p74
    $region14: #{perceptual_loss.9} parent=5 // pred_check_branch
      %77 = sbr.rel (%p75) target = $region16
    $region15: #{perceptual_loss.9} parent=5 // pred_region
      // Predicated region
      $region17: #{perceptual_loss.9} parent=15 // pred_check
        %p78 = pneg %p27
      $region18: #{perceptual_loss.9} parent=15 // pred_check_branch
        %80 = sbr.rel (%p78) target = $region20
      $region19: #{perceptual_loss.9} parent=15 // pred_region
        %p81 = scmp.lt.s32.totalorder %s7, 3
        %s82 = scalar_select %p81, %s7, 3
        %s83 = smul.addr %s82, 16
        %s84 = smul.addr %s83, 8
        %s85 = scalar_lea.vmem %s0, %s84
      $region20: #{perceptual_loss.9} parent=15 // pred_fallthru
        _
    $region16: #{perceptual_loss.9} parent=5 // pred_fallthru
      _
    %p86 = scmp.le.s32.totalorder 1, %s7
    %p87 = scmp.lt.s32.totalorder %s7, 5
    %p88 = pnand %p86, %p87
    %p89 = pneg %p88
    // Predicated region
    $region21: #{perceptual_loss.9} parent=5 // pred_check
      _
    $region22: #{perceptual_loss.9} parent=5 // pred_check_branch
      %91 = sbr.rel (%p88) target = $region24
    $region23: #{perceptual_loss.9} parent=5 // pred_region
      %s92 = ssub.s32 %s7, 1
      %p93 = scmp.lt.s32.totalorder %s12, 3
      %s94 = scalar_select %p93, %s12, 3
      %s95 = smul.addr %s94, 16
      %s96 = smul.addr %s95, 8
      %s97 = scalar_lea.vmem %s0, %s96
      %p98 = pneg %p33
      %p99 = pneg %p30
      %p100 = pneg %p59
      %p101 = pneg %p56
      %p102 = scmp.lt.s32.totalorder %s12, 3
      %s103 = scalar_select %p102, %s12, 3
      %s104 = smul.addr %s103, 8
      %s105 = smul.addr %s104, 8
      %s106 = scalar_lea.vmem %s1, %s105
      %p107 = scmp.lt.s32.totalorder %s12, 3
      %s108 = scalar_select %p107, %s12, 3
      %s109 = smul.addr %s108, 16
      %s110 = smul.addr %s109, 8
      %s111 = scalar_lea.vmem %s0, %s110
      %p112 = scmp.lt.s32.totalorder %s12, 3
      %s113 = scalar_select %p112, %s12, 3
      %s114 = smul.addr %s113, 8
      %s115 = smul.addr %s114, 8
      %s116 = scalar_lea.vmem %s1, %s115
      %v117 = vld [vmem:[%s111] sm:$0xff]
      %v118 = vld [vmem:[%s111 + $0x8] sm:$0xff]
      %v119 = vld [vmem:[%s111 + $0x10] sm:$0xff]
      %v120 = vld [vmem:[%s111 + $0x18] sm:$0xff]
      %v121 = vld [vmem:[%s111 + $0x20] sm:$0xff]
      %v122 = vld [vmem:[%s111 + $0x28] sm:$0xff]
      %v123 = vld [vmem:[%s111 + $0x30] sm:$0xff]
      %v124 = vld [vmem:[%s111 + $0x38] sm:$0xff]
      %v125 = vld [vmem:[%s111 + $0x40] sm:$0xff]
      %v126 = vld [vmem:[%s111 + $0x48] sm:$0xff]
      %v127 = vld [vmem:[%s111 + $0x50] sm:$0xff]
      %v128 = vld [vmem:[%s111 + $0x58] sm:$0xff]
      %v129 = vld [vmem:[%s111 + $0x60] sm:$0xff]
      %v130 = vld [vmem:[%s111 + $0x68] sm:$0xff]
      %v131 = vld [vmem:[%s111 + $0x70] sm:$0xff]
      %v132 = vld [vmem:[%s111 + $0x78] sm:$0xff]
      %149 = vrot.lane.b32.xlu0 %v117, 112
      %v150 = vpop.permute.xlu0 %149
      %151 = vrot.lane.b32.xlu0 %v118, 112
      %v152 = vpop.permute.xlu0 %151
      %153 = vrot.lane.b32.xlu0 %v119, 112
      %v154 = vpop.permute.xlu0 %153
      %155 = vrot.lane.b32.xlu0 %v120, 112
      %v156 = vpop.permute.xlu0 %155
      %157 = vrot.lane.b32.xlu0 %v121, 112
      %v158 = vpop.permute.xlu0 %157
      %159 = vrot.lane.b32.xlu0 %v122, 112
      %v160 = vpop.permute.xlu0 %159
      %161 = vrot.lane.b32.xlu0 %v123, 112
      %v162 = vpop.permute.xlu0 %161
      %163 = vrot.lane.b32.xlu0 %v124, 112
      %v164 = vpop.permute.xlu0 %163
      %165 = vrot.lane.b32.xlu0 %v125, 112
      %v166 = vpop.permute.xlu0 %165
      %167 = vrot.lane.b32.xlu0 %v126, 112
      %v168 = vpop.permute.xlu0 %167
      %169 = vrot.lane.b32.xlu0 %v127, 112
      %v170 = vpop.permute.xlu0 %169
      %171 = vrot.lane.b32.xlu0 %v128, 112
      %v172 = vpop.permute.xlu0 %171
      %173 = vrot.lane.b32.xlu0 %v129, 112
      %v174 = vpop.permute.xlu0 %173
      %175 = vrot.lane.b32.xlu0 %v130, 112
      %v176 = vpop.permute.xlu0 %175
      %177 = vrot.lane.b32.xlu0 %v131, 112
      %v178 = vpop.permute.xlu0 %177
      %179 = vrot.lane.b32.xlu0 %v132, 112
      %v180 = vpop.permute.xlu0 %179
      %v197 = vmax.f32 %v117, %v150
      %v198 = vmax.f32 %v118, %v152
      %v199 = vmax.f32 %v119, %v154
      %v200 = vmax.f32 %v120, %v156
      %v201 = vmax.f32 %v121, %v158
      %v202 = vmax.f32 %v122, %v160
      %v203 = vmax.f32 %v123, %v162
      %v204 = vmax.f32 %v124, %v164
      %v205 = vmax.f32 %v125, %v166
      %v206 = vmax.f32 %v126, %v168
      %v207 = vmax.f32 %v127, %v170
      %v208 = vmax.f32 %v128, %v172
      %v209 = vmax.f32 %v129, %v174
      %v210 = vmax.f32 %v130, %v176
      %v211 = vmax.f32 %v131, %v178
      %v212 = vmax.f32 %v132, %v180
      %v213 = vmax.f32 %v197, 0.0
      %v214 = vmax.f32 %v198, 0.0
      %v215 = vmax.f32 %v199, 0.0
      %v216 = vmax.f32 %v200, 0.0
      %v217 = vmax.f32 %v201, 0.0
      %v218 = vmax.f32 %v202, 0.0
      %v219 = vmax.f32 %v203, 0.0
      %v220 = vmax.f32 %v204, 0.0
      %v221 = vmax.f32 %v205, 0.0
      %v222 = vmax.f32 %v206, 0.0
      %v223 = vmax.f32 %v207, 0.0
      %v224 = vmax.f32 %v208, 0.0
      %v225 = vmax.f32 %v209, 0.0
      %v226 = vmax.f32 %v210, 0.0
      %v227 = vmax.f32 %v211, 0.0
      %v228 = vmax.f32 %v212, 0.0
      %v229 = vmax.f32 %v213, %v214
      %v230 = vmax.f32 %v215, %v216
      %v231 = vmax.f32 %v217, %v218
      %v232 = vmax.f32 %v219, %v220
      %v233 = vmax.f32 %v221, %v222
      %v234 = vmax.f32 %v223, %v224
      %v235 = vmax.f32 %v225, %v226
      %v236 = vmax.f32 %v227, %v228
      %vm237 = vcmask 130048
      %238 = vst.msk [vmem:[%s116] sm:$0xff] %vm237, %v229
      %239 = vst.msk [vmem:[%s116 + $0x8] sm:$0xff] %vm237, %v230
      %240 = vst.msk [vmem:[%s116 + $0x10] sm:$0xff] %vm237, %v231
      %241 = vst.msk [vmem:[%s116 + $0x18] sm:$0xff] %vm237, %v232
      %242 = vst.msk [vmem:[%s116 + $0x20] sm:$0xff] %vm237, %v233
      %243 = vst.msk [vmem:[%s116 + $0x28] sm:$0xff] %vm237, %v234
      %244 = vst.msk [vmem:[%s116 + $0x30] sm:$0xff] %vm237, %v235
      %245 = vst.msk [vmem:[%s116 + $0x38] sm:$0xff] %vm237, %v236
      %p246 = scmp.lt.s32.totalorder %s12, 3
      %s247 = scalar_select %p246, %s12, 3
      %s248 = smul.addr %s247, 8
      %s249 = smul.addr %s248, 8
      %s250 = scalar_lea.vmem %s1, %s249
      // Predicated region
      $region25: #{perceptual_loss.9} parent=23 // pred_check
        %p251 = pneg %p56
      $region26: #{perceptual_loss.9} parent=23 // pred_check_branch
        %253 = sbr.rel (%p251) target = $region28
      $region27: #{perceptual_loss.9} parent=23 // pred_region
        _
      $region28: #{perceptual_loss.9} parent=23 // pred_fallthru
        _
    $region24: #{perceptual_loss.9} parent=5 // pred_fallthru
      _
    %p254 = scmp.le.s32.totalorder 2, %s7
    // Predicated region
    $region29: #{perceptual_loss.9} parent=5 // pred_check
      %p255 = pneg %p254
    $region30: #{perceptual_loss.9} parent=5 // pred_check_branch
      %257 = sbr.rel (%p255) target = $region32
    $region31: #{perceptual_loss.9} parent=5 // pred_region
      %s258 = ssub.s32 %s7, 2
      // Predicated region
      $region33: #{perceptual_loss.9} parent=31 // pred_check
        %p259 = pneg %p62
      $region34: #{perceptual_loss.9} parent=31 // pred_check_branch
        %261 = sbr.rel (%p259) target = $region36
      $region35: #{perceptual_loss.9} parent=31 // pred_region
        %p262 = scmp.lt.s32.totalorder %s13, 3
        %s263 = scalar_select %p262, %s13, 3
        %s264 = smul.addr %s263, 8
        %s265 = smul.addr %s264, 8
        %s266 = scalar_lea.vmem %s1, %s265
      $region36: #{perceptual_loss.9} parent=31 // pred_fallthru
        _
    $region32: #{perceptual_loss.9} parent=5 // pred_fallthru
      _
  $region6: #{perceptual_loss.9} parent=0 // loop_footer
    %s11 = sadd.s32 1, %s7
  $region7: #{perceptual_loss.9} parent=0 // loop_footer_branch
    %6 = sbr.rel target = $region3
  $region8: #{perceptual_loss.9} parent=0 // loop_exit
    _

// kernel: perceptual_loss.10
$region0: #{perceptual_loss.10}
  #allocation0 [shape = 'u32[]', space=smem, size = 0x4, offset = 0x4, fixed_abs, tag = 'smem constant byte address 0x4 - core index']
  #allocation1 [shape = 'u32[144,128]{1,0:T(1,128)}', space=vmem, size = 0x12000, scoped, tag = 'internal scratch']
  %s0 = inlined_call_operand.vmem [shape: bf16[4,10,10,16], index: 0, kind: input, shape index: {}]
  %s1 = inlined_call_operand.vmem [shape: bf16[144,32], index: 1, kind: input, shape index: {}]
  %s2 = inlined_call_operand.vmem [shape: f32[1,32], index: 2, kind: input, shape index: {}]
  %s3 = inlined_call_operand.vmem [shape: f32[4,64,32], index: 3, kind: output, shape index: {}]
  %s4 = sld [smem:[#allocation0]]
  $region45: #{perceptual_loss.10} parent=0
    _
  %s6 = ssub.s32 1, %s4
  %s7 = scalar_select 0, %s6, %s4
  loop: start=0, step=1, limit=6
  $region2: #{perceptual_loss.10} parent=0 // loop_pre_header
    _
  $region3: #{perceptual_loss.10} parent=0 // loop_header
    %s9 = sphi 0, %s13
    %p10 = scmp.ge.s32.totalorder %s9, 6
    %s19 = sphi 0, %s21
    %s22 = sphi 0, %s19
    %s23 = sphi 0, %s22
    %s39 = sphi 0, %s23
    %s43 = sphi 0, %s43
    %s45 = sphi 0, %s43
    %s46 = sphi 0, %s45
    %s60 = sphi 0, %s46
    %s64 = sphi 0, %s64
    %s66 = sphi 0, %s64
    %s67 = sphi 0, %s66
    %s81 = sphi 0, %s67
    %s87 = sphi 0, %s89
    %s90 = sphi 0, %s87
    %s91 = sphi 0, %s90
    %s107 = sphi 0, %s91
  $region4: #{perceptual_loss.10} parent=0 // loop_header_branch
    %12 = sbr.rel (%p10) target = $region8
  $region5: #{perceptual_loss.10} parent=0 // loop_body
    %s14 = ssub.s32 %s9, 1
    %s15 = ssub.s32 %s9, 2
    %s16 = sadd.s32 %s9, 1
    %s17 = ssub.s32 %s9, %s16
    %p18 = scmp.eq.s32.totalorder %s17, 0
    %s20 = sadd.s32 %s19, 1
    %s21 = scalar_select %p18, %s19, %s20
    %p24 = pneg %p18
    %p25 = scmp.eq.s32.totalorder %s9, 3
    %p26 = por %p24, %p25
    %p27 = scmp.ne.s32.totalorder %s19, %s22
    %p28 = scmp.eq.s32.totalorder %s9, 0
    %p29 = por %p27, %p28
    %p30 = scmp.ne.s32.totalorder %s19, %s22
    %p31 = scmp.eq.s32.totalorder %s14, 3
    %p32 = por %p30, %p31
    %p33 = scmp.ne.s32.totalorder %s22, %s23
    %p34 = scmp.eq.s32.totalorder %s14, 0
    %p35 = por %p33, %p34
    %p36 = scmp.ne.s32.totalorder %s22, %s23
    %p37 = scmp.eq.s32.totalorder %s15, 3
    %p38 = por %p36, %p37
    %p40 = scmp.ne.s32.totalorder %s23, %s39
    %p41 = scmp.eq.s32.totalorder %s15, 0
    %p42 = por %p40, %p41
    %s44 = sadd.s32 %s43, 1
    %p47 = scmp.eq.s32.totalorder %s9, 3
    %p48 = scmp.ne.s32.totalorder %s43, %s45
    %p49 = scmp.eq.s32.totalorder %s9, 0
    %p50 = por %p48, %p49
    %p51 = scmp.ne.s32.totalorder %s43, %s45
    %p52 = scmp.eq.s32.totalorder %s14, 3
    %p53 = por %p51, %p52
    %p54 = scmp.ne.s32.totalorder %s45, %s46
    %p55 = scmp.eq.s32.totalorder %s14, 0
    %p56 = por %p54, %p55
    %p57 = scmp.ne.s32.totalorder %s45, %s46
    %p58 = scmp.eq.s32.totalorder %s15, 3
    %p59 = por %p57, %p58
    %p61 = scmp.ne.s32.totalorder %s46, %s60
    %p62 = scmp.eq.s32.totalorder %s15, 0
    %p63 = por %p61, %p62
    %s65 = sadd.s32 %s64, 1
    %p68 = scmp.eq.s32.totalorder %s9, 3
    %p69 = scmp.ne.s32.totalorder %s64, %s66
    %p70 = scmp.eq.s32.totalorder %s9, 0
    %p71 = por %p69, %p70
    %p72 = scmp.ne.s32.totalorder %s64, %s66
    %p73 = scmp.eq.s32.totalorder %s14, 3
    %p74 = por %p72, %p73
    %p75 = scmp.ne.s32.totalorder %s66, %s67
    %p76 = scmp.eq.s32.totalorder %s14, 0
    %p77 = por %p75, %p76
    %p78 = scmp.ne.s32.totalorder %s66, %s67
    %p79 = scmp.eq.s32.totalorder %s15, 3
    %p80 = por %p78, %p79
    %p82 = scmp.ne.s32.totalorder %s67, %s81
    %p83 = scmp.eq.s32.totalorder %s15, 0
    %p84 = por %p82, %p83
    %s85 = ssub.s32 %s9, %s16
    %p86 = scmp.eq.s32.totalorder %s85, 0
    %s88 = sadd.s32 %s87, 1
    %s89 = scalar_select %p86, %s87, %s88
    %p92 = pneg %p86
    %p93 = scmp.eq.s32.totalorder %s9, 3
    %p94 = por %p92, %p93
    %p95 = scmp.ne.s32.totalorder %s87, %s90
    %p96 = scmp.eq.s32.totalorder %s9, 0
    %p97 = por %p95, %p96
    %p98 = scmp.ne.s32.totalorder %s87, %s90
    %p99 = scmp.eq.s32.totalorder %s14, 3
    %p100 = por %p98, %p99
    %p101 = scmp.ne.s32.totalorder %s90, %s91
    %p102 = scmp.eq.s32.totalorder %s14, 0
    %p103 = por %p101, %p102
    %p104 = scmp.ne.s32.totalorder %s90, %s91
    %p105 = scmp.eq.s32.totalorder %s15, 3
    %p106 = por %p104, %p105
    %p108 = scmp.ne.s32.totalorder %s91, %s107
    %p109 = scmp.eq.s32.totalorder %s15, 0
    %p110 = por %p108, %p109
    %p111 = scmp.le.s32.totalorder 1, %s9
    %p112 = scmp.lt.s32.totalorder %s9, 5
    %p113 = pnand %p111, %p112
    %p114 = pneg %p113
    // Predicated region
    $region9: #{perceptual_loss.10} parent=5 // pred_check
      _
    $region10: #{perceptual_loss.10} parent=5 // pred_check_branch
      %116 = sbr.rel (%p113) target = $region12
    $region11: #{perceptual_loss.10} parent=5 // pred_region
      %s117 = ssub.s32 %s9, 1
      // Predicated region
      $region13: #{perceptual_loss.10} parent=11 // pred_check
        %p118 = pneg %p56
      $region14: #{perceptual_loss.10} parent=11 // pred_check_branch
        %120 = sbr.rel (%p118) target = $region16
      $region15: #{perceptual_loss.10} parent=11 // pred_region
        _
      $region16: #{perceptual_loss.10} parent=11 // pred_fallthru
        _
      // Predicated region
      $region17: #{perceptual_loss.10} parent=11 // pred_check
        %p121 = pneg %p77
      $region18: #{perceptual_loss.10} parent=11 // pred_check_branch
        %123 = sbr.rel (%p121) target = $region20
      $region19: #{perceptual_loss.10} parent=11 // pred_region
        _
      $region20: #{perceptual_loss.10} parent=11 // pred_fallthru
        _
    $region12: #{perceptual_loss.10} parent=5 // pred_fallthru
      _
    %p124 = scmp.lt.s32.totalorder %s9, 4
    // Predicated region
    $region21: #{perceptual_loss.10} parent=5 // pred_check
      %p125 = pneg %p124
    $region22: #{perceptual_loss.10} parent=5 // pred_check_branch
      %127 = sbr.rel (%p125) target = $region24
    $region23: #{perceptual_loss.10} parent=5 // pred_region
      // Predicated region
      $region25: #{perceptual_loss.10} parent=23 // pred_check
        %p128 = pneg %p29
      $region26: #{perceptual_loss.10} parent=23 // pred_check_branch
        %130 = sbr.rel (%p128) target = $region28
      $region27: #{perceptual_loss.10} parent=23 // pred_region
        %p131 = scmp.lt.s32.totalorder %s9, 3
        %s132 = scalar_select %p131, %s9, 3
        %s133 = smul.addr %s132, 20
        %s134 = smul.addr %s133, 4
        %s135 = scalar_lea.vmem %s0, %s134
      $region28: #{perceptual_loss.10} parent=23 // pred_fallthru
        _
    $region24: #{perceptual_loss.10} parent=5 // pred_fallthru
      _
    %p136 = scmp.le.s32.totalorder 1, %s9
    %p137 = scmp.lt.s32.totalorder %s9, 5
    %p138 = pnand %p136, %p137
    %p139 = pneg %p138
    // Predicated region
    $region29: #{perceptual_loss.10} parent=5 // pred_check
      _
    $region30: #{perceptual_loss.10} parent=5 // pred_check_branch
      %141 = sbr.rel (%p138) target = $region32
    $region31: #{perceptual_loss.10} parent=5 // pred_region
      %s142 = ssub.s32 %s9, 1
      %p143 = scmp.lt.s32.totalorder %s14, 3
      %s144 = scalar_select %p143, %s14, 3
      %s145 = smul.addr %s144, 20
      %s146 = smul.addr %s145, 4
      %s147 = scalar_lea.vmem %s0, %s146
      %p148 = pneg %p35
      %p149 = pneg %p32
      %p150 = pneg %p56
      %p151 = pneg %p53
      %p152 = pneg %p77
      %p153 = pneg %p74
      %p154 = pneg %p103
      %p155 = pneg %p100
      %p156 = scmp.lt.s32.totalorder %s14, 3
      %s157 = scalar_select %p156, %s14, 3
      %s158 = smul.addr %s157, 8
      %s159 = smul.addr %s158, 8
      %s160 = scalar_lea.vmem %s3, %s159
      %p161 = scmp.lt.s32.totalorder %s14, 3
      %s162 = scalar_select %p161, %s14, 3
      %s163 = smul.addr %s162, 20
      %s164 = smul.addr %s163, 4
      %s165 = scalar_lea.vmem %s0, %s164
      %p166 = scmp.lt.s32.totalorder %s14, 3
      %s167 = scalar_select %p166, %s14, 3
      %s168 = smul.addr %s167, 8
      %s169 = smul.addr %s168, 8
      %s170 = scalar_lea.vmem %s3, %s169
      %v172 = vld [vmem:[%s165] sm:$0xf]
      %v173 = vld [vmem:[%s165 + $0x8] sm:$0xf]
      %v174 = vld [vmem:[%s165 + $0x10] sm:$0xf]
      %v175 = vld [vmem:[%s165 + $0x18] sm:$0xf]
      %v176 = vld [vmem:[%s165 + $0x20] sm:$0xf]
      %v177 = vld [vmem:[%s165 + $0x28] sm:$0xf]
      %v178 = vld [vmem:[%s165 + $0x30] sm:$0xf]
      %v179 = vld [vmem:[%s165 + $0x38] sm:$0xf]
      %v180 = vld [vmem:[%s165 + $0x4] sm:$0x1]
      %v181 = vld [vmem:[%s165 + $0xc] sm:$0x1]
      %v182 = vld [vmem:[%s165 + $0x14] sm:$0x1]
      %v183 = vld [vmem:[%s165 + $0x1c] sm:$0x1]
      %v184 = vld [vmem:[%s165 + $0x24] sm:$0x1]
      %v185 = vld [vmem:[%s165 + $0x2c] sm:$0x1]
      %v186 = vld [vmem:[%s165 + $0x34] sm:$0x1]
      %v187 = vld [vmem:[%s165 + $0x3c] sm:$0x1]
      %vm188 = vsmask.f32 3328
      %vm189 = vsmask.f32 7440
      %vm190 = vmor %vm188, %vm189
      %v192 = vshrl.u32 %v172, 16
      %v194 = vrot.slane %v192, 4
      %v195 = vshll.u32 %v172, 16
      %v197 = vrot.slane %v195, 5
      %v198 = vor.u32 %v194, %v197
      %v199 = vrot.slane %v198, 4
      %v201 = vshll.u32 %v180, 16
      %v203 = vrot.slane %v201, 5
      %v204 = vsel %vm190, %v199, %v203
      %v206 = vshrl.u32 %v173, 16
      %v208 = vrot.slane %v206, 4
      %v209 = vshll.u32 %v173, 16
      %v211 = vrot.slane %v209, 5
      %v212 = vor.u32 %v208, %v211
      %v213 = vrot.slane %v212, 4
      %v215 = vshll.u32 %v181, 16
      %v217 = vrot.slane %v215, 5
      %v218 = vsel %vm190, %v213, %v217
      %v220 = vshrl.u32 %v174, 16
      %v222 = vrot.slane %v220, 4
      %v223 = vshll.u32 %v174, 16
      %v225 = vrot.slane %v223, 5
      %v226 = vor.u32 %v222, %v225
      %v227 = vrot.slane %v226, 4
      %v229 = vshll.u32 %v182, 16
      %v231 = vrot.slane %v229, 5
      %v232 = vsel %vm190, %v227, %v231
      %v234 = vshrl.u32 %v175, 16
      %v236 = vrot.slane %v234, 4
      %v237 = vshll.u32 %v175, 16
      %v239 = vrot.slane %v237, 5
      %v240 = vor.u32 %v236, %v239
      %v241 = vrot.slane %v240, 4
      %v243 = vshll.u32 %v183, 16
      %v245 = vrot.slane %v243, 5
      %v246 = vsel %vm190, %v241, %v245
      %v248 = vshrl.u32 %v176, 16
      %v250 = vrot.slane %v248, 4
      %v251 = vshll.u32 %v176, 16
      %v253 = vrot.slane %v251, 5
      %v254 = vor.u32 %v250, %v253
      %v255 = vrot.slane %v254, 4
      %v257 = vshll.u32 %v184, 16
      %v259 = vrot.slane %v257, 5
      %v260 = vsel %vm190, %v255, %v259
      %v262 = vshrl.u32 %v177, 16
      %v264 = vrot.slane %v262, 4
      %v265 = vshll.u32 %v177, 16
      %v267 = vrot.slane %v265, 5
      %v268 = vor.u32 %v264, %v267
      %v269 = vrot.slane %v268, 4
      %v271 = vshll.u32 %v185, 16
      %v273 = vrot.slane %v271, 5
      %v274 = vsel %vm190, %v269, %v273
      %v276 = vshrl.u32 %v178, 16
      %v278 = vrot.slane %v276, 4
      %v279 = vshll.u32 %v178, 16
      %v281 = vrot.slane %v279, 5
      %v282 = vor.u32 %v278, %v281
      %v283 = vrot.slane %v282, 4
      %v285 = vshll.u32 %v186, 16
      %v287 = vrot.slane %v285, 5
      %v288 = vsel %vm190, %v283, %v287
      %v290 = vshrl.u32 %v179, 16
      %v292 = vrot.slane %v290, 4
      %v293 = vshll.u32 %v179, 16
      %v295 = vrot.slane %v293, 5
      %v296 = vor.u32 %v292, %v295
      %v297 = vrot.slane %v296, 4
      %v299 = vshll.u32 %v187, 16
      %v301 = vrot.slane %v299, 5
      %v302 = vsel %vm190, %v297, %v301
      %v303 = vld [vmem:[%s165] sm:$0xe]
      %v304 = vld [vmem:[%s165 + $0x8] sm:$0xe]
      %v305 = vld [vmem:[%s165 + $0x10] sm:$0xe]
      %v306 = vld [vmem:[%s165 + $0x18] sm:$0xe]
      %v307 = vld [vmem:[%s165 + $0x20] sm:$0xe]
      %v308 = vld [vmem:[%s165 + $0x28] sm:$0xe]
      %v309 = vld [vmem:[%s165 + $0x30] sm:$0xe]
      %v310 = vld [vmem:[%s165 + $0x38] sm:$0xe]
      %vm327 = vcmask 1042432
      %vm328 = vcmask 1046532
      %vm329 = vmor %vm327, %vm328
      %v330 = vrot.slane %v303, 5
      %v331 = vrot.slane %v330, 4
      %v332 = vrot.slane %v180, 5
      %v333 = vsel %vm329, %v331, %v332
      %v334 = vrot.slane %v304, 5
      %v335 = vrot.slane %v334, 4
      %v336 = vrot.slane %v181, 5
      %v337 = vsel %vm329, %v335, %v336
      %v338 = vrot.slane %v305, 5
      %v339 = vrot.slane %v338, 4
      %v340 = vrot.slane %v182, 5
      %v341 = vsel %vm329, %v339, %v340
      %v342 = vrot.slane %v306, 5
      %v343 = vrot.slane %v342, 4
      %v344 = vrot.slane %v183, 5
      %v345 = vsel %vm329, %v343, %v344
      %v346 = vrot.slane %v307, 5
      %v347 = vrot.slane %v346, 4
      %v348 = vrot.slane %v184, 5
      %v349 = vsel %vm329, %v347, %v348
      %v350 = vrot.slane %v308, 5
      %v351 = vrot.slane %v350, 4
      %v352 = vrot.slane %v185, 5
      %v353 = vsel %vm329, %v351, %v352
      %v354 = vrot.slane %v309, 5
      %v355 = vrot.slane %v354, 4
      %v356 = vrot.slane %v186, 5
      %v357 = vsel %vm329, %v355, %v356
      %v358 = vrot.slane %v310, 5
      %v359 = vrot.slane %v358, 4
      %v360 = vrot.slane %v187, 5
      %v361 = vsel %vm329, %v359, %v360
      %s362 = scalar_lea.vmem %s165, 8
      %v363 = vld [vmem:[%s362] sm:$0xf]
      %v364 = vld [vmem:[%s362 + $0x8] sm:$0xf]
      %v365 = vld [vmem:[%s362 + $0x10] sm:$0xf]
      %v366 = vld [vmem:[%s362 + $0x18] sm:$0xf]
      %v367 = vld [vmem:[%s362 + $0x20] sm:$0xf]
      %v368 = vld [vmem:[%s362 + $0x28] sm:$0xf]
      %v369 = vld [vmem:[%s362 + $0x30] sm:$0xf]
      %v370 = vld [vmem:[%s362 + $0x38] sm:$0xf]
      %v371 = vld [vmem:[%s362 + $0x4] sm:$0x1]
      %v372 = vld [vmem:[%s362 + $0xc] sm:$0x1]
      %v373 = vld [vmem:[%s362 + $0x14] sm:$0x1]
      %v374 = vld [vmem:[%s362 + $0x1c] sm:$0x1]
      %v375 = vld [vmem:[%s362 + $0x24] sm:$0x1]
      %v376 = vld [vmem:[%s362 + $0x2c] sm:$0x1]
      %v377 = vld [vmem:[%s362 + $0x34] sm:$0x1]
      %v378 = vld [vmem:[%s362 + $0x3c] sm:$0x1]
      %v380 = vshrl.u32 %v363, 16
      %v382 = vrot.slane %v380, 4
      %v383 = vshll.u32 %v363, 16
      %v385 = vrot.slane %v383, 5
      %v386 = vor.u32 %v382, %v385
      %v387 = vrot.slane %v386, 4
      %v389 = vshll.u32 %v371, 16
      %v391 = vrot.slane %v389, 5
      %v392 = vsel %vm190, %v387, %v391
      %v394 = vshrl.u32 %v364, 16
      %v396 = vrot.slane %v394, 4
      %v397 = vshll.u32 %v364, 16
      %v399 = vrot.slane %v397, 5
      %v400 = vor.u32 %v396, %v399
      %v401 = vrot.slane %v400, 4
      %v403 = vshll.u32 %v372, 16
      %v405 = vrot.slane %v403, 5
      %v406 = vsel %vm190, %v401, %v405
      %v408 = vshrl.u32 %v365, 16
      %v410 = vrot.slane %v408, 4
      %v411 = vshll.u32 %v365, 16
      %v413 = vrot.slane %v411, 5
      %v414 = vor.u32 %v410, %v413
      %v415 = vrot.slane %v414, 4
      %v417 = vshll.u32 %v373, 16
      %v419 = vrot.slane %v417, 5
      %v420 = vsel %vm190, %v415, %v419
      %v422 = vshrl.u32 %v366, 16
      %v424 = vrot.slane %v422, 4
      %v425 = vshll.u32 %v366, 16
      %v427 = vrot.slane %v425, 5
      %v428 = vor.u32 %v424, %v427
      %v429 = vrot.slane %v428, 4
      %v431 = vshll.u32 %v374, 16
      %v433 = vrot.slane %v431, 5
      %v434 = vsel %vm190, %v429, %v433
      %v436 = vshrl.u32 %v367, 16
      %v438 = vrot.slane %v436, 4
      %v439 = vshll.u32 %v367, 16
      %v441 = vrot.slane %v439, 5
      %v442 = vor.u32 %v438, %v441
      %v443 = vrot.slane %v442, 4
      %v445 = vshll.u32 %v375, 16
      %v447 = vrot.slane %v445, 5
      %v448 = vsel %vm190, %v443, %v447
      %v450 = vshrl.u32 %v368, 16
      %v452 = vrot.slane %v450, 4
      %v453 = vshll.u32 %v368, 16
      %v455 = vrot.slane %v453, 5
      %v456 = vor.u32 %v452, %v455
      %v457 = vrot.slane %v456, 4
      %v459 = vshll.u32 %v376, 16
      %v461 = vrot.slane %v459, 5
      %v462 = vsel %vm190, %v457, %v461
      %v464 = vshrl.u32 %v369, 16
      %v466 = vrot.slane %v464, 4
      %v467 = vshll.u32 %v369, 16
      %v469 = vrot.slane %v467, 5
      %v470 = vor.u32 %v466, %v469
      %v471 = vrot.slane %v470, 4
      %v473 = vshll.u32 %v377, 16
      %v475 = vrot.slane %v473, 5
      %v476 = vsel %vm190, %v471, %v475
      %v478 = vshrl.u32 %v370, 16
      %v480 = vrot.slane %v478, 4
      %v481 = vshll.u32 %v370, 16
      %v483 = vrot.slane %v481, 5
      %v484 = vor.u32 %v480, %v483
      %v485 = vrot.slane %v484, 4
      %v487 = vshll.u32 %v378, 16
      %v489 = vrot.slane %v487, 5
      %v490 = vsel %vm190, %v485, %v489
      %v491 = vld [vmem:[%s362] sm:$0xe]
      %v492 = vld [vmem:[%s362 + $0x8] sm:$0xe]
      %v493 = vld [vmem:[%s362 + $0x10] sm:$0xe]
      %v494 = vld [vmem:[%s362 + $0x18] sm:$0xe]
      %v495 = vld [vmem:[%s362 + $0x20] sm:$0xe]
      %v496 = vld [vmem:[%s362 + $0x28] sm:$0xe]
      %v497 = vld [vmem:[%s362 + $0x30] sm:$0xe]
      %v498 = vld [vmem:[%s362 + $0x38] sm:$0xe]
      %v515 = vrot.slane %v491, 5
      %v516 = vrot.slane %v515, 4
      %v517 = vrot.slane %v371, 5
      %v518 = vsel %vm329, %v516, %v517
      %v519 = vrot.slane %v492, 5
      %v520 = vrot.slane %v519, 4
      %v521 = vrot.slane %v372, 5
      %v522 = vsel %vm329, %v520, %v521
      %v523 = vrot.slane %v493, 5
      %v524 = vrot.slane %v523, 4
      %v525 = vrot.slane %v373, 5
      %v526 = vsel %vm329, %v524, %v525
      %v527 = vrot.slane %v494, 5
      %v528 = vrot.slane %v527, 4
      %v529 = vrot.slane %v374, 5
      %v530 = vsel %vm329, %v528, %v529
      %v531 = vrot.slane %v495, 5
      %v532 = vrot.slane %v531, 4
      %v533 = vrot.slane %v375, 5
      %v534 = vsel %vm329, %v532, %v533
      %v535 = vrot.slane %v496, 5
      %v536 = vrot.slane %v535, 4
      %v537 = vrot.slane %v376, 5
      %v538 = vsel %vm329, %v536, %v537
      %v539 = vrot.slane %v497, 5
      %v540 = vrot.slane %v539, 4
      %v541 = vrot.slane %v377, 5
      %v542 = vsel %vm329, %v540, %v541
      %v543 = vrot.slane %v498, 5
      %v544 = vrot.slane %v543, 4
      %v545 = vrot.slane %v378, 5
      %v546 = vsel %vm329, %v544, %v545
      %s547 = scalar_lea.vmem %s165, 16
      %v548 = vld [vmem:[%s547] sm:$0xf]
      %v549 = vld [vmem:[%s547 + $0x8] sm:$0xf]
      %v550 = vld [vmem:[%s547 + $0x10] sm:$0xf]
      %v551 = vld [vmem:[%s547 + $0x18] sm:$0xf]
      %v552 = vld [vmem:[%s547 + $0x20] sm:$0xf]
      %v553 = vld [vmem:[%s547 + $0x28] sm:$0xf]
      %v554 = vld [vmem:[%s547 + $0x30] sm:$0xf]
      %v555 = vld [vmem:[%s547 + $0x38] sm:$0xf]
      %v556 = vld [vmem:[%s547 + $0x4] sm:$0x1]
      %v557 = vld [vmem:[%s547 + $0xc] sm:$0x1]
      %v558 = vld [vmem:[%s547 + $0x14] sm:$0x1]
      %v559 = vld [vmem:[%s547 + $0x1c] sm:$0x1]
      %v560 = vld [vmem:[%s547 + $0x24] sm:$0x1]
      %v561 = vld [vmem:[%s547 + $0x2c] sm:$0x1]
      %v562 = vld [vmem:[%s547 + $0x34] sm:$0x1]
      %v563 = vld [vmem:[%s547 + $0x3c] sm:$0x1]
      %v565 = vshrl.u32 %v548, 16
      %v567 = vrot.slane %v565, 4
      %v568 = vshll.u32 %v548, 16
      %v570 = vrot.slane %v568, 5
      %v571 = vor.u32 %v567, %v570
      %v572 = vrot.slane %v571, 4
      %v574 = vshll.u32 %v556, 16
      %v576 = vrot.slane %v574, 5
      %v577 = vsel %vm190, %v572, %v576
      %v579 = vshrl.u32 %v549, 16
      %v581 = vrot.slane %v579, 4
      %v582 = vshll.u32 %v549, 16
      %v584 = vrot.slane %v582, 5
      %v585 = vor.u32 %v581, %v584
      %v586 = vrot.slane %v585, 4
      %v588 = vshll.u32 %v557, 16
      %v590 = vrot.slane %v588, 5
      %v591 = vsel %vm190, %v586, %v590
      %v593 = vshrl.u32 %v550, 16
      %v595 = vrot.slane %v593, 4
      %v596 = vshll.u32 %v550, 16
      %v598 = vrot.slane %v596, 5
      %v599 = vor.u32 %v595, %v598
      %v600 = vrot.slane %v599, 4
      %v602 = vshll.u32 %v558, 16
      %v604 = vrot.slane %v602, 5
      %v605 = vsel %vm190, %v600, %v604
      %v607 = vshrl.u32 %v551, 16
      %v609 = vrot.slane %v607, 4
      %v610 = vshll.u32 %v551, 16
      %v612 = vrot.slane %v610, 5
      %v613 = vor.u32 %v609, %v612
      %v614 = vrot.slane %v613, 4
      %v616 = vshll.u32 %v559, 16
      %v618 = vrot.slane %v616, 5
      %v619 = vsel %vm190, %v614, %v618
      %v621 = vshrl.u32 %v552, 16
      %v623 = vrot.slane %v621, 4
      %v624 = vshll.u32 %v552, 16
      %v626 = vrot.slane %v624, 5
      %v627 = vor.u32 %v623, %v626
      %v628 = vrot.slane %v627, 4
      %v630 = vshll.u32 %v560, 16
      %v632 = vrot.slane %v630, 5
      %v633 = vsel %vm190, %v628, %v632
      %v635 = vshrl.u32 %v553, 16
      %v637 = vrot.slane %v635, 4
      %v638 = vshll.u32 %v553, 16
      %v640 = vrot.slane %v638, 5
      %v641 = vor.u32 %v637, %v640
      %v642 = vrot.slane %v641, 4
      %v644 = vshll.u32 %v561, 16
      %v646 = vrot.slane %v644, 5
      %v647 = vsel %vm190, %v642, %v646
      %v649 = vshrl.u32 %v554, 16
      %v651 = vrot.slane %v649, 4
      %v652 = vshll.u32 %v554, 16
      %v654 = vrot.slane %v652, 5
      %v655 = vor.u32 %v651, %v654
      %v656 = vrot.slane %v655, 4
      %v658 = vshll.u32 %v562, 16
      %v660 = vrot.slane %v658, 5
      %v661 = vsel %vm190, %v656, %v660
      %v663 = vshrl.u32 %v555, 16
      %v665 = vrot.slane %v663, 4
      %v666 = vshll.u32 %v555, 16
      %v668 = vrot.slane %v666, 5
      %v669 = vor.u32 %v665, %v668
      %v670 = vrot.slane %v669, 4
      %v672 = vshll.u32 %v563, 16
      %v674 = vrot.slane %v672, 5
      %v675 = vsel %vm190, %v670, %v674
      %v676 = vld [vmem:[%s547] sm:$0xe]
      %v677 = vld [vmem:[%s547 + $0x8] sm:$0xe]
      %v678 = vld [vmem:[%s547 + $0x10] sm:$0xe]
      %v679 = vld [vmem:[%s547 + $0x18] sm:$0xe]
      %v680 = vld [vmem:[%s547 + $0x20] sm:$0xe]
      %v681 = vld [vmem:[%s547 + $0x28] sm:$0xe]
      %v682 = vld [vmem:[%s547 + $0x30] sm:$0xe]
      %v683 = vld [vmem:[%s547 + $0x38] sm:$0xe]
      %v700 = vrot.slane %v676, 5
      %v701 = vrot.slane %v700, 4
      %v702 = vrot.slane %v556, 5
      %v703 = vsel %vm329, %v701, %v702
      %v704 = vrot.slane %v677, 5
      %v705 = vrot.slane %v704, 4
      %v706 = vrot.slane %v557, 5
      %v707 = vsel %vm329, %v705, %v706
      %v708 = vrot.slane %v678, 5
      %v709 = vrot.slane %v708, 4
      %v710 = vrot.slane %v558, 5
      %v711 = vsel %vm329, %v709, %v710
      %v712 = vrot.slane %v679, 5
      %v713 = vrot.slane %v712, 4
      %v714 = vrot.slane %v559, 5
      %v715 = vsel %vm329, %v713, %v714
      %v716 = vrot.slane %v680, 5
      %v717 = vrot.slane %v716, 4
      %v718 = vrot.slane %v560, 5
      %v719 = vsel %vm329, %v717, %v718
      %v720 = vrot.slane %v681, 5
      %v721 = vrot.slane %v720, 4
      %v722 = vrot.slane %v561, 5
      %v723 = vsel %vm329, %v721, %v722
      %v724 = vrot.slane %v682, 5
      %v725 = vrot.slane %v724, 4
      %v726 = vrot.slane %v562, 5
      %v727 = vsel %vm329, %v725, %v726
      %v728 = vrot.slane %v683, 5
      %v729 = vrot.slane %v728, 4
      %v730 = vrot.slane %v563, 5
      %v731 = vsel %vm329, %v729, %v730
      %v740 = vunpack.c.l.b16 %v172
      %v741 = vunpack.c.l.b16 %v173
      %v742 = vunpack.c.l.b16 %v174
      %v743 = vunpack.c.l.b16 %v175
      %v744 = vunpack.c.l.b16 %v176
      %v745 = vunpack.c.l.b16 %v177
      %v746 = vunpack.c.l.b16 %v178
      %v747 = vunpack.c.l.b16 %v179
      %v748 = vpack.c.b16 %v741, %v740
      %v749 = vpack.c.b16 %v743, %v742
      %v750 = vpack.c.b16 %v745, %v744
      %v751 = vpack.c.b16 %v747, %v746
      %v752 = vunpack.c.l.b16 %v204
      %v753 = vunpack.c.l.b16 %v218
      %v754 = vunpack.c.l.b16 %v232
      %v755 = vunpack.c.l.b16 %v246
      %v756 = vunpack.c.l.b16 %v260
      %v757 = vunpack.c.l.b16 %v274
      %v758 = vunpack.c.l.b16 %v288
      %v759 = vunpack.c.l.b16 %v302
      %v760 = vpack.c.b16 %v753, %v752
      %v761 = vpack.c.b16 %v755, %v754
      %v762 = vpack.c.b16 %v757, %v756
      %v763 = vpack.c.b16 %v759, %v758
      %764 = vrot.lane.b32.xlu0 %v760, 16
      %v765 = vpop.permute.xlu0 %764
      %766 = vrot.lane.b32.xlu0 %v761, 16
      %v767 = vpop.permute.xlu0 %766
      %768 = vrot.lane.b32.xlu0 %v762, 16
      %v769 = vpop.permute.xlu0 %768
      %770 = vrot.lane.b32.xlu0 %v763, 16
      %v771 = vpop.permute.xlu0 %770
      %v772 = vunpack.c.l.b16 %v333
      %v773 = vunpack.c.l.b16 %v337
      %v774 = vunpack.c.l.b16 %v341
      %v775 = vunpack.c.l.b16 %v345
      %v776 = vunpack.c.l.b16 %v349
      %v777 = vunpack.c.l.b16 %v353
      %v778 = vunpack.c.l.b16 %v357
      %v779 = vunpack.c.l.b16 %v361
      %v780 = vpack.c.b16 %v773, %v772
      %v781 = vpack.c.b16 %v775, %v774
      %v782 = vpack.c.b16 %v777, %v776
      %v783 = vpack.c.b16 %v779, %v778
      %784 = vrot.lane.b32.xlu0 %v780, 32
      %v785 = vpop.permute.xlu0 %784
      %786 = vrot.lane.b32.xlu0 %v781, 32
      %v787 = vpop.permute.xlu0 %786
      %788 = vrot.lane.b32.xlu0 %v782, 32
      %v789 = vpop.permute.xlu0 %788
      %790 = vrot.lane.b32.xlu0 %v783, 32
      %v791 = vpop.permute.xlu0 %790
      %v800 = vunpack.c.l.b16 %v363
      %v801 = vunpack.c.l.b16 %v364
      %v802 = vunpack.c.l.b16 %v365
      %v803 = vunpack.c.l.b16 %v366
      %v804 = vunpack.c.l.b16 %v367
      %v805 = vunpack.c.l.b16 %v368
      %v806 = vunpack.c.l.b16 %v369
      %v807 = vunpack.c.l.b16 %v370
      %v808 = vpack.c.b16 %v801, %v800
      %v809 = vpack.c.b16 %v803, %v802
      %v810 = vpack.c.b16 %v805, %v804
      %v811 = vpack.c.b16 %v807, %v806
      %812 = vrot.lane.b32.xlu0 %v808, 48
      %v813 = vpop.permute.xlu0 %812
      %814 = vrot.lane.b32.xlu0 %v809, 48
      %v815 = vpop.permute.xlu0 %814
      %816 = vrot.lane.b32.xlu0 %v810, 48
      %v817 = vpop.permute.xlu0 %816
      %818 = vrot.lane.b32.xlu0 %v811, 48
      %v819 = vpop.permute.xlu0 %818
      %v820 = vunpack.c.l.b16 %v392
      %v821 = vunpack.c.l.b16 %v406
      %v822 = vunpack.c.l.b16 %v420
      %v823 = vunpack.c.l.b16 %v434
      %v824 = vunpack.c.l.b16 %v448
      %v825 = vunpack.c.l.b16 %v462
      %v826 = vunpack.c.l.b16 %v476
      %v827 = vunpack.c.l.b16 %v490
      %v828 = vpack.c.b16 %v821, %v820
      %v829 = vpack.c.b16 %v823, %v822
      %v830 = vpack.c.b16 %v825, %v824
      %v831 = vpack.c.b16 %v827, %v826
      %832 = vrot.lane.b32.xlu0 %v828, 64
      %v833 = vpop.permute.xlu0 %832
      %834 = vrot.lane.b32.xlu0 %v829, 64
      %v835 = vpop.permute.xlu0 %834
      %836 = vrot.lane.b32.xlu0 %v830, 64
      %v837 = vpop.permute.xlu0 %836
      %838 = vrot.lane.b32.xlu0 %v831, 64
      %v839 = vpop.permute.xlu0 %838
      %v840 = vunpack.c.l.b16 %v518
      %v841 = vunpack.c.l.b16 %v522
      %v842 = vunpack.c.l.b16 %v526
      %v843 = vunpack.c.l.b16 %v530
      %v844 = vunpack.c.l.b16 %v534
      %v845 = vunpack.c.l.b16 %v538
      %v846 = vunpack.c.l.b16 %v542
      %v847 = vunpack.c.l.b16 %v546
      %v848 = vpack.c.b16 %v841, %v840
      %v849 = vpack.c.b16 %v843, %v842
      %v850 = vpack.c.b16 %v845, %v844
      %v851 = vpack.c.b16 %v847, %v846
      %852 = vrot.lane.b32.xlu0 %v848, 80
      %v853 = vpop.permute.xlu0 %852
      %854 = vrot.lane.b32.xlu0 %v849, 80
      %v855 = vpop.permute.xlu0 %854
      %856 = vrot.lane.b32.xlu0 %v850, 80
      %v857 = vpop.permute.xlu0 %856
      %858 = vrot.lane.b32.xlu0 %v851, 80
      %v859 = vpop.permute.xlu0 %858
      %v868 = vunpack.c.l.b16 %v548
      %v869 = vunpack.c.l.b16 %v549
      %v870 = vunpack.c.l.b16 %v550
      %v871 = vunpack.c.l.b16 %v551
      %v872 = vunpack.c.l.b16 %v552
      %v873 = vunpack.c.l.b16 %v553
      %v874 = vunpack.c.l.b16 %v554
      %v875 = vunpack.c.l.b16 %v555
      %v876 = vpack.c.b16 %v869, %v868
      %v877 = vpack.c.b16 %v871, %v870
      %v878 = vpack.c.b16 %v873, %v872
      %v879 = vpack.c.b16 %v875, %v874
      %880 = vrot.lane.b32.xlu0 %v876, 96
      %v881 = vpop.permute.xlu0 %880
      %882 = vrot.lane.b32.xlu0 %v877, 96
      %v883 = vpop.permute.xlu0 %882
      %884 = vrot.lane.b32.xlu0 %v878, 96
      %v885 = vpop.permute.xlu0 %884
      %886 = vrot.lane.b32.xlu0 %v879, 96
      %v887 = vpop.permute.xlu0 %886
      %v888 = vunpack.c.l.b16 %v577
      %v889 = vunpack.c.l.b16 %v591
      %v890 = vunpack.c.l.b16 %v605
      %v891 = vunpack.c.l.b16 %v619
      %v892 = vunpack.c.l.b16 %v633
      %v893 = vunpack.c.l.b16 %v647
      %v894 = vunpack.c.l.b16 %v661
      %v895 = vunpack.c.l.b16 %v675
      %v896 = vpack.c.b16 %v889, %v888
      %v897 = vpack.c.b16 %v891, %v890
      %v898 = vpack.c.b16 %v893, %v892
      %v899 = vpack.c.b16 %v895, %v894
      %900 = vrot.lane.b32.xlu0 %v896, 112
      %v901 = vpop.permute.xlu0 %900
      %902 = vrot.lane.b32.xlu0 %v897, 112
      %v903 = vpop.permute.xlu0 %902
      %904 = vrot.lane.b32.xlu0 %v898, 112
      %v905 = vpop.permute.xlu0 %904
      %906 = vrot.lane.b32.xlu0 %v899, 112
      %v907 = vpop.permute.xlu0 %906
      %v908 = vunpack.c.l.b16 %v703
      %v909 = vunpack.c.l.b16 %v707
      %v910 = vunpack.c.l.b16 %v711
      %v911 = vunpack.c.l.b16 %v715
      %v912 = vunpack.c.l.b16 %v719
      %v913 = vunpack.c.l.b16 %v723
      %v914 = vunpack.c.l.b16 %v727
      %v915 = vunpack.c.l.b16 %v731
      %v916 = vpack.c.b16 %v909, %v908
      %v917 = vpack.c.b16 %v911, %v910
      %v918 = vpack.c.b16 %v913, %v912
      %v919 = vpack.c.b16 %v915, %v914
      %vm920 = vcmask 130048
      %v923 = vsel %vm920, %v748, %v765
      %v926 = vsel %vm920, %v749, %v767
      %v929 = vsel %vm920, %v750, %v769
      %v932 = vsel %vm920, %v751, %v771
      %vm933 = vcmask 261120
      %v935 = vsel %vm933, %v923, %v785
      %v937 = vsel %vm933, %v926, %v787
      %v939 = vsel %vm933, %v929, %v789
      %v941 = vsel %vm933, %v932, %v791
      %vm942 = vcmask 392192
      %v944 = vsel %vm942, %v935, %v813
      %v946 = vsel %vm942, %v937, %v815
      %v948 = vsel %vm942, %v939, %v817
      %v950 = vsel %vm942, %v941, %v819
      %vm951 = vcmask 523264
      %v953 = vsel %vm951, %v944, %v833
      %v955 = vsel %vm951, %v946, %v835
      %v957 = vsel %vm951, %v948, %v837
      %v959 = vsel %vm951, %v950, %v839
      %vm960 = vcmask 654336
      %v962 = vsel %vm960, %v953, %v853
      %v964 = vsel %vm960, %v955, %v855
      %v966 = vsel %vm960, %v957, %v857
      %v968 = vsel %vm960, %v959, %v859
      %vm969 = vcmask 785408
      %v971 = vsel %vm969, %v962, %v881
      %v973 = vsel %vm969, %v964, %v883
      %v975 = vsel %vm969, %v966, %v885
      %v977 = vsel %vm969, %v968, %v887
      %vm978 = vcmask 916480
      %v980 = vsel %vm978, %v971, %v901
      %v983 = vsel %vm978, %v973, %v903
      %v986 = vsel %vm978, %v975, %v905
      %v989 = vsel %vm978, %v977, %v907
      %v991 = vld [vmem:[%s1] sm:$0xf]
      %v992 = vld [vmem:[%s1 + $0x4] sm:$0xf]
      %v993 = vld [vmem:[%s1 + $0x8] sm:$0xf]
      %v994 = vld [vmem:[%s1 + $0xc] sm:$0xf]
      %v995 = vld [vmem:[%s1 + $0x10] sm:$0xf]
      %v996 = vld [vmem:[%s1 + $0x14] sm:$0xf]
      %v997 = vld [vmem:[%s1 + $0x18] sm:$0xf]
      %v998 = vld [vmem:[%s1 + $0x1c] sm:$0xf]
      %v999 = vld [vmem:[%s1 + $0x20] sm:$0xf]
      %v1000 = vld [vmem:[%s1 + $0x24] sm:$0xf]
      %v1001 = vld [vmem:[%s1 + $0x28] sm:$0xf]
      %v1002 = vld [vmem:[%s1 + $0x2c] sm:$0xf]
      %v1003 = vld [vmem:[%s1 + $0x30] sm:$0xf]
      %v1004 = vld [vmem:[%s1 + $0x34] sm:$0xf]
      %v1005 = vld [vmem:[%s1 + $0x38] sm:$0xf]
      %v1006 = vld [vmem:[%s1 + $0x3c] sm:$0xf]
      %v1007 = vld [vmem:[%s1 + $0x40] sm:$0xf]
      %v1008 = vld [vmem:[%s1 + $0x44] sm:$0xf]
      %v1009 = vld [vmem:[%s2] sm:$0x1]
      %v1011 = vlaneseq
      %v1012 = vshrl.u32 %v1011, 7
      %v1013 = vsub.s32 0, %v1012
      %v1014 = vrot.slane %v1009, %v1013
      %v1034 = vunpack.c.l.b16 %v991
      %v1035 = vunpack.c.l.b16 %v992
      %v1036 = vunpack.c.l.b16 %v993
      %v1037 = vunpack.c.l.b16 %v994
      %v1038 = vunpack.c.l.b16 %v995
      %v1039 = vunpack.c.l.b16 %v996
      %v1040 = vunpack.c.l.b16 %v997
      %v1041 = vunpack.c.l.b16 %v998
      %v1042 = vunpack.c.l.b16 %v999
      %v1043 = vunpack.c.l.b16 %v1000
      %v1044 = vunpack.c.l.b16 %v1001
      %v1045 = vunpack.c.l.b16 %v1002
      %v1046 = vunpack.c.l.b16 %v1003
      %v1047 = vunpack.c.l.b16 %v1004
      %v1048 = vunpack.c.l.b16 %v1005
      %v1049 = vunpack.c.l.b16 %v1006
      %v1050 = vunpack.c.l.b16 %v1007
      %v1051 = vunpack.c.l.b16 %v1008
      %v1052 = vpack.c.b16 %v1035, %v1034
      %v1053 = vpack.c.b16 %v1037, %v1036
      %v1054 = vpack.c.b16 %v1039, %v1038
      %v1055 = vpack.c.b16 %v1041, %v1040
      %v1056 = vpack.c.b16 %v1043, %v1042
      %v1057 = vpack.c.b16 %v1045, %v1044
      %v1058 = vpack.c.b16 %v1047, %v1046
      %v1059 = vpack.c.b16 %v1049, %v1048
      %v1060 = vpack.c.b16 %v1051, %v1050
      %v1071 = vsel %vm920, %v916, 0
      %v1074 = vsel %vm920, %v917, 0
      %v1077 = vsel %vm920, %v918, 0
      %v1080 = vsel %vm920, %v919, 0
      %1082 = vmatprep.subr.bf16.mxu0 0
      %1083 = vmatpush1.bf16.msra.mxu0 %v1052
      %1084 = vmatprep.subr.bf16.mxu0 0
      %1085 = vmatpush1.bf16.msra.mxu0 %v1053
      %1086 = vmatprep.subr.bf16.mxu0 0
      %1087 = vmatpush1.bf16.msra.mxu0 %v1054
      %1088 = vmatprep.subr.bf16.mxu0 0
      %1089 = vmatpush1.bf16.msra.mxu0 %v1055
      %1090 = vmatprep.subr.bf16.mxu0 0
      %1091 = vmatpush1.bf16.msra.mxu0 %v1056
      %1092 = vmatprep.subr.bf16.mxu0 0
      %1093 = vmatpush1.bf16.msra.mxu0 %v1057
      %1094 = vmatprep.subr.bf16.mxu0 0
      %1095 = vmatpush1.bf16.msra.mxu0 %v1058
      %1096 = vmatprep.subr.bf16.mxu0 0
      %1097 = vmatpush1.bf16.msra.mxu0 %v1059
      %1098 = vmatprep.subr.bf16.mxu0 0
      %1099 = vmatpush1.bf16.msra.mxu0 %v1060
      %1100 = vmatprep.subr.bf16.mxu0 0
      %1101 = vmatpush1.bf16.msra.mxu0 0
      %1102 = vmatprep.subr.bf16.mxu0 0
      %1103 = vmatpush1.bf16.msra.mxu0 0
      %1104 = vmatprep.subr.bf16.mxu0 0
      %1105 = vmatpush1.bf16.msra.mxu0 0
      %1106 = vmatprep.subr.bf16.mxu0 0
      %1107 = vmatpush1.bf16.msra.mxu0 0
      %1108 = vmatprep.subr.bf16.mxu0 0
      %1109 = vmatpush1.bf16.msra.mxu0 0
      %1110 = vmatprep.subr.bf16.mxu0 0
      %1111 = vmatpush1.bf16.msra.mxu0 0
      %1112 = vmatprep.subr.bf16.mxu0 0
      %1113 = vmatpush1.bf16.msra.mxu0 0
      %1114 = vmatprep.mubr.bf16.mxu0 %v1071
      %1115 = vmatmul.mubr.bf16.gmra.mrb[0].mxu0 %v980
      %v1116 = vpop.f32.mrb[0].mxu0
      %v1117 = vadd.f32 %v1014, %v1116
      %v1118 = vpop.f32.mrb[0].mxu0
      %v1119 = vpop.f32.mrb[0].mxu0
      %v1120 = vadd.f32 %v1014, %v1119
      %v1121 = vpop.f32.mrb[0].mxu0
      %1122 = vmatprep.mubr.bf16.mxu0 %v1074
      %1123 = vmatmul.mubr.bf16.gmra.mrb[0].mxu0 %v983
      %v1124 = vpop.f32.mrb[0].mxu0
      %v1125 = vadd.f32 %v1014, %v1124
      %v1126 = vpop.f32.mrb[0].mxu0
      %v1127 = vpop.f32.mrb[0].mxu0
      %v1128 = vadd.f32 %v1014, %v1127
      %v1129 = vpop.f32.mrb[0].mxu0
      %1130 = vmatprep.mubr.bf16.mxu0 %v1077
      %1131 = vmatmul.mubr.bf16.gmra.mrb[0].mxu0 %v986
      %v1132 = vpop.f32.mrb[0].mxu0
      %v1133 = vadd.f32 %v1014, %v1132
      %v1134 = vpop.f32.mrb[0].mxu0
      %v1135 = vpop.f32.mrb[0].mxu0
      %v1136 = vadd.f32 %v1014, %v1135
      %v1137 = vpop.f32.mrb[0].mxu0
      %1138 = vmatprep.mubr.bf16.mxu0 %v1080
      %1139 = vmatmul.mubr.bf16.gmra.mrb[0].mxu0 %v989
      %v1140 = vpop.f32.mrb[0].mxu0
      %v1141 = vadd.f32 %v1014, %v1140
      %v1142 = vpop.f32.mrb[0].mxu0
      %v1143 = vpop.f32.mrb[0].mxu0
      %v1144 = vadd.f32 %v1014, %v1143
      %v1145 = vpop.f32.mrb[0].mxu0
      %1146 = vdwg.mxu0
      %v1147 = vmax.f32 %v1117, 0.0
      %v1148 = vmax.f32 %v1120, 0.0
      %v1149 = vmax.f32 %v1125, 0.0
      %v1150 = vmax.f32 %v1128, 0.0
      %v1151 = vmax.f32 %v1133, 0.0
      %v1152 = vmax.f32 %v1136, 0.0
      %v1153 = vmax.f32 %v1141, 0.0
      %v1154 = vmax.f32 %v1144, 0.0
      %1155 = vst.msk [vmem:[%s170] sm:$0xff] %vm933, %v1147
      %1156 = vst.msk [vmem:[%s170 + $0x8] sm:$0xff] %vm933, %v1148
      %1157 = vst.msk [vmem:[%s170 + $0x10] sm:$0xff] %vm933, %v1149
      %1158 = vst.msk [vmem:[%s170 + $0x18] sm:$0xff] %vm933, %v1150
      %1159 = vst.msk [vmem:[%s170 + $0x20] sm:$0xff] %vm933, %v1151
      %1160 = vst.msk [vmem:[%s170 + $0x28] sm:$0xff] %vm933, %v1152
      %1161 = vst.msk [vmem:[%s170 + $0x30] sm:$0xff] %vm933, %v1153
      %1162 = vst.msk [vmem:[%s170 + $0x38] sm:$0xff] %vm933, %v1154
      %p1163 = scmp.lt.s32.totalorder %s14, 3
      %s1164 = scalar_select %p1163, %s14, 3
      %s1165 = smul.addr %s1164, 8
      %s1166 = smul.addr %s1165, 8
      %s1167 = scalar_lea.vmem %s3, %s1166
      // Predicated region
      $region33: #{perceptual_loss.10} parent=31 // pred_check
        %p1168 = pneg %p100
      $region34: #{perceptual_loss.10} parent=31 // pred_check_branch
        %1170 = sbr.rel (%p1168) target = $region36
      $region35: #{perceptual_loss.10} parent=31 // pred_region
        _
      $region36: #{perceptual_loss.10} parent=31 // pred_fallthru
        _
    $region32: #{perceptual_loss.10} parent=5 // pred_fallthru
      _
    %p1171 = scmp.le.s32.totalorder 2, %s9
    // Predicated region
    $region37: #{perceptual_loss.10} parent=5 // pred_check
      %p1172 = pneg %p1171
    $region38: #{perceptual_loss.10} parent=5 // pred_check_branch
      %1174 = sbr.rel (%p1172) target = $region40
    $region39: #{perceptual_loss.10} parent=5 // pred_region
      %s1175 = ssub.s32 %s9, 2
      // Predicated region
      $region41: #{perceptual_loss.10} parent=39 // pred_check
        %p1176 = pneg %p106
      $region42: #{perceptual_loss.10} parent=39 // pred_check_branch
        %1178 = sbr.rel (%p1176) target = $region44
      $region43: #{perceptual_loss.10} parent=39 // pred_region
        %p1179 = scmp.lt.s32.totalorder %s15, 3
        %s1180 = scalar_select %p1179, %s15, 3
        %s1181 = smul.addr %s1180, 8
        %s1182 = smul.addr %s1181, 8
        %s1183 = scalar_lea.vmem %s3, %s1182
      $region44: #{perceptual_loss.10} parent=39 // pred_fallthru
        _
    $region40: #{perceptual_loss.10} parent=5 // pred_fallthru
      _
  $region6: #{perceptual_loss.10} parent=0 // loop_footer
    %s13 = sadd.s32 1, %s9
  $region7: #{perceptual_loss.10} parent=0 // loop_footer_branch
    %8 = sbr.rel target = $region3
  $region8: #{perceptual_loss.10} parent=0 // loop_exit
    _

// kernel: perceptual_loss.7
$region0: #{perceptual_loss.7}
  #allocation0 [shape = 'u32[]', space=smem, size = 0x4, offset = 0x4, fixed_abs, tag = 'smem constant byte address 0x4 - core index']
  #allocation1 [shape = 'u32[144,128]{1,0:T(1,128)}', space=vmem, size = 0x12000, scoped, tag = 'internal scratch']
  %s0 = inlined_call_operand.vmem [shape: bf16[4,18,18,3], index: 0, kind: input, shape index: {}]
  %s1 = inlined_call_operand.vmem [shape: bf16[27,16], index: 1, kind: input, shape index: {}]
  %s2 = inlined_call_operand.vmem [shape: f32[1,16], index: 2, kind: input, shape index: {}]
  %s3 = inlined_call_operand.vmem [shape: f32[4,256,16], index: 3, kind: output, shape index: {}]
  %s4 = sld [smem:[#allocation0]]
  $region45: #{perceptual_loss.7} parent=0
    _
  %s6 = ssub.s32 1, %s4
  %s7 = scalar_select 0, %s6, %s4
  loop: start=0, step=1, limit=6
  $region2: #{perceptual_loss.7} parent=0 // loop_pre_header
    _
  $region3: #{perceptual_loss.7} parent=0 // loop_header
    %s9 = sphi 0, %s13
    %p10 = scmp.ge.s32.totalorder %s9, 6
    %s19 = sphi 0, %s21
    %s22 = sphi 0, %s19
    %s23 = sphi 0, %s22
    %s39 = sphi 0, %s23
    %s43 = sphi 0, %s43
    %s45 = sphi 0, %s43
    %s46 = sphi 0, %s45
    %s60 = sphi 0, %s46
    %s64 = sphi 0, %s64
    %s66 = sphi 0, %s64
    %s67 = sphi 0, %s66
    %s81 = sphi 0, %s67
    %s87 = sphi 0, %s89
    %s90 = sphi 0, %s87
    %s91 = sphi 0, %s90
    %s107 = sphi 0, %s91
  $region4: #{perceptual_loss.7} parent=0 // loop_header_branch
    %12 = sbr.rel (%p10) target = $region8
  $region5: #{perceptual_loss.7} parent=0 // loop_body
    %s14 = ssub.s32 %s9, 1
    %s15 = ssub.s32 %s9, 2
    %s16 = sadd.s32 %s9, 1
    %s17 = ssub.s32 %s9, %s16
    %p18 = scmp.eq.s32.totalorder %s17, 0
    %s20 = sadd.s32 %s19, 1
    %s21 = scalar_select %p18, %s19, %s20
    %p24 = pneg %p18
    %p25 = scmp.eq.s32.totalorder %s9, 3
    %p26 = por %p24, %p25
    %p27 = scmp.ne.s32.totalorder %s19, %s22
    %p28 = scmp.eq.s32.totalorder %s9, 0
    %p29 = por %p27, %p28
    %p30 = scmp.ne.s32.totalorder %s19, %s22
    %p31 = scmp.eq.s32.totalorder %s14, 3
    %p32 = por %p30, %p31
    %p33 = scmp.ne.s32.totalorder %s22, %s23
    %p34 = scmp.eq.s32.totalorder %s14, 0
    %p35 = por %p33, %p34
    %p36 = scmp.ne.s32.totalorder %s22, %s23
    %p37 = scmp.eq.s32.totalorder %s15, 3
    %p38 = por %p36, %p37
    %p40 = scmp.ne.s32.totalorder %s23, %s39
    %p41 = scmp.eq.s32.totalorder %s15, 0
    %p42 = por %p40, %p41
    %s44 = sadd.s32 %s43, 1
    %p47 = scmp.eq.s32.totalorder %s9, 3
    %p48 = scmp.ne.s32.totalorder %s43, %s45
    %p49 = scmp.eq.s32.totalorder %s9, 0
    %p50 = por %p48, %p49
    %p51 = scmp.ne.s32.totalorder %s43, %s45
    %p52 = scmp.eq.s32.totalorder %s14, 3
    %p53 = por %p51, %p52
    %p54 = scmp.ne.s32.totalorder %s45, %s46
    %p55 = scmp.eq.s32.totalorder %s14, 0
    %p56 = por %p54, %p55
    %p57 = scmp.ne.s32.totalorder %s45, %s46
    %p58 = scmp.eq.s32.totalorder %s15, 3
    %p59 = por %p57, %p58
    %p61 = scmp.ne.s32.totalorder %s46, %s60
    %p62 = scmp.eq.s32.totalorder %s15, 0
    %p63 = por %p61, %p62
    %s65 = sadd.s32 %s64, 1
    %p68 = scmp.eq.s32.totalorder %s9, 3
    %p69 = scmp.ne.s32.totalorder %s64, %s66
    %p70 = scmp.eq.s32.totalorder %s9, 0
    %p71 = por %p69, %p70
    %p72 = scmp.ne.s32.totalorder %s64, %s66
    %p73 = scmp.eq.s32.totalorder %s14, 3
    %p74 = por %p72, %p73
    %p75 = scmp.ne.s32.totalorder %s66, %s67
    %p76 = scmp.eq.s32.totalorder %s14, 0
    %p77 = por %p75, %p76
    %p78 = scmp.ne.s32.totalorder %s66, %s67
    %p79 = scmp.eq.s32.totalorder %s15, 3
    %p80 = por %p78, %p79
    %p82 = scmp.ne.s32.totalorder %s67, %s81
    %p83 = scmp.eq.s32.totalorder %s15, 0
    %p84 = por %p82, %p83
    %s85 = ssub.s32 %s9, %s16
    %p86 = scmp.eq.s32.totalorder %s85, 0
    %s88 = sadd.s32 %s87, 1
    %s89 = scalar_select %p86, %s87, %s88
    %p92 = pneg %p86
    %p93 = scmp.eq.s32.totalorder %s9, 3
    %p94 = por %p92, %p93
    %p95 = scmp.ne.s32.totalorder %s87, %s90
    %p96 = scmp.eq.s32.totalorder %s9, 0
    %p97 = por %p95, %p96
    %p98 = scmp.ne.s32.totalorder %s87, %s90
    %p99 = scmp.eq.s32.totalorder %s14, 3
    %p100 = por %p98, %p99
    %p101 = scmp.ne.s32.totalorder %s90, %s91
    %p102 = scmp.eq.s32.totalorder %s14, 0
    %p103 = por %p101, %p102
    %p104 = scmp.ne.s32.totalorder %s90, %s91
    %p105 = scmp.eq.s32.totalorder %s15, 3
    %p106 = por %p104, %p105
    %p108 = scmp.ne.s32.totalorder %s91, %s107
    %p109 = scmp.eq.s32.totalorder %s15, 0
    %p110 = por %p108, %p109
    %p111 = scmp.le.s32.totalorder 1, %s9
    %p112 = scmp.lt.s32.totalorder %s9, 5
    %p113 = pnand %p111, %p112
    %p114 = pneg %p113
    // Predicated region
    $region9: #{perceptual_loss.7} parent=5 // pred_check
      _
    $region10: #{perceptual_loss.7} parent=5 // pred_check_branch
      %116 = sbr.rel (%p113) target = $region12
    $region11: #{perceptual_loss.7} parent=5 // pred_region
      %s117 = ssub.s32 %s9, 1
      // Predicated region
      $region13: #{perceptual_loss.7} parent=11 // pred_check
        %p118 = pneg %p56
      $region14: #{perceptual_loss.7} parent=11 // pred_check_branch
        %120 = sbr.rel (%p118) target = $region16
      $region15: #{perceptual_loss.7} parent=11 // pred_region
        _
      $region16: #{perceptual_loss.7} parent=11 // pred_fallthru
        _
      // Predicated region
      $region17: #{perceptual_loss.7} parent=11 // pred_check
        %p121 = pneg %p77
      $region18: #{perceptual_loss.7} parent=11 // pred_check_branch
        %123 = sbr.rel (%p121) target = $region20
      $region19: #{perceptual_loss.7} parent=11 // pred_region
        _
      $region20: #{perceptual_loss.7} parent=11 // pred_fallthru
        _
    $region12: #{perceptual_loss.7} parent=5 // pred_fallthru
      _
    %p124 = scmp.lt.s32.totalorder %s9, 4
    // Predicated region
    $region21: #{perceptual_loss.7} parent=5 // pred_check
      %p125 = pneg %p124
    $region22: #{perceptual_loss.7} parent=5 // pred_check_branch
      %127 = sbr.rel (%p125) target = $region24
    $region23: #{perceptual_loss.7} parent=5 // pred_region
      // Predicated region
      $region25: #{perceptual_loss.7} parent=23 // pred_check
        %p128 = pneg %p29
      $region26: #{perceptual_loss.7} parent=23 // pred_check_branch
        %130 = sbr.rel (%p128) target = $region28
      $region27: #{perceptual_loss.7} parent=23 // pred_region
        %p131 = scmp.lt.s32.totalorder %s9, 3
        %s132 = scalar_select %p131, %s9, 3
        %s133 = smul.addr %s132, 54
        %s134 = smul.addr %s133, 4
        %s135 = scalar_lea.vmem %s0, %s134
      $region28: #{perceptual_loss.7} parent=23 // pred_fallthru
        _
    $region24: #{perceptual_loss.7} parent=5 // pred_fallthru
      _
    %p136 = scmp.le.s32.totalorder 1, %s9
    %p137 = scmp.lt.s32.totalorder %s9, 5
    %p138 = pnand %p136, %p137
    %p139 = pneg %p138
    // Predicated region
    $region29: #{perceptual_loss.7} parent=5 // pred_check
      _
    $region30: #{perceptual_loss.7} parent=5 // pred_check_branch
      %141 = sbr.rel (%p138) target = $region32
    $region31: #{perceptual_loss.7} parent=5 // pred_region
      %s142 = ssub.s32 %s9, 1
      %p143 = scmp.lt.s32.totalorder %s14, 3
      %s144 = scalar_select %p143, %s14, 3
      %s145 = smul.addr %s144, 54
      %s146 = smul.addr %s145, 4
      %s147 = scalar_lea.vmem %s0, %s146
      %p148 = pneg %p35
      %p149 = pneg %p32
      %p150 = pneg %p56
      %p151 = pneg %p53
      %p152 = pneg %p77
      %p153 = pneg %p74
      %p154 = pneg %p103
      %p155 = pneg %p100
      %p156 = scmp.lt.s32.totalorder %s14, 3
      %s157 = scalar_select %p156, %s14, 3
      %s158 = smul.addr %s157, 32
      %s159 = smul.addr %s158, 8
      %s160 = scalar_lea.vmem %s3, %s159
      %p161 = scmp.lt.s32.totalorder %s14, 3
      %s162 = scalar_select %p161, %s14, 3
      %s163 = smul.addr %s162, 54
      %s164 = smul.addr %s163, 4
      %s165 = scalar_lea.vmem %s0, %s164
      %p166 = scmp.lt.s32.totalorder %s14, 3
      %s167 = scalar_select %p166, %s14, 3
      %s168 = smul.addr %s167, 32
      %s169 = smul.addr %s168, 8
      %s170 = scalar_lea.vmem %s3, %s169
      %v172 = vld [vmem:[%s165] sm:$0xf]
      %v173 = vld [vmem:[%s165 + $0x4] sm:$0xf]
      %v174 = vld [vmem:[%s165 + $0xc] sm:$0xf]
      %v175 = vld [vmem:[%s165 + $0x10] sm:$0xf]
      %v176 = vld [vmem:[%s165 + $0x18] sm:$0xf]
      %v177 = vld [vmem:[%s165 + $0x1c] sm:$0xf]
      %v178 = vld [vmem:[%s165 + $0x24] sm:$0xf]
      %v179 = vld [vmem:[%s165 + $0x28] sm:$0xf]
      %v180 = vld [vmem:[%s165 + $0x30] sm:$0xf]
      %v181 = vld [vmem:[%s165 + $0x34] sm:$0xf]
      %v182 = vld [vmem:[%s165 + $0x3c] sm:$0xf]
      %v183 = vld [vmem:[%s165 + $0x40] sm:$0xf]
      %v184 = vld [vmem:[%s165 + $0x48] sm:$0xf]
      %v185 = vld [vmem:[%s165 + $0x4c] sm:$0xf]
      %v186 = vld [vmem:[%s165 + $0x54] sm:$0xf]
      %v187 = vld [vmem:[%s165 + $0x58] sm:$0xf]
      %v188 = vld [vmem:[%s165 + $0x60] sm:$0xf]
      %v189 = vld [vmem:[%s165 + $0x64] sm:$0xf]
      %v190 = vld [vmem:[%s165 + $0x6c] sm:$0xf]
      %v191 = vld [vmem:[%s165 + $0x70] sm:$0xf]
      %v192 = vld [vmem:[%s165 + $0x78] sm:$0xf]
      %v193 = vld [vmem:[%s165 + $0x7c] sm:$0xf]
      %v194 = vld [vmem:[%s165 + $0x84] sm:$0xf]
      %v195 = vld [vmem:[%s165 + $0x88] sm:$0xf]
      %v196 = vld [vmem:[%s165 + $0x90] sm:$0xf]
      %v197 = vld [vmem:[%s165 + $0x94] sm:$0xf]
      %v198 = vld [vmem:[%s165 + $0x9c] sm:$0xf]
      %v199 = vld [vmem:[%s165 + $0xa0] sm:$0xf]
      %v200 = vld [vmem:[%s165 + $0xa8] sm:$0xf]
      %v201 = vld [vmem:[%s165 + $0xac] sm:$0xf]
      %v202 = vld [vmem:[%s165 + $0xb4] sm:$0xf]
      %v203 = vld [vmem:[%s165 + $0xb8] sm:$0xf]
      %v204 = vld [vmem:[%s165 + $0x8] sm:$0x1]
      %v205 = vld [vmem:[%s165 + $0x14] sm:$0x1]
      %v206 = vld [vmem:[%s165 + $0x20] sm:$0x1]
      %v207 = vld [vmem:[%s165 + $0x2c] sm:$0x1]
      %v208 = vld [vmem:[%s165 + $0x38] sm:$0x1]
      %v209 = vld [vmem:[%s165 + $0x44] sm:$0x1]
      %v210 = vld [vmem:[%s165 + $0x50] sm:$0x1]
      %v211 = vld [vmem:[%s165 + $0x5c] sm:$0x1]
      %v212 = vld [vmem:[%s165 + $0x68] sm:$0x1]
      %v213 = vld [vmem:[%s165 + $0x74] sm:$0x1]
      %v214 = vld [vmem:[%s165 + $0x80] sm:$0x1]
      %v215 = vld [vmem:[%s165 + $0x8c] sm:$0x1]
      %v216 = vld [vmem:[%s165 + $0x98] sm:$0x1]
      %v217 = vld [vmem:[%s165 + $0xa4] sm:$0x1]
      %v218 = vld [vmem:[%s165 + $0xb0] sm:$0x1]
      %v219 = vld [vmem:[%s165 + $0xbc] sm:$0x1]
      %vm220 = vsmask.f32 3328
      %vm221 = vsmask.f32 7440
      %vm222 = vmor %vm220, %vm221
      %v224 = vshrl.u32 %v172, 16
      %v226 = vrot.slane %v224, 4
      %v227 = vshll.u32 %v172, 16
      %v229 = vrot.slane %v227, 5
      %v230 = vor.u32 %v226, %v229
      %v231 = vrot.slane %v230, 4
      %v233 = vshll.u32 %v173, 16
      %v235 = vrot.slane %v233, 5
      %v236 = vsel %vm222, %v231, %v235
      %v237 = vshrl.u32 %v173, 16
      %v239 = vrot.slane %v237, 4
      %v240 = vor.u32 %v239, %v235
      %v241 = vrot.slane %v240, 4
      %v243 = vshll.u32 %v204, 16
      %v245 = vrot.slane %v243, 5
      %v246 = vsel %vm222, %v241, %v245
      %v248 = vshrl.u32 %v174, 16
      %v250 = vrot.slane %v248, 4
      %v251 = vshll.u32 %v174, 16
      %v253 = vrot.slane %v251, 5
      %v254 = vor.u32 %v250, %v253
      %v255 = vrot.slane %v254, 4
      %v257 = vshll.u32 %v175, 16
      %v259 = vrot.slane %v257, 5
      %v260 = vsel %vm222, %v255, %v259
      %v261 = vshrl.u32 %v175, 16
      %v263 = vrot.slane %v261, 4
      %v264 = vor.u32 %v263, %v259
      %v265 = vrot.slane %v264, 4
      %v267 = vshll.u32 %v205, 16
      %v269 = vrot.slane %v267, 5
      %v270 = vsel %vm222, %v265, %v269
      %v272 = vshrl.u32 %v176, 16
      %v274 = vrot.slane %v272, 4
      %v275 = vshll.u32 %v176, 16
      %v277 = vrot.slane %v275, 5
      %v278 = vor.u32 %v274, %v277
      %v279 = vrot.slane %v278, 4
      %v281 = vshll.u32 %v177, 16
      %v283 = vrot.slane %v281, 5
      %v284 = vsel %vm222, %v279, %v283
      %v285 = vshrl.u32 %v177, 16
      %v287 = vrot.slane %v285, 4
      %v288 = vor.u32 %v287, %v283
      %v289 = vrot.slane %v288, 4
      %v291 = vshll.u32 %v206, 16
      %v293 = vrot.slane %v291, 5
      %v294 = vsel %vm222, %v289, %v293
      %v296 = vshrl.u32 %v178, 16
      %v298 = vrot.slane %v296, 4
      %v299 = vshll.u32 %v178, 16
      %v301 = vrot.slane %v299, 5
      %v302 = vor.u32 %v298, %v301
      %v303 = vrot.slane %v302, 4
      %v305 = vshll.u32 %v179, 16
      %v307 = vrot.slane %v305, 5
      %v308 = vsel %vm222, %v303, %v307
      %v309 = vshrl.u32 %v179, 16
      %v311 = vrot.slane %v309, 4
      %v312 = vor.u32 %v311, %v307
      %v313 = vrot.slane %v312, 4
      %v315 = vshll.u32 %v207, 16
      %v317 = vrot.slane %v315, 5
      %v318 = vsel %vm222, %v313, %v317
      %v320 = vshrl.u32 %v180, 16
      %v322 = vrot.slane %v320, 4
      %v323 = vshll.u32 %v180, 16
      %v325 = vrot.slane %v323, 5
      %v326 = vor.u32 %v322, %v325
      %v327 = vrot.slane %v326, 4
      %v329 = vshll.u32 %v181, 16
      %v331 = vrot.slane %v329, 5
      %v332 = vsel %vm222, %v327, %v331
      %v333 = vshrl.u32 %v181, 16
      %v335 = vrot.slane %v333, 4
      %v336 = vor.u32 %v335, %v331
      %v337 = vrot.slane %v336, 4
      %v339 = vshll.u32 %v208, 16
      %v341 = vrot.slane %v339, 5
      %v342 = vsel %vm222, %v337, %v341
      %v344 = vshrl.u32 %v182, 16
      %v346 = vrot.slane %v344, 4
      %v347 = vshll.u32 %v182, 16
      %v349 = vrot.slane %v347, 5
      %v350 = vor.u32 %v346, %v349
      %v351 = vrot.slane %v350, 4
      %v353 = vshll.u32 %v183, 16
      %v355 = vrot.slane %v353, 5
      %v356 = vsel %vm222, %v351, %v355
      %v357 = vshrl.u32 %v183, 16
      %v359 = vrot.slane %v357, 4
      %v360 = vor.u32 %v359, %v355
      %v361 = vrot.slane %v360, 4
      %v363 = vshll.u32 %v209, 16
      %v365 = vrot.slane %v363, 5
      %v366 = vsel %vm222, %v361, %v365
      %v368 = vshrl.u32 %v184, 16
      %v370 = vrot.slane %v368, 4
      %v371 = vshll.u32 %v184, 16
      %v373 = vrot.slane %v371, 5
      %v374 = vor.u32 %v370, %v373
      %v375 = vrot.slane %v374, 4
      %v377 = vshll.u32 %v185, 16
      %v379 = vrot.slane %v377, 5
      %v380 = vsel %vm222, %v375, %v379
      %v381 = vshrl.u32 %v185, 16
      %v383 = vrot.slane %v381, 4
      %v384 = vor.u32 %v383, %v379
      %v385 = vrot.slane %v384, 4
      %v387 = vshll.u32 %v210, 16
      %v389 = vrot.slane %v387, 5
      %v390 = vsel %vm222, %v385, %v389
      %v392 = vshrl.u32 %v186, 16
      %v394 = vrot.slane %v392, 4
      %v395 = vshll.u32 %v186, 16
      %v397 = vrot.slane %v395, 5
      %v398 = vor.u32 %v394, %v397
      %v399 = vrot.slane %v398, 4
      %v401 = vshll.u32 %v187, 16
      %v403 = vrot.slane %v401, 5
      %v404 = vsel %vm222, %v399, %v403
      %v405 = vshrl.u32 %v187, 16
      %v407 = vrot.slane %v405, 4
      %v408 = vor.u32 %v407, %v403
      %v409 = vrot.slane %v408, 4
      %v411 = vshll.u32 %v211, 16
      %v413 = vrot.slane %v411, 5
      %v414 = vsel %vm222, %v409, %v413
      %v416 = vshrl.u32 %v188, 16
      %v418 = vrot.slane %v416, 4
      %v419 = vshll.u32 %v188, 16
      %v421 = vrot.slane %v419, 5
      %v422 = vor.u32 %v418, %v421
      %v423 = vrot.slane %v422, 4
      %v425 = vshll.u32 %v189, 16
      %v427 = vrot.slane %v425, 5
      %v428 = vsel %vm222, %v423, %v427
      %v429 = vshrl.u32 %v189, 16
      %v431 = vrot.slane %v429, 4
      %v432 = vor.u32 %v431, %v427
      %v433 = vrot.slane %v432, 4
      %v435 = vshll.u32 %v212, 16
      %v437 = vrot.slane %v435, 5
      %v438 = vsel %vm222, %v433, %v437
      %v440 = vshrl.u32 %v190, 16
      %v442 = vrot.slane %v440, 4
      %v443 = vshll.u32 %v190, 16
      %v445 = vrot.slane %v443, 5
      %v446 = vor.u32 %v442, %v445
      %v447 = vrot.slane %v446, 4
      %v449 = vshll.u32 %v191, 16
      %v451 = vrot.slane %v449, 5
      %v452 = vsel %vm222, %v447, %v451
      %v453 = vshrl.u32 %v191, 16
      %v455 = vrot.slane %v453, 4
      %v456 = vor.u32 %v455, %v451
      %v457 = vrot.slane %v456, 4
      %v459 = vshll.u32 %v213, 16
      %v461 = vrot.slane %v459, 5
      %v462 = vsel %vm222, %v457, %v461
      %v464 = vshrl.u32 %v192, 16
      %v466 = vrot.slane %v464, 4
      %v467 = vshll.u32 %v192, 16
      %v469 = vrot.slane %v467, 5
      %v470 = vor.u32 %v466, %v469
      %v471 = vrot.slane %v470, 4
      %v473 = vshll.u32 %v193, 16
      %v475 = vrot.slane %v473, 5
      %v476 = vsel %vm222, %v471, %v475
      %v477 = vshrl.u32 %v193, 16
      %v479 = vrot.slane %v477, 4
      %v480 = vor.u32 %v479, %v475
      %v481 = vrot.slane %v480, 4
      %v483 = vshll.u32 %v214, 16
      %v485 = vrot.slane %v483, 5
      %v486 = vsel %vm222, %v481, %v485
      %v488 = vshrl.u32 %v194, 16
      %v490 = vrot.slane %v488, 4
      %v491 = vshll.u32 %v194, 16
      %v493 = vrot.slane %v491, 5
      %v494 = vor.u32 %v490, %v493
      %v495 = vrot.slane %v494, 4
      %v497 = vshll.u32 %v195, 16
      %v499 = vrot.slane %v497, 5
      %v500 = vsel %vm222, %v495, %v499
      %v501 = vshrl.u32 %v195, 16
      %v503 = vrot.slane %v501, 4
      %v504 = vor.u32 %v503, %v499
      %v505 = vrot.slane %v504, 4
      %v507 = vshll.u32 %v215, 16
      %v509 = vrot.slane %v507, 5
      %v510 = vsel %vm222, %v505, %v509
      %v512 = vshrl.u32 %v196, 16
      %v514 = vrot.slane %v512, 4
      %v515 = vshll.u32 %v196, 16
      %v517 = vrot.slane %v515, 5
      %v518 = vor.u32 %v514, %v517
      %v519 = vrot.slane %v518, 4
      %v521 = vshll.u32 %v197, 16
      %v523 = vrot.slane %v521, 5
      %v524 = vsel %vm222, %v519, %v523
      %v525 = vshrl.u32 %v197, 16
      %v527 = vrot.slane %v525, 4
      %v528 = vor.u32 %v527, %v523
      %v529 = vrot.slane %v528, 4
      %v531 = vshll.u32 %v216, 16
      %v533 = vrot.slane %v531, 5
      %v534 = vsel %vm222, %v529, %v533
      %v536 = vshrl.u32 %v198, 16
      %v538 = vrot.slane %v536, 4
      %v539 = vshll.u32 %v198, 16
      %v541 = vrot.slane %v539, 5
      %v542 = vor.u32 %v538, %v541
      %v543 = vrot.slane %v542, 4
      %v545 = vshll.u32 %v199, 16
      %v547 = vrot.slane %v545, 5
      %v548 = vsel %vm222, %v543, %v547
      %v549 = vshrl.u32 %v199, 16
      %v551 = vrot.slane %v549, 4
      %v552 = vor.u32 %v551, %v547
      %v553 = vrot.slane %v552, 4
      %v555 = vshll.u32 %v217, 16
      %v557 = vrot.slane %v555, 5
      %v558 = vsel %vm222, %v553, %v557
      %v560 = vshrl.u32 %v200, 16
      %v562 = vrot.slane %v560, 4
      %v563 = vshll.u32 %v200, 16
      %v565 = vrot.slane %v563, 5
      %v566 = vor.u32 %v562, %v565
      %v567 = vrot.slane %v566, 4
      %v569 = vshll.u32 %v201, 16
      %v571 = vrot.slane %v569, 5
      %v572 = vsel %vm222, %v567, %v571
      %v573 = vshrl.u32 %v201, 16
      %v575 = vrot.slane %v573, 4
      %v576 = vor.u32 %v575, %v571
      %v577 = vrot.slane %v576, 4
      %v579 = vshll.u32 %v218, 16
      %v581 = vrot.slane %v579, 5
      %v582 = vsel %vm222, %v577, %v581
      %v584 = vshrl.u32 %v202, 16
      %v586 = vrot.slane %v584, 4
      %v587 = vshll.u32 %v202, 16
      %v589 = vrot.slane %v587, 5
      %v590 = vor.u32 %v586, %v589
      %v591 = vrot.slane %v590, 4
      %v593 = vshll.u32 %v203, 16
      %v595 = vrot.slane %v593, 5
      %v596 = vsel %vm222, %v591, %v595
      %v597 = vshrl.u32 %v203, 16
      %v599 = vrot.slane %v597, 4
      %v600 = vor.u32 %v599, %v595
      %v601 = vrot.slane %v600, 4
      %v603 = vshll.u32 %v219, 16
      %v605 = vrot.slane %v603, 5
      %v606 = vsel %vm222, %v601, %v605
      %v607 = vld [vmem:[%s165] sm:$0xe]
      %v608 = vld [vmem:[%s165 + $0xc] sm:$0xe]
      %v609 = vld [vmem:[%s165 + $0x18] sm:$0xe]
      %v610 = vld [vmem:[%s165 + $0x24] sm:$0xe]
      %v611 = vld [vmem:[%s165 + $0x30] sm:$0xe]
      %v612 = vld [vmem:[%s165 + $0x3c] sm:$0xe]
      %v613 = vld [vmem:[%s165 + $0x48] sm:$0xe]
      %v614 = vld [vmem:[%s165 + $0x54] sm:$0xe]
      %v615 = vld [vmem:[%s165 + $0x60] sm:$0xe]
      %v616 = vld [vmem:[%s165 + $0x6c] sm:$0xe]
      %v617 = vld [vmem:[%s165 + $0x78] sm:$0xe]
      %v618 = vld [vmem:[%s165 + $0x84] sm:$0xe]
      %v619 = vld [vmem:[%s165 + $0x90] sm:$0xe]
      %v620 = vld [vmem:[%s165 + $0x9c] sm:$0xe]
      %v621 = vld [vmem:[%s165 + $0xa8] sm:$0xe]
      %v622 = vld [vmem:[%s165 + $0xb4] sm:$0xe]
      %vm671 = vcmask 1042432
      %vm672 = vcmask 1046532
      %vm673 = vmor %vm671, %vm672
      %v674 = vrot.slane %v607, 5
      %v675 = vrot.slane %v674, 4
      %v676 = vrot.slane %v173, 5
      %v677 = vsel %vm673, %v675, %v676
      %v678 = vrot.slane %v676, 4
      %v679 = vrot.slane %v204, 5
      %v680 = vsel %vm673, %v678, %v679
      %v681 = vrot.slane %v608, 5
      %v682 = vrot.slane %v681, 4
      %v683 = vrot.slane %v175, 5
      %v684 = vsel %vm673, %v682, %v683
      %v685 = vrot.slane %v683, 4
      %v686 = vrot.slane %v205, 5
      %v687 = vsel %vm673, %v685, %v686
      %v688 = vrot.slane %v609, 5
      %v689 = vrot.slane %v688, 4
      %v690 = vrot.slane %v177, 5
      %v691 = vsel %vm673, %v689, %v690
      %v692 = vrot.slane %v690, 4
      %v693 = vrot.slane %v206, 5
      %v694 = vsel %vm673, %v692, %v693
      %v695 = vrot.slane %v610, 5
      %v696 = vrot.slane %v695, 4
      %v697 = vrot.slane %v179, 5
      %v698 = vsel %vm673, %v696, %v697
      %v699 = vrot.slane %v697, 4
      %v700 = vrot.slane %v207, 5
      %v701 = vsel %vm673, %v699, %v700
      %v702 = vrot.slane %v611, 5
      %v703 = vrot.slane %v702, 4
      %v704 = vrot.slane %v181, 5
      %v705 = vsel %vm673, %v703, %v704
      %v706 = vrot.slane %v704, 4
      %v707 = vrot.slane %v208, 5
      %v708 = vsel %vm673, %v706, %v707
      %v709 = vrot.slane %v612, 5
      %v710 = vrot.slane %v709, 4
      %v711 = vrot.slane %v183, 5
      %v712 = vsel %vm673, %v710, %v711
      %v713 = vrot.slane %v711, 4
      %v714 = vrot.slane %v209, 5
      %v715 = vsel %vm673, %v713, %v714
      %v716 = vrot.slane %v613, 5
      %v717 = vrot.slane %v716, 4
      %v718 = vrot.slane %v185, 5
      %v719 = vsel %vm673, %v717, %v718
      %v720 = vrot.slane %v718, 4
      %v721 = vrot.slane %v210, 5
      %v722 = vsel %vm673, %v720, %v721
      %v723 = vrot.slane %v614, 5
      %v724 = vrot.slane %v723, 4
      %v725 = vrot.slane %v187, 5
      %v726 = vsel %vm673, %v724, %v725
      %v727 = vrot.slane %v725, 4
      %v728 = vrot.slane %v211, 5
      %v729 = vsel %vm673, %v727, %v728
      %v730 = vrot.slane %v615, 5
      %v731 = vrot.slane %v730, 4
      %v732 = vrot.slane %v189, 5
      %v733 = vsel %vm673, %v731, %v732
      %v734 = vrot.slane %v732, 4
      %v735 = vrot.slane %v212, 5
      %v736 = vsel %vm673, %v734, %v735
      %v737 = vrot.slane %v616, 5
      %v738 = vrot.slane %v737, 4
      %v739 = vrot.slane %v191, 5
      %v740 = vsel %vm673, %v738, %v739
      %v741 = vrot.slane %v739, 4
      %v742 = vrot.slane %v213, 5
      %v743 = vsel %vm673, %v741, %v742
      %v744 = vrot.slane %v617, 5
      %v745 = vrot.slane %v744, 4
      %v746 = vrot.slane %v193, 5
      %v747 = vsel %vm673, %v745, %v746
      %v748 = vrot.slane %v746, 4
      %v749 = vrot.slane %v214, 5
      %v750 = vsel %vm673, %v748, %v749
      %v751 = vrot.slane %v618, 5
      %v752 = vrot.slane %v751, 4
      %v753 = vrot.slane %v195, 5
      %v754 = vsel %vm673, %v752, %v753
      %v755 = vrot.slane %v753, 4
      %v756 = vrot.slane %v215, 5
      %v757 = vsel %vm673, %v755, %v756
      %v758 = vrot.slane %v619, 5
      %v759 = vrot.slane %v758, 4
      %v760 = vrot.slane %v197, 5
      %v761 = vsel %vm673, %v759, %v760
      %v762 = vrot.slane %v760, 4
      %v763 = vrot.slane %v216, 5
      %v764 = vsel %vm673, %v762, %v763
      %v765 = vrot.slane %v620, 5
      %v766 = vrot.slane %v765, 4
      %v767 = vrot.slane %v199, 5
      %v768 = vsel %vm673, %v766, %v767
      %v769 = vrot.slane %v767, 4
      %v770 = vrot.slane %v217, 5
      %v771 = vsel %vm673, %v769, %v770
      %v772 = vrot.slane %v621, 5
      %v773 = vrot.slane %v772, 4
      %v774 = vrot.slane %v201, 5
      %v775 = vsel %vm673, %v773, %v774
      %v776 = vrot.slane %v774, 4
      %v777 = vrot.slane %v218, 5
      %v778 = vsel %vm673, %v776, %v777
      %v779 = vrot.slane %v622, 5
      %v780 = vrot.slane %v779, 4
      %v781 = vrot.slane %v203, 5
      %v782 = vsel %vm673, %v780, %v781
      %v783 = vrot.slane %v781, 4
      %v784 = vrot.slane %v219, 5
      %v785 = vsel %vm673, %v783, %v784
      %s786 = scalar_lea.vmem %s165, 12
      %v787 = vld [vmem:[%s786] sm:$0xf]
      %v788 = vld [vmem:[%s786 + $0x4] sm:$0xf]
      %v789 = vld [vmem:[%s786 + $0xc] sm:$0xf]
      %v790 = vld [vmem:[%s786 + $0x10] sm:$0xf]
      %v791 = vld [vmem:[%s786 + $0x18] sm:$0xf]
      %v792 = vld [vmem:[%s786 + $0x1c] sm:$0xf]
      %v793 = vld [vmem:[%s786 + $0x24] sm:$0xf]
      %v794 = vld [vmem:[%s786 + $0x28] sm:$0xf]
      %v795 = vld [vmem:[%s786 + $0x30] sm:$0xf]
      %v796 = vld [vmem:[%s786 + $0x34] sm:$0xf]
      %v797 = vld [vmem:[%s786 + $0x3c] sm:$0xf]
      %v798 = vld [vmem:[%s786 + $0x40] sm:$0xf]
      %v799 = vld [vmem:[%s786 + $0x48] sm:$0xf]
      %v800 = vld [vmem:[%s786 + $0x4c] sm:$0xf]
      %v801 = vld [vmem:[%s786 + $0x54] sm:$0xf]
      %v802 = vld [vmem:[%s786 + $0x58] sm:$0xf]
      %v803 = vld [vmem:[%s786 + $0x60] sm:$0xf]
      %v804 = vld [vmem:[%s786 + $0x64] sm:$0xf]
      %v805 = vld [vmem:[%s786 + $0x6c] sm:$0xf]
      %v806 = vld [vmem:[%s786 + $0x70] sm:$0xf]
      %v807 = vld [vmem:[%s786 + $0x78] sm:$0xf]
      %v808 = vld [vmem:[%s786 + $0x7c] sm:$0xf]
      %v809 = vld [vmem:[%s786 + $0x84] sm:$0xf]
      %v810 = vld [vmem:[%s786 + $0x88] sm:$0xf]
      %v811 = vld [vmem:[%s786 + $0x90] sm:$0xf]
      %v812 = vld [vmem:[%s786 + $0x94] sm:$0xf]
      %v813 = vld [vmem:[%s786 + $0x9c] sm:$0xf]
      %v814 = vld [vmem:[%s786 + $0xa0] sm:$0xf]
      %v815 = vld [vmem:[%s786 + $0xa8] sm:$0xf]
      %v816 = vld [vmem:[%s786 + $0xac] sm:$0xf]
      %v817 = vld [vmem:[%s786 + $0xb4] sm:$0xf]
      %v818 = vld [vmem:[%s786 + $0xb8] sm:$0xf]
      %v819 = vld [vmem:[%s786 + $0x8] sm:$0x1]
      %v820 = vld [vmem:[%s786 + $0x14] sm:$0x1]
      %v821 = vld [vmem:[%s786 + $0x20] sm:$0x1]
      %v822 = vld [vmem:[%s786 + $0x2c] sm:$0x1]
      %v823 = vld [vmem:[%s786 + $0x38] sm:$0x1]
      %v824 = vld [vmem:[%s786 + $0x44] sm:$0x1]
      %v825 = vld [vmem:[%s786 + $0x50] sm:$0x1]
      %v826 = vld [vmem:[%s786 + $0x5c] sm:$0x1]
      %v827 = vld [vmem:[%s786 + $0x68] sm:$0x1]
      %v828 = vld [vmem:[%s786 + $0x74] sm:$0x1]
      %v829 = vld [vmem:[%s786 + $0x80] sm:$0x1]
      %v830 = vld [vmem:[%s786 + $0x8c] sm:$0x1]
      %v831 = vld [vmem:[%s786 + $0x98] sm:$0x1]
      %v832 = vld [vmem:[%s786 + $0xa4] sm:$0x1]
      %v833 = vld [vmem:[%s786 + $0xb0] sm:$0x1]
      %v834 = vld [vmem:[%s786 + $0xbc] sm:$0x1]
      %v836 = vshrl.u32 %v787, 16
      %v838 = vrot.slane %v836, 4
      %v839 = vshll.u32 %v787, 16
      %v841 = vrot.slane %v839, 5
      %v842 = vor.u32 %v838, %v841
      %v843 = vrot.slane %v842, 4
      %v845 = vshll.u32 %v788, 16
      %v847 = vrot.slane %v845, 5
      %v848 = vsel %vm222, %v843, %v847
      %v849 = vshrl.u32 %v788, 16
      %v851 = vrot.slane %v849, 4
      %v852 = vor.u32 %v851, %v847
      %v853 = vrot.slane %v852, 4
      %v855 = vshll.u32 %v819, 16
      %v857 = vrot.slane %v855, 5
      %v858 = vsel %vm222, %v853, %v857
      %v860 = vshrl.u32 %v789, 16
      %v862 = vrot.slane %v860, 4
      %v863 = vshll.u32 %v789, 16
      %v865 = vrot.slane %v863, 5
      %v866 = vor.u32 %v862, %v865
      %v867 = vrot.slane %v866, 4
      %v869 = vshll.u32 %v790, 16
      %v871 = vrot.slane %v869, 5
      %v872 = vsel %vm222, %v867, %v871
      %v873 = vshrl.u32 %v790, 16
      %v875 = vrot.slane %v873, 4
      %v876 = vor.u32 %v875, %v871
      %v877 = vrot.slane %v876, 4
      %v879 = vshll.u32 %v820, 16
      %v881 = vrot.slane %v879, 5
      %v882 = vsel %vm222, %v877, %v881
      %v884 = vshrl.u32 %v791, 16
      %v886 = vrot.slane %v884, 4
      %v887 = vshll.u32 %v791, 16
      %v889 = vrot.slane %v887, 5
      %v890 = vor.u32 %v886, %v889
      %v891 = vrot.slane %v890, 4
      %v893 = vshll.u32 %v792, 16
      %v895 = vrot.slane %v893, 5
      %v896 = vsel %vm222, %v891, %v895
      %v897 = vshrl.u32 %v792, 16
      %v899 = vrot.slane %v897, 4
      %v900 = vor.u32 %v899, %v895
      %v901 = vrot.slane %v900, 4
      %v903 = vshll.u32 %v821, 16
      %v905 = vrot.slane %v903, 5
      %v906 = vsel %vm222, %v901, %v905
      %v908 = vshrl.u32 %v793, 16
      %v910 = vrot.slane %v908, 4
      %v911 = vshll.u32 %v793, 16
      %v913 = vrot.slane %v911, 5
      %v914 = vor.u32 %v910, %v913
      %v915 = vrot.slane %v914, 4
      %v917 = vshll.u32 %v794, 16
      %v919 = vrot.slane %v917, 5
      %v920 = vsel %vm222, %v915, %v919
      %v921 = vshrl.u32 %v794, 16
      %v923 = vrot.slane %v921, 4
      %v924 = vor.u32 %v923, %v919
      %v925 = vrot.slane %v924, 4
      %v927 = vshll.u32 %v822, 16
      %v929 = vrot.slane %v927, 5
      %v930 = vsel %vm222, %v925, %v929
      %v932 = vshrl.u32 %v795, 16
      %v934 = vrot.slane %v932, 4
      %v935 = vshll.u32 %v795, 16
      %v937 = vrot.slane %v935, 5
      %v938 = vor.u32 %v934, %v937
      %v939 = vrot.slane %v938, 4
      %v941 = vshll.u32 %v796, 16
      %v943 = vrot.slane %v941, 5
      %v944 = vsel %vm222, %v939, %v943
      %v945 = vshrl.u32 %v796, 16
      %v947 = vrot.slane %v945, 4
      %v948 = vor.u32 %v947, %v943
      %v949 = vrot.slane %v948, 4
      %v951 = vshll.u32 %v823, 16
      %v953 = vrot.slane %v951, 5
      %v954 = vsel %vm222, %v949, %v953
      %v956 = vshrl.u32 %v797, 16
      %v958 = vrot.slane %v956, 4
      %v959 = vshll.u32 %v797, 16
      %v961 = vrot.slane %v959, 5
      %v962 = vor.u32 %v958, %v961
      %v963 = vrot.slane %v962, 4
      %v965 = vshll.u32 %v798, 16
      %v967 = vrot.slane %v965, 5
      %v968 = vsel %vm222, %v963, %v967
      %v969 = vshrl.u32 %v798, 16
      %v971 = vrot.slane %v969, 4
      %v972 = vor.u32 %v971, %v967
      %v973 = vrot.slane %v972, 4
      %v975 = vshll.u32 %v824, 16
      %v977 = vrot.slane %v975, 5
      %v978 = vsel %vm222, %v973, %v977
      %v980 = vshrl.u32 %v799, 16
      %v982 = vrot.slane %v980, 4
      %v983 = vshll.u32 %v799, 16
      %v985 = vrot.slane %v983, 5
      %v986 = vor.u32 %v982, %v985
      %v987 = vrot.slane %v986, 4
      %v989 = vshll.u32 %v800, 16
      %v991 = vrot.slane %v989, 5
      %v992 = vsel %vm222, %v987, %v991
      %v993 = vshrl.u32 %v800, 16
      %v995 = vrot.slane %v993, 4
      %v996 = vor.u32 %v995, %v991
      %v997 = vrot.slane %v996, 4
      %v999 = vshll.u32 %v825, 16
      %v1001 = vrot.slane %v999, 5
      %v1002 = vsel %vm222, %v997, %v1001
      %v1004 = vshrl.u32 %v801, 16
      %v1006 = vrot.slane %v1004, 4
      %v1007 = vshll.u32 %v801, 16
      %v1009 = vrot.slane %v1007, 5
      %v1010 = vor.u32 %v1006, %v1009
      %v1011 = vrot.slane %v1010, 4
      %v1013 = vshll.u32 %v802, 16
      %v1015 = vrot.slane %v1013, 5
      %v1016 = vsel %vm222, %v1011, %v1015
      %v1017 = vshrl.u32 %v802, 16
      %v1019 = vrot.slane %v1017, 4
      %v1020 = vor.u32 %v1019, %v1015
      %v1021 = vrot.slane %v1020, 4
      %v1023 = vshll.u32 %v826, 16
      %v1025 = vrot.slane %v1023, 5
      %v1026 = vsel %vm222, %v1021, %v1025
      %v1028 = vshrl.u32 %v803, 16
      %v1030 = vrot.slane %v1028, 4
      %v1031 = vshll.u32 %v803, 16
      %v1033 = vrot.slane %v1031, 5
      %v1034 = vor.u32 %v1030, %v1033
      %v1035 = vrot.slane %v1034, 4
      %v1037 = vshll.u32 %v804, 16
      %v1039 = vrot.slane %v1037, 5
      %v1040 = vsel %vm222, %v1035, %v1039
      %v1041 = vshrl.u32 %v804, 16
      %v1043 = vrot.slane %v1041, 4
      %v1044 = vor.u32 %v1043, %v1039
      %v1045 = vrot.slane %v1044, 4
      %v1047 = vshll.u32 %v827, 16
      %v1049 = vrot.slane %v1047, 5
      %v1050 = vsel %vm222, %v1045, %v1049
      %v1052 = vshrl.u32 %v805, 16
      %v1054 = vrot.slane %v1052, 4
      %v1055 = vshll.u32 %v805, 16
      %v1057 = vrot.slane %v1055, 5
      %v1058 = vor.u32 %v1054, %v1057
      %v1059 = vrot.slane %v1058, 4
      %v1061 = vshll.u32 %v806, 16
      %v1063 = vrot.slane %v1061, 5
      %v1064 = vsel %vm222, %v1059, %v1063
      %v1065 = vshrl.u32 %v806, 16
      %v1067 = vrot.slane %v1065, 4
      %v1068 = vor.u32 %v1067, %v1063
      %v1069 = vrot.slane %v1068, 4
      %v1071 = vshll.u32 %v828, 16
      %v1073 = vrot.slane %v1071, 5
      %v1074 = vsel %vm222, %v1069, %v1073
      %v1076 = vshrl.u32 %v807, 16
      %v1078 = vrot.slane %v1076, 4
      %v1079 = vshll.u32 %v807, 16
      %v1081 = vrot.slane %v1079, 5
      %v1082 = vor.u32 %v1078, %v1081
      %v1083 = vrot.slane %v1082, 4
      %v1085 = vshll.u32 %v808, 16
      %v1087 = vrot.slane %v1085, 5
      %v1088 = vsel %vm222, %v1083, %v1087
      %v1089 = vshrl.u32 %v808, 16
      %v1091 = vrot.slane %v1089, 4
      %v1092 = vor.u32 %v1091, %v1087
      %v1093 = vrot.slane %v1092, 4
      %v1095 = vshll.u32 %v829, 16
      %v1097 = vrot.slane %v1095, 5
      %v1098 = vsel %vm222, %v1093, %v1097
      %v1100 = vshrl.u32 %v809, 16
      %v1102 = vrot.slane %v1100, 4
      %v1103 = vshll.u32 %v809, 16
      %v1105 = vrot.slane %v1103, 5
      %v1106 = vor.u32 %v1102, %v1105
      %v1107 = vrot.slane %v1106, 4
      %v1109 = vshll.u32 %v810, 16
      %v1111 = vrot.slane %v1109, 5
      %v1112 = vsel %vm222, %v1107, %v1111
      %v1113 = vshrl.u32 %v810, 16
      %v1115 = vrot.slane %v1113, 4
      %v1116 = vor.u32 %v1115, %v1111
      %v1117 = vrot.slane %v1116, 4
      %v1119 = vshll.u32 %v830, 16
      %v1121 = vrot.slane %v1119, 5
      %v1122 = vsel %vm222, %v1117, %v1121
      %v1124 = vshrl.u32 %v811, 16
      %v1126 = vrot.slane %v1124, 4
      %v1127 = vshll.u32 %v811, 16
      %v1129 = vrot.slane %v1127, 5
      %v1130 = vor.u32 %v1126, %v1129
      %v1131 = vrot.slane %v1130, 4
      %v1133 = vshll.u32 %v812, 16
      %v1135 = vrot.slane %v1133, 5
      %v1136 = vsel %vm222, %v1131, %v1135
      %v1137 = vshrl.u32 %v812, 16
      %v1139 = vrot.slane %v1137, 4
      %v1140 = vor.u32 %v1139, %v1135
      %v1141 = vrot.slane %v1140, 4
      %v1143 = vshll.u32 %v831, 16
      %v1145 = vrot.slane %v1143, 5
      %v1146 = vsel %vm222, %v1141, %v1145
      %v1148 = vshrl.u32 %v813, 16
      %v1150 = vrot.slane %v1148, 4
      %v1151 = vshll.u32 %v813, 16
      %v1153 = vrot.slane %v1151, 5
      %v1154 = vor.u32 %v1150, %v1153
      %v1155 = vrot.slane %v1154, 4
      %v1157 = vshll.u32 %v814, 16
      %v1159 = vrot.slane %v1157, 5
      %v1160 = vsel %vm222, %v1155, %v1159
      %v1161 = vshrl.u32 %v814, 16
      %v1163 = vrot.slane %v1161, 4
      %v1164 = vor.u32 %v1163, %v1159
      %v1165 = vrot.slane %v1164, 4
      %v1167 = vshll.u32 %v832, 16
      %v1169 = vrot.slane %v1167, 5
      %v1170 = vsel %vm222, %v1165, %v1169
      %v1172 = vshrl.u32 %v815, 16
      %v1174 = vrot.slane %v1172, 4
      %v1175 = vshll.u32 %v815, 16
      %v1177 = vrot.slane %v1175, 5
      %v1178 = vor.u32 %v1174, %v1177
      %v1179 = vrot.slane %v1178, 4
      %v1181 = vshll.u32 %v816, 16
      %v1183 = vrot.slane %v1181, 5
      %v1184 = vsel %vm222, %v1179, %v1183
      %v1185 = vshrl.u32 %v816, 16
      %v1187 = vrot.slane %v1185, 4
      %v1188 = vor.u32 %v1187, %v1183
      %v1189 = vrot.slane %v1188, 4
      %v1191 = vshll.u32 %v833, 16
      %v1193 = vrot.slane %v1191, 5
      %v1194 = vsel %vm222, %v1189, %v1193
      %v1196 = vshrl.u32 %v817, 16
      %v1198 = vrot.slane %v1196, 4
      %v1199 = vshll.u32 %v817, 16
      %v1201 = vrot.slane %v1199, 5
      %v1202 = vor.u32 %v1198, %v1201
      %v1203 = vrot.slane %v1202, 4
      %v1205 = vshll.u32 %v818, 16
      %v1207 = vrot.slane %v1205, 5
      %v1208 = vsel %vm222, %v1203, %v1207
      %v1209 = vshrl.u32 %v818, 16
      %v1211 = vrot.slane %v1209, 4
      %v1212 = vor.u32 %v1211, %v1207
      %v1213 = vrot.slane %v1212, 4
      %v1215 = vshll.u32 %v834, 16
      %v1217 = vrot.slane %v1215, 5
      %v1218 = vsel %vm222, %v1213, %v1217
      %v1219 = vld [vmem:[%s786] sm:$0xe]
      %v1220 = vld [vmem:[%s786 + $0xc] sm:$0xe]
      %v1221 = vld [vmem:[%s786 + $0x18] sm:$0xe]
      %v1222 = vld [vmem:[%s786 + $0x24] sm:$0xe]
      %v1223 = vld [vmem:[%s786 + $0x30] sm:$0xe]
      %v1224 = vld [vmem:[%s786 + $0x3c] sm:$0xe]
      %v1225 = vld [vmem:[%s786 + $0x48] sm:$0xe]
      %v1226 = vld [vmem:[%s786 + $0x54] sm:$0xe]
      %v1227 = vld [vmem:[%s786 + $0x60] sm:$0xe]
      %v1228 = vld [vmem:[%s786 + $0x6c] sm:$0xe]
      %v1229 = vld [vmem:[%s786 + $0x78] sm:$0xe]
      %v1230 = vld [vmem:[%s786 + $0x84] sm:$0xe]
      %v1231 = vld [vmem:[%s786 + $0x90] sm:$0xe]
      %v1232 = vld [vmem:[%s786 + $0x9c] sm:$0xe]
      %v1233 = vld [vmem:[%s786 + $0xa8] sm:$0xe]
      %v1234 = vld [vmem:[%s786 + $0xb4] sm:$0xe]
      %v1283 = vrot.slane %v1219, 5
      %v1284 = vrot.slane %v1283, 4
      %v1285 = vrot.slane %v788, 5
      %v1286 = vsel %vm673, %v1284, %v1285
      %v1287 = vrot.slane %v1285, 4
      %v1288 = vrot.slane %v819, 5
      %v1289 = vsel %vm673, %v1287, %v1288
      %v1290 = vrot.slane %v1220, 5
      %v1291 = vrot.slane %v1290, 4
      %v1292 = vrot.slane %v790, 5
      %v1293 = vsel %vm673, %v1291, %v1292
      %v1294 = vrot.slane %v1292, 4
      %v1295 = vrot.slane %v820, 5
      %v1296 = vsel %vm673, %v1294, %v1295
      %v1297 = vrot.slane %v1221, 5
      %v1298 = vrot.slane %v1297, 4
      %v1299 = vrot.slane %v792, 5
      %v1300 = vsel %vm673, %v1298, %v1299
      %v1301 = vrot.slane %v1299, 4
      %v1302 = vrot.slane %v821, 5
      %v1303 = vsel %vm673, %v1301, %v1302
      %v1304 = vrot.slane %v1222, 5
      %v1305 = vrot.slane %v1304, 4
      %v1306 = vrot.slane %v794, 5
      %v1307 = vsel %vm673, %v1305, %v1306
      %v1308 = vrot.slane %v1306, 4
      %v1309 = vrot.slane %v822, 5
      %v1310 = vsel %vm673, %v1308, %v1309
      %v1311 = vrot.slane %v1223, 5
      %v1312 = vrot.slane %v1311, 4
      %v1313 = vrot.slane %v796, 5
      %v1314 = vsel %vm673, %v1312, %v1313
      %v1315 = vrot.slane %v1313, 4
      %v1316 = vrot.slane %v823, 5
      %v1317 = vsel %vm673, %v1315, %v1316
      %v1318 = vrot.slane %v1224, 5
      %v1319 = vrot.slane %v1318, 4
      %v1320 = vrot.slane %v798, 5
      %v1321 = vsel %vm673, %v1319, %v1320
      %v1322 = vrot.slane %v1320, 4
      %v1323 = vrot.slane %v824, 5
      %v1324 = vsel %vm673, %v1322, %v1323
      %v1325 = vrot.slane %v1225, 5
      %v1326 = vrot.slane %v1325, 4
      %v1327 = vrot.slane %v800, 5
      %v1328 = vsel %vm673, %v1326, %v1327
      %v1329 = vrot.slane %v1327, 4
      %v1330 = vrot.slane %v825, 5
      %v1331 = vsel %vm673, %v1329, %v1330
      %v1332 = vrot.slane %v1226, 5
      %v1333 = vrot.slane %v1332, 4
      %v1334 = vrot.slane %v802, 5
      %v1335 = vsel %vm673, %v1333, %v1334
      %v1336 = vrot.slane %v1334, 4
      %v1337 = vrot.slane %v826, 5
      %v1338 = vsel %vm673, %v1336, %v1337
      %v1339 = vrot.slane %v1227, 5
      %v1340 = vrot.slane %v1339, 4
      %v1341 = vrot.slane %v804, 5
      %v1342 = vsel %vm673, %v1340, %v1341
      %v1343 = vrot.slane %v1341, 4
      %v1344 = vrot.slane %v827, 5
      %v1345 = vsel %vm673, %v1343, %v1344
      %v1346 = vrot.slane %v1228, 5
      %v1347 = vrot.slane %v1346, 4
      %v1348 = vrot.slane %v806, 5
      %v1349 = vsel %vm673, %v1347, %v1348
      %v1350 = vrot.slane %v1348, 4
      %v1351 = vrot.slane %v828, 5
      %v1352 = vsel %vm673, %v1350, %v1351
      %v1353 = vrot.slane %v1229, 5
      %v1354 = vrot.slane %v1353, 4
      %v1355 = vrot.slane %v808, 5
      %v1356 = vsel %vm673, %v1354, %v1355
      %v1357 = vrot.slane %v1355, 4
      %v1358 = vrot.slane %v829, 5
      %v1359 = vsel %vm673, %v1357, %v1358
      %v1360 = vrot.slane %v1230, 5
      %v1361 = vrot.slane %v1360, 4
      %v1362 = vrot.slane %v810, 5
      %v1363 = vsel %vm673, %v1361, %v1362
      %v1364 = vrot.slane %v1362, 4
      %v1365 = vrot.slane %v830, 5
      %v1366 = vsel %vm673, %v1364, %v1365
      %v1367 = vrot.slane %v1231, 5
      %v1368 = vrot.slane %v1367, 4
      %v1369 = vrot.slane %v812, 5
      %v1370 = vsel %vm673, %v1368, %v1369
      %v1371 = vrot.slane %v1369, 4
      %v1372 = vrot.slane %v831, 5
      %v1373 = vsel %vm673, %v1371, %v1372
      %v1374 = vrot.slane %v1232, 5
      %v1375 = vrot.slane %v1374, 4
      %v1376 = vrot.slane %v814, 5
      %v1377 = vsel %vm673, %v1375, %v1376
      %v1378 = vrot.slane %v1376, 4
      %v1379 = vrot.slane %v832, 5
      %v1380 = vsel %vm673, %v1378, %v1379
      %v1381 = vrot.slane %v1233, 5
      %v1382 = vrot.slane %v1381, 4
      %v1383 = vrot.slane %v816, 5
      %v1384 = vsel %vm673, %v1382, %v1383
      %v1385 = vrot.slane %v1383, 4
      %v1386 = vrot.slane %v833, 5
      %v1387 = vsel %vm673, %v1385, %v1386
      %v1388 = vrot.slane %v1234, 5
      %v1389 = vrot.slane %v1388, 4
      %v1390 = vrot.slane %v818, 5
      %v1391 = vsel %vm673, %v1389, %v1390
      %v1392 = vrot.slane %v1390, 4
      %v1393 = vrot.slane %v834, 5
      %v1394 = vsel %vm673, %v1392, %v1393
      %s1395 = scalar_lea.vmem %s165, 24
      %v1396 = vld [vmem:[%s1395] sm:$0xf]
      %v1397 = vld [vmem:[%s1395 + $0x4] sm:$0xf]
      %v1398 = vld [vmem:[%s1395 + $0xc] sm:$0xf]
      %v1399 = vld [vmem:[%s1395 + $0x10] sm:$0xf]
      %v1400 = vld [vmem:[%s1395 + $0x18] sm:$0xf]
      %v1401 = vld [vmem:[%s1395 + $0x1c] sm:$0xf]
      %v1402 = vld [vmem:[%s1395 + $0x24] sm:$0xf]
      %v1403 = vld [vmem:[%s1395 + $0x28] sm:$0xf]
      %v1404 = vld [vmem:[%s1395 + $0x30] sm:$0xf]
      %v1405 = vld [vmem:[%s1395 + $0x34] sm:$0xf]
      %v1406 = vld [vmem:[%s1395 + $0x3c] sm:$0xf]
      %v1407 = vld [vmem:[%s1395 + $0x40] sm:$0xf]
      %v1408 = vld [vmem:[%s1395 + $0x48] sm:$0xf]
      %v1409 = vld [vmem:[%s1395 + $0x4c] sm:$0xf]
      %v1410 = vld [vmem:[%s1395 + $0x54] sm:$0xf]
      %v1411 = vld [vmem:[%s1395 + $0x58] sm:$0xf]
      %v1412 = vld [vmem:[%s1395 + $0x60] sm:$0xf]
      %v1413 = vld [vmem:[%s1395 + $0x64] sm:$0xf]
      %v1414 = vld [vmem:[%s1395 + $0x6c] sm:$0xf]
      %v1415 = vld [vmem:[%s1395 + $0x70] sm:$0xf]
      %v1416 = vld [vmem:[%s1395 + $0x78] sm:$0xf]
      %v1417 = vld [vmem:[%s1395 + $0x7c] sm:$0xf]
      %v1418 = vld [vmem:[%s1395 + $0x84] sm:$0xf]
      %v1419 = vld [vmem:[%s1395 + $0x88] sm:$0xf]
      %v1420 = vld [vmem:[%s1395 + $0x90] sm:$0xf]
      %v1421 = vld [vmem:[%s1395 + $0x94] sm:$0xf]
      %v1422 = vld [vmem:[%s1395 + $0x9c] sm:$0xf]
      %v1423 = vld [vmem:[%s1395 + $0xa0] sm:$0xf]
      %v1424 = vld [vmem:[%s1395 + $0xa8] sm:$0xf]
      %v1425 = vld [vmem:[%s1395 + $0xac] sm:$0xf]
      %v1426 = vld [vmem:[%s1395 + $0xb4] sm:$0xf]
      %v1427 = vld [vmem:[%s1395 + $0xb8] sm:$0xf]
      %v1428 = vld [vmem:[%s1395 + $0x8] sm:$0x1]
      %v1429 = vld [vmem:[%s1395 + $0x14] sm:$0x1]
      %v1430 = vld [vmem:[%s1395 + $0x20] sm:$0x1]
      %v1431 = vld [vmem:[%s1395 + $0x2c] sm:$0x1]
      %v1432 = vld [vmem:[%s1395 + $0x38] sm:$0x1]
      %v1433 = vld [vmem:[%s1395 + $0x44] sm:$0x1]
      %v1434 = vld [vmem:[%s1395 + $0x50] sm:$0x1]
      %v1435 = vld [vmem:[%s1395 + $0x5c] sm:$0x1]
      %v1436 = vld [vmem:[%s1395 + $0x68] sm:$0x1]
      %v1437 = vld [vmem:[%s1395 + $0x74] sm:$0x1]
      %v1438 = vld [vmem:[%s1395 + $0x80] sm:$0x1]
      %v1439 = vld [vmem:[%s1395 + $0x8c] sm:$0x1]
      %v1440 = vld [vmem:[%s1395 + $0x98] sm:$0x1]
      %v1441 = vld [vmem:[%s1395 + $0xa4] sm:$0x1]
      %v1442 = vld [vmem:[%s1395 + $0xb0] sm:$0x1]
      %v1443 = vld [vmem:[%s1395 + $0xbc] sm:$0x1]
      %v1445 = vshrl.u32 %v1396, 16
      %v1447 = vrot.slane %v1445, 4
      %v1448 = vshll.u32 %v1396, 16
      %v1450 = vrot.slane %v1448, 5
      %v1451 = vor.u32 %v1447, %v1450
      %v1452 = vrot.slane %v1451, 4
      %v1454 = vshll.u32 %v1397, 16
      %v1456 = vrot.slane %v1454, 5
      %v1457 = vsel %vm222, %v1452, %v1456
      %v1458 = vshrl.u32 %v1397, 16
      %v1460 = vrot.slane %v1458, 4
      %v1461 = vor.u32 %v1460, %v1456
      %v1462 = vrot.slane %v1461, 4
      %v1464 = vshll.u32 %v1428, 16
      %v1466 = vrot.slane %v1464, 5
      %v1467 = vsel %vm222, %v1462, %v1466
      %v1469 = vshrl.u32 %v1398, 16
      %v1471 = vrot.slane %v1469, 4
      %v1472 = vshll.u32 %v1398, 16
      %v1474 = vrot.slane %v1472, 5
      %v1475 = vor.u32 %v1471, %v1474
      %v1476 = vrot.slane %v1475, 4
      %v1478 = vshll.u32 %v1399, 16
      %v1480 = vrot.slane %v1478, 5
      %v1481 = vsel %vm222, %v1476, %v1480
      %v1482 = vshrl.u32 %v1399, 16
      %v1484 = vrot.slane %v1482, 4
      %v1485 = vor.u32 %v1484, %v1480
      %v1486 = vrot.slane %v1485, 4
      %v1488 = vshll.u32 %v1429, 16
      %v1490 = vrot.slane %v1488, 5
      %v1491 = vsel %vm222, %v1486, %v1490
      %v1493 = vshrl.u32 %v1400, 16
      %v1495 = vrot.slane %v1493, 4
      %v1496 = vshll.u32 %v1400, 16
      %v1498 = vrot.slane %v1496, 5
      %v1499 = vor.u32 %v1495, %v1498
      %v1500 = vrot.slane %v1499, 4
      %v1502 = vshll.u32 %v1401, 16
      %v1504 = vrot.slane %v1502, 5
      %v1505 = vsel %vm222, %v1500, %v1504
      %v1506 = vshrl.u32 %v1401, 16
      %v1508 = vrot.slane %v1506, 4
      %v1509 = vor.u32 %v1508, %v1504
      %v1510 = vrot.slane %v1509, 4
      %v1512 = vshll.u32 %v1430, 16
      %v1514 = vrot.slane %v1512, 5
      %v1515 = vsel %vm222, %v1510, %v1514
      %v1517 = vshrl.u32 %v1402, 16
      %v1519 = vrot.slane %v1517, 4
      %v1520 = vshll.u32 %v1402, 16
      %v1522 = vrot.slane %v1520, 5
      %v1523 = vor.u32 %v1519, %v1522
      %v1524 = vrot.slane %v1523, 4
      %v1526 = vshll.u32 %v1403, 16
      %v1528 = vrot.slane %v1526, 5
      %v1529 = vsel %vm222, %v1524, %v1528
      %v1530 = vshrl.u32 %v1403, 16
      %v1532 = vrot.slane %v1530, 4
      %v1533 = vor.u32 %v1532, %v1528
      %v1534 = vrot.slane %v1533, 4
      %v1536 = vshll.u32 %v1431, 16
      %v1538 = vrot.slane %v1536, 5
      %v1539 = vsel %vm222, %v1534, %v1538
      %v1541 = vshrl.u32 %v1404, 16
      %v1543 = vrot.slane %v1541, 4
      %v1544 = vshll.u32 %v1404, 16
      %v1546 = vrot.slane %v1544, 5
      %v1547 = vor.u32 %v1543, %v1546
      %v1548 = vrot.slane %v1547, 4
      %v1550 = vshll.u32 %v1405, 16
      %v1552 = vrot.slane %v1550, 5
      %v1553 = vsel %vm222, %v1548, %v1552
      %v1554 = vshrl.u32 %v1405, 16
      %v1556 = vrot.slane %v1554, 4
      %v1557 = vor.u32 %v1556, %v1552
      %v1558 = vrot.slane %v1557, 4
      %v1560 = vshll.u32 %v1432, 16
      %v1562 = vrot.slane %v1560, 5
      %v1563 = vsel %vm222, %v1558, %v1562
      %v1565 = vshrl.u32 %v1406, 16
      %v1567 = vrot.slane %v1565, 4
      %v1568 = vshll.u32 %v1406, 16
      %v1570 = vrot.slane %v1568, 5
      %v1571 = vor.u32 %v1567, %v1570
      %v1572 = vrot.slane %v1571, 4
      %v1574 = vshll.u32 %v1407, 16
      %v1576 = vrot.slane %v1574, 5
      %v1577 = vsel %vm222, %v1572, %v1576
      %v1578 = vshrl.u32 %v1407, 16
      %v1580 = vrot.slane %v1578, 4
      %v1581 = vor.u32 %v1580, %v1576
      %v1582 = vrot.slane %v1581, 4
      %v1584 = vshll.u32 %v1433, 16
      %v1586 = vrot.slane %v1584, 5
      %v1587 = vsel %vm222, %v1582, %v1586
      %v1589 = vshrl.u32 %v1408, 16
      %v1591 = vrot.slane %v1589, 4
      %v1592 = vshll.u32 %v1408, 16
      %v1594 = vrot.slane %v1592, 5
      %v1595 = vor.u32 %v1591, %v1594
      %v1596 = vrot.slane %v1595, 4
      %v1598 = vshll.u32 %v1409, 16
      %v1600 = vrot.slane %v1598, 5
      %v1601 = vsel %vm222, %v1596, %v1600
      %v1602 = vshrl.u32 %v1409, 16
      %v1604 = vrot.slane %v1602, 4
      %v1605 = vor.u32 %v1604, %v1600
      %v1606 = vrot.slane %v1605, 4
      %v1608 = vshll.u32 %v1434, 16
      %v1610 = vrot.slane %v1608, 5
      %v1611 = vsel %vm222, %v1606, %v1610
      %v1613 = vshrl.u32 %v1410, 16
      %v1615 = vrot.slane %v1613, 4
      %v1616 = vshll.u32 %v1410, 16
      %v1618 = vrot.slane %v1616, 5
      %v1619 = vor.u32 %v1615, %v1618
      %v1620 = vrot.slane %v1619, 4
      %v1622 = vshll.u32 %v1411, 16
      %v1624 = vrot.slane %v1622, 5
      %v1625 = vsel %vm222, %v1620, %v1624
      %v1626 = vshrl.u32 %v1411, 16
      %v1628 = vrot.slane %v1626, 4
      %v1629 = vor.u32 %v1628, %v1624
      %v1630 = vrot.slane %v1629, 4
      %v1632 = vshll.u32 %v1435, 16
      %v1634 = vrot.slane %v1632, 5
      %v1635 = vsel %vm222, %v1630, %v1634
      %v1637 = vshrl.u32 %v1412, 16
      %v1639 = vrot.slane %v1637, 4
      %v1640 = vshll.u32 %v1412, 16
      %v1642 = vrot.slane %v1640, 5
      %v1643 = vor.u32 %v1639, %v1642
      %v1644 = vrot.slane %v1643, 4
      %v1646 = vshll.u32 %v1413, 16
      %v1648 = vrot.slane %v1646, 5
      %v1649 = vsel %vm222, %v1644, %v1648
      %v1650 = vshrl.u32 %v1413, 16
      %v1652 = vrot.slane %v1650, 4
      %v1653 = vor.u32 %v1652, %v1648
      %v1654 = vrot.slane %v1653, 4
      %v1656 = vshll.u32 %v1436, 16
      %v1658 = vrot.slane %v1656, 5
      %v1659 = vsel %vm222, %v1654, %v1658
      %v1661 = vshrl.u32 %v1414, 16
      %v1663 = vrot.slane %v1661, 4
      %v1664 = vshll.u32 %v1414, 16
      %v1666 = vrot.slane %v1664, 5
      %v1667 = vor.u32 %v1663, %v1666
      %v1668 = vrot.slane %v1667, 4
      %v1670 = vshll.u32 %v1415, 16
      %v1672 = vrot.slane %v1670, 5
      %v1673 = vsel %vm222, %v1668, %v1672
      %v1674 = vshrl.u32 %v1415, 16
      %v1676 = vrot.slane %v1674, 4
      %v1677 = vor.u32 %v1676, %v1672
      %v1678 = vrot.slane %v1677, 4
      %v1680 = vshll.u32 %v1437, 16
      %v1682 = vrot.slane %v1680, 5
      %v1683 = vsel %vm222, %v1678, %v1682
      %v1685 = vshrl.u32 %v1416, 16
      %v1687 = vrot.slane %v1685, 4
      %v1688 = vshll.u32 %v1416, 16
      %v1690 = vrot.slane %v1688, 5
      %v1691 = vor.u32 %v1687, %v1690
      %v1692 = vrot.slane %v1691, 4
      %v1694 = vshll.u32 %v1417, 16
      %v1696 = vrot.slane %v1694, 5
      %v1697 = vsel %vm222, %v1692, %v1696
      %v1698 = vshrl.u32 %v1417, 16
      %v1700 = vrot.slane %v1698, 4
      %v1701 = vor.u32 %v1700, %v1696
      %v1702 = vrot.slane %v1701, 4
      %v1704 = vshll.u32 %v1438, 16
      %v1706 = vrot.slane %v1704, 5
      %v1707 = vsel %vm222, %v1702, %v1706
      %v1709 = vshrl.u32 %v1418, 16
      %v1711 = vrot.slane %v1709, 4
      %v1712 = vshll.u32 %v1418, 16
      %v1714 = vrot.slane %v1712, 5
      %v1715 = vor.u32 %v1711, %v1714
      %v1716 = vrot.slane %v1715, 4
      %v1718 = vshll.u32 %v1419, 16
      %v1720 = vrot.slane %v1718, 5
      %v1721 = vsel %vm222, %v1716, %v1720
      %v1722 = vshrl.u32 %v1419, 16
      %v1724 = vrot.slane %v1722, 4
      %v1725 = vor.u32 %v1724, %v1720
      %v1726 = vrot.slane %v1725, 4
      %v1728 = vshll.u32 %v1439, 16
      %v1730 = vrot.slane %v1728, 5
      %v1731 = vsel %vm222, %v1726, %v1730
      %v1733 = vshrl.u32 %v1420, 16
      %v1735 = vrot.slane %v1733, 4
      %v1736 = vshll.u32 %v1420, 16
      %v1738 = vrot.slane %v1736, 5
      %v1739 = vor.u32 %v1735, %v1738
      %v1740 = vrot.slane %v1739, 4
      %v1742 = vshll.u32 %v1421, 16
      %v1744 = vrot.slane %v1742, 5
      %v1745 = vsel %vm222, %v1740, %v1744
      %v1746 = vshrl.u32 %v1421, 16
      %v1748 = vrot.slane %v1746, 4
      %v1749 = vor.u32 %v1748, %v1744
      %v1750 = vrot.slane %v1749, 4
      %v1752 = vshll.u32 %v1440, 16
      %v1754 = vrot.slane %v1752, 5
      %v1755 = vsel %vm222, %v1750, %v1754
      %v1757 = vshrl.u32 %v1422, 16
      %v1759 = vrot.slane %v1757, 4
      %v1760 = vshll.u32 %v1422, 16
      %v1762 = vrot.slane %v1760, 5
      %v1763 = vor.u32 %v1759, %v1762
      %v1764 = vrot.slane %v1763, 4
      %v1766 = vshll.u32 %v1423, 16
      %v1768 = vrot.slane %v1766, 5
      %v1769 = vsel %vm222, %v1764, %v1768
      %v1770 = vshrl.u32 %v1423, 16
      %v1772 = vrot.slane %v1770, 4
      %v1773 = vor.u32 %v1772, %v1768
      %v1774 = vrot.slane %v1773, 4
      %v1776 = vshll.u32 %v1441, 16
      %v1778 = vrot.slane %v1776, 5
      %v1779 = vsel %vm222, %v1774, %v1778
      %v1781 = vshrl.u32 %v1424, 16
      %v1783 = vrot.slane %v1781, 4
      %v1784 = vshll.u32 %v1424, 16
      %v1786 = vrot.slane %v1784, 5
      %v1787 = vor.u32 %v1783, %v1786
      %v1788 = vrot.slane %v1787, 4
      %v1790 = vshll.u32 %v1425, 16
      %v1792 = vrot.slane %v1790, 5
      %v1793 = vsel %vm222, %v1788, %v1792
      %v1794 = vshrl.u32 %v1425, 16
      %v1796 = vrot.slane %v1794, 4
      %v1797 = vor.u32 %v1796, %v1792
      %v1798 = vrot.slane %v1797, 4
      %v1800 = vshll.u32 %v1442, 16
      %v1802 = vrot.slane %v1800, 5
      %v1803 = vsel %vm222, %v1798, %v1802
      %v1805 = vshrl.u32 %v1426, 16
      %v1807 = vrot.slane %v1805, 4
      %v1808 = vshll.u32 %v1426, 16
      %v1810 = vrot.slane %v1808, 5
      %v1811 = vor.u32 %v1807, %v1810
      %v1812 = vrot.slane %v1811, 4
      %v1814 = vshll.u32 %v1427, 16
      %v1816 = vrot.slane %v1814, 5
      %v1817 = vsel %vm222, %v1812, %v1816
      %v1818 = vshrl.u32 %v1427, 16
      %v1820 = vrot.slane %v1818, 4
      %v1821 = vor.u32 %v1820, %v1816
      %v1822 = vrot.slane %v1821, 4
      %v1824 = vshll.u32 %v1443, 16
      %v1826 = vrot.slane %v1824, 5
      %v1827 = vsel %vm222, %v1822, %v1826
      %v1828 = vld [vmem:[%s1395] sm:$0xe]
      %v1829 = vld [vmem:[%s1395 + $0xc] sm:$0xe]
      %v1830 = vld [vmem:[%s1395 + $0x18] sm:$0xe]
      %v1831 = vld [vmem:[%s1395 + $0x24] sm:$0xe]
      %v1832 = vld [vmem:[%s1395 + $0x30] sm:$0xe]
      %v1833 = vld [vmem:[%s1395 + $0x3c] sm:$0xe]
      %v1834 = vld [vmem:[%s1395 + $0x48] sm:$0xe]
      %v1835 = vld [vmem:[%s1395 + $0x54] sm:$0xe]
      %v1836 = vld [vmem:[%s1395 + $0x60] sm:$0xe]
      %v1837 = vld [vmem:[%s1395 + $0x6c] sm:$0xe]
      %v1838 = vld [vmem:[%s1395 + $0x78] sm:$0xe]
      %v1839 = vld [vmem:[%s1395 + $0x84] sm:$0xe]
      %v1840 = vld [vmem:[%s1395 + $0x90] sm:$0xe]
      %v1841 = vld [vmem:[%s1395 + $0x9c] sm:$0xe]
      %v1842 = vld [vmem:[%s1395 + $0xa8] sm:$0xe]
      %v1843 = vld [vmem:[%s1395 + $0xb4] sm:$0xe]
      %v1892 = vrot.slane %v1828, 5
      %v1893 = vrot.slane %v1892, 4
      %v1894 = vrot.slane %v1397, 5
      %v1895 = vsel %vm673, %v1893, %v1894
      %v1896 = vrot.slane %v1894, 4
      %v1897 = vrot.slane %v1428, 5
      %v1898 = vsel %vm673, %v1896, %v1897
      %v1899 = vrot.slane %v1829, 5
      %v1900 = vrot.slane %v1899, 4
      %v1901 = vrot.slane %v1399, 5
      %v1902 = vsel %vm673, %v1900, %v1901
      %v1903 = vrot.slane %v1901, 4
      %v1904 = vrot.slane %v1429, 5
      %v1905 = vsel %vm673, %v1903, %v1904
      %v1906 = vrot.slane %v1830, 5
      %v1907 = vrot.slane %v1906, 4
      %v1908 = vrot.slane %v1401, 5
      %v1909 = vsel %vm673, %v1907, %v1908
      %v1910 = vrot.slane %v1908, 4
      %v1911 = vrot.slane %v1430, 5
      %v1912 = vsel %vm673, %v1910, %v1911
      %v1913 = vrot.slane %v1831, 5
      %v1914 = vrot.slane %v1913, 4
      %v1915 = vrot.slane %v1403, 5
      %v1916 = vsel %vm673, %v1914, %v1915
      %v1917 = vrot.slane %v1915, 4
      %v1918 = vrot.slane %v1431, 5
      %v1919 = vsel %vm673, %v1917, %v1918
      %v1920 = vrot.slane %v1832, 5
      %v1921 = vrot.slane %v1920, 4
      %v1922 = vrot.slane %v1405, 5
      %v1923 = vsel %vm673, %v1921, %v1922
      %v1924 = vrot.slane %v1922, 4
      %v1925 = vrot.slane %v1432, 5
      %v1926 = vsel %vm673, %v1924, %v1925
      %v1927 = vrot.slane %v1833, 5
      %v1928 = vrot.slane %v1927, 4
      %v1929 = vrot.slane %v1407, 5
      %v1930 = vsel %vm673, %v1928, %v1929
      %v1931 = vrot.slane %v1929, 4
      %v1932 = vrot.slane %v1433, 5
      %v1933 = vsel %vm673, %v1931, %v1932
      %v1934 = vrot.slane %v1834, 5
      %v1935 = vrot.slane %v1934, 4
      %v1936 = vrot.slane %v1409, 5
      %v1937 = vsel %vm673, %v1935, %v1936
      %v1938 = vrot.slane %v1936, 4
      %v1939 = vrot.slane %v1434, 5
      %v1940 = vsel %vm673, %v1938, %v1939
      %v1941 = vrot.slane %v1835, 5
      %v1942 = vrot.slane %v1941, 4
      %v1943 = vrot.slane %v1411, 5
      %v1944 = vsel %vm673, %v1942, %v1943
      %v1945 = vrot.slane %v1943, 4
      %v1946 = vrot.slane %v1435, 5
      %v1947 = vsel %vm673, %v1945, %v1946
      %v1948 = vrot.slane %v1836, 5
      %v1949 = vrot.slane %v1948, 4
      %v1950 = vrot.slane %v1413, 5
      %v1951 = vsel %vm673, %v1949, %v1950
      %v1952 = vrot.slane %v1950, 4
      %v1953 = vrot.slane %v1436, 5
      %v1954 = vsel %vm673, %v1952, %v1953
      %v1955 = vrot.slane %v1837, 5
      %v1956 = vrot.slane %v1955, 4
      %v1957 = vrot.slane %v1415, 5
      %v1958 = vsel %vm673, %v1956, %v1957
      %v1959 = vrot.slane %v1957, 4
      %v1960 = vrot.slane %v1437, 5
      %v1961 = vsel %vm673, %v1959, %v1960
      %v1962 = vrot.slane %v1838, 5
      %v1963 = vrot.slane %v1962, 4
      %v1964 = vrot.slane %v1417, 5
      %v1965 = vsel %vm673, %v1963, %v1964
      %v1966 = vrot.slane %v1964, 4
      %v1967 = vrot.slane %v1438, 5
      %v1968 = vsel %vm673, %v1966, %v1967
      %v1969 = vrot.slane %v1839, 5
      %v1970 = vrot.slane %v1969, 4
      %v1971 = vrot.slane %v1419, 5
      %v1972 = vsel %vm673, %v1970, %v1971
      %v1973 = vrot.slane %v1971, 4
      %v1974 = vrot.slane %v1439, 5
      %v1975 = vsel %vm673, %v1973, %v1974
      %v1976 = vrot.slane %v1840, 5
      %v1977 = vrot.slane %v1976, 4
      %v1978 = vrot.slane %v1421, 5
      %v1979 = vsel %vm673, %v1977, %v1978
      %v1980 = vrot.slane %v1978, 4
      %v1981 = vrot.slane %v1440, 5
      %v1982 = vsel %vm673, %v1980, %v1981
      %v1983 = vrot.slane %v1841, 5
      %v1984 = vrot.slane %v1983, 4
      %v1985 = vrot.slane %v1423, 5
      %v1986 = vsel %vm673, %v1984, %v1985
      %v1987 = vrot.slane %v1985, 4
      %v1988 = vrot.slane %v1441, 5
      %v1989 = vsel %vm673, %v1987, %v1988
      %v1990 = vrot.slane %v1842, 5
      %v1991 = vrot.slane %v1990, 4
      %v1992 = vrot.slane %v1425, 5
      %v1993 = vsel %vm673, %v1991, %v1992
      %v1994 = vrot.slane %v1992, 4
      %v1995 = vrot.slane %v1442, 5
      %v1996 = vsel %vm673, %v1994, %v1995
      %v1997 = vrot.slane %v1843, 5
      %v1998 = vrot.slane %v1997, 4
      %v1999 = vrot.slane %v1427, 5
      %v2000 = vsel %vm673, %v1998, %v1999
      %v2001 = vrot.slane %v1999, 4
      %v2002 = vrot.slane %v1443, 5
      %v2003 = vsel %vm673, %v2001, %v2002
      %v2020 = vunpack.c.l.b16 %v172
      %v2021 = vunpack.c.l.b16 %v173
      %v2022 = vunpack.c.l.b16 %v174
      %v2023 = vunpack.c.l.b16 %v175
      %v2024 = vunpack.c.l.b16 %v176
      %v2025 = vunpack.c.l.b16 %v177
      %v2026 = vunpack.c.l.b16 %v178
      %v2027 = vunpack.c.l.b16 %v179
      %v2028 = vunpack.c.l.b16 %v180
      %v2029 = vunpack.c.l.b16 %v181
      %v2030 = vunpack.c.l.b16 %v182
      %v2031 = vunpack.c.l.b16 %v183
      %v2032 = vunpack.c.l.b16 %v184
      %v2033 = vunpack.c.l.b16 %v185
      %v2034 = vunpack.c.l.b16 %v186
      %v2035 = vunpack.c.l.b16 %v187
      %v2036 = vunpack.c.l.b16 %v188
      %v2037 = vunpack.c.l.b16 %v189
      %v2038 = vunpack.c.l.b16 %v190
      %v2039 = vunpack.c.l.b16 %v191
      %v2040 = vunpack.c.l.b16 %v192
      %v2041 = vunpack.c.l.b16 %v193
      %v2042 = vunpack.c.l.b16 %v194
      %v2043 = vunpack.c.l.b16 %v195
      %v2044 = vunpack.c.l.b16 %v196
      %v2045 = vunpack.c.l.b16 %v197
      %v2046 = vunpack.c.l.b16 %v198
      %v2047 = vunpack.c.l.b16 %v199
      %v2048 = vunpack.c.l.b16 %v200
      %v2049 = vunpack.c.l.b16 %v201
      %v2050 = vunpack.c.l.b16 %v202
      %v2051 = vunpack.c.l.b16 %v203
      %v2052 = vpack.c.b16 %v2021, %v2020
      %v2053 = vpack.c.b16 %v2023, %v2022
      %v2054 = vpack.c.b16 %v2025, %v2024
      %v2055 = vpack.c.b16 %v2027, %v2026
      %v2056 = vpack.c.b16 %v2029, %v2028
      %v2057 = vpack.c.b16 %v2031, %v2030
      %v2058 = vpack.c.b16 %v2033, %v2032
      %v2059 = vpack.c.b16 %v2035, %v2034
      %v2060 = vpack.c.b16 %v2037, %v2036
      %v2061 = vpack.c.b16 %v2039, %v2038
      %v2062 = vpack.c.b16 %v2041, %v2040
      %v2063 = vpack.c.b16 %v2043, %v2042
      %v2064 = vpack.c.b16 %v2045, %v2044
      %v2065 = vpack.c.b16 %v2047, %v2046
      %v2066 = vpack.c.b16 %v2049, %v2048
      %v2067 = vpack.c.b16 %v2051, %v2050
      %v2068 = vunpack.c.l.b16 %v236
      %v2069 = vunpack.c.l.b16 %v246
      %v2070 = vunpack.c.l.b16 %v260
      %v2071 = vunpack.c.l.b16 %v270
      %v2072 = vunpack.c.l.b16 %v284
      %v2073 = vunpack.c.l.b16 %v294
      %v2074 = vunpack.c.l.b16 %v308
      %v2075 = vunpack.c.l.b16 %v318
      %v2076 = vunpack.c.l.b16 %v332
      %v2077 = vunpack.c.l.b16 %v342
      %v2078 = vunpack.c.l.b16 %v356
      %v2079 = vunpack.c.l.b16 %v366
      %v2080 = vunpack.c.l.b16 %v380
      %v2081 = vunpack.c.l.b16 %v390
      %v2082 = vunpack.c.l.b16 %v404
      %v2083 = vunpack.c.l.b16 %v414
      %v2084 = vunpack.c.l.b16 %v428
      %v2085 = vunpack.c.l.b16 %v438
      %v2086 = vunpack.c.l.b16 %v452
      %v2087 = vunpack.c.l.b16 %v462
      %v2088 = vunpack.c.l.b16 %v476
      %v2089 = vunpack.c.l.b16 %v486
      %v2090 = vunpack.c.l.b16 %v500
      %v2091 = vunpack.c.l.b16 %v510
      %v2092 = vunpack.c.l.b16 %v524
      %v2093 = vunpack.c.l.b16 %v534
      %v2094 = vunpack.c.l.b16 %v548
      %v2095 = vunpack.c.l.b16 %v558
      %v2096 = vunpack.c.l.b16 %v572
      %v2097 = vunpack.c.l.b16 %v582
      %v2098 = vunpack.c.l.b16 %v596
      %v2099 = vunpack.c.l.b16 %v606
      %v2100 = vpack.c.b16 %v2069, %v2068
      %v2101 = vpack.c.b16 %v2071, %v2070
      %v2102 = vpack.c.b16 %v2073, %v2072
      %v2103 = vpack.c.b16 %v2075, %v2074
      %v2104 = vpack.c.b16 %v2077, %v2076
      %v2105 = vpack.c.b16 %v2079, %v2078
      %v2106 = vpack.c.b16 %v2081, %v2080
      %v2107 = vpack.c.b16 %v2083, %v2082
      %v2108 = vpack.c.b16 %v2085, %v2084
      %v2109 = vpack.c.b16 %v2087, %v2086
      %v2110 = vpack.c.b16 %v2089, %v2088
      %v2111 = vpack.c.b16 %v2091, %v2090
      %v2112 = vpack.c.b16 %v2093, %v2092
      %v2113 = vpack.c.b16 %v2095, %v2094
      %v2114 = vpack.c.b16 %v2097, %v2096
      %v2115 = vpack.c.b16 %v2099, %v2098
      %2116 = vrot.lane.b32.xlu0 %v2100, 3
      %v2117 = vpop.permute.xlu0 %2116
      %2118 = vrot.lane.b32.xlu0 %v2101, 3
      %v2119 = vpop.permute.xlu0 %2118
      %2120 = vrot.lane.b32.xlu0 %v2102, 3
      %v2121 = vpop.permute.xlu0 %2120
      %2122 = vrot.lane.b32.xlu0 %v2103, 3
      %v2123 = vpop.permute.xlu0 %2122
      %2124 = vrot.lane.b32.xlu0 %v2104, 3
      %v2125 = vpop.permute.xlu0 %2124
      %2126 = vrot.lane.b32.xlu0 %v2105, 3
      %v2127 = vpop.permute.xlu0 %2126
      %2128 = vrot.lane.b32.xlu0 %v2106, 3
      %v2129 = vpop.permute.xlu0 %2128
      %2130 = vrot.lane.b32.xlu0 %v2107, 3
      %v2131 = vpop.permute.xlu0 %2130
      %2132 = vrot.lane.b32.xlu0 %v2108, 3
      %v2133 = vpop.permute.xlu0 %2132
      %2134 = vrot.lane.b32.xlu0 %v2109, 3
      %v2135 = vpop.permute.xlu0 %2134
      %2136 = vrot.lane.b32.xlu0 %v2110, 3
      %v2137 = vpop.permute.xlu0 %2136
      %2138 = vrot.lane.b32.xlu0 %v2111, 3
      %v2139 = vpop.permute.xlu0 %2138
      %2140 = vrot.lane.b32.xlu0 %v2112, 3
      %v2141 = vpop.permute.xlu0 %2140
      %2142 = vrot.lane.b32.xlu0 %v2113, 3
      %v2143 = vpop.permute.xlu0 %2142
      %2144 = vrot.lane.b32.xlu0 %v2114, 3
      %v2145 = vpop.permute.xlu0 %2144
      %2146 = vrot.lane.b32.xlu0 %v2115, 3
      %v2147 = vpop.permute.xlu0 %2146
      %v2148 = vunpack.c.l.b16 %v677
      %v2149 = vunpack.c.l.b16 %v680
      %v2150 = vunpack.c.l.b16 %v684
      %v2151 = vunpack.c.l.b16 %v687
      %v2152 = vunpack.c.l.b16 %v691
      %v2153 = vunpack.c.l.b16 %v694
      %v2154 = vunpack.c.l.b16 %v698
      %v2155 = vunpack.c.l.b16 %v701
      %v2156 = vunpack.c.l.b16 %v705
      %v2157 = vunpack.c.l.b16 %v708
      %v2158 = vunpack.c.l.b16 %v712
      %v2159 = vunpack.c.l.b16 %v715
      %v2160 = vunpack.c.l.b16 %v719
      %v2161 = vunpack.c.l.b16 %v722
      %v2162 = vunpack.c.l.b16 %v726
      %v2163 = vunpack.c.l.b16 %v729
      %v2164 = vunpack.c.l.b16 %v733
      %v2165 = vunpack.c.l.b16 %v736
      %v2166 = vunpack.c.l.b16 %v740
      %v2167 = vunpack.c.l.b16 %v743
      %v2168 = vunpack.c.l.b16 %v747
      %v2169 = vunpack.c.l.b16 %v750
      %v2170 = vunpack.c.l.b16 %v754
      %v2171 = vunpack.c.l.b16 %v757
      %v2172 = vunpack.c.l.b16 %v761
      %v2173 = vunpack.c.l.b16 %v764
      %v2174 = vunpack.c.l.b16 %v768
      %v2175 = vunpack.c.l.b16 %v771
      %v2176 = vunpack.c.l.b16 %v775
      %v2177 = vunpack.c.l.b16 %v778
      %v2178 = vunpack.c.l.b16 %v782
      %v2179 = vunpack.c.l.b16 %v785
      %v2180 = vpack.c.b16 %v2149, %v2148
      %v2181 = vpack.c.b16 %v2151, %v2150
      %v2182 = vpack.c.b16 %v2153, %v2152
      %v2183 = vpack.c.b16 %v2155, %v2154
      %v2184 = vpack.c.b16 %v2157, %v2156
      %v2185 = vpack.c.b16 %v2159, %v2158
      %v2186 = vpack.c.b16 %v2161, %v2160
      %v2187 = vpack.c.b16 %v2163, %v2162
      %v2188 = vpack.c.b16 %v2165, %v2164
      %v2189 = vpack.c.b16 %v2167, %v2166
      %v2190 = vpack.c.b16 %v2169, %v2168
      %v2191 = vpack.c.b16 %v2171, %v2170
      %v2192 = vpack.c.b16 %v2173, %v2172
      %v2193 = vpack.c.b16 %v2175, %v2174
      %v2194 = vpack.c.b16 %v2177, %v2176
      %v2195 = vpack.c.b16 %v2179, %v2178
      %2196 = vrot.lane.b32.xlu0 %v2180, 6
      %v2197 = vpop.permute.xlu0 %2196
      %2198 = vrot.lane.b32.xlu0 %v2181, 6
      %v2199 = vpop.permute.xlu0 %2198
      %2200 = vrot.lane.b32.xlu0 %v2182, 6
      %v2201 = vpop.permute.xlu0 %2200
      %2202 = vrot.lane.b32.xlu0 %v2183, 6
      %v2203 = vpop.permute.xlu0 %2202
      %2204 = vrot.lane.b32.xlu0 %v2184, 6
      %v2205 = vpop.permute.xlu0 %2204
      %2206 = vrot.lane.b32.xlu0 %v2185, 6
      %v2207 = vpop.permute.xlu0 %2206
      %2208 = vrot.lane.b32.xlu0 %v2186, 6
      %v2209 = vpop.permute.xlu0 %2208
      %2210 = vrot.lane.b32.xlu0 %v2187, 6
      %v2211 = vpop.permute.xlu0 %2210
      %2212 = vrot.lane.b32.xlu0 %v2188, 6
      %v2213 = vpop.permute.xlu0 %2212
      %2214 = vrot.lane.b32.xlu0 %v2189, 6
      %v2215 = vpop.permute.xlu0 %2214
      %2216 = vrot.lane.b32.xlu0 %v2190, 6
      %v2217 = vpop.permute.xlu0 %2216
      %2218 = vrot.lane.b32.xlu0 %v2191, 6
      %v2219 = vpop.permute.xlu0 %2218
      %2220 = vrot.lane.b32.xlu0 %v2192, 6
      %v2221 = vpop.permute.xlu0 %2220
      %2222 = vrot.lane.b32.xlu0 %v2193, 6
      %v2223 = vpop.permute.xlu0 %2222
      %2224 = vrot.lane.b32.xlu0 %v2194, 6
      %v2225 = vpop.permute.xlu0 %2224
      %2226 = vrot.lane.b32.xlu0 %v2195, 6
      %v2227 = vpop.permute.xlu0 %2226
      %v2244 = vunpack.c.l.b16 %v787
      %v2245 = vunpack.c.l.b16 %v788
      %v2246 = vunpack.c.l.b16 %v789
      %v2247 = vunpack.c.l.b16 %v790
      %v2248 = vunpack.c.l.b16 %v791
      %v2249 = vunpack.c.l.b16 %v792
      %v2250 = vunpack.c.l.b16 %v793
      %v2251 = vunpack.c.l.b16 %v794
      %v2252 = vunpack.c.l.b16 %v795
      %v2253 = vunpack.c.l.b16 %v796
      %v2254 = vunpack.c.l.b16 %v797
      %v2255 = vunpack.c.l.b16 %v798
      %v2256 = vunpack.c.l.b16 %v799
      %v2257 = vunpack.c.l.b16 %v800
      %v2258 = vunpack.c.l.b16 %v801
      %v2259 = vunpack.c.l.b16 %v802
      %v2260 = vunpack.c.l.b16 %v803
      %v2261 = vunpack.c.l.b16 %v804
      %v2262 = vunpack.c.l.b16 %v805
      %v2263 = vunpack.c.l.b16 %v806
      %v2264 = vunpack.c.l.b16 %v807
      %v2265 = vunpack.c.l.b16 %v808
      %v2266 = vunpack.c.l.b16 %v809
      %v2267 = vunpack.c.l.b16 %v810
      %v2268 = vunpack.c.l.b16 %v811
      %v2269 = vunpack.c.l.b16 %v812
      %v2270 = vunpack.c.l.b16 %v813
      %v2271 = vunpack.c.l.b16 %v814
      %v2272 = vunpack.c.l.b16 %v815
      %v2273 = vunpack.c.l.b16 %v816
      %v2274 = vunpack.c.l.b16 %v817
      %v2275 = vunpack.c.l.b16 %v818
      %v2276 = vpack.c.b16 %v2245, %v2244
      %v2277 = vpack.c.b16 %v2247, %v2246
      %v2278 = vpack.c.b16 %v2249, %v2248
      %v2279 = vpack.c.b16 %v2251, %v2250
      %v2280 = vpack.c.b16 %v2253, %v2252
      %v2281 = vpack.c.b16 %v2255, %v2254
      %v2282 = vpack.c.b16 %v2257, %v2256
      %v2283 = vpack.c.b16 %v2259, %v2258
      %v2284 = vpack.c.b16 %v2261, %v2260
      %v2285 = vpack.c.b16 %v2263, %v2262
      %v2286 = vpack.c.b16 %v2265, %v2264
      %v2287 = vpack.c.b16 %v2267, %v2266
      %v2288 = vpack.c.b16 %v2269, %v2268
      %v2289 = vpack.c.b16 %v2271, %v2270
      %v2290 = vpack.c.b16 %v2273, %v2272
      %v2291 = vpack.c.b16 %v2275, %v2274
      %2292 = vrot.lane.b32.xlu0 %v2276, 9
      %v2293 = vpop.permute.xlu0 %2292
      %2294 = vrot.lane.b32.xlu0 %v2277, 9
      %v2295 = vpop.permute.xlu0 %2294
      %2296 = vrot.lane.b32.xlu0 %v2278, 9
      %v2297 = vpop.permute.xlu0 %2296
      %2298 = vrot.lane.b32.xlu0 %v2279, 9
      %v2299 = vpop.permute.xlu0 %2298
      %2300 = vrot.lane.b32.xlu0 %v2280, 9
      %v2301 = vpop.permute.xlu0 %2300
      %2302 = vrot.lane.b32.xlu0 %v2281, 9
      %v2303 = vpop.permute.xlu0 %2302
      %2304 = vrot.lane.b32.xlu0 %v2282, 9
      %v2305 = vpop.permute.xlu0 %2304
      %2306 = vrot.lane.b32.xlu0 %v2283, 9
      %v2307 = vpop.permute.xlu0 %2306
      %2308 = vrot.lane.b32.xlu0 %v2284, 9
      %v2309 = vpop.permute.xlu0 %2308
      %2310 = vrot.lane.b32.xlu0 %v2285, 9
      %v2311 = vpop.permute.xlu0 %2310
      %2312 = vrot.lane.b32.xlu0 %v2286, 9
      %v2313 = vpop.permute.xlu0 %2312
      %2314 = vrot.lane.b32.xlu0 %v2287, 9
      %v2315 = vpop.permute.xlu0 %2314
      %2316 = vrot.lane.b32.xlu0 %v2288, 9
      %v2317 = vpop.permute.xlu0 %2316
      %2318 = vrot.lane.b32.xlu0 %v2289, 9
      %v2319 = vpop.permute.xlu0 %2318
      %2320 = vrot.lane.b32.xlu0 %v2290, 9
      %v2321 = vpop.permute.xlu0 %2320
      %2322 = vrot.lane.b32.xlu0 %v2291, 9
      %v2323 = vpop.permute.xlu0 %2322
      %v2324 = vunpack.c.l.b16 %v848
      %v2325 = vunpack.c.l.b16 %v858
      %v2326 = vunpack.c.l.b16 %v872
      %v2327 = vunpack.c.l.b16 %v882
      %v2328 = vunpack.c.l.b16 %v896
      %v2329 = vunpack.c.l.b16 %v906
      %v2330 = vunpack.c.l.b16 %v920
      %v2331 = vunpack.c.l.b16 %v930
      %v2332 = vunpack.c.l.b16 %v944
      %v2333 = vunpack.c.l.b16 %v954
      %v2334 = vunpack.c.l.b16 %v968
      %v2335 = vunpack.c.l.b16 %v978
      %v2336 = vunpack.c.l.b16 %v992
      %v2337 = vunpack.c.l.b16 %v1002
      %v2338 = vunpack.c.l.b16 %v1016
      %v2339 = vunpack.c.l.b16 %v1026
      %v2340 = vunpack.c.l.b16 %v1040
      %v2341 = vunpack.c.l.b16 %v1050
      %v2342 = vunpack.c.l.b16 %v1064
      %v2343 = vunpack.c.l.b16 %v1074
      %v2344 = vunpack.c.l.b16 %v1088
      %v2345 = vunpack.c.l.b16 %v1098
      %v2346 = vunpack.c.l.b16 %v1112
      %v2347 = vunpack.c.l.b16 %v1122
      %v2348 = vunpack.c.l.b16 %v1136
      %v2349 = vunpack.c.l.b16 %v1146
      %v2350 = vunpack.c.l.b16 %v1160
      %v2351 = vunpack.c.l.b16 %v1170
      %v2352 = vunpack.c.l.b16 %v1184
      %v2353 = vunpack.c.l.b16 %v1194
      %v2354 = vunpack.c.l.b16 %v1208
      %v2355 = vunpack.c.l.b16 %v1218
      %v2356 = vpack.c.b16 %v2325, %v2324
      %v2357 = vpack.c.b16 %v2327, %v2326
      %v2358 = vpack.c.b16 %v2329, %v2328
      %v2359 = vpack.c.b16 %v2331, %v2330
      %v2360 = vpack.c.b16 %v2333, %v2332
      %v2361 = vpack.c.b16 %v2335, %v2334
      %v2362 = vpack.c.b16 %v2337, %v2336
      %v2363 = vpack.c.b16 %v2339, %v2338
      %v2364 = vpack.c.b16 %v2341, %v2340
      %v2365 = vpack.c.b16 %v2343, %v2342
      %v2366 = vpack.c.b16 %v2345, %v2344
      %v2367 = vpack.c.b16 %v2347, %v2346
      %v2368 = vpack.c.b16 %v2349, %v2348
      %v2369 = vpack.c.b16 %v2351, %v2350
      %v2370 = vpack.c.b16 %v2353, %v2352
      %v2371 = vpack.c.b16 %v2355, %v2354
      %2372 = vrot.lane.b32.xlu0 %v2356, 12
      %v2373 = vpop.permute.xlu0 %2372
      %2374 = vrot.lane.b32.xlu0 %v2357, 12
      %v2375 = vpop.permute.xlu0 %2374
      %2376 = vrot.lane.b32.xlu0 %v2358, 12
      %v2377 = vpop.permute.xlu0 %2376
      %2378 = vrot.lane.b32.xlu0 %v2359, 12
      %v2379 = vpop.permute.xlu0 %2378
      %2380 = vrot.lane.b32.xlu0 %v2360, 12
      %v2381 = vpop.permute.xlu0 %2380
      %2382 = vrot.lane.b32.xlu0 %v2361, 12
      %v2383 = vpop.permute.xlu0 %2382
      %2384 = vrot.lane.b32.xlu0 %v2362, 12
      %v2385 = vpop.permute.xlu0 %2384
      %2386 = vrot.lane.b32.xlu0 %v2363, 12
      %v2387 = vpop.permute.xlu0 %2386
      %2388 = vrot.lane.b32.xlu0 %v2364, 12
      %v2389 = vpop.permute.xlu0 %2388
      %2390 = vrot.lane.b32.xlu0 %v2365, 12
      %v2391 = vpop.permute.xlu0 %2390
      %2392 = vrot.lane.b32.xlu0 %v2366, 12
      %v2393 = vpop.permute.xlu0 %2392
      %2394 = vrot.lane.b32.xlu0 %v2367, 12
      %v2395 = vpop.permute.xlu0 %2394
      %2396 = vrot.lane.b32.xlu0 %v2368, 12
      %v2397 = vpop.permute.xlu0 %2396
      %2398 = vrot.lane.b32.xlu0 %v2369, 12
      %v2399 = vpop.permute.xlu0 %2398
      %2400 = vrot.lane.b32.xlu0 %v2370, 12
      %v2401 = vpop.permute.xlu0 %2400
      %2402 = vrot.lane.b32.xlu0 %v2371, 12
      %v2403 = vpop.permute.xlu0 %2402
      %v2404 = vunpack.c.l.b16 %v1286
      %v2405 = vunpack.c.l.b16 %v1289
      %v2406 = vunpack.c.l.b16 %v1293
      %v2407 = vunpack.c.l.b16 %v1296
      %v2408 = vunpack.c.l.b16 %v1300
      %v2409 = vunpack.c.l.b16 %v1303
      %v2410 = vunpack.c.l.b16 %v1307
      %v2411 = vunpack.c.l.b16 %v1310
      %v2412 = vunpack.c.l.b16 %v1314
      %v2413 = vunpack.c.l.b16 %v1317
      %v2414 = vunpack.c.l.b16 %v1321
      %v2415 = vunpack.c.l.b16 %v1324
      %v2416 = vunpack.c.l.b16 %v1328
      %v2417 = vunpack.c.l.b16 %v1331
      %v2418 = vunpack.c.l.b16 %v1335
      %v2419 = vunpack.c.l.b16 %v1338
      %v2420 = vunpack.c.l.b16 %v1342
      %v2421 = vunpack.c.l.b16 %v1345
      %v2422 = vunpack.c.l.b16 %v1349
      %v2423 = vunpack.c.l.b16 %v1352
      %v2424 = vunpack.c.l.b16 %v1356
      %v2425 = vunpack.c.l.b16 %v1359
      %v2426 = vunpack.c.l.b16 %v1363
      %v2427 = vunpack.c.l.b16 %v1366
      %v2428 = vunpack.c.l.b16 %v1370
      %v2429 = vunpack.c.l.b16 %v1373
      %v2430 = vunpack.c.l.b16 %v1377
      %v2431 = vunpack.c.l.b16 %v1380
      %v2432 = vunpack.c.l.b16 %v1384
      %v2433 = vunpack.c.l.b16 %v1387
      %v2434 = vunpack.c.l.b16 %v1391
      %v2435 = vunpack.c.l.b16 %v1394
      %v2436 = vpack.c.b16 %v2405, %v2404
      %v2437 = vpack.c.b16 %v2407, %v2406
      %v2438 = vpack.c.b16 %v2409, %v2408
      %v2439 = vpack.c.b16 %v2411, %v2410
      %v2440 = vpack.c.b16 %v2413, %v2412
      %v2441 = vpack.c.b16 %v2415, %v2414
      %v2442 = vpack.c.b16 %v2417, %v2416
      %v2443 = vpack.c.b16 %v2419, %v2418
      %v2444 = vpack.c.b16 %v2421, %v2420
      %v2445 = vpack.c.b16 %v2423, %v2422
      %v2446 = vpack.c.b16 %v2425, %v2424
      %v2447 = vpack.c.b16 %v2427, %v2426
      %v2448 = vpack.c.b16 %v2429, %v2428
      %v2449 = vpack.c.b16 %v2431, %v2430
      %v2450 = vpack.c.b16 %v2433, %v2432
      %v2451 = vpack.c.b16 %v2435, %v2434
      %2452 = vrot.lane.b32.xlu0 %v2436, 15
      %v2453 = vpop.permute.xlu0 %2452
      %2454 = vrot.lane.b32.xlu0 %v2437, 15
      %v2455 = vpop.permute.xlu0 %2454
      %2456 = vrot.lane.b32.xlu0 %v2438, 15
      %v2457 = vpop.permute.xlu0 %2456
      %2458 = vrot.lane.b32.xlu0 %v2439, 15
      %v2459 = vpop.permute.xlu0 %2458
      %2460 = vrot.lane.b32.xlu0 %v2440, 15
      %v2461 = vpop.permute.xlu0 %2460
      %2462 = vrot.lane.b32.xlu0 %v2441, 15
      %v2463 = vpop.permute.xlu0 %2462
      %2464 = vrot.lane.b32.xlu0 %v2442, 15
      %v2465 = vpop.permute.xlu0 %2464
      %2466 = vrot.lane.b32.xlu0 %v2443, 15
      %v2467 = vpop.permute.xlu0 %2466
      %2468 = vrot.lane.b32.xlu0 %v2444, 15
      %v2469 = vpop.permute.xlu0 %2468
      %2470 = vrot.lane.b32.xlu0 %v2445, 15
      %v2471 = vpop.permute.xlu0 %2470
      %2472 = vrot.lane.b32.xlu0 %v2446, 15
      %v2473 = vpop.permute.xlu0 %2472
      %2474 = vrot.lane.b32.xlu0 %v2447, 15
      %v2475 = vpop.permute.xlu0 %2474
      %2476 = vrot.lane.b32.xlu0 %v2448, 15
      %v2477 = vpop.permute.xlu0 %2476
      %2478 = vrot.lane.b32.xlu0 %v2449, 15
      %v2479 = vpop.permute.xlu0 %2478
      %2480 = vrot.lane.b32.xlu0 %v2450, 15
      %v2481 = vpop.permute.xlu0 %2480
      %2482 = vrot.lane.b32.xlu0 %v2451, 15
      %v2483 = vpop.permute.xlu0 %2482
      %v2500 = vunpack.c.l.b16 %v1396
      %v2501 = vunpack.c.l.b16 %v1397
      %v2502 = vunpack.c.l.b16 %v1398
      %v2503 = vunpack.c.l.b16 %v1399
      %v2504 = vunpack.c.l.b16 %v1400
      %v2505 = vunpack.c.l.b16 %v1401
      %v2506 = vunpack.c.l.b16 %v1402
      %v2507 = vunpack.c.l.b16 %v1403
      %v2508 = vunpack.c.l.b16 %v1404
      %v2509 = vunpack.c.l.b16 %v1405
      %v2510 = vunpack.c.l.b16 %v1406
      %v2511 = vunpack.c.l.b16 %v1407
      %v2512 = vunpack.c.l.b16 %v1408
      %v2513 = vunpack.c.l.b16 %v1409
      %v2514 = vunpack.c.l.b16 %v1410
      %v2515 = vunpack.c.l.b16 %v1411
      %v2516 = vunpack.c.l.b16 %v1412
      %v2517 = vunpack.c.l.b16 %v1413
      %v2518 = vunpack.c.l.b16 %v1414
      %v2519 = vunpack.c.l.b16 %v1415
      %v2520 = vunpack.c.l.b16 %v1416
      %v2521 = vunpack.c.l.b16 %v1417
      %v2522 = vunpack.c.l.b16 %v1418
      %v2523 = vunpack.c.l.b16 %v1419
      %v2524 = vunpack.c.l.b16 %v1420
      %v2525 = vunpack.c.l.b16 %v1421
      %v2526 = vunpack.c.l.b16 %v1422
      %v2527 = vunpack.c.l.b16 %v1423
      %v2528 = vunpack.c.l.b16 %v1424
      %v2529 = vunpack.c.l.b16 %v1425
      %v2530 = vunpack.c.l.b16 %v1426
      %v2531 = vunpack.c.l.b16 %v1427
      %v2532 = vpack.c.b16 %v2501, %v2500
      %v2533 = vpack.c.b16 %v2503, %v2502
      %v2534 = vpack.c.b16 %v2505, %v2504
      %v2535 = vpack.c.b16 %v2507, %v2506
      %v2536 = vpack.c.b16 %v2509, %v2508
      %v2537 = vpack.c.b16 %v2511, %v2510
      %v2538 = vpack.c.b16 %v2513, %v2512
      %v2539 = vpack.c.b16 %v2515, %v2514
      %v2540 = vpack.c.b16 %v2517, %v2516
      %v2541 = vpack.c.b16 %v2519, %v2518
      %v2542 = vpack.c.b16 %v2521, %v2520
      %v2543 = vpack.c.b16 %v2523, %v2522
      %v2544 = vpack.c.b16 %v2525, %v2524
      %v2545 = vpack.c.b16 %v2527, %v2526
      %v2546 = vpack.c.b16 %v2529, %v2528
      %v2547 = vpack.c.b16 %v2531, %v2530
      %2548 = vrot.lane.b32.xlu0 %v2532, 18
      %v2549 = vpop.permute.xlu0 %2548
      %2550 = vrot.lane.b32.xlu0 %v2533, 18
      %v2551 = vpop.permute.xlu0 %2550
      %2552 = vrot.lane.b32.xlu0 %v2534, 18
      %v2553 = vpop.permute.xlu0 %2552
      %2554 = vrot.lane.b32.xlu0 %v2535, 18
      %v2555 = vpop.permute.xlu0 %2554
      %2556 = vrot.lane.b32.xlu0 %v2536, 18
      %v2557 = vpop.permute.xlu0 %2556
      %2558 = vrot.lane.b32.xlu0 %v2537, 18
      %v2559 = vpop.permute.xlu0 %2558
      %2560 = vrot.lane.b32.xlu0 %v2538, 18
      %v2561 = vpop.permute.xlu0 %2560
      %2562 = vrot.lane.b32.xlu0 %v2539, 18
      %v2563 = vpop.permute.xlu0 %2562
      %2564 = vrot.lane.b32.xlu0 %v2540, 18
      %v2565 = vpop.permute.xlu0 %2564
      %2566 = vrot.lane.b32.xlu0 %v2541, 18
      %v2567 = vpop.permute.xlu0 %2566
      %2568 = vrot.lane.b32.xlu0 %v2542, 18
      %v2569 = vpop.permute.xlu0 %2568
      %2570 = vrot.lane.b32.xlu0 %v2543, 18
      %v2571 = vpop.permute.xlu0 %2570
      %2572 = vrot.lane.b32.xlu0 %v2544, 18
      %v2573 = vpop.permute.xlu0 %2572
      %2574 = vrot.lane.b32.xlu0 %v2545, 18
      %v2575 = vpop.permute.xlu0 %2574
      %2576 = vrot.lane.b32.xlu0 %v2546, 18
      %v2577 = vpop.permute.xlu0 %2576
      %2578 = vrot.lane.b32.xlu0 %v2547, 18
      %v2579 = vpop.permute.xlu0 %2578
      %v2580 = vunpack.c.l.b16 %v1457
      %v2581 = vunpack.c.l.b16 %v1467
      %v2582 = vunpack.c.l.b16 %v1481
      %v2583 = vunpack.c.l.b16 %v1491
      %v2584 = vunpack.c.l.b16 %v1505
      %v2585 = vunpack.c.l.b16 %v1515
      %v2586 = vunpack.c.l.b16 %v1529
      %v2587 = vunpack.c.l.b16 %v1539
      %v2588 = vunpack.c.l.b16 %v1553
      %v2589 = vunpack.c.l.b16 %v1563
      %v2590 = vunpack.c.l.b16 %v1577
      %v2591 = vunpack.c.l.b16 %v1587
      %v2592 = vunpack.c.l.b16 %v1601
      %v2593 = vunpack.c.l.b16 %v1611
      %v2594 = vunpack.c.l.b16 %v1625
      %v2595 = vunpack.c.l.b16 %v1635
      %v2596 = vunpack.c.l.b16 %v1649
      %v2597 = vunpack.c.l.b16 %v1659
      %v2598 = vunpack.c.l.b16 %v1673
      %v2599 = vunpack.c.l.b16 %v1683
      %v2600 = vunpack.c.l.b16 %v1697
      %v2601 = vunpack.c.l.b16 %v1707
      %v2602 = vunpack.c.l.b16 %v1721
      %v2603 = vunpack.c.l.b16 %v1731
      %v2604 = vunpack.c.l.b16 %v1745
      %v2605 = vunpack.c.l.b16 %v1755
      %v2606 = vunpack.c.l.b16 %v1769
      %v2607 = vunpack.c.l.b16 %v1779
      %v2608 = vunpack.c.l.b16 %v1793
      %v2609 = vunpack.c.l.b16 %v1803
      %v2610 = vunpack.c.l.b16 %v1817
      %v2611 = vunpack.c.l.b16 %v1827
      %v2612 = vpack.c.b16 %v2581, %v2580
      %v2613 = vpack.c.b16 %v2583, %v2582
      %v2614 = vpack.c.b16 %v2585, %v2584
      %v2615 = vpack.c.b16 %v2587, %v2586
      %v2616 = vpack.c.b16 %v2589, %v2588
      %v2617 = vpack.c.b16 %v2591, %v2590
      %v2618 = vpack.c.b16 %v2593, %v2592
      %v2619 = vpack.c.b16 %v2595, %v2594
      %v2620 = vpack.c.b16 %v2597, %v2596
      %v2621 = vpack.c.b16 %v2599, %v2598
      %v2622 = vpack.c.b16 %v2601, %v2600
      %v2623 = vpack.c.b16 %v2603, %v2602
      %v2624 = vpack.c.b16 %v2605, %v2604
      %v2625 = vpack.c.b16 %v2607, %v2606
      %v2626 = vpack.c.b16 %v2609, %v2608
      %v2627 = vpack.c.b16 %v2611, %v2610
      %2628 = vrot.lane.b32.xlu0 %v2612, 21
      %v2629 = vpop.permute.xlu0 %2628
      %2630 = vrot.lane.b32.xlu0 %v2613, 21
      %v2631 = vpop.permute.xlu0 %2630
      %2632 = vrot.lane.b32.xlu0 %v2614, 21
      %v2633 = vpop.permute.xlu0 %2632
      %2634 = vrot.lane.b32.xlu0 %v2615, 21
      %v2635 = vpop.permute.xlu0 %2634
      %2636 = vrot.lane.b32.xlu0 %v2616, 21
      %v2637 = vpop.permute.xlu0 %2636
      %2638 = vrot.lane.b32.xlu0 %v2617, 21
      %v2639 = vpop.permute.xlu0 %2638
      %2640 = vrot.lane.b32.xlu0 %v2618, 21
      %v2641 = vpop.permute.xlu0 %2640
      %2642 = vrot.lane.b32.xlu0 %v2619, 21
      %v2643 = vpop.permute.xlu0 %2642
      %2644 = vrot.lane.b32.xlu0 %v2620, 21
      %v2645 = vpop.permute.xlu0 %2644
      %2646 = vrot.lane.b32.xlu0 %v2621, 21
      %v2647 = vpop.permute.xlu0 %2646
      %2648 = vrot.lane.b32.xlu0 %v2622, 21
      %v2649 = vpop.permute.xlu0 %2648
      %2650 = vrot.lane.b32.xlu0 %v2623, 21
      %v2651 = vpop.permute.xlu0 %2650
      %2652 = vrot.lane.b32.xlu0 %v2624, 21
      %v2653 = vpop.permute.xlu0 %2652
      %2654 = vrot.lane.b32.xlu0 %v2625, 21
      %v2655 = vpop.permute.xlu0 %2654
      %2656 = vrot.lane.b32.xlu0 %v2626, 21
      %v2657 = vpop.permute.xlu0 %2656
      %2658 = vrot.lane.b32.xlu0 %v2627, 21
      %v2659 = vpop.permute.xlu0 %2658
      %v2660 = vunpack.c.l.b16 %v1895
      %v2661 = vunpack.c.l.b16 %v1898
      %v2662 = vunpack.c.l.b16 %v1902
      %v2663 = vunpack.c.l.b16 %v1905
      %v2664 = vunpack.c.l.b16 %v1909
      %v2665 = vunpack.c.l.b16 %v1912
      %v2666 = vunpack.c.l.b16 %v1916
      %v2667 = vunpack.c.l.b16 %v1919
      %v2668 = vunpack.c.l.b16 %v1923
      %v2669 = vunpack.c.l.b16 %v1926
      %v2670 = vunpack.c.l.b16 %v1930
      %v2671 = vunpack.c.l.b16 %v1933
      %v2672 = vunpack.c.l.b16 %v1937
      %v2673 = vunpack.c.l.b16 %v1940
      %v2674 = vunpack.c.l.b16 %v1944
      %v2675 = vunpack.c.l.b16 %v1947
      %v2676 = vunpack.c.l.b16 %v1951
      %v2677 = vunpack.c.l.b16 %v1954
      %v2678 = vunpack.c.l.b16 %v1958
      %v2679 = vunpack.c.l.b16 %v1961
      %v2680 = vunpack.c.l.b16 %v1965
      %v2681 = vunpack.c.l.b16 %v1968
      %v2682 = vunpack.c.l.b16 %v1972
      %v2683 = vunpack.c.l.b16 %v1975
      %v2684 = vunpack.c.l.b16 %v1979
      %v2685 = vunpack.c.l.b16 %v1982
      %v2686 = vunpack.c.l.b16 %v1986
      %v2687 = vunpack.c.l.b16 %v1989
      %v2688 = vunpack.c.l.b16 %v1993
      %v2689 = vunpack.c.l.b16 %v1996
      %v2690 = vunpack.c.l.b16 %v2000
      %v2691 = vunpack.c.l.b16 %v2003
      %v2692 = vpack.c.b16 %v2661, %v2660
      %v2693 = vpack.c.b16 %v2663, %v2662
      %v2694 = vpack.c.b16 %v2665, %v2664
      %v2695 = vpack.c.b16 %v2667, %v2666
      %v2696 = vpack.c.b16 %v2669, %v2668
      %v2697 = vpack.c.b16 %v2671, %v2670
      %v2698 = vpack.c.b16 %v2673, %v2672
      %v2699 = vpack.c.b16 %v2675, %v2674
      %v2700 = vpack.c.b16 %v2677, %v2676
      %v2701 = vpack.c.b16 %v2679, %v2678
      %v2702 = vpack.c.b16 %v2681, %v2680
      %v2703 = vpack.c.b16 %v2683, %v2682
      %v2704 = vpack.c.b16 %v2685, %v2684
      %v2705 = vpack.c.b16 %v2687, %v2686
      %v2706 = vpack.c.b16 %v2689, %v2688
      %v2707 = vpack.c.b16 %v2691, %v2690
      %2708 = vrot.lane.b32.xlu0 %v2692, 24
      %v2709 = vpop.permute.xlu0 %2708
      %2710 = vrot.lane.b32.xlu0 %v2693, 24
      %v2711 = vpop.permute.xlu0 %2710
      %2712 = vrot.lane.b32.xlu0 %v2694, 24
      %v2713 = vpop.permute.xlu0 %2712
      %2714 = vrot.lane.b32.xlu0 %v2695, 24
      %v2715 = vpop.permute.xlu0 %2714
      %2716 = vrot.lane.b32.xlu0 %v2696, 24
      %v2717 = vpop.permute.xlu0 %2716
      %2718 = vrot.lane.b32.xlu0 %v2697, 24
      %v2719 = vpop.permute.xlu0 %2718
      %2720 = vrot.lane.b32.xlu0 %v2698, 24
      %v2721 = vpop.permute.xlu0 %2720
      %2722 = vrot.lane.b32.xlu0 %v2699, 24
      %v2723 = vpop.permute.xlu0 %2722
      %2724 = vrot.lane.b32.xlu0 %v2700, 24
      %v2725 = vpop.permute.xlu0 %2724
      %2726 = vrot.lane.b32.xlu0 %v2701, 24
      %v2727 = vpop.permute.xlu0 %2726
      %2728 = vrot.lane.b32.xlu0 %v2702, 24
      %v2729 = vpop.permute.xlu0 %2728
      %2730 = vrot.lane.b32.xlu0 %v2703, 24
      %v2731 = vpop.permute.xlu0 %2730
      %2732 = vrot.lane.b32.xlu0 %v2704, 24
      %v2733 = vpop.permute.xlu0 %2732
      %2734 = vrot.lane.b32.xlu0 %v2705, 24
      %v2735 = vpop.permute.xlu0 %2734
      %2736 = vrot.lane.b32.xlu0 %v2706, 24
      %v2737 = vpop.permute.xlu0 %2736
      %2738 = vrot.lane.b32.xlu0 %v2707, 24
      %v2739 = vpop.permute.xlu0 %2738
      %vm2740 = vcmask 23552
      %v2743 = vsel %vm2740, %v2052, %v2117
      %v2746 = vsel %vm2740, %v2053, %v2119
      %v2749 = vsel %vm2740, %v2054, %v2121
      %v2752 = vsel %vm2740, %v2055, %v2123
      %v2755 = vsel %vm2740, %v2056, %v2125
      %v2758 = vsel %vm2740, %v2057, %v2127
      %v2761 = vsel %vm2740, %v2058, %v2129
      %v2764 = vsel %vm2740, %v2059, %v2131
      %v2767 = vsel %vm2740, %v2060, %v2133
      %v2770 = vsel %vm2740, %v2061, %v2135
      %v2773 = vsel %vm2740, %v2062, %v2137
      %v2776 = vsel %vm2740, %v2063, %v2139
      %v2779 = vsel %vm2740, %v2064, %v2141
      %v2782 = vsel %vm2740, %v2065, %v2143
      %v2785 = vsel %vm2740, %v2066, %v2145
      %v2788 = vsel %vm2740, %v2067, %v2147
      %vm2789 = vcmask 48128
      %v2791 = vsel %vm2789, %v2743, %v2197
      %v2793 = vsel %vm2789, %v2746, %v2199
      %v2795 = vsel %vm2789, %v2749, %v2201
      %v2797 = vsel %vm2789, %v2752, %v2203
      %v2799 = vsel %vm2789, %v2755, %v2205
      %v2801 = vsel %vm2789, %v2758, %v2207
      %v2803 = vsel %vm2789, %v2761, %v2209
      %v2805 = vsel %vm2789, %v2764, %v2211
      %v2807 = vsel %vm2789, %v2767, %v2213
      %v2809 = vsel %vm2789, %v2770, %v2215
      %v2811 = vsel %vm2789, %v2773, %v2217
      %v2813 = vsel %vm2789, %v2776, %v2219
      %v2815 = vsel %vm2789, %v2779, %v2221
      %v2817 = vsel %vm2789, %v2782, %v2223
      %v2819 = vsel %vm2789, %v2785, %v2225
      %v2821 = vsel %vm2789, %v2788, %v2227
      %vm2822 = vcmask 72704
      %v2824 = vsel %vm2822, %v2791, %v2293
      %v2826 = vsel %vm2822, %v2793, %v2295
      %v2828 = vsel %vm2822, %v2795, %v2297
      %v2830 = vsel %vm2822, %v2797, %v2299
      %v2832 = vsel %vm2822, %v2799, %v2301
      %v2834 = vsel %vm2822, %v2801, %v2303
      %v2836 = vsel %vm2822, %v2803, %v2305
      %v2838 = vsel %vm2822, %v2805, %v2307
      %v2840 = vsel %vm2822, %v2807, %v2309
      %v2842 = vsel %vm2822, %v2809, %v2311
      %v2844 = vsel %vm2822, %v2811, %v2313
      %v2846 = vsel %vm2822, %v2813, %v2315
      %v2848 = vsel %vm2822, %v2815, %v2317
      %v2850 = vsel %vm2822, %v2817, %v2319
      %v2852 = vsel %vm2822, %v2819, %v2321
      %v2854 = vsel %vm2822, %v2821, %v2323
      %vm2855 = vcmask 97280
      %v2857 = vsel %vm2855, %v2824, %v2373
      %v2859 = vsel %vm2855, %v2826, %v2375
      %v2861 = vsel %vm2855, %v2828, %v2377
      %v2863 = vsel %vm2855, %v2830, %v2379
      %v2865 = vsel %vm2855, %v2832, %v2381
      %v2867 = vsel %vm2855, %v2834, %v2383
      %v2869 = vsel %vm2855, %v2836, %v2385
      %v2871 = vsel %vm2855, %v2838, %v2387
      %v2873 = vsel %vm2855, %v2840, %v2389
      %v2875 = vsel %vm2855, %v2842, %v2391
      %v2877 = vsel %vm2855, %v2844, %v2393
      %v2879 = vsel %vm2855, %v2846, %v2395
      %v2881 = vsel %vm2855, %v2848, %v2397
      %v2883 = vsel %vm2855, %v2850, %v2399
      %v2885 = vsel %vm2855, %v2852, %v2401
      %v2887 = vsel %vm2855, %v2854, %v2403
      %vm2888 = vcmask 121856
      %v2890 = vsel %vm2888, %v2857, %v2453
      %v2892 = vsel %vm2888, %v2859, %v2455
      %v2894 = vsel %vm2888, %v2861, %v2457
      %v2896 = vsel %vm2888, %v2863, %v2459
      %v2898 = vsel %vm2888, %v2865, %v2461
      %v2900 = vsel %vm2888, %v2867, %v2463
      %v2902 = vsel %vm2888, %v2869, %v2465
      %v2904 = vsel %vm2888, %v2871, %v2467
      %v2906 = vsel %vm2888, %v2873, %v2469
      %v2908 = vsel %vm2888, %v2875, %v2471
      %v2910 = vsel %vm2888, %v2877, %v2473
      %v2912 = vsel %vm2888, %v2879, %v2475
      %v2914 = vsel %vm2888, %v2881, %v2477
      %v2916 = vsel %vm2888, %v2883, %v2479
      %v2918 = vsel %vm2888, %v2885, %v2481
      %v2920 = vsel %vm2888, %v2887, %v2483
      %vm2921 = vcmask 146432
      %v2923 = vsel %vm2921, %v2890, %v2549
      %v2925 = vsel %vm2921, %v2892, %v2551
      %v2927 = vsel %vm2921, %v2894, %v2553
      %v2929 = vsel %vm2921, %v2896, %v2555
      %v2931 = vsel %vm2921, %v2898, %v2557
      %v2933 = vsel %vm2921, %v2900, %v2559
      %v2935 = vsel %vm2921, %v2902, %v2561
      %v2937 = vsel %vm2921, %v2904, %v2563
      %v2939 = vsel %vm2921, %v2906, %v2565
      %v2941 = vsel %vm2921, %v2908, %v2567
      %v2943 = vsel %vm2921, %v2910, %v2569
      %v2945 = vsel %vm2921, %v2912, %v2571
      %v2947 = vsel %vm2921, %v2914, %v2573
      %v2949 = vsel %vm2921, %v2916, %v2575
      %v2951 = vsel %vm2921, %v2918, %v2577
      %v2953 = vsel %vm2921, %v2920, %v2579
      %vm2954 = vcmask 171008
      %v2956 = vsel %vm2954, %v2923, %v2629
      %v2958 = vsel %vm2954, %v2925, %v2631
      %v2960 = vsel %vm2954, %v2927, %v2633
      %v2962 = vsel %vm2954, %v2929, %v2635
      %v2964 = vsel %vm2954, %v2931, %v2637
      %v2966 = vsel %vm2954, %v2933, %v2639
      %v2968 = vsel %vm2954, %v2935, %v2641
      %v2970 = vsel %vm2954, %v2937, %v2643
      %v2972 = vsel %vm2954, %v2939, %v2645
      %v2974 = vsel %vm2954, %v2941, %v2647
      %v2976 = vsel %vm2954, %v2943, %v2649
      %v2978 = vsel %vm2954, %v2945, %v2651
      %v2980 = vsel %vm2954, %v2947, %v2653
      %v2982 = vsel %vm2954, %v2949, %v2655
      %v2984 = vsel %vm2954, %v2951, %v2657
      %v2986 = vsel %vm2954, %v2953, %v2659
      %vm2987 = vcmask 195584
      %v2989 = vsel %vm2987, %v2956, %v2709
      %v2991 = vsel %vm2987, %v2958, %v2711
      %v2993 = vsel %vm2987, %v2960, %v2713
      %v2995 = vsel %vm2987, %v2962, %v2715
      %v2997 = vsel %vm2987, %v2964, %v2717
      %v2999 = vsel %vm2987, %v2966, %v2719
      %v3001 = vsel %vm2987, %v2968, %v2721
      %v3003 = vsel %vm2987, %v2970, %v2723
      %v3005 = vsel %vm2987, %v2972, %v2725
      %v3007 = vsel %vm2987, %v2974, %v2727
      %v3009 = vsel %vm2987, %v2976, %v2729
      %v3011 = vsel %vm2987, %v2978, %v2731
      %v3013 = vsel %vm2987, %v2980, %v2733
      %v3015 = vsel %vm2987, %v2982, %v2735
      %v3017 = vsel %vm2987, %v2984, %v2737
      %v3019 = vsel %vm2987, %v2986, %v2739
      %v3020 = vld [vmem:[%s1] sm:$0xf]
      %v3021 = vld [vmem:[%s1 + $0x4] sm:$0xf]
      %v3022 = vld [vmem:[%s1 + $0x8] sm:$0xf]
      %v3023 = vld [vmem:[%s1 + $0xc] sm:$0x3]
      %v3024 = vld [vmem:[%s2] sm:$0x1]
      %v3026 = vlaneseq
      %v3027 = vshrl.u32 %v3026, 7
      %v3028 = vsub.s32 0, %v3027
      %v3029 = vrot.slane %v3024, %v3028
      %v3035 = vunpack.c.l.b16 %v3020
      %v3036 = vunpack.c.l.b16 %v3021
      %v3037 = vunpack.c.l.b16 %v3022
      %v3038 = vunpack.c.l.b16 %v3023
      %v3039 = vpack.c.b16 %v3036, %v3035
      %v3040 = vpack.c.b16 %v3038, %v3037
      %vm3042 = vcmask 220160
      %v3043 = vsel %vm3042, %v2989, 0
      %v3045 = vsel %vm3042, %v2991, 0
      %v3047 = vsel %vm3042, %v2993, 0
      %v3049 = vsel %vm3042, %v2995, 0
      %v3051 = vsel %vm3042, %v2997, 0
      %v3053 = vsel %vm3042, %v2999, 0
      %v3055 = vsel %vm3042, %v3001, 0
      %v3057 = vsel %vm3042, %v3003, 0
      %v3059 = vsel %vm3042, %v3005, 0
      %v3061 = vsel %vm3042, %v3007, 0
      %v3063 = vsel %vm3042, %v3009, 0
      %v3065 = vsel %vm3042, %v3011, 0
      %v3067 = vsel %vm3042, %v3013, 0
      %v3069 = vsel %vm3042, %v3015, 0
      %v3071 = vsel %vm3042, %v3017, 0
      %v3073 = vsel %vm3042, %v3019, 0
      %vm3075 = vcmask 1044480
      %vm3076 = vcmask 1045504
      %v3077 = vsel %vm3075, 4294967295, 65535
      %v3078 = vsel %vm3076, %v3077, 0
      %v3080 = vand.u32 %v3040, %v3078
      %3082 = vmatprep.subr.bf16.mxu0 0
      %3083 = vmatpush1.bf16.msra.mxu0 %v3039
      %3084 = vmatprep.subr.bf16.mxu0 0
      %3085 = vmatpush1.bf16.msra.mxu0 %v3080
      %3086 = vmatprep.subr.bf16.mxu0 0
      %3087 = vmatpush1.bf16.msra.mxu0 0
      %3088 = vmatprep.subr.bf16.mxu0 0
      %3089 = vmatpush1.bf16.msra.mxu0 0
      %3090 = vmatprep.subr.bf16.mxu0 0
      %3091 = vmatpush1.bf16.msra.mxu0 0
      %3092 = vmatprep.subr.bf16.mxu0 0
      %3093 = vmatpush1.bf16.msra.mxu0 0
      %3094 = vmatprep.subr.bf16.mxu0 0
      %3095 = vmatpush1.bf16.msra.mxu0 0
      %3096 = vmatprep.subr.bf16.mxu0 0
      %3097 = vmatpush1.bf16.msra.mxu0 0
      %3098 = vmatprep.subr.bf16.mxu0 0
      %3099 = vmatpush1.bf16.msra.mxu0 0
      %3100 = vmatprep.subr.bf16.mxu0 0
      %3101 = vmatpush1.bf16.msra.mxu0 0
      %3102 = vmatprep.subr.bf16.mxu0 0
      %3103 = vmatpush1.bf16.msra.mxu0 0
      %3104 = vmatprep.subr.bf16.mxu0 0
      %3105 = vmatpush1.bf16.msra.mxu0 0
      %3106 = vmatprep.subr.bf16.mxu0 0
      %3107 = vmatpush1.bf16.msra.mxu0 0
      %3108 = vmatprep.subr.bf16.mxu0 0
      %3109 = vmatpush1.bf16.msra.mxu0 0
      %3110 = vmatprep.subr.bf16.mxu0 0
      %3111 = vmatpush1.bf16.msra.mxu0 0
      %3112 = vmatprep.subr.bf16.mxu0 0
      %3113 = vmatpush1.bf16.msra.mxu0 0
      %3114 = vmatprep.mubr.bf16.mxu0 0
      %3115 = vmatmul.mubr.bf16.gmra.mrb[0].mxu0 %v3043
      %v3116 = vpop.f32.mrb[0].mxu0
      %v3117 = vadd.f32 %v3029, %v3116
      %v3118 = vpop.f32.mrb[0].mxu0
      %v3119 = vpop.f32.mrb[0].mxu0
      %v3120 = vadd.f32 %v3029, %v3119
      %v3121 = vpop.f32.mrb[0].mxu0
      %3122 = vmatprep.mubr.bf16.mxu0 0
      %3123 = vmatmul.mubr.bf16.gmra.mrb[0].mxu0 %v3045
      %v3124 = vpop.f32.mrb[0].mxu0
      %v3125 = vadd.f32 %v3029, %v3124
      %v3126 = vpop.f32.mrb[0].mxu0
      %v3127 = vpop.f32.mrb[0].mxu0
      %v3128 = vadd.f32 %v3029, %v3127
      %v3129 = vpop.f32.mrb[0].mxu0
      %3130 = vmatprep.mubr.bf16.mxu0 0
      %3131 = vmatmul.mubr.bf16.gmra.mrb[0].mxu0 %v3047
      %v3132 = vpop.f32.mrb[0].mxu0
      %v3133 = vadd.f32 %v3029, %v3132
      %v3134 = vpop.f32.mrb[0].mxu0
      %v3135 = vpop.f32.mrb[0].mxu0
      %v3136 = vadd.f32 %v3029, %v3135
      %v3137 = vpop.f32.mrb[0].mxu0
      %3138 = vmatprep.mubr.bf16.mxu0 0
      %3139 = vmatmul.mubr.bf16.gmra.mrb[0].mxu0 %v3049
      %v3140 = vpop.f32.mrb[0].mxu0
      %v3141 = vadd.f32 %v3029, %v3140
      %v3142 = vpop.f32.mrb[0].mxu0
      %v3143 = vpop.f32.mrb[0].mxu0
      %v3144 = vadd.f32 %v3029, %v3143
      %v3145 = vpop.f32.mrb[0].mxu0
      %3146 = vmatprep.mubr.bf16.mxu0 0
      %3147 = vmatmul.mubr.bf16.gmra.mrb[0].mxu0 %v3051
      %v3148 = vpop.f32.mrb[0].mxu0
      %v3149 = vadd.f32 %v3029, %v3148
      %v3150 = vpop.f32.mrb[0].mxu0
      %v3151 = vpop.f32.mrb[0].mxu0
      %v3152 = vadd.f32 %v3029, %v3151
      %v3153 = vpop.f32.mrb[0].mxu0
      %3154 = vmatprep.mubr.bf16.mxu0 0
      %3155 = vmatmul.mubr.bf16.gmra.mrb[0].mxu0 %v3053
      %v3156 = vpop.f32.mrb[0].mxu0
      %v3157 = vadd.f32 %v3029, %v3156
      %v3158 = vpop.f32.mrb[0].mxu0
      %v3159 = vpop.f32.mrb[0].mxu0
      %v3160 = vadd.f32 %v3029, %v3159
      %v3161 = vpop.f32.mrb[0].mxu0
      %3162 = vmatprep.mubr.bf16.mxu0 0
      %3163 = vmatmul.mubr.bf16.gmra.mrb[0].mxu0 %v3055
      %v3164 = vpop.f32.mrb[0].mxu0
      %v3165 = vadd.f32 %v3029, %v3164
      %v3166 = vpop.f32.mrb[0].mxu0
      %v3167 = vpop.f32.mrb[0].mxu0
      %v3168 = vadd.f32 %v3029, %v3167
      %v3169 = vpop.f32.mrb[0].mxu0
      %3170 = vmatprep.mubr.bf16.mxu0 0
      %3171 = vmatmul.mubr.bf16.gmra.mrb[0].mxu0 %v3057
      %v3172 = vpop.f32.mrb[0].mxu0
      %v3173 = vadd.f32 %v3029, %v3172
      %v3174 = vpop.f32.mrb[0].mxu0
      %v3175 = vpop.f32.mrb[0].mxu0
      %v3176 = vadd.f32 %v3029, %v3175
      %v3177 = vpop.f32.mrb[0].mxu0
      %3178 = vmatprep.mubr.bf16.mxu0 0
      %3179 = vmatmul.mubr.bf16.gmra.mrb[0].mxu0 %v3059
      %v3180 = vpop.f32.mrb[0].mxu0
      %v3181 = vadd.f32 %v3029, %v3180
      %v3182 = vpop.f32.mrb[0].mxu0
      %v3183 = vpop.f32.mrb[0].mxu0
      %v3184 = vadd.f32 %v3029, %v3183
      %v3185 = vpop.f32.mrb[0].mxu0
      %3186 = vmatprep.mubr.bf16.mxu0 0
      %3187 = vmatmul.mubr.bf16.gmra.mrb[0].mxu0 %v3061
      %v3188 = vpop.f32.mrb[0].mxu0
      %v3189 = vadd.f32 %v3029, %v3188
      %v3190 = vpop.f32.mrb[0].mxu0
      %v3191 = vpop.f32.mrb[0].mxu0
      %v3192 = vadd.f32 %v3029, %v3191
      %v3193 = vpop.f32.mrb[0].mxu0
      %3194 = vmatprep.mubr.bf16.mxu0 0
      %3195 = vmatmul.mubr.bf16.gmra.mrb[0].mxu0 %v3063
      %v3196 = vpop.f32.mrb[0].mxu0
      %v3197 = vadd.f32 %v3029, %v3196
      %v3198 = vpop.f32.mrb[0].mxu0
      %v3199 = vpop.f32.mrb[0].mxu0
      %v3200 = vadd.f32 %v3029, %v3199
      %v3201 = vpop.f32.mrb[0].mxu0
      %3202 = vmatprep.mubr.bf16.mxu0 0
      %3203 = vmatmul.mubr.bf16.gmra.mrb[0].mxu0 %v3065
      %v3204 = vpop.f32.mrb[0].mxu0
      %v3205 = vadd.f32 %v3029, %v3204
      %v3206 = vpop.f32.mrb[0].mxu0
      %v3207 = vpop.f32.mrb[0].mxu0
      %v3208 = vadd.f32 %v3029, %v3207
      %v3209 = vpop.f32.mrb[0].mxu0
      %3210 = vmatprep.mubr.bf16.mxu0 0
      %3211 = vmatmul.mubr.bf16.gmra.mrb[0].mxu0 %v3067
      %v3212 = vpop.f32.mrb[0].mxu0
      %v3213 = vadd.f32 %v3029, %v3212
      %v3214 = vpop.f32.mrb[0].mxu0
      %v3215 = vpop.f32.mrb[0].mxu0
      %v3216 = vadd.f32 %v3029, %v3215
      %v3217 = vpop.f32.mrb[0].mxu0
      %3218 = vmatprep.mubr.bf16.mxu0 0
      %3219 = vmatmul.mubr.bf16.gmra.mrb[0].mxu0 %v3069
      %v3220 = vpop.f32.mrb[0].mxu0
      %v3221 = vadd.f32 %v3029, %v3220
      %v3222 = vpop.f32.mrb[0].mxu0
      %v3223 = vpop.f32.mrb[0].mxu0
      %v3224 = vadd.f32 %v3029, %v3223
      %v3225 = vpop.f32.mrb[0].mxu0
      %3226 = vmatprep.mubr.bf16.mxu0 0
      %3227 = vmatmul.mubr.bf16.gmra.mrb[0].mxu0 %v3071
      %v3228 = vpop.f32.mrb[0].mxu0
      %v3229 = vadd.f32 %v3029, %v3228
      %v3230 = vpop.f32.mrb[0].mxu0
      %v3231 = vpop.f32.mrb[0].mxu0
      %v3232 = vadd.f32 %v3029, %v3231
      %v3233 = vpop.f32.mrb[0].mxu0
      %3234 = vmatprep.mubr.bf16.mxu0 0
      %3235 = vmatmul.mubr.bf16.gmra.mrb[0].mxu0 %v3073
      %v3236 = vpop.f32.mrb[0].mxu0
      %v3237 = vadd.f32 %v3029, %v3236
      %v3238 = vpop.f32.mrb[0].mxu0
      %v3239 = vpop.f32.mrb[0].mxu0
      %v3240 = vadd.f32 %v3029, %v3239
      %v3241 = vpop.f32.mrb[0].mxu0
      %3242 = vdwg.mxu0
      %v3243 = vmax.f32 %v3117, 0.0
      %v3244 = vmax.f32 %v3120, 0.0
      %v3245 = vmax.f32 %v3125, 0.0
      %v3246 = vmax.f32 %v3128, 0.0
      %v3247 = vmax.f32 %v3133, 0.0
      %v3248 = vmax.f32 %v3136, 0.0
      %v3249 = vmax.f32 %v3141, 0.0
      %v3250 = vmax.f32 %v3144, 0.0
      %v3251 = vmax.f32 %v3149, 0.0
      %v3252 = vmax.f32 %v3152, 0.0
      %v3253 = vmax.f32 %v3157, 0.0
      %v3254 = vmax.f32 %v3160, 0.0
      %v3255 = vmax.f32 %v3165, 0.0
      %v3256 = vmax.f32 %v3168, 0.0
      %v3257 = vmax.f32 %v3173, 0.0
      %v3258 = vmax.f32 %v3176, 0.0
      %v3259 = vmax.f32 %v3181, 0.0
      %v3260 = vmax.f32 %v3184, 0.0
      %v3261 = vmax.f32 %v3189, 0.0
      %v3262 = vmax.f32 %v3192, 0.0
      %v3263 = vmax.f32 %v3197, 0.0
      %v3264 = vmax.f32 %v3200, 0.0
      %v3265 = vmax.f32 %v3205, 0.0
      %v3266 = vmax.f32 %v3208, 0.0
      %v3267 = vmax.f32 %v3213, 0.0
      %v3268 = vmax.f32 %v3216, 0.0
      %v3269 = vmax.f32 %v3221, 0.0
      %v3270 = vmax.f32 %v3224, 0.0
      %v3271 = vmax.f32 %v3229, 0.0
      %v3272 = vmax.f32 %v3232, 0.0
      %v3273 = vmax.f32 %v3237, 0.0
      %v3274 = vmax.f32 %v3240, 0.0
      %vm3275 = vcmask 130048
      %3276 = vst.msk [vmem:[%s170] sm:$0xff] %vm3275, %v3243
      %3277 = vst.msk [vmem:[%s170 + $0x8] sm:$0xff] %vm3275, %v3244
      %3278 = vst.msk [vmem:[%s170 + $0x10] sm:$0xff] %vm3275, %v3245
      %3279 = vst.msk [vmem:[%s170 + $0x18] sm:$0xff] %vm3275, %v3246
      %3280 = vst.msk [vmem:[%s170 + $0x20] sm:$0xff] %vm3275, %v3247
      %3281 = vst.msk [vmem:[%s170 + $0x28] sm:$0xff] %vm3275, %v3248
      %3282 = vst.msk [vmem:[%s170 + $0x30] sm:$0xff] %vm3275, %v3249
      %3283 = vst.msk [vmem:[%s170 + $0x38] sm:$0xff] %vm3275, %v3250
      %3284 = vst.msk [vmem:[%s170 + $0x40] sm:$0xff] %vm3275, %v3251
      %3285 = vst.msk [vmem:[%s170 + $0x48] sm:$0xff] %vm3275, %v3252
      %3286 = vst.msk [vmem:[%s170 + $0x50] sm:$0xff] %vm3275, %v3253
      %3287 = vst.msk [vmem:[%s170 + $0x58] sm:$0xff] %vm3275, %v3254
      %3288 = vst.msk [vmem:[%s170 + $0x60] sm:$0xff] %vm3275, %v3255
      %3289 = vst.msk [vmem:[%s170 + $0x68] sm:$0xff] %vm3275, %v3256
      %3290 = vst.msk [vmem:[%s170 + $0x70] sm:$0xff] %vm3275, %v3257
      %3291 = vst.msk [vmem:[%s170 + $0x78] sm:$0xff] %vm3275, %v3258
      %3292 = vst.msk [vmem:[%s170 + $0x80] sm:$0xff] %vm3275, %v3259
      %3293 = vst.msk [vmem:[%s170 + $0x88] sm:$0xff] %vm3275, %v3260
      %3294 = vst.msk [vmem:[%s170 + $0x90] sm:$0xff] %vm3275, %v3261
      %3295 = vst.msk [vmem:[%s170 + $0x98] sm:$0xff] %vm3275, %v3262
      %3296 = vst.msk [vmem:[%s170 + $0xa0] sm:$0xff] %vm3275, %v3263
      %3297 = vst.msk [vmem:[%s170 + $0xa8] sm:$0xff] %vm3275, %v3264
      %3298 = vst.msk [vmem:[%s170 + $0xb0] sm:$0xff] %vm3275, %v3265
      %3299 = vst.msk [vmem:[%s170 + $0xb8] sm:$0xff] %vm3275, %v3266
      %3300 = vst.msk [vmem:[%s170 + $0xc0] sm:$0xff] %vm3275, %v3267
      %3301 = vst.msk [vmem:[%s170 + $0xc8] sm:$0xff] %vm3275, %v3268
      %3302 = vst.msk [vmem:[%s170 + $0xd0] sm:$0xff] %vm3275, %v3269
      %3303 = vst.msk [vmem:[%s170 + $0xd8] sm:$0xff] %vm3275, %v3270
      %3304 = vst.msk [vmem:[%s170 + $0xe0] sm:$0xff] %vm3275, %v3271
      %3305 = vst.msk [vmem:[%s170 + $0xe8] sm:$0xff] %vm3275, %v3272
      %3306 = vst.msk [vmem:[%s170 + $0xf0] sm:$0xff] %vm3275, %v3273
      %3307 = vst.msk [vmem:[%s170 + $0xf8] sm:$0xff] %vm3275, %v3274
      %p3308 = scmp.lt.s32.totalorder %s14, 3
      %s3309 = scalar_select %p3308, %s14, 3
      %s3310 = smul.addr %s3309, 32
      %s3311 = smul.addr %s3310, 8
      %s3312 = scalar_lea.vmem %s3, %s3311
      // Predicated region
      $region33: #{perceptual_loss.7} parent=31 // pred_check
        %p3313 = pneg %p100
      $region34: #{perceptual_loss.7} parent=31 // pred_check_branch
        %3315 = sbr.rel (%p3313) target = $region36
      $region35: #{perceptual_loss.7} parent=31 // pred_region
        _
      $region36: #{perceptual_loss.7} parent=31 // pred_fallthru
        _
    $region32: #{perceptual_loss.7} parent=5 // pred_fallthru
      _
    %p3316 = scmp.le.s32.totalorder 2, %s9
    // Predicated region
    $region37: #{perceptual_loss.7} parent=5 // pred_check
      %p3317 = pneg %p3316
    $region38: #{perceptual_loss.7} parent=5 // pred_check_branch
      %3319 = sbr.rel (%p3317) target = $region40
    $region39: #{perceptual_loss.7} parent=5 // pred_region
      %s3320 = ssub.s32 %s9, 2
      // Predicated region
      $region41: #{perceptual_loss.7} parent=39 // pred_check
        %p3321 = pneg %p106
      $region42: #{perceptual_loss.7} parent=39 // pred_check_branch
        %3323 = sbr.rel (%p3321) target = $region44
      $region43: #{perceptual_loss.7} parent=39 // pred_region
        %p3324 = scmp.lt.s32.totalorder %s15, 3
        %s3325 = scalar_select %p3324, %s15, 3
        %s3326 = smul.addr %s3325, 32
        %s3327 = smul.addr %s3326, 8
        %s3328 = scalar_lea.vmem %s3, %s3327
      $region44: #{perceptual_loss.7} parent=39 // pred_fallthru
        _
    $region40: #{perceptual_loss.7} parent=5 // pred_fallthru
      _
  $region6: #{perceptual_loss.7} parent=0 // loop_footer
    %s13 = sadd.s32 1, %s9
  $region7: #{perceptual_loss.7} parent=0 // loop_footer_branch
    %8 = sbr.rel target = $region3
  $region8: #{perceptual_loss.7} parent=0 // loop_exit
    _

// kernel: perceptual_loss.8
$region0: #{perceptual_loss.8}
  #allocation0 [shape = 'u32[]', space=smem, size = 0x4, offset = 0x4, fixed_abs, tag = 'smem constant byte address 0x4 - core index']
  #allocation1 [shape = 'u32[144,128]{1,0:T(1,128)}', space=vmem, size = 0x12000, scoped, tag = 'internal scratch']
  %s0 = inlined_call_operand.vmem [shape: bf16[4,18,18,16], index: 0, kind: input, shape index: {}]
  %s1 = inlined_call_operand.vmem [shape: bf16[144,16], index: 1, kind: input, shape index: {}]
  %s2 = inlined_call_operand.vmem [shape: f32[1,16], index: 2, kind: input, shape index: {}]
  %s3 = inlined_call_operand.vmem [shape: f32[4,256,16], index: 3, kind: output, shape index: {}]
  %s4 = sld [smem:[#allocation0]]
  $region45: #{perceptual_loss.8} parent=0
    _
  %s6 = ssub.s32 1, %s4
  %s7 = scalar_select 0, %s6, %s4
  loop: start=0, step=1, limit=6
  $region2: #{perceptual_loss.8} parent=0 // loop_pre_header
    _
  $region3: #{perceptual_loss.8} parent=0 // loop_header
    %s9 = sphi 0, %s13
    %p10 = scmp.ge.s32.totalorder %s9, 6
    %s19 = sphi 0, %s21
    %s22 = sphi 0, %s19
    %s23 = sphi 0, %s22
    %s39 = sphi 0, %s23
    %s43 = sphi 0, %s43
    %s45 = sphi 0, %s43
    %s46 = sphi 0, %s45
    %s60 = sphi 0, %s46
    %s64 = sphi 0, %s64
    %s66 = sphi 0, %s64
    %s67 = sphi 0, %s66
    %s81 = sphi 0, %s67
    %s87 = sphi 0, %s89
    %s90 = sphi 0, %s87
    %s91 = sphi 0, %s90
    %s107 = sphi 0, %s91
  $region4: #{perceptual_loss.8} parent=0 // loop_header_branch
    %12 = sbr.rel (%p10) target = $region8
  $region5: #{perceptual_loss.8} parent=0 // loop_body
    %s14 = ssub.s32 %s9, 1
    %s15 = ssub.s32 %s9, 2
    %s16 = sadd.s32 %s9, 1
    %s17 = ssub.s32 %s9, %s16
    %p18 = scmp.eq.s32.totalorder %s17, 0
    %s20 = sadd.s32 %s19, 1
    %s21 = scalar_select %p18, %s19, %s20
    %p24 = pneg %p18
    %p25 = scmp.eq.s32.totalorder %s9, 3
    %p26 = por %p24, %p25
    %p27 = scmp.ne.s32.totalorder %s19, %s22
    %p28 = scmp.eq.s32.totalorder %s9, 0
    %p29 = por %p27, %p28
    %p30 = scmp.ne.s32.totalorder %s19, %s22
    %p31 = scmp.eq.s32.totalorder %s14, 3
    %p32 = por %p30, %p31
    %p33 = scmp.ne.s32.totalorder %s22, %s23
    %p34 = scmp.eq.s32.totalorder %s14, 0
    %p35 = por %p33, %p34
    %p36 = scmp.ne.s32.totalorder %s22, %s23
    %p37 = scmp.eq.s32.totalorder %s15, 3
    %p38 = por %p36, %p37
    %p40 = scmp.ne.s32.totalorder %s23, %s39
    %p41 = scmp.eq.s32.totalorder %s15, 0
    %p42 = por %p40, %p41
    %s44 = sadd.s32 %s43, 1
    %p47 = scmp.eq.s32.totalorder %s9, 3
    %p48 = scmp.ne.s32.totalorder %s43, %s45
    %p49 = scmp.eq.s32.totalorder %s9, 0
    %p50 = por %p48, %p49
    %p51 = scmp.ne.s32.totalorder %s43, %s45
    %p52 = scmp.eq.s32.totalorder %s14, 3
    %p53 = por %p51, %p52
    %p54 = scmp.ne.s32.totalorder %s45, %s46
    %p55 = scmp.eq.s32.totalorder %s14, 0
    %p56 = por %p54, %p55
    %p57 = scmp.ne.s32.totalorder %s45, %s46
    %p58 = scmp.eq.s32.totalorder %s15, 3
    %p59 = por %p57, %p58
    %p61 = scmp.ne.s32.totalorder %s46, %s60
    %p62 = scmp.eq.s32.totalorder %s15, 0
    %p63 = por %p61, %p62
    %s65 = sadd.s32 %s64, 1
    %p68 = scmp.eq.s32.totalorder %s9, 3
    %p69 = scmp.ne.s32.totalorder %s64, %s66
    %p70 = scmp.eq.s32.totalorder %s9, 0
    %p71 = por %p69, %p70
    %p72 = scmp.ne.s32.totalorder %s64, %s66
    %p73 = scmp.eq.s32.totalorder %s14, 3
    %p74 = por %p72, %p73
    %p75 = scmp.ne.s32.totalorder %s66, %s67
    %p76 = scmp.eq.s32.totalorder %s14, 0
    %p77 = por %p75, %p76
    %p78 = scmp.ne.s32.totalorder %s66, %s67
    %p79 = scmp.eq.s32.totalorder %s15, 3
    %p80 = por %p78, %p79
    %p82 = scmp.ne.s32.totalorder %s67, %s81
    %p83 = scmp.eq.s32.totalorder %s15, 0
    %p84 = por %p82, %p83
    %s85 = ssub.s32 %s9, %s16
    %p86 = scmp.eq.s32.totalorder %s85, 0
    %s88 = sadd.s32 %s87, 1
    %s89 = scalar_select %p86, %s87, %s88
    %p92 = pneg %p86
    %p93 = scmp.eq.s32.totalorder %s9, 3
    %p94 = por %p92, %p93
    %p95 = scmp.ne.s32.totalorder %s87, %s90
    %p96 = scmp.eq.s32.totalorder %s9, 0
    %p97 = por %p95, %p96
    %p98 = scmp.ne.s32.totalorder %s87, %s90
    %p99 = scmp.eq.s32.totalorder %s14, 3
    %p100 = por %p98, %p99
    %p101 = scmp.ne.s32.totalorder %s90, %s91
    %p102 = scmp.eq.s32.totalorder %s14, 0
    %p103 = por %p101, %p102
    %p104 = scmp.ne.s32.totalorder %s90, %s91
    %p105 = scmp.eq.s32.totalorder %s15, 3
    %p106 = por %p104, %p105
    %p108 = scmp.ne.s32.totalorder %s91, %s107
    %p109 = scmp.eq.s32.totalorder %s15, 0
    %p110 = por %p108, %p109
    %p111 = scmp.le.s32.totalorder 1, %s9
    %p112 = scmp.lt.s32.totalorder %s9, 5
    %p113 = pnand %p111, %p112
    %p114 = pneg %p113
    // Predicated region
    $region9: #{perceptual_loss.8} parent=5 // pred_check
      _
    $region10: #{perceptual_loss.8} parent=5 // pred_check_branch
      %116 = sbr.rel (%p113) target = $region12
    $region11: #{perceptual_loss.8} parent=5 // pred_region
      %s117 = ssub.s32 %s9, 1
      // Predicated region
      $region13: #{perceptual_loss.8} parent=11 // pred_check
        %p118 = pneg %p56
      $region14: #{perceptual_loss.8} parent=11 // pred_check_branch
        %120 = sbr.rel (%p118) target = $region16
      $region15: #{perceptual_loss.8} parent=11 // pred_region
        _
      $region16: #{perceptual_loss.8} parent=11 // pred_fallthru
        _
      // Predicated region
      $region17: #{perceptual_loss.8} parent=11 // pred_check
        %p121 = pneg %p77
      $region18: #{perceptual_loss.8} parent=11 // pred_check_branch
        %123 = sbr.rel (%p121) target = $region20
      $region19: #{perceptual_loss.8} parent=11 // pred_region
        _
      $region20: #{perceptual_loss.8} parent=11 // pred_fallthru
        _
    $region12: #{perceptual_loss.8} parent=5 // pred_fallthru
      _
    %p124 = scmp.lt.s32.totalorder %s9, 4
    // Predicated region
    $region21: #{perceptual_loss.8} parent=5 // pred_check
      %p125 = pneg %p124
    $region22: #{perceptual_loss.8} parent=5 // pred_check_branch
      %127 = sbr.rel (%p125) target = $region24
    $region23: #{perceptual_loss.8} parent=5 // pred_region
      // Predicated region
      $region25: #{perceptual_loss.8} parent=23 // pred_check
        %p128 = pneg %p29
      $region26: #{perceptual_loss.8} parent=23 // pred_check_branch
        %130 = sbr.rel (%p128) target = $region28
      $region27: #{perceptual_loss.8} parent=23 // pred_region
        %p131 = scmp.lt.s32.totalorder %s9, 3
        %s132 = scalar_select %p131, %s9, 3
        %s133 = smul.addr %s132, 54
        %s134 = smul.addr %s133, 4
        %s135 = scalar_lea.vmem %s0, %s134
      $region28: #{perceptual_loss.8} parent=23 // pred_fallthru
        _
    $region24: #{perceptual_loss.8} parent=5 // pred_fallthru
      _
    %p136 = scmp.le.s32.totalorder 1, %s9
    %p137 = scmp.lt.s32.totalorder %s9, 5
    %p138 = pnand %p136, %p137
    %p139 = pneg %p138
    // Predicated region
    $region29: #{perceptual_loss.8} parent=5 // pred_check
      _
    $region30: #{perceptual_loss.8} parent=5 // pred_check_branch
      %141 = sbr.rel (%p138) target = $region32
    $region31: #{perceptual_loss.8} parent=5 // pred_region
      %s142 = ssub.s32 %s9, 1
      %p143 = scmp.lt.s32.totalorder %s14, 3
      %s144 = scalar_select %p143, %s14, 3
      %s145 = smul.addr %s144, 54
      %s146 = smul.addr %s145, 4
      %s147 = scalar_lea.vmem %s0, %s146
      %p148 = pneg %p35
      %p149 = pneg %p32
      %p150 = pneg %p56
      %p151 = pneg %p53
      %p152 = pneg %p77
      %p153 = pneg %p74
      %p154 = pneg %p103
      %p155 = pneg %p100
      %p156 = scmp.lt.s32.totalorder %s14, 3
      %s157 = scalar_select %p156, %s14, 3
      %s158 = smul.addr %s157, 32
      %s159 = smul.addr %s158, 8
      %s160 = scalar_lea.vmem %s3, %s159
      %p161 = scmp.lt.s32.totalorder %s14, 3
      %s162 = scalar_select %p161, %s14, 3
      %s163 = smul.addr %s162, 54
      %s164 = smul.addr %s163, 4
      %s165 = scalar_lea.vmem %s0, %s164
      %p166 = scmp.lt.s32.totalorder %s14, 3
      %s167 = scalar_select %p166, %s14, 3
      %s168 = smul.addr %s167, 32
      %s169 = smul.addr %s168, 8
      %s170 = scalar_lea.vmem %s3, %s169
      %v172 = vld [vmem:[%s165] sm:$0xf]
      %v173 = vld [vmem:[%s165 + $0x4] sm:$0xf]
      %v174 = vld [vmem:[%s165 + $0xc] sm:$0xf]
      %v175 = vld [vmem:[%s165 + $0x10] sm:$0xf]
      %v176 = vld [vmem:[%s165 + $0x18] sm:$0xf]
      %v177 = vld [vmem:[%s165 + $0x1c] sm:$0xf]
      %v178 = vld [vmem:[%s165 + $0x24] sm:$0xf]
      %v179 = vld [vmem:[%s165 + $0x28] sm:$0xf]
      %v180 = vld [vmem:[%s165 + $0x30] sm:$0xf]
      %v181 = vld [vmem:[%s165 + $0x34] sm:$0xf]
      %v182 = vld [vmem:[%s165 + $0x3c] sm:$0xf]
      %v183 = vld [vmem:[%s165 + $0x40] sm:$0xf]
      %v184 = vld [vmem:[%s165 + $0x48] sm:$0xf]
      %v185 = vld [vmem:[%s165 + $0x4c] sm:$0xf]
      %v186 = vld [vmem:[%s165 + $0x54] sm:$0xf]
      %v187 = vld [vmem:[%s165 + $0x58] sm:$0xf]
      %v188 = vld [vmem:[%s165 + $0x60] sm:$0xf]
      %v189 = vld [vmem:[%s165 + $0x64] sm:$0xf]
      %v190 = vld [vmem:[%s165 + $0x6c] sm:$0xf]
      %v191 = vld [vmem:[%s165 + $0x70] sm:$0xf]
      %v192 = vld [vmem:[%s165 + $0x78] sm:$0xf]
      %v193 = vld [vmem:[%s165 + $0x7c] sm:$0xf]
      %v194 = vld [vmem:[%s165 + $0x84] sm:$0xf]
      %v195 = vld [vmem:[%s165 + $0x88] sm:$0xf]
      %v196 = vld [vmem:[%s165 + $0x90] sm:$0xf]
      %v197 = vld [vmem:[%s165 + $0x94] sm:$0xf]
      %v198 = vld [vmem:[%s165 + $0x9c] sm:$0xf]
      %v199 = vld [vmem:[%s165 + $0xa0] sm:$0xf]
      %v200 = vld [vmem:[%s165 + $0xa8] sm:$0xf]
      %v201 = vld [vmem:[%s165 + $0xac] sm:$0xf]
      %v202 = vld [vmem:[%s165 + $0xb4] sm:$0xf]
      %v203 = vld [vmem:[%s165 + $0xb8] sm:$0xf]
      %v204 = vld [vmem:[%s165 + $0x8] sm:$0x1]
      %v205 = vld [vmem:[%s165 + $0x14] sm:$0x1]
      %v206 = vld [vmem:[%s165 + $0x20] sm:$0x1]
      %v207 = vld [vmem:[%s165 + $0x2c] sm:$0x1]
      %v208 = vld [vmem:[%s165 + $0x38] sm:$0x1]
      %v209 = vld [vmem:[%s165 + $0x44] sm:$0x1]
      %v210 = vld [vmem:[%s165 + $0x50] sm:$0x1]
      %v211 = vld [vmem:[%s165 + $0x5c] sm:$0x1]
      %v212 = vld [vmem:[%s165 + $0x68] sm:$0x1]
      %v213 = vld [vmem:[%s165 + $0x74] sm:$0x1]
      %v214 = vld [vmem:[%s165 + $0x80] sm:$0x1]
      %v215 = vld [vmem:[%s165 + $0x8c] sm:$0x1]
      %v216 = vld [vmem:[%s165 + $0x98] sm:$0x1]
      %v217 = vld [vmem:[%s165 + $0xa4] sm:$0x1]
      %v218 = vld [vmem:[%s165 + $0xb0] sm:$0x1]
      %v219 = vld [vmem:[%s165 + $0xbc] sm:$0x1]
      %vm220 = vsmask.f32 3328
      %vm221 = vsmask.f32 7440
      %vm222 = vmor %vm220, %vm221
      %v224 = vshrl.u32 %v172, 16
      %v226 = vrot.slane %v224, 4
      %v227 = vshll.u32 %v172, 16
      %v229 = vrot.slane %v227, 5
      %v230 = vor.u32 %v226, %v229
      %v231 = vrot.slane %v230, 4
      %v233 = vshll.u32 %v173, 16
      %v235 = vrot.slane %v233, 5
      %v236 = vsel %vm222, %v231, %v235
      %v237 = vshrl.u32 %v173, 16
      %v239 = vrot.slane %v237, 4
      %v240 = vor.u32 %v239, %v235
      %v241 = vrot.slane %v240, 4
      %v243 = vshll.u32 %v204, 16
      %v245 = vrot.slane %v243, 5
      %v246 = vsel %vm222, %v241, %v245
      %v248 = vshrl.u32 %v174, 16
      %v250 = vrot.slane %v248, 4
      %v251 = vshll.u32 %v174, 16
      %v253 = vrot.slane %v251, 5
      %v254 = vor.u32 %v250, %v253
      %v255 = vrot.slane %v254, 4
      %v257 = vshll.u32 %v175, 16
      %v259 = vrot.slane %v257, 5
      %v260 = vsel %vm222, %v255, %v259
      %v261 = vshrl.u32 %v175, 16
      %v263 = vrot.slane %v261, 4
      %v264 = vor.u32 %v263, %v259
      %v265 = vrot.slane %v264, 4
      %v267 = vshll.u32 %v205, 16
      %v269 = vrot.slane %v267, 5
      %v270 = vsel %vm222, %v265, %v269
      %v272 = vshrl.u32 %v176, 16
      %v274 = vrot.slane %v272, 4
      %v275 = vshll.u32 %v176, 16
      %v277 = vrot.slane %v275, 5
      %v278 = vor.u32 %v274, %v277
      %v279 = vrot.slane %v278, 4
      %v281 = vshll.u32 %v177, 16
      %v283 = vrot.slane %v281, 5
      %v284 = vsel %vm222, %v279, %v283
      %v285 = vshrl.u32 %v177, 16
      %v287 = vrot.slane %v285, 4
      %v288 = vor.u32 %v287, %v283
      %v289 = vrot.slane %v288, 4
      %v291 = vshll.u32 %v206, 16
      %v293 = vrot.slane %v291, 5
      %v294 = vsel %vm222, %v289, %v293
      %v296 = vshrl.u32 %v178, 16
      %v298 = vrot.slane %v296, 4
      %v299 = vshll.u32 %v178, 16
      %v301 = vrot.slane %v299, 5
      %v302 = vor.u32 %v298, %v301
      %v303 = vrot.slane %v302, 4
      %v305 = vshll.u32 %v179, 16
      %v307 = vrot.slane %v305, 5
      %v308 = vsel %vm222, %v303, %v307
      %v309 = vshrl.u32 %v179, 16
      %v311 = vrot.slane %v309, 4
      %v312 = vor.u32 %v311, %v307
      %v313 = vrot.slane %v312, 4
      %v315 = vshll.u32 %v207, 16
      %v317 = vrot.slane %v315, 5
      %v318 = vsel %vm222, %v313, %v317
      %v320 = vshrl.u32 %v180, 16
      %v322 = vrot.slane %v320, 4
      %v323 = vshll.u32 %v180, 16
      %v325 = vrot.slane %v323, 5
      %v326 = vor.u32 %v322, %v325
      %v327 = vrot.slane %v326, 4
      %v329 = vshll.u32 %v181, 16
      %v331 = vrot.slane %v329, 5
      %v332 = vsel %vm222, %v327, %v331
      %v333 = vshrl.u32 %v181, 16
      %v335 = vrot.slane %v333, 4
      %v336 = vor.u32 %v335, %v331
      %v337 = vrot.slane %v336, 4
      %v339 = vshll.u32 %v208, 16
      %v341 = vrot.slane %v339, 5
      %v342 = vsel %vm222, %v337, %v341
      %v344 = vshrl.u32 %v182, 16
      %v346 = vrot.slane %v344, 4
      %v347 = vshll.u32 %v182, 16
      %v349 = vrot.slane %v347, 5
      %v350 = vor.u32 %v346, %v349
      %v351 = vrot.slane %v350, 4
      %v353 = vshll.u32 %v183, 16
      %v355 = vrot.slane %v353, 5
      %v356 = vsel %vm222, %v351, %v355
      %v357 = vshrl.u32 %v183, 16
      %v359 = vrot.slane %v357, 4
      %v360 = vor.u32 %v359, %v355
      %v361 = vrot.slane %v360, 4
      %v363 = vshll.u32 %v209, 16
      %v365 = vrot.slane %v363, 5
      %v366 = vsel %vm222, %v361, %v365
      %v368 = vshrl.u32 %v184, 16
      %v370 = vrot.slane %v368, 4
      %v371 = vshll.u32 %v184, 16
      %v373 = vrot.slane %v371, 5
      %v374 = vor.u32 %v370, %v373
      %v375 = vrot.slane %v374, 4
      %v377 = vshll.u32 %v185, 16
      %v379 = vrot.slane %v377, 5
      %v380 = vsel %vm222, %v375, %v379
      %v381 = vshrl.u32 %v185, 16
      %v383 = vrot.slane %v381, 4
      %v384 = vor.u32 %v383, %v379
      %v385 = vrot.slane %v384, 4
      %v387 = vshll.u32 %v210, 16
      %v389 = vrot.slane %v387, 5
      %v390 = vsel %vm222, %v385, %v389
      %v392 = vshrl.u32 %v186, 16
      %v394 = vrot.slane %v392, 4
      %v395 = vshll.u32 %v186, 16
      %v397 = vrot.slane %v395, 5
      %v398 = vor.u32 %v394, %v397
      %v399 = vrot.slane %v398, 4
      %v401 = vshll.u32 %v187, 16
      %v403 = vrot.slane %v401, 5
      %v404 = vsel %vm222, %v399, %v403
      %v405 = vshrl.u32 %v187, 16
      %v407 = vrot.slane %v405, 4
      %v408 = vor.u32 %v407, %v403
      %v409 = vrot.slane %v408, 4
      %v411 = vshll.u32 %v211, 16
      %v413 = vrot.slane %v411, 5
      %v414 = vsel %vm222, %v409, %v413
      %v416 = vshrl.u32 %v188, 16
      %v418 = vrot.slane %v416, 4
      %v419 = vshll.u32 %v188, 16
      %v421 = vrot.slane %v419, 5
      %v422 = vor.u32 %v418, %v421
      %v423 = vrot.slane %v422, 4
      %v425 = vshll.u32 %v189, 16
      %v427 = vrot.slane %v425, 5
      %v428 = vsel %vm222, %v423, %v427
      %v429 = vshrl.u32 %v189, 16
      %v431 = vrot.slane %v429, 4
      %v432 = vor.u32 %v431, %v427
      %v433 = vrot.slane %v432, 4
      %v435 = vshll.u32 %v212, 16
      %v437 = vrot.slane %v435, 5
      %v438 = vsel %vm222, %v433, %v437
      %v440 = vshrl.u32 %v190, 16
      %v442 = vrot.slane %v440, 4
      %v443 = vshll.u32 %v190, 16
      %v445 = vrot.slane %v443, 5
      %v446 = vor.u32 %v442, %v445
      %v447 = vrot.slane %v446, 4
      %v449 = vshll.u32 %v191, 16
      %v451 = vrot.slane %v449, 5
      %v452 = vsel %vm222, %v447, %v451
      %v453 = vshrl.u32 %v191, 16
      %v455 = vrot.slane %v453, 4
      %v456 = vor.u32 %v455, %v451
      %v457 = vrot.slane %v456, 4
      %v459 = vshll.u32 %v213, 16
      %v461 = vrot.slane %v459, 5
      %v462 = vsel %vm222, %v457, %v461
      %v464 = vshrl.u32 %v192, 16
      %v466 = vrot.slane %v464, 4
      %v467 = vshll.u32 %v192, 16
      %v469 = vrot.slane %v467, 5
      %v470 = vor.u32 %v466, %v469
      %v471 = vrot.slane %v470, 4
      %v473 = vshll.u32 %v193, 16
      %v475 = vrot.slane %v473, 5
      %v476 = vsel %vm222, %v471, %v475
      %v477 = vshrl.u32 %v193, 16
      %v479 = vrot.slane %v477, 4
      %v480 = vor.u32 %v479, %v475
      %v481 = vrot.slane %v480, 4
      %v483 = vshll.u32 %v214, 16
      %v485 = vrot.slane %v483, 5
      %v486 = vsel %vm222, %v481, %v485
      %v488 = vshrl.u32 %v194, 16
      %v490 = vrot.slane %v488, 4
      %v491 = vshll.u32 %v194, 16
      %v493 = vrot.slane %v491, 5
      %v494 = vor.u32 %v490, %v493
      %v495 = vrot.slane %v494, 4
      %v497 = vshll.u32 %v195, 16
      %v499 = vrot.slane %v497, 5
      %v500 = vsel %vm222, %v495, %v499
      %v501 = vshrl.u32 %v195, 16
      %v503 = vrot.slane %v501, 4
      %v504 = vor.u32 %v503, %v499
      %v505 = vrot.slane %v504, 4
      %v507 = vshll.u32 %v215, 16
      %v509 = vrot.slane %v507, 5
      %v510 = vsel %vm222, %v505, %v509
      %v512 = vshrl.u32 %v196, 16
      %v514 = vrot.slane %v512, 4
      %v515 = vshll.u32 %v196, 16
      %v517 = vrot.slane %v515, 5
      %v518 = vor.u32 %v514, %v517
      %v519 = vrot.slane %v518, 4
      %v521 = vshll.u32 %v197, 16
      %v523 = vrot.slane %v521, 5
      %v524 = vsel %vm222, %v519, %v523
      %v525 = vshrl.u32 %v197, 16
      %v527 = vrot.slane %v525, 4
      %v528 = vor.u32 %v527, %v523
      %v529 = vrot.slane %v528, 4
      %v531 = vshll.u32 %v216, 16
      %v533 = vrot.slane %v531, 5
      %v534 = vsel %vm222, %v529, %v533
      %v536 = vshrl.u32 %v198, 16
      %v538 = vrot.slane %v536, 4
      %v539 = vshll.u32 %v198, 16
      %v541 = vrot.slane %v539, 5
      %v542 = vor.u32 %v538, %v541
      %v543 = vrot.slane %v542, 4
      %v545 = vshll.u32 %v199, 16
      %v547 = vrot.slane %v545, 5
      %v548 = vsel %vm222, %v543, %v547
      %v549 = vshrl.u32 %v199, 16
      %v551 = vrot.slane %v549, 4
      %v552 = vor.u32 %v551, %v547
      %v553 = vrot.slane %v552, 4
      %v555 = vshll.u32 %v217, 16
      %v557 = vrot.slane %v555, 5
      %v558 = vsel %vm222, %v553, %v557
      %v560 = vshrl.u32 %v200, 16
      %v562 = vrot.slane %v560, 4
      %v563 = vshll.u32 %v200, 16
      %v565 = vrot.slane %v563, 5
      %v566 = vor.u32 %v562, %v565
      %v567 = vrot.slane %v566, 4
      %v569 = vshll.u32 %v201, 16
      %v571 = vrot.slane %v569, 5
      %v572 = vsel %vm222, %v567, %v571
      %v573 = vshrl.u32 %v201, 16
      %v575 = vrot.slane %v573, 4
      %v576 = vor.u32 %v575, %v571
      %v577 = vrot.slane %v576, 4
      %v579 = vshll.u32 %v218, 16
      %v581 = vrot.slane %v579, 5
      %v582 = vsel %vm222, %v577, %v581
      %v584 = vshrl.u32 %v202, 16
      %v586 = vrot.slane %v584, 4
      %v587 = vshll.u32 %v202, 16
      %v589 = vrot.slane %v587, 5
      %v590 = vor.u32 %v586, %v589
      %v591 = vrot.slane %v590, 4
      %v593 = vshll.u32 %v203, 16
      %v595 = vrot.slane %v593, 5
      %v596 = vsel %vm222, %v591, %v595
      %v597 = vshrl.u32 %v203, 16
      %v599 = vrot.slane %v597, 4
      %v600 = vor.u32 %v599, %v595
      %v601 = vrot.slane %v600, 4
      %v603 = vshll.u32 %v219, 16
      %v605 = vrot.slane %v603, 5
      %v606 = vsel %vm222, %v601, %v605
      %v607 = vld [vmem:[%s165] sm:$0xe]
      %v608 = vld [vmem:[%s165 + $0xc] sm:$0xe]
      %v609 = vld [vmem:[%s165 + $0x18] sm:$0xe]
      %v610 = vld [vmem:[%s165 + $0x24] sm:$0xe]
      %v611 = vld [vmem:[%s165 + $0x30] sm:$0xe]
      %v612 = vld [vmem:[%s165 + $0x3c] sm:$0xe]
      %v613 = vld [vmem:[%s165 + $0x48] sm:$0xe]
      %v614 = vld [vmem:[%s165 + $0x54] sm:$0xe]
      %v615 = vld [vmem:[%s165 + $0x60] sm:$0xe]
      %v616 = vld [vmem:[%s165 + $0x6c] sm:$0xe]
      %v617 = vld [vmem:[%s165 + $0x78] sm:$0xe]
      %v618 = vld [vmem:[%s165 + $0x84] sm:$0xe]
      %v619 = vld [vmem:[%s165 + $0x90] sm:$0xe]
      %v620 = vld [vmem:[%s165 + $0x9c] sm:$0xe]
      %v621 = vld [vmem:[%s165 + $0xa8] sm:$0xe]
      %v622 = vld [vmem:[%s165 + $0xb4] sm:$0xe]
      %vm671 = vcmask 1042432
      %vm672 = vcmask 1046532
      %vm673 = vmor %vm671, %vm672
      %v674 = vrot.slane %v607, 5
      %v675 = vrot.slane %v674, 4
      %v676 = vrot.slane %v173, 5
      %v677 = vsel %vm673, %v675, %v676
      %v678 = vrot.slane %v676, 4
      %v679 = vrot.slane %v204, 5
      %v680 = vsel %vm673, %v678, %v679
      %v681 = vrot.slane %v608, 5
      %v682 = vrot.slane %v681, 4
      %v683 = vrot.slane %v175, 5
      %v684 = vsel %vm673, %v682, %v683
      %v685 = vrot.slane %v683, 4
      %v686 = vrot.slane %v205, 5
      %v687 = vsel %vm673, %v685, %v686
      %v688 = vrot.slane %v609, 5
      %v689 = vrot.slane %v688, 4
      %v690 = vrot.slane %v177, 5
      %v691 = vsel %vm673, %v689, %v690
      %v692 = vrot.slane %v690, 4
      %v693 = vrot.slane %v206, 5
      %v694 = vsel %vm673, %v692, %v693
      %v695 = vrot.slane %v610, 5
      %v696 = vrot.slane %v695, 4
      %v697 = vrot.slane %v179, 5
      %v698 = vsel %vm673, %v696, %v697
      %v699 = vrot.slane %v697, 4
      %v700 = vrot.slane %v207, 5
      %v701 = vsel %vm673, %v699, %v700
      %v702 = vrot.slane %v611, 5
      %v703 = vrot.slane %v702, 4
      %v704 = vrot.slane %v181, 5
      %v705 = vsel %vm673, %v703, %v704
      %v706 = vrot.slane %v704, 4
      %v707 = vrot.slane %v208, 5
      %v708 = vsel %vm673, %v706, %v707
      %v709 = vrot.slane %v612, 5
      %v710 = vrot.slane %v709, 4
      %v711 = vrot.slane %v183, 5
      %v712 = vsel %vm673, %v710, %v711
      %v713 = vrot.slane %v711, 4
      %v714 = vrot.slane %v209, 5
      %v715 = vsel %vm673, %v713, %v714
      %v716 = vrot.slane %v613, 5
      %v717 = vrot.slane %v716, 4
      %v718 = vrot.slane %v185, 5
      %v719 = vsel %vm673, %v717, %v718
      %v720 = vrot.slane %v718, 4
      %v721 = vrot.slane %v210, 5
      %v722 = vsel %vm673, %v720, %v721
      %v723 = vrot.slane %v614, 5
      %v724 = vrot.slane %v723, 4
      %v725 = vrot.slane %v187, 5
      %v726 = vsel %vm673, %v724, %v725
      %v727 = vrot.slane %v725, 4
      %v728 = vrot.slane %v211, 5
      %v729 = vsel %vm673, %v727, %v728
      %v730 = vrot.slane %v615, 5
      %v731 = vrot.slane %v730, 4
      %v732 = vrot.slane %v189, 5
      %v733 = vsel %vm673, %v731, %v732
      %v734 = vrot.slane %v732, 4
      %v735 = vrot.slane %v212, 5
      %v736 = vsel %vm673, %v734, %v735
      %v737 = vrot.slane %v616, 5
      %v738 = vrot.slane %v737, 4
      %v739 = vrot.slane %v191, 5
      %v740 = vsel %vm673, %v738, %v739
      %v741 = vrot.slane %v739, 4
      %v742 = vrot.slane %v213, 5
      %v743 = vsel %vm673, %v741, %v742
      %v744 = vrot.slane %v617, 5
      %v745 = vrot.slane %v744, 4
      %v746 = vrot.slane %v193, 5
      %v747 = vsel %vm673, %v745, %v746
      %v748 = vrot.slane %v746, 4
      %v749 = vrot.slane %v214, 5
      %v750 = vsel %vm673, %v748, %v749
      %v751 = vrot.slane %v618, 5
      %v752 = vrot.slane %v751, 4
      %v753 = vrot.slane %v195, 5
      %v754 = vsel %vm673, %v752, %v753
      %v755 = vrot.slane %v753, 4
      %v756 = vrot.slane %v215, 5
      %v757 = vsel %vm673, %v755, %v756
      %v758 = vrot.slane %v619, 5
      %v759 = vrot.slane %v758, 4
      %v760 = vrot.slane %v197, 5
      %v761 = vsel %vm673, %v759, %v760
      %v762 = vrot.slane %v760, 4
      %v763 = vrot.slane %v216, 5
      %v764 = vsel %vm673, %v762, %v763
      %v765 = vrot.slane %v620, 5
      %v766 = vrot.slane %v765, 4
      %v767 = vrot.slane %v199, 5
      %v768 = vsel %vm673, %v766, %v767
      %v769 = vrot.slane %v767, 4
      %v770 = vrot.slane %v217, 5
      %v771 = vsel %vm673, %v769, %v770
      %v772 = vrot.slane %v621, 5
      %v773 = vrot.slane %v772, 4
      %v774 = vrot.slane %v201, 5
      %v775 = vsel %vm673, %v773, %v774
      %v776 = vrot.slane %v774, 4
      %v777 = vrot.slane %v218, 5
      %v778 = vsel %vm673, %v776, %v777
      %v779 = vrot.slane %v622, 5
      %v780 = vrot.slane %v779, 4
      %v781 = vrot.slane %v203, 5
      %v782 = vsel %vm673, %v780, %v781
      %v783 = vrot.slane %v781, 4
      %v784 = vrot.slane %v219, 5
      %v785 = vsel %vm673, %v783, %v784
      %s786 = scalar_lea.vmem %s165, 12
      %v787 = vld [vmem:[%s786] sm:$0xf]
      %v788 = vld [vmem:[%s786 + $0x4] sm:$0xf]
      %v789 = vld [vmem:[%s786 + $0xc] sm:$0xf]
      %v790 = vld [vmem:[%s786 + $0x10] sm:$0xf]
      %v791 = vld [vmem:[%s786 + $0x18] sm:$0xf]
      %v792 = vld [vmem:[%s786 + $0x1c] sm:$0xf]
      %v793 = vld [vmem:[%s786 + $0x24] sm:$0xf]
      %v794 = vld [vmem:[%s786 + $0x28] sm:$0xf]
      %v795 = vld [vmem:[%s786 + $0x30] sm:$0xf]
      %v796 = vld [vmem:[%s786 + $0x34] sm:$0xf]
      %v797 = vld [vmem:[%s786 + $0x3c] sm:$0xf]
      %v798 = vld [vmem:[%s786 + $0x40] sm:$0xf]
      %v799 = vld [vmem:[%s786 + $0x48] sm:$0xf]
      %v800 = vld [vmem:[%s786 + $0x4c] sm:$0xf]
      %v801 = vld [vmem:[%s786 + $0x54] sm:$0xf]
      %v802 = vld [vmem:[%s786 + $0x58] sm:$0xf]
      %v803 = vld [vmem:[%s786 + $0x60] sm:$0xf]
      %v804 = vld [vmem:[%s786 + $0x64] sm:$0xf]
      %v805 = vld [vmem:[%s786 + $0x6c] sm:$0xf]
      %v806 = vld [vmem:[%s786 + $0x70] sm:$0xf]
      %v807 = vld [vmem:[%s786 + $0x78] sm:$0xf]
      %v808 = vld [vmem:[%s786 + $0x7c] sm:$0xf]
      %v809 = vld [vmem:[%s786 + $0x84] sm:$0xf]
      %v810 = vld [vmem:[%s786 + $0x88] sm:$0xf]
      %v811 = vld [vmem:[%s786 + $0x90] sm:$0xf]
      %v812 = vld [vmem:[%s786 + $0x94] sm:$0xf]
      %v813 = vld [vmem:[%s786 + $0x9c] sm:$0xf]
      %v814 = vld [vmem:[%s786 + $0xa0] sm:$0xf]
      %v815 = vld [vmem:[%s786 + $0xa8] sm:$0xf]
      %v816 = vld [vmem:[%s786 + $0xac] sm:$0xf]
      %v817 = vld [vmem:[%s786 + $0xb4] sm:$0xf]
      %v818 = vld [vmem:[%s786 + $0xb8] sm:$0xf]
      %v819 = vld [vmem:[%s786 + $0x8] sm:$0x1]
      %v820 = vld [vmem:[%s786 + $0x14] sm:$0x1]
      %v821 = vld [vmem:[%s786 + $0x20] sm:$0x1]
      %v822 = vld [vmem:[%s786 + $0x2c] sm:$0x1]
      %v823 = vld [vmem:[%s786 + $0x38] sm:$0x1]
      %v824 = vld [vmem:[%s786 + $0x44] sm:$0x1]
      %v825 = vld [vmem:[%s786 + $0x50] sm:$0x1]
      %v826 = vld [vmem:[%s786 + $0x5c] sm:$0x1]
      %v827 = vld [vmem:[%s786 + $0x68] sm:$0x1]
      %v828 = vld [vmem:[%s786 + $0x74] sm:$0x1]
      %v829 = vld [vmem:[%s786 + $0x80] sm:$0x1]
      %v830 = vld [vmem:[%s786 + $0x8c] sm:$0x1]
      %v831 = vld [vmem:[%s786 + $0x98] sm:$0x1]
      %v832 = vld [vmem:[%s786 + $0xa4] sm:$0x1]
      %v833 = vld [vmem:[%s786 + $0xb0] sm:$0x1]
      %v834 = vld [vmem:[%s786 + $0xbc] sm:$0x1]
      %v836 = vshrl.u32 %v787, 16
      %v838 = vrot.slane %v836, 4
      %v839 = vshll.u32 %v787, 16
      %v841 = vrot.slane %v839, 5
      %v842 = vor.u32 %v838, %v841
      %v843 = vrot.slane %v842, 4
      %v845 = vshll.u32 %v788, 16
      %v847 = vrot.slane %v845, 5
      %v848 = vsel %vm222, %v843, %v847
      %v849 = vshrl.u32 %v788, 16
      %v851 = vrot.slane %v849, 4
      %v852 = vor.u32 %v851, %v847
      %v853 = vrot.slane %v852, 4
      %v855 = vshll.u32 %v819, 16
      %v857 = vrot.slane %v855, 5
      %v858 = vsel %vm222, %v853, %v857
      %v860 = vshrl.u32 %v789, 16
      %v862 = vrot.slane %v860, 4
      %v863 = vshll.u32 %v789, 16
      %v865 = vrot.slane %v863, 5
      %v866 = vor.u32 %v862, %v865
      %v867 = vrot.slane %v866, 4
      %v869 = vshll.u32 %v790, 16
      %v871 = vrot.slane %v869, 5
      %v872 = vsel %vm222, %v867, %v871
      %v873 = vshrl.u32 %v790, 16
      %v875 = vrot.slane %v873, 4
      %v876 = vor.u32 %v875, %v871
      %v877 = vrot.slane %v876, 4
      %v879 = vshll.u32 %v820, 16
      %v881 = vrot.slane %v879, 5
      %v882 = vsel %vm222, %v877, %v881
      %v884 = vshrl.u32 %v791, 16
      %v886 = vrot.slane %v884, 4
      %v887 = vshll.u32 %v791, 16
      %v889 = vrot.slane %v887, 5
      %v890 = vor.u32 %v886, %v889
      %v891 = vrot.slane %v890, 4
      %v893 = vshll.u32 %v792, 16
      %v895 = vrot.slane %v893, 5
      %v896 = vsel %vm222, %v891, %v895
      %v897 = vshrl.u32 %v792, 16
      %v899 = vrot.slane %v897, 4
      %v900 = vor.u32 %v899, %v895
      %v901 = vrot.slane %v900, 4
      %v903 = vshll.u32 %v821, 16
      %v905 = vrot.slane %v903, 5
      %v906 = vsel %vm222, %v901, %v905
      %v908 = vshrl.u32 %v793, 16
      %v910 = vrot.slane %v908, 4
      %v911 = vshll.u32 %v793, 16
      %v913 = vrot.slane %v911, 5
      %v914 = vor.u32 %v910, %v913
      %v915 = vrot.slane %v914, 4
      %v917 = vshll.u32 %v794, 16
      %v919 = vrot.slane %v917, 5
      %v920 = vsel %vm222, %v915, %v919
      %v921 = vshrl.u32 %v794, 16
      %v923 = vrot.slane %v921, 4
      %v924 = vor.u32 %v923, %v919
      %v925 = vrot.slane %v924, 4
      %v927 = vshll.u32 %v822, 16
      %v929 = vrot.slane %v927, 5
      %v930 = vsel %vm222, %v925, %v929
      %v932 = vshrl.u32 %v795, 16
      %v934 = vrot.slane %v932, 4
      %v935 = vshll.u32 %v795, 16
      %v937 = vrot.slane %v935, 5
      %v938 = vor.u32 %v934, %v937
      %v939 = vrot.slane %v938, 4
      %v941 = vshll.u32 %v796, 16
      %v943 = vrot.slane %v941, 5
      %v944 = vsel %vm222, %v939, %v943
      %v945 = vshrl.u32 %v796, 16
      %v947 = vrot.slane %v945, 4
      %v948 = vor.u32 %v947, %v943
      %v949 = vrot.slane %v948, 4
      %v951 = vshll.u32 %v823, 16
      %v953 = vrot.slane %v951, 5
      %v954 = vsel %vm222, %v949, %v953
      %v956 = vshrl.u32 %v797, 16
      %v958 = vrot.slane %v956, 4
      %v959 = vshll.u32 %v797, 16
      %v961 = vrot.slane %v959, 5
      %v962 = vor.u32 %v958, %v961
      %v963 = vrot.slane %v962, 4
      %v965 = vshll.u32 %v798, 16
      %v967 = vrot.slane %v965, 5
      %v968 = vsel %vm222, %v963, %v967
      %v969 = vshrl.u32 %v798, 16
      %v971 = vrot.slane %v969, 4
      %v972 = vor.u32 %v971, %v967
      %v973 = vrot.slane %v972, 4
      %v975 = vshll.u32 %v824, 16
      %v977 = vrot.slane %v975, 5
      %v978 = vsel %vm222, %v973, %v977
      %v980 = vshrl.u32 %v799, 16
      %v982 = vrot.slane %v980, 4
      %v983 = vshll.u32 %v799, 16
      %v985 = vrot.slane %v983, 5
      %v986 = vor.u32 %v982, %v985
      %v987 = vrot.slane %v986, 4
      %v989 = vshll.u32 %v800, 16
      %v991 = vrot.slane %v989, 5
      %v992 = vsel %vm222, %v987, %v991
      %v993 = vshrl.u32 %v800, 16
      %v995 = vrot.slane %v993, 4
      %v996 = vor.u32 %v995, %v991
      %v997 = vrot.slane %v996, 4
      %v999 = vshll.u32 %v825, 16
      %v1001 = vrot.slane %v999, 5
      %v1002 = vsel %vm222, %v997, %v1001
      %v1004 = vshrl.u32 %v801, 16
      %v1006 = vrot.slane %v1004, 4
      %v1007 = vshll.u32 %v801, 16
      %v1009 = vrot.slane %v1007, 5
      %v1010 = vor.u32 %v1006, %v1009
      %v1011 = vrot.slane %v1010, 4
      %v1013 = vshll.u32 %v802, 16
      %v1015 = vrot.slane %v1013, 5
      %v1016 = vsel %vm222, %v1011, %v1015
      %v1017 = vshrl.u32 %v802, 16
      %v1019 = vrot.slane %v1017, 4
      %v1020 = vor.u32 %v1019, %v1015
      %v1021 = vrot.slane %v1020, 4
      %v1023 = vshll.u32 %v826, 16
      %v1025 = vrot.slane %v1023, 5
      %v1026 = vsel %vm222, %v1021, %v1025
      %v1028 = vshrl.u32 %v803, 16
      %v1030 = vrot.slane %v1028, 4
      %v1031 = vshll.u32 %v803, 16
      %v1033 = vrot.slane %v1031, 5
      %v1034 = vor.u32 %v1030, %v1033
      %v1035 = vrot.slane %v1034, 4
      %v1037 = vshll.u32 %v804, 16
      %v1039 = vrot.slane %v1037, 5
      %v1040 = vsel %vm222, %v1035, %v1039
      %v1041 = vshrl.u32 %v804, 16
      %v1043 = vrot.slane %v1041, 4
      %v1044 = vor.u32 %v1043, %v1039
      %v1045 = vrot.slane %v1044, 4
      %v1047 = vshll.u32 %v827, 16
      %v1049 = vrot.slane %v1047, 5
      %v1050 = vsel %vm222, %v1045, %v1049
      %v1052 = vshrl.u32 %v805, 16
      %v1054 = vrot.slane %v1052, 4
      %v1055 = vshll.u32 %v805, 16
      %v1057 = vrot.slane %v1055, 5
      %v1058 = vor.u32 %v1054, %v1057
      %v1059 = vrot.slane %v1058, 4
      %v1061 = vshll.u32 %v806, 16
      %v1063 = vrot.slane %v1061, 5
      %v1064 = vsel %vm222, %v1059, %v1063
      %v1065 = vshrl.u32 %v806, 16
      %v1067 = vrot.slane %v1065, 4
      %v1068 = vor.u32 %v1067, %v1063
      %v1069 = vrot.slane %v1068, 4
      %v1071 = vshll.u32 %v828, 16
      %v1073 = vrot.slane %v1071, 5
      %v1074 = vsel %vm222, %v1069, %v1073
      %v1076 = vshrl.u32 %v807, 16
      %v1078 = vrot.slane %v1076, 4
      %v1079 = vshll.u32 %v807, 16
      %v1081 = vrot.slane %v1079, 5
      %v1082 = vor.u32 %v1078, %v1081
      %v1083 = vrot.slane %v1082, 4
      %v1085 = vshll.u32 %v808, 16
      %v1087 = vrot.slane %v1085, 5
      %v1088 = vsel %vm222, %v1083, %v1087
      %v1089 = vshrl.u32 %v808, 16
      %v1091 = vrot.slane %v1089, 4
      %v1092 = vor.u32 %v1091, %v1087
      %v1093 = vrot.slane %v1092, 4
      %v1095 = vshll.u32 %v829, 16
      %v1097 = vrot.slane %v1095, 5
      %v1098 = vsel %vm222, %v1093, %v1097
      %v1100 = vshrl.u32 %v809, 16
      %v1102 = vrot.slane %v1100, 4
      %v1103 = vshll.u32 %v809, 16
      %v1105 = vrot.slane %v1103, 5
      %v1106 = vor.u32 %v1102, %v1105
      %v1107 = vrot.slane %v1106, 4
      %v1109 = vshll.u32 %v810, 16
      %v1111 = vrot.slane %v1109, 5
      %v1112 = vsel %vm222, %v1107, %v1111
      %v1113 = vshrl.u32 %v810, 16
      %v1115 = vrot.slane %v1113, 4
      %v1116 = vor.u32 %v1115, %v1111
      %v1117 = vrot.slane %v1116, 4
      %v1119 = vshll.u32 %v830, 16
      %v1121 = vrot.slane %v1119, 5
      %v1122 = vsel %vm222, %v1117, %v1121
      %v1124 = vshrl.u32 %v811, 16
      %v1126 = vrot.slane %v1124, 4
      %v1127 = vshll.u32 %v811, 16
      %v1129 = vrot.slane %v1127, 5
      %v1130 = vor.u32 %v1126, %v1129
      %v1131 = vrot.slane %v1130, 4
      %v1133 = vshll.u32 %v812, 16
      %v1135 = vrot.slane %v1133, 5
      %v1136 = vsel %vm222, %v1131, %v1135
      %v1137 = vshrl.u32 %v812, 16
      %v1139 = vrot.slane %v1137, 4
      %v1140 = vor.u32 %v1139, %v1135
      %v1141 = vrot.slane %v1140, 4
      %v1143 = vshll.u32 %v831, 16
      %v1145 = vrot.slane %v1143, 5
      %v1146 = vsel %vm222, %v1141, %v1145
      %v1148 = vshrl.u32 %v813, 16
      %v1150 = vrot.slane %v1148, 4
      %v1151 = vshll.u32 %v813, 16
      %v1153 = vrot.slane %v1151, 5
      %v1154 = vor.u32 %v1150, %v1153
      %v1155 = vrot.slane %v1154, 4
      %v1157 = vshll.u32 %v814, 16
      %v1159 = vrot.slane %v1157, 5
      %v1160 = vsel %vm222, %v1155, %v1159
      %v1161 = vshrl.u32 %v814, 16
      %v1163 = vrot.slane %v1161, 4
      %v1164 = vor.u32 %v1163, %v1159
      %v1165 = vrot.slane %v1164, 4
      %v1167 = vshll.u32 %v832, 16
      %v1169 = vrot.slane %v1167, 5
      %v1170 = vsel %vm222, %v1165, %v1169
      %v1172 = vshrl.u32 %v815, 16
      %v1174 = vrot.slane %v1172, 4
      %v1175 = vshll.u32 %v815, 16
      %v1177 = vrot.slane %v1175, 5
      %v1178 = vor.u32 %v1174, %v1177
      %v1179 = vrot.slane %v1178, 4
      %v1181 = vshll.u32 %v816, 16
      %v1183 = vrot.slane %v1181, 5
      %v1184 = vsel %vm222, %v1179, %v1183
      %v1185 = vshrl.u32 %v816, 16
      %v1187 = vrot.slane %v1185, 4
      %v1188 = vor.u32 %v1187, %v1183
      %v1189 = vrot.slane %v1188, 4
      %v1191 = vshll.u32 %v833, 16
      %v1193 = vrot.slane %v1191, 5
      %v1194 = vsel %vm222, %v1189, %v1193
      %v1196 = vshrl.u32 %v817, 16
      %v1198 = vrot.slane %v1196, 4
      %v1199 = vshll.u32 %v817, 16
      %v1201 = vrot.slane %v1199, 5
      %v1202 = vor.u32 %v1198, %v1201
      %v1203 = vrot.slane %v1202, 4
      %v1205 = vshll.u32 %v818, 16
      %v1207 = vrot.slane %v1205, 5
      %v1208 = vsel %vm222, %v1203, %v1207
      %v1209 = vshrl.u32 %v818, 16
      %v1211 = vrot.slane %v1209, 4
      %v1212 = vor.u32 %v1211, %v1207
      %v1213 = vrot.slane %v1212, 4
      %v1215 = vshll.u32 %v834, 16
      %v1217 = vrot.slane %v1215, 5
      %v1218 = vsel %vm222, %v1213, %v1217
      %v1219 = vld [vmem:[%s786] sm:$0xe]
      %v1220 = vld [vmem:[%s786 + $0xc] sm:$0xe]
      %v1221 = vld [vmem:[%s786 + $0x18] sm:$0xe]
      %v1222 = vld [vmem:[%s786 + $0x24] sm:$0xe]
      %v1223 = vld [vmem:[%s786 + $0x30] sm:$0xe]
      %v1224 = vld [vmem:[%s786 + $0x3c] sm:$0xe]
      %v1225 = vld [vmem:[%s786 + $0x48] sm:$0xe]
      %v1226 = vld [vmem:[%s786 + $0x54] sm:$0xe]
      %v1227 = vld [vmem:[%s786 + $0x60] sm:$0xe]
      %v1228 = vld [vmem:[%s786 + $0x6c] sm:$0xe]
      %v1229 = vld [vmem:[%s786 + $0x78] sm:$0xe]
      %v1230 = vld [vmem:[%s786 + $0x84] sm:$0xe]
      %v1231 = vld [vmem:[%s786 + $0x90] sm:$0xe]
      %v1232 = vld [vmem:[%s786 + $0x9c] sm:$0xe]
      %v1233 = vld [vmem:[%s786 + $0xa8] sm:$0xe]
      %v1234 = vld [vmem:[%s786 + $0xb4] sm:$0xe]
      %v1283 = vrot.slane %v1219, 5
      %v1284 = vrot.slane %v1283, 4
      %v1285 = vrot.slane %v788, 5
      %v1286 = vsel %vm673, %v1284, %v1285
      %v1287 = vrot.slane %v1285, 4
      %v1288 = vrot.slane %v819, 5
      %v1289 = vsel %vm673, %v1287, %v1288
      %v1290 = vrot.slane %v1220, 5
      %v1291 = vrot.slane %v1290, 4
      %v1292 = vrot.slane %v790, 5
      %v1293 = vsel %vm673, %v1291, %v1292
      %v1294 = vrot.slane %v1292, 4
      %v1295 = vrot.slane %v820, 5
      %v1296 = vsel %vm673, %v1294, %v1295
      %v1297 = vrot.slane %v1221, 5
      %v1298 = vrot.slane %v1297, 4
      %v1299 = vrot.slane %v792, 5
      %v1300 = vsel %vm673, %v1298, %v1299
      %v1301 = vrot.slane %v1299, 4
      %v1302 = vrot.slane %v821, 5
      %v1303 = vsel %vm673, %v1301, %v1302
      %v1304 = vrot.slane %v1222, 5
      %v1305 = vrot.slane %v1304, 4
      %v1306 = vrot.slane %v794, 5
      %v1307 = vsel %vm673, %v1305, %v1306
      %v1308 = vrot.slane %v1306, 4
      %v1309 = vrot.slane %v822, 5
      %v1310 = vsel %vm673, %v1308, %v1309
      %v1311 = vrot.slane %v1223, 5
      %v1312 = vrot.slane %v1311, 4
      %v1313 = vrot.slane %v796, 5
      %v1314 = vsel %vm673, %v1312, %v1313
      %v1315 = vrot.slane %v1313, 4
      %v1316 = vrot.slane %v823, 5
      %v1317 = vsel %vm673, %v1315, %v1316
      %v1318 = vrot.slane %v1224, 5
      %v1319 = vrot.slane %v1318, 4
      %v1320 = vrot.slane %v798, 5
      %v1321 = vsel %vm673, %v1319, %v1320
      %v1322 = vrot.slane %v1320, 4
      %v1323 = vrot.slane %v824, 5
      %v1324 = vsel %vm673, %v1322, %v1323
      %v1325 = vrot.slane %v1225, 5
      %v1326 = vrot.slane %v1325, 4
      %v1327 = vrot.slane %v800, 5
      %v1328 = vsel %vm673, %v1326, %v1327
      %v1329 = vrot.slane %v1327, 4
      %v1330 = vrot.slane %v825, 5
      %v1331 = vsel %vm673, %v1329, %v1330
      %v1332 = vrot.slane %v1226, 5
      %v1333 = vrot.slane %v1332, 4
      %v1334 = vrot.slane %v802, 5
      %v1335 = vsel %vm673, %v1333, %v1334
      %v1336 = vrot.slane %v1334, 4
      %v1337 = vrot.slane %v826, 5
      %v1338 = vsel %vm673, %v1336, %v1337
      %v1339 = vrot.slane %v1227, 5
      %v1340 = vrot.slane %v1339, 4
      %v1341 = vrot.slane %v804, 5
      %v1342 = vsel %vm673, %v1340, %v1341
      %v1343 = vrot.slane %v1341, 4
      %v1344 = vrot.slane %v827, 5
      %v1345 = vsel %vm673, %v1343, %v1344
      %v1346 = vrot.slane %v1228, 5
      %v1347 = vrot.slane %v1346, 4
      %v1348 = vrot.slane %v806, 5
      %v1349 = vsel %vm673, %v1347, %v1348
      %v1350 = vrot.slane %v1348, 4
      %v1351 = vrot.slane %v828, 5
      %v1352 = vsel %vm673, %v1350, %v1351
      %v1353 = vrot.slane %v1229, 5
      %v1354 = vrot.slane %v1353, 4
      %v1355 = vrot.slane %v808, 5
      %v1356 = vsel %vm673, %v1354, %v1355
      %v1357 = vrot.slane %v1355, 4
      %v1358 = vrot.slane %v829, 5
      %v1359 = vsel %vm673, %v1357, %v1358
      %v1360 = vrot.slane %v1230, 5
      %v1361 = vrot.slane %v1360, 4
      %v1362 = vrot.slane %v810, 5
      %v1363 = vsel %vm673, %v1361, %v1362
      %v1364 = vrot.slane %v1362, 4
      %v1365 = vrot.slane %v830, 5
      %v1366 = vsel %vm673, %v1364, %v1365
      %v1367 = vrot.slane %v1231, 5
      %v1368 = vrot.slane %v1367, 4
      %v1369 = vrot.slane %v812, 5
      %v1370 = vsel %vm673, %v1368, %v1369
      %v1371 = vrot.slane %v1369, 4
      %v1372 = vrot.slane %v831, 5
      %v1373 = vsel %vm673, %v1371, %v1372
      %v1374 = vrot.slane %v1232, 5
      %v1375 = vrot.slane %v1374, 4
      %v1376 = vrot.slane %v814, 5
      %v1377 = vsel %vm673, %v1375, %v1376
      %v1378 = vrot.slane %v1376, 4
      %v1379 = vrot.slane %v832, 5
      %v1380 = vsel %vm673, %v1378, %v1379
      %v1381 = vrot.slane %v1233, 5
      %v1382 = vrot.slane %v1381, 4
      %v1383 = vrot.slane %v816, 5
      %v1384 = vsel %vm673, %v1382, %v1383
      %v1385 = vrot.slane %v1383, 4
      %v1386 = vrot.slane %v833, 5
      %v1387 = vsel %vm673, %v1385, %v1386
      %v1388 = vrot.slane %v1234, 5
      %v1389 = vrot.slane %v1388, 4
      %v1390 = vrot.slane %v818, 5
      %v1391 = vsel %vm673, %v1389, %v1390
      %v1392 = vrot.slane %v1390, 4
      %v1393 = vrot.slane %v834, 5
      %v1394 = vsel %vm673, %v1392, %v1393
      %s1395 = scalar_lea.vmem %s165, 24
      %v1396 = vld [vmem:[%s1395] sm:$0xf]
      %v1397 = vld [vmem:[%s1395 + $0x4] sm:$0xf]
      %v1398 = vld [vmem:[%s1395 + $0xc] sm:$0xf]
      %v1399 = vld [vmem:[%s1395 + $0x10] sm:$0xf]
      %v1400 = vld [vmem:[%s1395 + $0x18] sm:$0xf]
      %v1401 = vld [vmem:[%s1395 + $0x1c] sm:$0xf]
      %v1402 = vld [vmem:[%s1395 + $0x24] sm:$0xf]
      %v1403 = vld [vmem:[%s1395 + $0x28] sm:$0xf]
      %v1404 = vld [vmem:[%s1395 + $0x30] sm:$0xf]
      %v1405 = vld [vmem:[%s1395 + $0x34] sm:$0xf]
      %v1406 = vld [vmem:[%s1395 + $0x3c] sm:$0xf]
      %v1407 = vld [vmem:[%s1395 + $0x40] sm:$0xf]
      %v1408 = vld [vmem:[%s1395 + $0x48] sm:$0xf]
      %v1409 = vld [vmem:[%s1395 + $0x4c] sm:$0xf]
      %v1410 = vld [vmem:[%s1395 + $0x54] sm:$0xf]
      %v1411 = vld [vmem:[%s1395 + $0x58] sm:$0xf]
      %v1412 = vld [vmem:[%s1395 + $0x60] sm:$0xf]
      %v1413 = vld [vmem:[%s1395 + $0x64] sm:$0xf]
      %v1414 = vld [vmem:[%s1395 + $0x6c] sm:$0xf]
      %v1415 = vld [vmem:[%s1395 + $0x70] sm:$0xf]
      %v1416 = vld [vmem:[%s1395 + $0x78] sm:$0xf]
      %v1417 = vld [vmem:[%s1395 + $0x7c] sm:$0xf]
      %v1418 = vld [vmem:[%s1395 + $0x84] sm:$0xf]
      %v1419 = vld [vmem:[%s1395 + $0x88] sm:$0xf]
      %v1420 = vld [vmem:[%s1395 + $0x90] sm:$0xf]
      %v1421 = vld [vmem:[%s1395 + $0x94] sm:$0xf]
      %v1422 = vld [vmem:[%s1395 + $0x9c] sm:$0xf]
      %v1423 = vld [vmem:[%s1395 + $0xa0] sm:$0xf]
      %v1424 = vld [vmem:[%s1395 + $0xa8] sm:$0xf]
      %v1425 = vld [vmem:[%s1395 + $0xac] sm:$0xf]
      %v1426 = vld [vmem:[%s1395 + $0xb4] sm:$0xf]
      %v1427 = vld [vmem:[%s1395 + $0xb8] sm:$0xf]
      %v1428 = vld [vmem:[%s1395 + $0x8] sm:$0x1]
      %v1429 = vld [vmem:[%s1395 + $0x14] sm:$0x1]
      %v1430 = vld [vmem:[%s1395 + $0x20] sm:$0x1]
      %v1431 = vld [vmem:[%s1395 + $0x2c] sm:$0x1]
      %v1432 = vld [vmem:[%s1395 + $0x38] sm:$0x1]
      %v1433 = vld [vmem:[%s1395 + $0x44] sm:$0x1]
      %v1434 = vld [vmem:[%s1395 + $0x50] sm:$0x1]
      %v1435 = vld [vmem:[%s1395 + $0x5c] sm:$0x1]
      %v1436 = vld [vmem:[%s1395 + $0x68] sm:$0x1]
      %v1437 = vld [vmem:[%s1395 + $0x74] sm:$0x1]
      %v1438 = vld [vmem:[%s1395 + $0x80] sm:$0x1]
      %v1439 = vld [vmem:[%s1395 + $0x8c] sm:$0x1]
      %v1440 = vld [vmem:[%s1395 + $0x98] sm:$0x1]
      %v1441 = vld [vmem:[%s1395 + $0xa4] sm:$0x1]
      %v1442 = vld [vmem:[%s1395 + $0xb0] sm:$0x1]
      %v1443 = vld [vmem:[%s1395 + $0xbc] sm:$0x1]
      %v1445 = vshrl.u32 %v1396, 16
      %v1447 = vrot.slane %v1445, 4
      %v1448 = vshll.u32 %v1396, 16
      %v1450 = vrot.slane %v1448, 5
      %v1451 = vor.u32 %v1447, %v1450
      %v1452 = vrot.slane %v1451, 4
      %v1454 = vshll.u32 %v1397, 16
      %v1456 = vrot.slane %v1454, 5
      %v1457 = vsel %vm222, %v1452, %v1456
      %v1458 = vshrl.u32 %v1397, 16
      %v1460 = vrot.slane %v1458, 4
      %v1461 = vor.u32 %v1460, %v1456
      %v1462 = vrot.slane %v1461, 4
      %v1464 = vshll.u32 %v1428, 16
      %v1466 = vrot.slane %v1464, 5
      %v1467 = vsel %vm222, %v1462, %v1466
      %v1469 = vshrl.u32 %v1398, 16
      %v1471 = vrot.slane %v1469, 4
      %v1472 = vshll.u32 %v1398, 16
      %v1474 = vrot.slane %v1472, 5
      %v1475 = vor.u32 %v1471, %v1474
      %v1476 = vrot.slane %v1475, 4
      %v1478 = vshll.u32 %v1399, 16
      %v1480 = vrot.slane %v1478, 5
      %v1481 = vsel %vm222, %v1476, %v1480
      %v1482 = vshrl.u32 %v1399, 16
      %v1484 = vrot.slane %v1482, 4
      %v1485 = vor.u32 %v1484, %v1480
      %v1486 = vrot.slane %v1485, 4
      %v1488 = vshll.u32 %v1429, 16
      %v1490 = vrot.slane %v1488, 5
      %v1491 = vsel %vm222, %v1486, %v1490
      %v1493 = vshrl.u32 %v1400, 16
      %v1495 = vrot.slane %v1493, 4
      %v1496 = vshll.u32 %v1400, 16
      %v1498 = vrot.slane %v1496, 5
      %v1499 = vor.u32 %v1495, %v1498
      %v1500 = vrot.slane %v1499, 4
      %v1502 = vshll.u32 %v1401, 16
      %v1504 = vrot.slane %v1502, 5
      %v1505 = vsel %vm222, %v1500, %v1504
      %v1506 = vshrl.u32 %v1401, 16
      %v1508 = vrot.slane %v1506, 4
      %v1509 = vor.u32 %v1508, %v1504
      %v1510 = vrot.slane %v1509, 4
      %v1512 = vshll.u32 %v1430, 16
      %v1514 = vrot.slane %v1512, 5
      %v1515 = vsel %vm222, %v1510, %v1514
      %v1517 = vshrl.u32 %v1402, 16
      %v1519 = vrot.slane %v1517, 4
      %v1520 = vshll.u32 %v1402, 16
      %v1522 = vrot.slane %v1520, 5
      %v1523 = vor.u32 %v1519, %v1522
      %v1524 = vrot.slane %v1523, 4
      %v1526 = vshll.u32 %v1403, 16
      %v1528 = vrot.slane %v1526, 5
      %v1529 = vsel %vm222, %v1524, %v1528
      %v1530 = vshrl.u32 %v1403, 16
      %v1532 = vrot.slane %v1530, 4
      %v1533 = vor.u32 %v1532, %v1528
      %v1534 = vrot.slane %v1533, 4
      %v1536 = vshll.u32 %v1431, 16
      %v1538 = vrot.slane %v1536, 5
      %v1539 = vsel %vm222, %v1534, %v1538
      %v1541 = vshrl.u32 %v1404, 16
      %v1543 = vrot.slane %v1541, 4
      %v1544 = vshll.u32 %v1404, 16
      %v1546 = vrot.slane %v1544, 5
      %v1547 = vor.u32 %v1543, %v1546
      %v1548 = vrot.slane %v1547, 4
      %v1550 = vshll.u32 %v1405, 16
      %v1552 = vrot.slane %v1550, 5
      %v1553 = vsel %vm222, %v1548, %v1552
      %v1554 = vshrl.u32 %v1405, 16
      %v1556 = vrot.slane %v1554, 4
      %v1557 = vor.u32 %v1556, %v1552
      %v1558 = vrot.slane %v1557, 4
      %v1560 = vshll.u32 %v1432, 16
      %v1562 = vrot.slane %v1560, 5
      %v1563 = vsel %vm222, %v1558, %v1562
      %v1565 = vshrl.u32 %v1406, 16
      %v1567 = vrot.slane %v1565, 4
      %v1568 = vshll.u32 %v1406, 16
      %v1570 = vrot.slane %v1568, 5
      %v1571 = vor.u32 %v1567, %v1570
      %v1572 = vrot.slane %v1571, 4
      %v1574 = vshll.u32 %v1407, 16
      %v1576 = vrot.slane %v1574, 5
      %v1577 = vsel %vm222, %v1572, %v1576
      %v1578 = vshrl.u32 %v1407, 16
      %v1580 = vrot.slane %v1578, 4
      %v1581 = vor.u32 %v1580, %v1576
      %v1582 = vrot.slane %v1581, 4
      %v1584 = vshll.u32 %v1433, 16
      %v1586 = vrot.slane %v1584, 5
      %v1587 = vsel %vm222, %v1582, %v1586
      %v1589 = vshrl.u32 %v1408, 16
      %v1591 = vrot.slane %v1589, 4
      %v1592 = vshll.u32 %v1408, 16
      %v1594 = vrot.slane %v1592, 5
      %v1595 = vor.u32 %v1591, %v1594
      %v1596 = vrot.slane %v1595, 4
      %v1598 = vshll.u32 %v1409, 16
      %v1600 = vrot.slane %v1598, 5
      %v1601 = vsel %vm222, %v1596, %v1600
      %v1602 = vshrl.u32 %v1409, 16
      %v1604 = vrot.slane %v1602, 4
      %v1605 = vor.u32 %v1604, %v1600
      %v1606 = vrot.slane %v1605, 4
      %v1608 = vshll.u32 %v1434, 16
      %v1610 = vrot.slane %v1608, 5
      %v1611 = vsel %vm222, %v1606, %v1610
      %v1613 = vshrl.u32 %v1410, 16
      %v1615 = vrot.slane %v1613, 4
      %v1616 = vshll.u32 %v1410, 16
      %v1618 = vrot.slane %v1616, 5
      %v1619 = vor.u32 %v1615, %v1618
      %v1620 = vrot.slane %v1619, 4
      %v1622 = vshll.u32 %v1411, 16
      %v1624 = vrot.slane %v1622, 5
      %v1625 = vsel %vm222, %v1620, %v1624
      %v1626 = vshrl.u32 %v1411, 16
      %v1628 = vrot.slane %v1626, 4
      %v1629 = vor.u32 %v1628, %v1624
      %v1630 = vrot.slane %v1629, 4
      %v1632 = vshll.u32 %v1435, 16
      %v1634 = vrot.slane %v1632, 5
      %v1635 = vsel %vm222, %v1630, %v1634
      %v1637 = vshrl.u32 %v1412, 16
      %v1639 = vrot.slane %v1637, 4
      %v1640 = vshll.u32 %v1412, 16
      %v1642 = vrot.slane %v1640, 5
      %v1643 = vor.u32 %v1639, %v1642
      %v1644 = vrot.slane %v1643, 4
      %v1646 = vshll.u32 %v1413, 16
      %v1648 = vrot.slane %v1646, 5
      %v1649 = vsel %vm222, %v1644, %v1648
      %v1650 = vshrl.u32 %v1413, 16
      %v1652 = vrot.slane %v1650, 4
      %v1653 = vor.u32 %v1652, %v1648
      %v1654 = vrot.slane %v1653, 4
      %v1656 = vshll.u32 %v1436, 16
      %v1658 = vrot.slane %v1656, 5
      %v1659 = vsel %vm222, %v1654, %v1658
      %v1661 = vshrl.u32 %v1414, 16
      %v1663 = vrot.slane %v1661, 4
      %v1664 = vshll.u32 %v1414, 16
      %v1666 = vrot.slane %v1664, 5
      %v1667 = vor.u32 %v1663, %v1666
      %v1668 = vrot.slane %v1667, 4
      %v1670 = vshll.u32 %v1415, 16
      %v1672 = vrot.slane %v1670, 5
      %v1673 = vsel %vm222, %v1668, %v1672
      %v1674 = vshrl.u32 %v1415, 16
      %v1676 = vrot.slane %v1674, 4
      %v1677 = vor.u32 %v1676, %v1672
      %v1678 = vrot.slane %v1677, 4
      %v1680 = vshll.u32 %v1437, 16
      %v1682 = vrot.slane %v1680, 5
      %v1683 = vsel %vm222, %v1678, %v1682
      %v1685 = vshrl.u32 %v1416, 16
      %v1687 = vrot.slane %v1685, 4
      %v1688 = vshll.u32 %v1416, 16
      %v1690 = vrot.slane %v1688, 5
      %v1691 = vor.u32 %v1687, %v1690
      %v1692 = vrot.slane %v1691, 4
      %v1694 = vshll.u32 %v1417, 16
      %v1696 = vrot.slane %v1694, 5
      %v1697 = vsel %vm222, %v1692, %v1696
      %v1698 = vshrl.u32 %v1417, 16
      %v1700 = vrot.slane %v1698, 4
      %v1701 = vor.u32 %v1700, %v1696
      %v1702 = vrot.slane %v1701, 4
      %v1704 = vshll.u32 %v1438, 16
      %v1706 = vrot.slane %v1704, 5
      %v1707 = vsel %vm222, %v1702, %v1706
      %v1709 = vshrl.u32 %v1418, 16
      %v1711 = vrot.slane %v1709, 4
      %v1712 = vshll.u32 %v1418, 16
      %v1714 = vrot.slane %v1712, 5
      %v1715 = vor.u32 %v1711, %v1714
      %v1716 = vrot.slane %v1715, 4
      %v1718 = vshll.u32 %v1419, 16
      %v1720 = vrot.slane %v1718, 5
      %v1721 = vsel %vm222, %v1716, %v1720
      %v1722 = vshrl.u32 %v1419, 16
      %v1724 = vrot.slane %v1722, 4
      %v1725 = vor.u32 %v1724, %v1720
      %v1726 = vrot.slane %v1725, 4
      %v1728 = vshll.u32 %v1439, 16
      %v1730 = vrot.slane %v1728, 5
      %v1731 = vsel %vm222, %v1726, %v1730
      %v1733 = vshrl.u32 %v1420, 16
      %v1735 = vrot.slane %v1733, 4
      %v1736 = vshll.u32 %v1420, 16
      %v1738 = vrot.slane %v1736, 5
      %v1739 = vor.u32 %v1735, %v1738
      %v1740 = vrot.slane %v1739, 4
      %v1742 = vshll.u32 %v1421, 16
      %v1744 = vrot.slane %v1742, 5
      %v1745 = vsel %vm222, %v1740, %v1744
      %v1746 = vshrl.u32 %v1421, 16
      %v1748 = vrot.slane %v1746, 4
      %v1749 = vor.u32 %v1748, %v1744
      %v1750 = vrot.slane %v1749, 4
      %v1752 = vshll.u32 %v1440, 16
      %v1754 = vrot.slane %v1752, 5
      %v1755 = vsel %vm222, %v1750, %v1754
      %v1757 = vshrl.u32 %v1422, 16
      %v1759 = vrot.slane %v1757, 4
      %v1760 = vshll.u32 %v1422, 16
      %v1762 = vrot.slane %v1760, 5
      %v1763 = vor.u32 %v1759, %v1762
      %v1764 = vrot.slane %v1763, 4
      %v1766 = vshll.u32 %v1423, 16
      %v1768 = vrot.slane %v1766, 5
      %v1769 = vsel %vm222, %v1764, %v1768
      %v1770 = vshrl.u32 %v1423, 16
      %v1772 = vrot.slane %v1770, 4
      %v1773 = vor.u32 %v1772, %v1768
      %v1774 = vrot.slane %v1773, 4
      %v1776 = vshll.u32 %v1441, 16
      %v1778 = vrot.slane %v1776, 5
      %v1779 = vsel %vm222, %v1774, %v1778
      %v1781 = vshrl.u32 %v1424, 16
      %v1783 = vrot.slane %v1781, 4
      %v1784 = vshll.u32 %v1424, 16
      %v1786 = vrot.slane %v1784, 5
      %v1787 = vor.u32 %v1783, %v1786
      %v1788 = vrot.slane %v1787, 4
      %v1790 = vshll.u32 %v1425, 16
      %v1792 = vrot.slane %v1790, 5
      %v1793 = vsel %vm222, %v1788, %v1792
      %v1794 = vshrl.u32 %v1425, 16
      %v1796 = vrot.slane %v1794, 4
      %v1797 = vor.u32 %v1796, %v1792
      %v1798 = vrot.slane %v1797, 4
      %v1800 = vshll.u32 %v1442, 16
      %v1802 = vrot.slane %v1800, 5
      %v1803 = vsel %vm222, %v1798, %v1802
      %v1805 = vshrl.u32 %v1426, 16
      %v1807 = vrot.slane %v1805, 4
      %v1808 = vshll.u32 %v1426, 16
      %v1810 = vrot.slane %v1808, 5
      %v1811 = vor.u32 %v1807, %v1810
      %v1812 = vrot.slane %v1811, 4
      %v1814 = vshll.u32 %v1427, 16
      %v1816 = vrot.slane %v1814, 5
      %v1817 = vsel %vm222, %v1812, %v1816
      %v1818 = vshrl.u32 %v1427, 16
      %v1820 = vrot.slane %v1818, 4
      %v1821 = vor.u32 %v1820, %v1816
      %v1822 = vrot.slane %v1821, 4
      %v1824 = vshll.u32 %v1443, 16
      %v1826 = vrot.slane %v1824, 5
      %v1827 = vsel %vm222, %v1822, %v1826
      %v1828 = vld [vmem:[%s1395] sm:$0xe]
      %v1829 = vld [vmem:[%s1395 + $0xc] sm:$0xe]
      %v1830 = vld [vmem:[%s1395 + $0x18] sm:$0xe]
      %v1831 = vld [vmem:[%s1395 + $0x24] sm:$0xe]
      %v1832 = vld [vmem:[%s1395 + $0x30] sm:$0xe]
      %v1833 = vld [vmem:[%s1395 + $0x3c] sm:$0xe]
      %v1834 = vld [vmem:[%s1395 + $0x48] sm:$0xe]
      %v1835 = vld [vmem:[%s1395 + $0x54] sm:$0xe]
      %v1836 = vld [vmem:[%s1395 + $0x60] sm:$0xe]
      %v1837 = vld [vmem:[%s1395 + $0x6c] sm:$0xe]
      %v1838 = vld [vmem:[%s1395 + $0x78] sm:$0xe]
      %v1839 = vld [vmem:[%s1395 + $0x84] sm:$0xe]
      %v1840 = vld [vmem:[%s1395 + $0x90] sm:$0xe]
      %v1841 = vld [vmem:[%s1395 + $0x9c] sm:$0xe]
      %v1842 = vld [vmem:[%s1395 + $0xa8] sm:$0xe]
      %v1843 = vld [vmem:[%s1395 + $0xb4] sm:$0xe]
      %v1892 = vrot.slane %v1828, 5
      %v1893 = vrot.slane %v1892, 4
      %v1894 = vrot.slane %v1397, 5
      %v1895 = vsel %vm673, %v1893, %v1894
      %v1896 = vrot.slane %v1894, 4
      %v1897 = vrot.slane %v1428, 5
      %v1898 = vsel %vm673, %v1896, %v1897
      %v1899 = vrot.slane %v1829, 5
      %v1900 = vrot.slane %v1899, 4
      %v1901 = vrot.slane %v1399, 5
      %v1902 = vsel %vm673, %v1900, %v1901
      %v1903 = vrot.slane %v1901, 4
      %v1904 = vrot.slane %v1429, 5
      %v1905 = vsel %vm673, %v1903, %v1904
      %v1906 = vrot.slane %v1830, 5
      %v1907 = vrot.slane %v1906, 4
      %v1908 = vrot.slane %v1401, 5
      %v1909 = vsel %vm673, %v1907, %v1908
      %v1910 = vrot.slane %v1908, 4
      %v1911 = vrot.slane %v1430, 5
      %v1912 = vsel %vm673, %v1910, %v1911
      %v1913 = vrot.slane %v1831, 5
      %v1914 = vrot.slane %v1913, 4
      %v1915 = vrot.slane %v1403, 5
      %v1916 = vsel %vm673, %v1914, %v1915
      %v1917 = vrot.slane %v1915, 4
      %v1918 = vrot.slane %v1431, 5
      %v1919 = vsel %vm673, %v1917, %v1918
      %v1920 = vrot.slane %v1832, 5
      %v1921 = vrot.slane %v1920, 4
      %v1922 = vrot.slane %v1405, 5
      %v1923 = vsel %vm673, %v1921, %v1922
      %v1924 = vrot.slane %v1922, 4
      %v1925 = vrot.slane %v1432, 5
      %v1926 = vsel %vm673, %v1924, %v1925
      %v1927 = vrot.slane %v1833, 5
      %v1928 = vrot.slane %v1927, 4
      %v1929 = vrot.slane %v1407, 5
      %v1930 = vsel %vm673, %v1928, %v1929
      %v1931 = vrot.slane %v1929, 4
      %v1932 = vrot.slane %v1433, 5
      %v1933 = vsel %vm673, %v1931, %v1932
      %v1934 = vrot.slane %v1834, 5
      %v1935 = vrot.slane %v1934, 4
      %v1936 = vrot.slane %v1409, 5
      %v1937 = vsel %vm673, %v1935, %v1936
      %v1938 = vrot.slane %v1936, 4
      %v1939 = vrot.slane %v1434, 5
      %v1940 = vsel %vm673, %v1938, %v1939
      %v1941 = vrot.slane %v1835, 5
      %v1942 = vrot.slane %v1941, 4
      %v1943 = vrot.slane %v1411, 5
      %v1944 = vsel %vm673, %v1942, %v1943
      %v1945 = vrot.slane %v1943, 4
      %v1946 = vrot.slane %v1435, 5
      %v1947 = vsel %vm673, %v1945, %v1946
      %v1948 = vrot.slane %v1836, 5
      %v1949 = vrot.slane %v1948, 4
      %v1950 = vrot.slane %v1413, 5
      %v1951 = vsel %vm673, %v1949, %v1950
      %v1952 = vrot.slane %v1950, 4
      %v1953 = vrot.slane %v1436, 5
      %v1954 = vsel %vm673, %v1952, %v1953
      %v1955 = vrot.slane %v1837, 5
      %v1956 = vrot.slane %v1955, 4
      %v1957 = vrot.slane %v1415, 5
      %v1958 = vsel %vm673, %v1956, %v1957
      %v1959 = vrot.slane %v1957, 4
      %v1960 = vrot.slane %v1437, 5
      %v1961 = vsel %vm673, %v1959, %v1960
      %v1962 = vrot.slane %v1838, 5
      %v1963 = vrot.slane %v1962, 4
      %v1964 = vrot.slane %v1417, 5
      %v1965 = vsel %vm673, %v1963, %v1964
      %v1966 = vrot.slane %v1964, 4
      %v1967 = vrot.slane %v1438, 5
      %v1968 = vsel %vm673, %v1966, %v1967
      %v1969 = vrot.slane %v1839, 5
      %v1970 = vrot.slane %v1969, 4
      %v1971 = vrot.slane %v1419, 5
      %v1972 = vsel %vm673, %v1970, %v1971
      %v1973 = vrot.slane %v1971, 4
      %v1974 = vrot.slane %v1439, 5
      %v1975 = vsel %vm673, %v1973, %v1974
      %v1976 = vrot.slane %v1840, 5
      %v1977 = vrot.slane %v1976, 4
      %v1978 = vrot.slane %v1421, 5
      %v1979 = vsel %vm673, %v1977, %v1978
      %v1980 = vrot.slane %v1978, 4
      %v1981 = vrot.slane %v1440, 5
      %v1982 = vsel %vm673, %v1980, %v1981
      %v1983 = vrot.slane %v1841, 5
      %v1984 = vrot.slane %v1983, 4
      %v1985 = vrot.slane %v1423, 5
      %v1986 = vsel %vm673, %v1984, %v1985
      %v1987 = vrot.slane %v1985, 4
      %v1988 = vrot.slane %v1441, 5
      %v1989 = vsel %vm673, %v1987, %v1988
      %v1990 = vrot.slane %v1842, 5
      %v1991 = vrot.slane %v1990, 4
      %v1992 = vrot.slane %v1425, 5
      %v1993 = vsel %vm673, %v1991, %v1992
      %v1994 = vrot.slane %v1992, 4
      %v1995 = vrot.slane %v1442, 5
      %v1996 = vsel %vm673, %v1994, %v1995
      %v1997 = vrot.slane %v1843, 5
      %v1998 = vrot.slane %v1997, 4
      %v1999 = vrot.slane %v1427, 5
      %v2000 = vsel %vm673, %v1998, %v1999
      %v2001 = vrot.slane %v1999, 4
      %v2002 = vrot.slane %v1443, 5
      %v2003 = vsel %vm673, %v2001, %v2002
      %v2020 = vunpack.c.l.b16 %v172
      %v2021 = vunpack.c.l.b16 %v173
      %v2022 = vunpack.c.l.b16 %v174
      %v2023 = vunpack.c.l.b16 %v175
      %v2024 = vunpack.c.l.b16 %v176
      %v2025 = vunpack.c.l.b16 %v177
      %v2026 = vunpack.c.l.b16 %v178
      %v2027 = vunpack.c.l.b16 %v179
      %v2028 = vunpack.c.l.b16 %v180
      %v2029 = vunpack.c.l.b16 %v181
      %v2030 = vunpack.c.l.b16 %v182
      %v2031 = vunpack.c.l.b16 %v183
      %v2032 = vunpack.c.l.b16 %v184
      %v2033 = vunpack.c.l.b16 %v185
      %v2034 = vunpack.c.l.b16 %v186
      %v2035 = vunpack.c.l.b16 %v187
      %v2036 = vunpack.c.l.b16 %v188
      %v2037 = vunpack.c.l.b16 %v189
      %v2038 = vunpack.c.l.b16 %v190
      %v2039 = vunpack.c.l.b16 %v191
      %v2040 = vunpack.c.l.b16 %v192
      %v2041 = vunpack.c.l.b16 %v193
      %v2042 = vunpack.c.l.b16 %v194
      %v2043 = vunpack.c.l.b16 %v195
      %v2044 = vunpack.c.l.b16 %v196
      %v2045 = vunpack.c.l.b16 %v197
      %v2046 = vunpack.c.l.b16 %v198
      %v2047 = vunpack.c.l.b16 %v199
      %v2048 = vunpack.c.l.b16 %v200
      %v2049 = vunpack.c.l.b16 %v201
      %v2050 = vunpack.c.l.b16 %v202
      %v2051 = vunpack.c.l.b16 %v203
      %v2052 = vpack.c.b16 %v2021, %v2020
      %v2053 = vpack.c.b16 %v2023, %v2022
      %v2054 = vpack.c.b16 %v2025, %v2024
      %v2055 = vpack.c.b16 %v2027, %v2026
      %v2056 = vpack.c.b16 %v2029, %v2028
      %v2057 = vpack.c.b16 %v2031, %v2030
      %v2058 = vpack.c.b16 %v2033, %v2032
      %v2059 = vpack.c.b16 %v2035, %v2034
      %v2060 = vpack.c.b16 %v2037, %v2036
      %v2061 = vpack.c.b16 %v2039, %v2038
      %v2062 = vpack.c.b16 %v2041, %v2040
      %v2063 = vpack.c.b16 %v2043, %v2042
      %v2064 = vpack.c.b16 %v2045, %v2044
      %v2065 = vpack.c.b16 %v2047, %v2046
      %v2066 = vpack.c.b16 %v2049, %v2048
      %v2067 = vpack.c.b16 %v2051, %v2050
      %v2068 = vunpack.c.l.b16 %v236
      %v2069 = vunpack.c.l.b16 %v246
      %v2070 = vunpack.c.l.b16 %v260
      %v2071 = vunpack.c.l.b16 %v270
      %v2072 = vunpack.c.l.b16 %v284
      %v2073 = vunpack.c.l.b16 %v294
      %v2074 = vunpack.c.l.b16 %v308
      %v2075 = vunpack.c.l.b16 %v318
      %v2076 = vunpack.c.l.b16 %v332
      %v2077 = vunpack.c.l.b16 %v342
      %v2078 = vunpack.c.l.b16 %v356
      %v2079 = vunpack.c.l.b16 %v366
      %v2080 = vunpack.c.l.b16 %v380
      %v2081 = vunpack.c.l.b16 %v390
      %v2082 = vunpack.c.l.b16 %v404
      %v2083 = vunpack.c.l.b16 %v414
      %v2084 = vunpack.c.l.b16 %v428
      %v2085 = vunpack.c.l.b16 %v438
      %v2086 = vunpack.c.l.b16 %v452
      %v2087 = vunpack.c.l.b16 %v462
      %v2088 = vunpack.c.l.b16 %v476
      %v2089 = vunpack.c.l.b16 %v486
      %v2090 = vunpack.c.l.b16 %v500
      %v2091 = vunpack.c.l.b16 %v510
      %v2092 = vunpack.c.l.b16 %v524
      %v2093 = vunpack.c.l.b16 %v534
      %v2094 = vunpack.c.l.b16 %v548
      %v2095 = vunpack.c.l.b16 %v558
      %v2096 = vunpack.c.l.b16 %v572
      %v2097 = vunpack.c.l.b16 %v582
      %v2098 = vunpack.c.l.b16 %v596
      %v2099 = vunpack.c.l.b16 %v606
      %v2100 = vpack.c.b16 %v2069, %v2068
      %v2101 = vpack.c.b16 %v2071, %v2070
      %v2102 = vpack.c.b16 %v2073, %v2072
      %v2103 = vpack.c.b16 %v2075, %v2074
      %v2104 = vpack.c.b16 %v2077, %v2076
      %v2105 = vpack.c.b16 %v2079, %v2078
      %v2106 = vpack.c.b16 %v2081, %v2080
      %v2107 = vpack.c.b16 %v2083, %v2082
      %v2108 = vpack.c.b16 %v2085, %v2084
      %v2109 = vpack.c.b16 %v2087, %v2086
      %v2110 = vpack.c.b16 %v2089, %v2088
      %v2111 = vpack.c.b16 %v2091, %v2090
      %v2112 = vpack.c.b16 %v2093, %v2092
      %v2113 = vpack.c.b16 %v2095, %v2094
      %v2114 = vpack.c.b16 %v2097, %v2096
      %v2115 = vpack.c.b16 %v2099, %v2098
      %2116 = vrot.lane.b32.xlu0 %v2100, 16
      %v2117 = vpop.permute.xlu0 %2116
      %2118 = vrot.lane.b32.xlu0 %v2101, 16
      %v2119 = vpop.permute.xlu0 %2118
      %2120 = vrot.lane.b32.xlu0 %v2102, 16
      %v2121 = vpop.permute.xlu0 %2120
      %2122 = vrot.lane.b32.xlu0 %v2103, 16
      %v2123 = vpop.permute.xlu0 %2122
      %2124 = vrot.lane.b32.xlu0 %v2104, 16
      %v2125 = vpop.permute.xlu0 %2124
      %2126 = vrot.lane.b32.xlu0 %v2105, 16
      %v2127 = vpop.permute.xlu0 %2126
      %2128 = vrot.lane.b32.xlu0 %v2106, 16
      %v2129 = vpop.permute.xlu0 %2128
      %2130 = vrot.lane.b32.xlu0 %v2107, 16
      %v2131 = vpop.permute.xlu0 %2130
      %2132 = vrot.lane.b32.xlu0 %v2108, 16
      %v2133 = vpop.permute.xlu0 %2132
      %2134 = vrot.lane.b32.xlu0 %v2109, 16
      %v2135 = vpop.permute.xlu0 %2134
      %2136 = vrot.lane.b32.xlu0 %v2110, 16
      %v2137 = vpop.permute.xlu0 %2136
      %2138 = vrot.lane.b32.xlu0 %v2111, 16
      %v2139 = vpop.permute.xlu0 %2138
      %2140 = vrot.lane.b32.xlu0 %v2112, 16
      %v2141 = vpop.permute.xlu0 %2140
      %2142 = vrot.lane.b32.xlu0 %v2113, 16
      %v2143 = vpop.permute.xlu0 %2142
      %2144 = vrot.lane.b32.xlu0 %v2114, 16
      %v2145 = vpop.permute.xlu0 %2144
      %2146 = vrot.lane.b32.xlu0 %v2115, 16
      %v2147 = vpop.permute.xlu0 %2146
      %v2148 = vunpack.c.l.b16 %v677
      %v2149 = vunpack.c.l.b16 %v680
      %v2150 = vunpack.c.l.b16 %v684
      %v2151 = vunpack.c.l.b16 %v687
      %v2152 = vunpack.c.l.b16 %v691
      %v2153 = vunpack.c.l.b16 %v694
      %v2154 = vunpack.c.l.b16 %v698
      %v2155 = vunpack.c.l.b16 %v701
      %v2156 = vunpack.c.l.b16 %v705
      %v2157 = vunpack.c.l.b16 %v708
      %v2158 = vunpack.c.l.b16 %v712
      %v2159 = vunpack.c.l.b16 %v715
      %v2160 = vunpack.c.l.b16 %v719
      %v2161 = vunpack.c.l.b16 %v722
      %v2162 = vunpack.c.l.b16 %v726
      %v2163 = vunpack.c.l.b16 %v729
      %v2164 = vunpack.c.l.b16 %v733
      %v2165 = vunpack.c.l.b16 %v736
      %v2166 = vunpack.c.l.b16 %v740
      %v2167 = vunpack.c.l.b16 %v743
      %v2168 = vunpack.c.l.b16 %v747
      %v2169 = vunpack.c.l.b16 %v750
      %v2170 = vunpack.c.l.b16 %v754
      %v2171 = vunpack.c.l.b16 %v757
      %v2172 = vunpack.c.l.b16 %v761
      %v2173 = vunpack.c.l.b16 %v764
      %v2174 = vunpack.c.l.b16 %v768
      %v2175 = vunpack.c.l.b16 %v771
      %v2176 = vunpack.c.l.b16 %v775
      %v2177 = vunpack.c.l.b16 %v778
      %v2178 = vunpack.c.l.b16 %v782
      %v2179 = vunpack.c.l.b16 %v785
      %v2180 = vpack.c.b16 %v2149, %v2148
      %v2181 = vpack.c.b16 %v2151, %v2150
      %v2182 = vpack.c.b16 %v2153, %v2152
      %v2183 = vpack.c.b16 %v2155, %v2154
      %v2184 = vpack.c.b16 %v2157, %v2156
      %v2185 = vpack.c.b16 %v2159, %v2158
      %v2186 = vpack.c.b16 %v2161, %v2160
      %v2187 = vpack.c.b16 %v2163, %v2162
      %v2188 = vpack.c.b16 %v2165, %v2164
      %v2189 = vpack.c.b16 %v2167, %v2166
      %v2190 = vpack.c.b16 %v2169, %v2168
      %v2191 = vpack.c.b16 %v2171, %v2170
      %v2192 = vpack.c.b16 %v2173, %v2172
      %v2193 = vpack.c.b16 %v2175, %v2174
      %v2194 = vpack.c.b16 %v2177, %v2176
      %v2195 = vpack.c.b16 %v2179, %v2178
      %2196 = vrot.lane.b32.xlu0 %v2180, 32
      %v2197 = vpop.permute.xlu0 %2196
      %2198 = vrot.lane.b32.xlu0 %v2181, 32
      %v2199 = vpop.permute.xlu0 %2198
      %2200 = vrot.lane.b32.xlu0 %v2182, 32
      %v2201 = vpop.permute.xlu0 %2200
      %2202 = vrot.lane.b32.xlu0 %v2183, 32
      %v2203 = vpop.permute.xlu0 %2202
      %2204 = vrot.lane.b32.xlu0 %v2184, 32
      %v2205 = vpop.permute.xlu0 %2204
      %2206 = vrot.lane.b32.xlu0 %v2185, 32
      %v2207 = vpop.permute.xlu0 %2206
      %2208 = vrot.lane.b32.xlu0 %v2186, 32
      %v2209 = vpop.permute.xlu0 %2208
      %2210 = vrot.lane.b32.xlu0 %v2187, 32
      %v2211 = vpop.permute.xlu0 %2210
      %2212 = vrot.lane.b32.xlu0 %v2188, 32
      %v2213 = vpop.permute.xlu0 %2212
      %2214 = vrot.lane.b32.xlu0 %v2189, 32
      %v2215 = vpop.permute.xlu0 %2214
      %2216 = vrot.lane.b32.xlu0 %v2190, 32
      %v2217 = vpop.permute.xlu0 %2216
      %2218 = vrot.lane.b32.xlu0 %v2191, 32
      %v2219 = vpop.permute.xlu0 %2218
      %2220 = vrot.lane.b32.xlu0 %v2192, 32
      %v2221 = vpop.permute.xlu0 %2220
      %2222 = vrot.lane.b32.xlu0 %v2193, 32
      %v2223 = vpop.permute.xlu0 %2222
      %2224 = vrot.lane.b32.xlu0 %v2194, 32
      %v2225 = vpop.permute.xlu0 %2224
      %2226 = vrot.lane.b32.xlu0 %v2195, 32
      %v2227 = vpop.permute.xlu0 %2226
      %v2244 = vunpack.c.l.b16 %v787
      %v2245 = vunpack.c.l.b16 %v788
      %v2246 = vunpack.c.l.b16 %v789
      %v2247 = vunpack.c.l.b16 %v790
      %v2248 = vunpack.c.l.b16 %v791
      %v2249 = vunpack.c.l.b16 %v792
      %v2250 = vunpack.c.l.b16 %v793
      %v2251 = vunpack.c.l.b16 %v794
      %v2252 = vunpack.c.l.b16 %v795
      %v2253 = vunpack.c.l.b16 %v796
      %v2254 = vunpack.c.l.b16 %v797
      %v2255 = vunpack.c.l.b16 %v798
      %v2256 = vunpack.c.l.b16 %v799
      %v2257 = vunpack.c.l.b16 %v800
      %v2258 = vunpack.c.l.b16 %v801
      %v2259 = vunpack.c.l.b16 %v802
      %v2260 = vunpack.c.l.b16 %v803
      %v2261 = vunpack.c.l.b16 %v804
      %v2262 = vunpack.c.l.b16 %v805
      %v2263 = vunpack.c.l.b16 %v806
      %v2264 = vunpack.c.l.b16 %v807
      %v2265 = vunpack.c.l.b16 %v808
      %v2266 = vunpack.c.l.b16 %v809
      %v2267 = vunpack.c.l.b16 %v810
      %v2268 = vunpack.c.l.b16 %v811
      %v2269 = vunpack.c.l.b16 %v812
      %v2270 = vunpack.c.l.b16 %v813
      %v2271 = vunpack.c.l.b16 %v814
      %v2272 = vunpack.c.l.b16 %v815
      %v2273 = vunpack.c.l.b16 %v816
      %v2274 = vunpack.c.l.b16 %v817
      %v2275 = vunpack.c.l.b16 %v818
      %v2276 = vpack.c.b16 %v2245, %v2244
      %v2277 = vpack.c.b16 %v2247, %v2246
      %v2278 = vpack.c.b16 %v2249, %v2248
      %v2279 = vpack.c.b16 %v2251, %v2250
      %v2280 = vpack.c.b16 %v2253, %v2252
      %v2281 = vpack.c.b16 %v2255, %v2254
      %v2282 = vpack.c.b16 %v2257, %v2256
      %v2283 = vpack.c.b16 %v2259, %v2258
      %v2284 = vpack.c.b16 %v2261, %v2260
      %v2285 = vpack.c.b16 %v2263, %v2262
      %v2286 = vpack.c.b16 %v2265, %v2264
      %v2287 = vpack.c.b16 %v2267, %v2266
      %v2288 = vpack.c.b16 %v2269, %v2268
      %v2289 = vpack.c.b16 %v2271, %v2270
      %v2290 = vpack.c.b16 %v2273, %v2272
      %v2291 = vpack.c.b16 %v2275, %v2274
      %2292 = vrot.lane.b32.xlu0 %v2276, 48
      %v2293 = vpop.permute.xlu0 %2292
      %2294 = vrot.lane.b32.xlu0 %v2277, 48
      %v2295 = vpop.permute.xlu0 %2294
      %2296 = vrot.lane.b32.xlu0 %v2278, 48
      %v2297 = vpop.permute.xlu0 %2296
      %2298 = vrot.lane.b32.xlu0 %v2279, 48
      %v2299 = vpop.permute.xlu0 %2298
      %2300 = vrot.lane.b32.xlu0 %v2280, 48
      %v2301 = vpop.permute.xlu0 %2300
      %2302 = vrot.lane.b32.xlu0 %v2281, 48
      %v2303 = vpop.permute.xlu0 %2302
      %2304 = vrot.lane.b32.xlu0 %v2282, 48
      %v2305 = vpop.permute.xlu0 %2304
      %2306 = vrot.lane.b32.xlu0 %v2283, 48
      %v2307 = vpop.permute.xlu0 %2306
      %2308 = vrot.lane.b32.xlu0 %v2284, 48
      %v2309 = vpop.permute.xlu0 %2308
      %2310 = vrot.lane.b32.xlu0 %v2285, 48
      %v2311 = vpop.permute.xlu0 %2310
      %2312 = vrot.lane.b32.xlu0 %v2286, 48
      %v2313 = vpop.permute.xlu0 %2312
      %2314 = vrot.lane.b32.xlu0 %v2287, 48
      %v2315 = vpop.permute.xlu0 %2314
      %2316 = vrot.lane.b32.xlu0 %v2288, 48
      %v2317 = vpop.permute.xlu0 %2316
      %2318 = vrot.lane.b32.xlu0 %v2289, 48
      %v2319 = vpop.permute.xlu0 %2318
      %2320 = vrot.lane.b32.xlu0 %v2290, 48
      %v2321 = vpop.permute.xlu0 %2320
      %2322 = vrot.lane.b32.xlu0 %v2291, 48
      %v2323 = vpop.permute.xlu0 %2322
      %v2324 = vunpack.c.l.b16 %v848
      %v2325 = vunpack.c.l.b16 %v858
      %v2326 = vunpack.c.l.b16 %v872
      %v2327 = vunpack.c.l.b16 %v882
      %v2328 = vunpack.c.l.b16 %v896
      %v2329 = vunpack.c.l.b16 %v906
      %v2330 = vunpack.c.l.b16 %v920
      %v2331 = vunpack.c.l.b16 %v930
      %v2332 = vunpack.c.l.b16 %v944
      %v2333 = vunpack.c.l.b16 %v954
      %v2334 = vunpack.c.l.b16 %v968
      %v2335 = vunpack.c.l.b16 %v978
      %v2336 = vunpack.c.l.b16 %v992
      %v2337 = vunpack.c.l.b16 %v1002
      %v2338 = vunpack.c.l.b16 %v1016
      %v2339 = vunpack.c.l.b16 %v1026
      %v2340 = vunpack.c.l.b16 %v1040
      %v2341 = vunpack.c.l.b16 %v1050
      %v2342 = vunpack.c.l.b16 %v1064
      %v2343 = vunpack.c.l.b16 %v1074
      %v2344 = vunpack.c.l.b16 %v1088
      %v2345 = vunpack.c.l.b16 %v1098
      %v2346 = vunpack.c.l.b16 %v1112
      %v2347 = vunpack.c.l.b16 %v1122
      %v2348 = vunpack.c.l.b16 %v1136
      %v2349 = vunpack.c.l.b16 %v1146
      %v2350 = vunpack.c.l.b16 %v1160
      %v2351 = vunpack.c.l.b16 %v1170
      %v2352 = vunpack.c.l.b16 %v1184
      %v2353 = vunpack.c.l.b16 %v1194
      %v2354 = vunpack.c.l.b16 %v1208
      %v2355 = vunpack.c.l.b16 %v1218
      %v2356 = vpack.c.b16 %v2325, %v2324
      %v2357 = vpack.c.b16 %v2327, %v2326
      %v2358 = vpack.c.b16 %v2329, %v2328
      %v2359 = vpack.c.b16 %v2331, %v2330
      %v2360 = vpack.c.b16 %v2333, %v2332
      %v2361 = vpack.c.b16 %v2335, %v2334
      %v2362 = vpack.c.b16 %v2337, %v2336
      %v2363 = vpack.c.b16 %v2339, %v2338
      %v2364 = vpack.c.b16 %v2341, %v2340
      %v2365 = vpack.c.b16 %v2343, %v2342
      %v2366 = vpack.c.b16 %v2345, %v2344
      %v2367 = vpack.c.b16 %v2347, %v2346
      %v2368 = vpack.c.b16 %v2349, %v2348
      %v2369 = vpack.c.b16 %v2351, %v2350
      %v2370 = vpack.c.b16 %v2353, %v2352
      %v2371 = vpack.c.b16 %v2355, %v2354
      %2372 = vrot.lane.b32.xlu0 %v2356, 64
      %v2373 = vpop.permute.xlu0 %2372
      %2374 = vrot.lane.b32.xlu0 %v2357, 64
      %v2375 = vpop.permute.xlu0 %2374
      %2376 = vrot.lane.b32.xlu0 %v2358, 64
      %v2377 = vpop.permute.xlu0 %2376
      %2378 = vrot.lane.b32.xlu0 %v2359, 64
      %v2379 = vpop.permute.xlu0 %2378
      %2380 = vrot.lane.b32.xlu0 %v2360, 64
      %v2381 = vpop.permute.xlu0 %2380
      %2382 = vrot.lane.b32.xlu0 %v2361, 64
      %v2383 = vpop.permute.xlu0 %2382
      %2384 = vrot.lane.b32.xlu0 %v2362, 64
      %v2385 = vpop.permute.xlu0 %2384
      %2386 = vrot.lane.b32.xlu0 %v2363, 64
      %v2387 = vpop.permute.xlu0 %2386
      %2388 = vrot.lane.b32.xlu0 %v2364, 64
      %v2389 = vpop.permute.xlu0 %2388
      %2390 = vrot.lane.b32.xlu0 %v2365, 64
      %v2391 = vpop.permute.xlu0 %2390
      %2392 = vrot.lane.b32.xlu0 %v2366, 64
      %v2393 = vpop.permute.xlu0 %2392
      %2394 = vrot.lane.b32.xlu0 %v2367, 64
      %v2395 = vpop.permute.xlu0 %2394
      %2396 = vrot.lane.b32.xlu0 %v2368, 64
      %v2397 = vpop.permute.xlu0 %2396
      %2398 = vrot.lane.b32.xlu0 %v2369, 64
      %v2399 = vpop.permute.xlu0 %2398
      %2400 = vrot.lane.b32.xlu0 %v2370, 64
      %v2401 = vpop.permute.xlu0 %2400
      %2402 = vrot.lane.b32.xlu0 %v2371, 64
      %v2403 = vpop.permute.xlu0 %2402
      %v2404 = vunpack.c.l.b16 %v1286
      %v2405 = vunpack.c.l.b16 %v1289
      %v2406 = vunpack.c.l.b16 %v1293
      %v2407 = vunpack.c.l.b16 %v1296
      %v2408 = vunpack.c.l.b16 %v1300
      %v2409 = vunpack.c.l.b16 %v1303
      %v2410 = vunpack.c.l.b16 %v1307
      %v2411 = vunpack.c.l.b16 %v1310
      %v2412 = vunpack.c.l.b16 %v1314
      %v2413 = vunpack.c.l.b16 %v1317
      %v2414 = vunpack.c.l.b16 %v1321
      %v2415 = vunpack.c.l.b16 %v1324
      %v2416 = vunpack.c.l.b16 %v1328
      %v2417 = vunpack.c.l.b16 %v1331
      %v2418 = vunpack.c.l.b16 %v1335
      %v2419 = vunpack.c.l.b16 %v1338
      %v2420 = vunpack.c.l.b16 %v1342
      %v2421 = vunpack.c.l.b16 %v1345
      %v2422 = vunpack.c.l.b16 %v1349
      %v2423 = vunpack.c.l.b16 %v1352
      %v2424 = vunpack.c.l.b16 %v1356
      %v2425 = vunpack.c.l.b16 %v1359
      %v2426 = vunpack.c.l.b16 %v1363
      %v2427 = vunpack.c.l.b16 %v1366
      %v2428 = vunpack.c.l.b16 %v1370
      %v2429 = vunpack.c.l.b16 %v1373
      %v2430 = vunpack.c.l.b16 %v1377
      %v2431 = vunpack.c.l.b16 %v1380
      %v2432 = vunpack.c.l.b16 %v1384
      %v2433 = vunpack.c.l.b16 %v1387
      %v2434 = vunpack.c.l.b16 %v1391
      %v2435 = vunpack.c.l.b16 %v1394
      %v2436 = vpack.c.b16 %v2405, %v2404
      %v2437 = vpack.c.b16 %v2407, %v2406
      %v2438 = vpack.c.b16 %v2409, %v2408
      %v2439 = vpack.c.b16 %v2411, %v2410
      %v2440 = vpack.c.b16 %v2413, %v2412
      %v2441 = vpack.c.b16 %v2415, %v2414
      %v2442 = vpack.c.b16 %v2417, %v2416
      %v2443 = vpack.c.b16 %v2419, %v2418
      %v2444 = vpack.c.b16 %v2421, %v2420
      %v2445 = vpack.c.b16 %v2423, %v2422
      %v2446 = vpack.c.b16 %v2425, %v2424
      %v2447 = vpack.c.b16 %v2427, %v2426
      %v2448 = vpack.c.b16 %v2429, %v2428
      %v2449 = vpack.c.b16 %v2431, %v2430
      %v2450 = vpack.c.b16 %v2433, %v2432
      %v2451 = vpack.c.b16 %v2435, %v2434
      %2452 = vrot.lane.b32.xlu0 %v2436, 80
      %v2453 = vpop.permute.xlu0 %2452
      %2454 = vrot.lane.b32.xlu0 %v2437, 80
      %v2455 = vpop.permute.xlu0 %2454
      %2456 = vrot.lane.b32.xlu0 %v2438, 80
      %v2457 = vpop.permute.xlu0 %2456
      %2458 = vrot.lane.b32.xlu0 %v2439, 80
      %v2459 = vpop.permute.xlu0 %2458
      %2460 = vrot.lane.b32.xlu0 %v2440, 80
      %v2461 = vpop.permute.xlu0 %2460
      %2462 = vrot.lane.b32.xlu0 %v2441, 80
      %v2463 = vpop.permute.xlu0 %2462
      %2464 = vrot.lane.b32.xlu0 %v2442, 80
      %v2465 = vpop.permute.xlu0 %2464
      %2466 = vrot.lane.b32.xlu0 %v2443, 80
      %v2467 = vpop.permute.xlu0 %2466
      %2468 = vrot.lane.b32.xlu0 %v2444, 80
      %v2469 = vpop.permute.xlu0 %2468
      %2470 = vrot.lane.b32.xlu0 %v2445, 80
      %v2471 = vpop.permute.xlu0 %2470
      %2472 = vrot.lane.b32.xlu0 %v2446, 80
      %v2473 = vpop.permute.xlu0 %2472
      %2474 = vrot.lane.b32.xlu0 %v2447, 80
      %v2475 = vpop.permute.xlu0 %2474
      %2476 = vrot.lane.b32.xlu0 %v2448, 80
      %v2477 = vpop.permute.xlu0 %2476
      %2478 = vrot.lane.b32.xlu0 %v2449, 80
      %v2479 = vpop.permute.xlu0 %2478
      %2480 = vrot.lane.b32.xlu0 %v2450, 80
      %v2481 = vpop.permute.xlu0 %2480
      %2482 = vrot.lane.b32.xlu0 %v2451, 80
      %v2483 = vpop.permute.xlu0 %2482
      %v2500 = vunpack.c.l.b16 %v1396
      %v2501 = vunpack.c.l.b16 %v1397
      %v2502 = vunpack.c.l.b16 %v1398
      %v2503 = vunpack.c.l.b16 %v1399
      %v2504 = vunpack.c.l.b16 %v1400
      %v2505 = vunpack.c.l.b16 %v1401
      %v2506 = vunpack.c.l.b16 %v1402
      %v2507 = vunpack.c.l.b16 %v1403
      %v2508 = vunpack.c.l.b16 %v1404
      %v2509 = vunpack.c.l.b16 %v1405
      %v2510 = vunpack.c.l.b16 %v1406
      %v2511 = vunpack.c.l.b16 %v1407
      %v2512 = vunpack.c.l.b16 %v1408
      %v2513 = vunpack.c.l.b16 %v1409
      %v2514 = vunpack.c.l.b16 %v1410
      %v2515 = vunpack.c.l.b16 %v1411
      %v2516 = vunpack.c.l.b16 %v1412
      %v2517 = vunpack.c.l.b16 %v1413
      %v2518 = vunpack.c.l.b16 %v1414
      %v2519 = vunpack.c.l.b16 %v1415
      %v2520 = vunpack.c.l.b16 %v1416
      %v2521 = vunpack.c.l.b16 %v1417
      %v2522 = vunpack.c.l.b16 %v1418
      %v2523 = vunpack.c.l.b16 %v1419
      %v2524 = vunpack.c.l.b16 %v1420
      %v2525 = vunpack.c.l.b16 %v1421
      %v2526 = vunpack.c.l.b16 %v1422
      %v2527 = vunpack.c.l.b16 %v1423
      %v2528 = vunpack.c.l.b16 %v1424
      %v2529 = vunpack.c.l.b16 %v1425
      %v2530 = vunpack.c.l.b16 %v1426
      %v2531 = vunpack.c.l.b16 %v1427
      %v2532 = vpack.c.b16 %v2501, %v2500
      %v2533 = vpack.c.b16 %v2503, %v2502
      %v2534 = vpack.c.b16 %v2505, %v2504
      %v2535 = vpack.c.b16 %v2507, %v2506
      %v2536 = vpack.c.b16 %v2509, %v2508
      %v2537 = vpack.c.b16 %v2511, %v2510
      %v2538 = vpack.c.b16 %v2513, %v2512
      %v2539 = vpack.c.b16 %v2515, %v2514
      %v2540 = vpack.c.b16 %v2517, %v2516
      %v2541 = vpack.c.b16 %v2519, %v2518
      %v2542 = vpack.c.b16 %v2521, %v2520
      %v2543 = vpack.c.b16 %v2523, %v2522
      %v2544 = vpack.c.b16 %v2525, %v2524
      %v2545 = vpack.c.b16 %v2527, %v2526
      %v2546 = vpack.c.b16 %v2529, %v2528
      %v2547 = vpack.c.b16 %v2531, %v2530
      %2548 = vrot.lane.b32.xlu0 %v2532, 96
      %v2549 = vpop.permute.xlu0 %2548
      %2550 = vrot.lane.b32.xlu0 %v2533, 96
      %v2551 = vpop.permute.xlu0 %2550
      %2552 = vrot.lane.b32.xlu0 %v2534, 96
      %v2553 = vpop.permute.xlu0 %2552
      %2554 = vrot.lane.b32.xlu0 %v2535, 96
      %v2555 = vpop.permute.xlu0 %2554
      %2556 = vrot.lane.b32.xlu0 %v2536, 96
      %v2557 = vpop.permute.xlu0 %2556
      %2558 = vrot.lane.b32.xlu0 %v2537, 96
      %v2559 = vpop.permute.xlu0 %2558
      %2560 = vrot.lane.b32.xlu0 %v2538, 96
      %v2561 = vpop.permute.xlu0 %2560
      %2562 = vrot.lane.b32.xlu0 %v2539, 96
      %v2563 = vpop.permute.xlu0 %2562
      %2564 = vrot.lane.b32.xlu0 %v2540, 96
      %v2565 = vpop.permute.xlu0 %2564
      %2566 = vrot.lane.b32.xlu0 %v2541, 96
      %v2567 = vpop.permute.xlu0 %2566
      %2568 = vrot.lane.b32.xlu0 %v2542, 96
      %v2569 = vpop.permute.xlu0 %2568
      %2570 = vrot.lane.b32.xlu0 %v2543, 96
      %v2571 = vpop.permute.xlu0 %2570
      %2572 = vrot.lane.b32.xlu0 %v2544, 96
      %v2573 = vpop.permute.xlu0 %2572
      %2574 = vrot.lane.b32.xlu0 %v2545, 96
      %v2575 = vpop.permute.xlu0 %2574
      %2576 = vrot.lane.b32.xlu0 %v2546, 96
      %v2577 = vpop.permute.xlu0 %2576
      %2578 = vrot.lane.b32.xlu0 %v2547, 96
      %v2579 = vpop.permute.xlu0 %2578
      %v2580 = vunpack.c.l.b16 %v1457
      %v2581 = vunpack.c.l.b16 %v1467
      %v2582 = vunpack.c.l.b16 %v1481
      %v2583 = vunpack.c.l.b16 %v1491
      %v2584 = vunpack.c.l.b16 %v1505
      %v2585 = vunpack.c.l.b16 %v1515
      %v2586 = vunpack.c.l.b16 %v1529
      %v2587 = vunpack.c.l.b16 %v1539
      %v2588 = vunpack.c.l.b16 %v1553
      %v2589 = vunpack.c.l.b16 %v1563
      %v2590 = vunpack.c.l.b16 %v1577
      %v2591 = vunpack.c.l.b16 %v1587
      %v2592 = vunpack.c.l.b16 %v1601
      %v2593 = vunpack.c.l.b16 %v1611
      %v2594 = vunpack.c.l.b16 %v1625
      %v2595 = vunpack.c.l.b16 %v1635
      %v2596 = vunpack.c.l.b16 %v1649
      %v2597 = vunpack.c.l.b16 %v1659
      %v2598 = vunpack.c.l.b16 %v1673
      %v2599 = vunpack.c.l.b16 %v1683
      %v2600 = vunpack.c.l.b16 %v1697
      %v2601 = vunpack.c.l.b16 %v1707
      %v2602 = vunpack.c.l.b16 %v1721
      %v2603 = vunpack.c.l.b16 %v1731
      %v2604 = vunpack.c.l.b16 %v1745
      %v2605 = vunpack.c.l.b16 %v1755
      %v2606 = vunpack.c.l.b16 %v1769
      %v2607 = vunpack.c.l.b16 %v1779
      %v2608 = vunpack.c.l.b16 %v1793
      %v2609 = vunpack.c.l.b16 %v1803
      %v2610 = vunpack.c.l.b16 %v1817
      %v2611 = vunpack.c.l.b16 %v1827
      %v2612 = vpack.c.b16 %v2581, %v2580
      %v2613 = vpack.c.b16 %v2583, %v2582
      %v2614 = vpack.c.b16 %v2585, %v2584
      %v2615 = vpack.c.b16 %v2587, %v2586
      %v2616 = vpack.c.b16 %v2589, %v2588
      %v2617 = vpack.c.b16 %v2591, %v2590
      %v2618 = vpack.c.b16 %v2593, %v2592
      %v2619 = vpack.c.b16 %v2595, %v2594
      %v2620 = vpack.c.b16 %v2597, %v2596
      %v2621 = vpack.c.b16 %v2599, %v2598
      %v2622 = vpack.c.b16 %v2601, %v2600
      %v2623 = vpack.c.b16 %v2603, %v2602
      %v2624 = vpack.c.b16 %v2605, %v2604
      %v2625 = vpack.c.b16 %v2607, %v2606
      %v2626 = vpack.c.b16 %v2609, %v2608
      %v2627 = vpack.c.b16 %v2611, %v2610
      %2628 = vrot.lane.b32.xlu0 %v2612, 112
      %v2629 = vpop.permute.xlu0 %2628
      %2630 = vrot.lane.b32.xlu0 %v2613, 112
      %v2631 = vpop.permute.xlu0 %2630
      %2632 = vrot.lane.b32.xlu0 %v2614, 112
      %v2633 = vpop.permute.xlu0 %2632
      %2634 = vrot.lane.b32.xlu0 %v2615, 112
      %v2635 = vpop.permute.xlu0 %2634
      %2636 = vrot.lane.b32.xlu0 %v2616, 112
      %v2637 = vpop.permute.xlu0 %2636
      %2638 = vrot.lane.b32.xlu0 %v2617, 112
      %v2639 = vpop.permute.xlu0 %2638
      %2640 = vrot.lane.b32.xlu0 %v2618, 112
      %v2641 = vpop.permute.xlu0 %2640
      %2642 = vrot.lane.b32.xlu0 %v2619, 112
      %v2643 = vpop.permute.xlu0 %2642
      %2644 = vrot.lane.b32.xlu0 %v2620, 112
      %v2645 = vpop.permute.xlu0 %2644
      %2646 = vrot.lane.b32.xlu0 %v2621, 112
      %v2647 = vpop.permute.xlu0 %2646
      %2648 = vrot.lane.b32.xlu0 %v2622, 112
      %v2649 = vpop.permute.xlu0 %2648
      %2650 = vrot.lane.b32.xlu0 %v2623, 112
      %v2651 = vpop.permute.xlu0 %2650
      %2652 = vrot.lane.b32.xlu0 %v2624, 112
      %v2653 = vpop.permute.xlu0 %2652
      %2654 = vrot.lane.b32.xlu0 %v2625, 112
      %v2655 = vpop.permute.xlu0 %2654
      %2656 = vrot.lane.b32.xlu0 %v2626, 112
      %v2657 = vpop.permute.xlu0 %2656
      %2658 = vrot.lane.b32.xlu0 %v2627, 112
      %v2659 = vpop.permute.xlu0 %2658
      %v2660 = vunpack.c.l.b16 %v1895
      %v2661 = vunpack.c.l.b16 %v1898
      %v2662 = vunpack.c.l.b16 %v1902
      %v2663 = vunpack.c.l.b16 %v1905
      %v2664 = vunpack.c.l.b16 %v1909
      %v2665 = vunpack.c.l.b16 %v1912
      %v2666 = vunpack.c.l.b16 %v1916
      %v2667 = vunpack.c.l.b16 %v1919
      %v2668 = vunpack.c.l.b16 %v1923
      %v2669 = vunpack.c.l.b16 %v1926
      %v2670 = vunpack.c.l.b16 %v1930
      %v2671 = vunpack.c.l.b16 %v1933
      %v2672 = vunpack.c.l.b16 %v1937
      %v2673 = vunpack.c.l.b16 %v1940
      %v2674 = vunpack.c.l.b16 %v1944
      %v2675 = vunpack.c.l.b16 %v1947
      %v2676 = vunpack.c.l.b16 %v1951
      %v2677 = vunpack.c.l.b16 %v1954
      %v2678 = vunpack.c.l.b16 %v1958
      %v2679 = vunpack.c.l.b16 %v1961
      %v2680 = vunpack.c.l.b16 %v1965
      %v2681 = vunpack.c.l.b16 %v1968
      %v2682 = vunpack.c.l.b16 %v1972
      %v2683 = vunpack.c.l.b16 %v1975
      %v2684 = vunpack.c.l.b16 %v1979
      %v2685 = vunpack.c.l.b16 %v1982
      %v2686 = vunpack.c.l.b16 %v1986
      %v2687 = vunpack.c.l.b16 %v1989
      %v2688 = vunpack.c.l.b16 %v1993
      %v2689 = vunpack.c.l.b16 %v1996
      %v2690 = vunpack.c.l.b16 %v2000
      %v2691 = vunpack.c.l.b16 %v2003
      %v2692 = vpack.c.b16 %v2661, %v2660
      %v2693 = vpack.c.b16 %v2663, %v2662
      %v2694 = vpack.c.b16 %v2665, %v2664
      %v2695 = vpack.c.b16 %v2667, %v2666
      %v2696 = vpack.c.b16 %v2669, %v2668
      %v2697 = vpack.c.b16 %v2671, %v2670
      %v2698 = vpack.c.b16 %v2673, %v2672
      %v2699 = vpack.c.b16 %v2675, %v2674
      %v2700 = vpack.c.b16 %v2677, %v2676
      %v2701 = vpack.c.b16 %v2679, %v2678
      %v2702 = vpack.c.b16 %v2681, %v2680
      %v2703 = vpack.c.b16 %v2683, %v2682
      %v2704 = vpack.c.b16 %v2685, %v2684
      %v2705 = vpack.c.b16 %v2687, %v2686
      %v2706 = vpack.c.b16 %v2689, %v2688
      %v2707 = vpack.c.b16 %v2691, %v2690
      %vm2708 = vcmask 130048
      %v2711 = vsel %vm2708, %v2052, %v2117
      %v2714 = vsel %vm2708, %v2053, %v2119
      %v2717 = vsel %vm2708, %v2054, %v2121
      %v2720 = vsel %vm2708, %v2055, %v2123
      %v2723 = vsel %vm2708, %v2056, %v2125
      %v2726 = vsel %vm2708, %v2057, %v2127
      %v2729 = vsel %vm2708, %v2058, %v2129
      %v2732 = vsel %vm2708, %v2059, %v2131
      %v2735 = vsel %vm2708, %v2060, %v2133
      %v2738 = vsel %vm2708, %v2061, %v2135
      %v2741 = vsel %vm2708, %v2062, %v2137
      %v2744 = vsel %vm2708, %v2063, %v2139
      %v2747 = vsel %vm2708, %v2064, %v2141
      %v2750 = vsel %vm2708, %v2065, %v2143
      %v2753 = vsel %vm2708, %v2066, %v2145
      %v2756 = vsel %vm2708, %v2067, %v2147
      %vm2757 = vcmask 261120
      %v2759 = vsel %vm2757, %v2711, %v2197
      %v2761 = vsel %vm2757, %v2714, %v2199
      %v2763 = vsel %vm2757, %v2717, %v2201
      %v2765 = vsel %vm2757, %v2720, %v2203
      %v2767 = vsel %vm2757, %v2723, %v2205
      %v2769 = vsel %vm2757, %v2726, %v2207
      %v2771 = vsel %vm2757, %v2729, %v2209
      %v2773 = vsel %vm2757, %v2732, %v2211
      %v2775 = vsel %vm2757, %v2735, %v2213
      %v2777 = vsel %vm2757, %v2738, %v2215
      %v2779 = vsel %vm2757, %v2741, %v2217
      %v2781 = vsel %vm2757, %v2744, %v2219
      %v2783 = vsel %vm2757, %v2747, %v2221
      %v2785 = vsel %vm2757, %v2750, %v2223
      %v2787 = vsel %vm2757, %v2753, %v2225
      %v2789 = vsel %vm2757, %v2756, %v2227
      %vm2790 = vcmask 392192
      %v2792 = vsel %vm2790, %v2759, %v2293
      %v2794 = vsel %vm2790, %v2761, %v2295
      %v2796 = vsel %vm2790, %v2763, %v2297
      %v2798 = vsel %vm2790, %v2765, %v2299
      %v2800 = vsel %vm2790, %v2767, %v2301
      %v2802 = vsel %vm2790, %v2769, %v2303
      %v2804 = vsel %vm2790, %v2771, %v2305
      %v2806 = vsel %vm2790, %v2773, %v2307
      %v2808 = vsel %vm2790, %v2775, %v2309
      %v2810 = vsel %vm2790, %v2777, %v2311
      %v2812 = vsel %vm2790, %v2779, %v2313
      %v2814 = vsel %vm2790, %v2781, %v2315
      %v2816 = vsel %vm2790, %v2783, %v2317
      %v2818 = vsel %vm2790, %v2785, %v2319
      %v2820 = vsel %vm2790, %v2787, %v2321
      %v2822 = vsel %vm2790, %v2789, %v2323
      %vm2823 = vcmask 523264
      %v2825 = vsel %vm2823, %v2792, %v2373
      %v2827 = vsel %vm2823, %v2794, %v2375
      %v2829 = vsel %vm2823, %v2796, %v2377
      %v2831 = vsel %vm2823, %v2798, %v2379
      %v2833 = vsel %vm2823, %v2800, %v2381
      %v2835 = vsel %vm2823, %v2802, %v2383
      %v2837 = vsel %vm2823, %v2804, %v2385
      %v2839 = vsel %vm2823, %v2806, %v2387
      %v2841 = vsel %vm2823, %v2808, %v2389
      %v2843 = vsel %vm2823, %v2810, %v2391
      %v2845 = vsel %vm2823, %v2812, %v2393
      %v2847 = vsel %vm2823, %v2814, %v2395
      %v2849 = vsel %vm2823, %v2816, %v2397
      %v2851 = vsel %vm2823, %v2818, %v2399
      %v2853 = vsel %vm2823, %v2820, %v2401
      %v2855 = vsel %vm2823, %v2822, %v2403
      %vm2856 = vcmask 654336
      %v2858 = vsel %vm2856, %v2825, %v2453
      %v2860 = vsel %vm2856, %v2827, %v2455
      %v2862 = vsel %vm2856, %v2829, %v2457
      %v2864 = vsel %vm2856, %v2831, %v2459
      %v2866 = vsel %vm2856, %v2833, %v2461
      %v2868 = vsel %vm2856, %v2835, %v2463
      %v2870 = vsel %vm2856, %v2837, %v2465
      %v2872 = vsel %vm2856, %v2839, %v2467
      %v2874 = vsel %vm2856, %v2841, %v2469
      %v2876 = vsel %vm2856, %v2843, %v2471
      %v2878 = vsel %vm2856, %v2845, %v2473
      %v2880 = vsel %vm2856, %v2847, %v2475
      %v2882 = vsel %vm2856, %v2849, %v2477
      %v2884 = vsel %vm2856, %v2851, %v2479
      %v2886 = vsel %vm2856, %v2853, %v2481
      %v2888 = vsel %vm2856, %v2855, %v2483
      %vm2889 = vcmask 785408
      %v2891 = vsel %vm2889, %v2858, %v2549
      %v2893 = vsel %vm2889, %v2860, %v2551
      %v2895 = vsel %vm2889, %v2862, %v2553
      %v2897 = vsel %vm2889, %v2864, %v2555
      %v2899 = vsel %vm2889, %v2866, %v2557
      %v2901 = vsel %vm2889, %v2868, %v2559
      %v2903 = vsel %vm2889, %v2870, %v2561
      %v2905 = vsel %vm2889, %v2872, %v2563
      %v2907 = vsel %vm2889, %v2874, %v2565
      %v2909 = vsel %vm2889, %v2876, %v2567
      %v2911 = vsel %vm2889, %v2878, %v2569
      %v2913 = vsel %vm2889, %v2880, %v2571
      %v2915 = vsel %vm2889, %v2882, %v2573
      %v2917 = vsel %vm2889, %v2884, %v2575
      %v2919 = vsel %vm2889, %v2886, %v2577
      %v2921 = vsel %vm2889, %v2888, %v2579
      %vm2922 = vcmask 916480
      %v2924 = vsel %vm2922, %v2891, %v2629
      %v2927 = vsel %vm2922, %v2893, %v2631
      %v2930 = vsel %vm2922, %v2895, %v2633
      %v2933 = vsel %vm2922, %v2897, %v2635
      %v2936 = vsel %vm2922, %v2899, %v2637
      %v2939 = vsel %vm2922, %v2901, %v2639
      %v2942 = vsel %vm2922, %v2903, %v2641
      %v2945 = vsel %vm2922, %v2905, %v2643
      %v2948 = vsel %vm2922, %v2907, %v2645
      %v2951 = vsel %vm2922, %v2909, %v2647
      %v2954 = vsel %vm2922, %v2911, %v2649
      %v2957 = vsel %vm2922, %v2913, %v2651
      %v2960 = vsel %vm2922, %v2915, %v2653
      %v2963 = vsel %vm2922, %v2917, %v2655
      %v2966 = vsel %vm2922, %v2919, %v2657
      %v2969 = vsel %vm2922, %v2921, %v2659
      %v2971 = vld [vmem:[%s1] sm:$0xf]
      %v2972 = vld [vmem:[%s1 + $0x4] sm:$0xf]
      %v2973 = vld [vmem:[%s1 + $0x8] sm:$0xf]
      %v2974 = vld [vmem:[%s1 + $0xc] sm:$0xf]
      %v2975 = vld [vmem:[%s1 + $0x10] sm:$0xf]
      %v2976 = vld [vmem:[%s1 + $0x14] sm:$0xf]
      %v2977 = vld [vmem:[%s1 + $0x18] sm:$0xf]
      %v2978 = vld [vmem:[%s1 + $0x1c] sm:$0xf]
      %v2979 = vld [vmem:[%s1 + $0x20] sm:$0xf]
      %v2980 = vld [vmem:[%s1 + $0x24] sm:$0xf]
      %v2981 = vld [vmem:[%s1 + $0x28] sm:$0xf]
      %v2982 = vld [vmem:[%s1 + $0x2c] sm:$0xf]
      %v2983 = vld [vmem:[%s1 + $0x30] sm:$0xf]
      %v2984 = vld [vmem:[%s1 + $0x34] sm:$0xf]
      %v2985 = vld [vmem:[%s1 + $0x38] sm:$0xf]
      %v2986 = vld [vmem:[%s1 + $0x3c] sm:$0xf]
      %v2987 = vld [vmem:[%s1 + $0x40] sm:$0xf]
      %v2988 = vld [vmem:[%s1 + $0x44] sm:$0xf]
      %v2989 = vld [vmem:[%s2] sm:$0x1]
      %v2991 = vlaneseq
      %v2992 = vshrl.u32 %v2991, 7
      %v2993 = vsub.s32 0, %v2992
      %v2994 = vrot.slane %v2989, %v2993
      %v3014 = vunpack.c.l.b16 %v2971
      %v3015 = vunpack.c.l.b16 %v2972
      %v3016 = vunpack.c.l.b16 %v2973
      %v3017 = vunpack.c.l.b16 %v2974
      %v3018 = vunpack.c.l.b16 %v2975
      %v3019 = vunpack.c.l.b16 %v2976
      %v3020 = vunpack.c.l.b16 %v2977
      %v3021 = vunpack.c.l.b16 %v2978
      %v3022 = vunpack.c.l.b16 %v2979
      %v3023 = vunpack.c.l.b16 %v2980
      %v3024 = vunpack.c.l.b16 %v2981
      %v3025 = vunpack.c.l.b16 %v2982
      %v3026 = vunpack.c.l.b16 %v2983
      %v3027 = vunpack.c.l.b16 %v2984
      %v3028 = vunpack.c.l.b16 %v2985
      %v3029 = vunpack.c.l.b16 %v2986
      %v3030 = vunpack.c.l.b16 %v2987
      %v3031 = vunpack.c.l.b16 %v2988
      %v3032 = vpack.c.b16 %v3015, %v3014
      %v3033 = vpack.c.b16 %v3017, %v3016
      %v3034 = vpack.c.b16 %v3019, %v3018
      %v3035 = vpack.c.b16 %v3021, %v3020
      %v3036 = vpack.c.b16 %v3023, %v3022
      %v3037 = vpack.c.b16 %v3025, %v3024
      %v3038 = vpack.c.b16 %v3027, %v3026
      %v3039 = vpack.c.b16 %v3029, %v3028
      %v3040 = vpack.c.b16 %v3031, %v3030
      %v3051 = vsel %vm2708, %v2692, 0
      %v3054 = vsel %vm2708, %v2693, 0
      %v3057 = vsel %vm2708, %v2694, 0
      %v3060 = vsel %vm2708, %v2695, 0
      %v3063 = vsel %vm2708, %v2696, 0
      %v3066 = vsel %vm2708, %v2697, 0
      %v3069 = vsel %vm2708, %v2698, 0
      %v3072 = vsel %vm2708, %v2699, 0
      %v3075 = vsel %vm2708, %v2700, 0
      %v3078 = vsel %vm2708, %v2701, 0
      %v3081 = vsel %vm2708, %v2702, 0
      %v3084 = vsel %vm2708, %v2703, 0
      %v3087 = vsel %vm2708, %v2704, 0
      %v3090 = vsel %vm2708, %v2705, 0
      %v3093 = vsel %vm2708, %v2706, 0
      %v3096 = vsel %vm2708, %v2707, 0
      %3098 = vmatprep.subr.bf16.mxu0 0
      %3099 = vmatpush1.bf16.msra.mxu0 %v3032
      %3100 = vmatprep.subr.bf16.mxu0 0
      %3101 = vmatpush1.bf16.msra.mxu0 %v3033
      %3102 = vmatprep.subr.bf16.mxu0 0
      %3103 = vmatpush1.bf16.msra.mxu0 %v3034
      %3104 = vmatprep.subr.bf16.mxu0 0
      %3105 = vmatpush1.bf16.msra.mxu0 %v3035
      %3106 = vmatprep.subr.bf16.mxu0 0
      %3107 = vmatpush1.bf16.msra.mxu0 %v3036
      %3108 = vmatprep.subr.bf16.mxu0 0
      %3109 = vmatpush1.bf16.msra.mxu0 %v3037
      %3110 = vmatprep.subr.bf16.mxu0 0
      %3111 = vmatpush1.bf16.msra.mxu0 %v3038
      %3112 = vmatprep.subr.bf16.mxu0 0
      %3113 = vmatpush1.bf16.msra.mxu0 %v3039
      %3114 = vmatprep.subr.bf16.mxu0 0
      %3115 = vmatpush1.bf16.msra.mxu0 %v3040
      %3116 = vmatprep.subr.bf16.mxu0 0
      %3117 = vmatpush1.bf16.msra.mxu0 0
      %3118 = vmatprep.subr.bf16.mxu0 0
      %3119 = vmatpush1.bf16.msra.mxu0 0
      %3120 = vmatprep.subr.bf16.mxu0 0
      %3121 = vmatpush1.bf16.msra.mxu0 0
      %3122 = vmatprep.subr.bf16.mxu0 0
      %3123 = vmatpush1.bf16.msra.mxu0 0
      %3124 = vmatprep.subr.bf16.mxu0 0
      %3125 = vmatpush1.bf16.msra.mxu0 0
      %3126 = vmatprep.subr.bf16.mxu0 0
      %3127 = vmatpush1.bf16.msra.mxu0 0
      %3128 = vmatprep.subr.bf16.mxu0 0
      %3129 = vmatpush1.bf16.msra.mxu0 0
      %3130 = vmatprep.mubr.bf16.mxu0 %v3051
      %3131 = vmatmul.mubr.bf16.gmra.mrb[0].mxu0 %v2924
      %v3132 = vpop.f32.mrb[0].mxu0
      %v3133 = vadd.f32 %v2994, %v3132
      %v3134 = vpop.f32.mrb[0].mxu0
      %v3135 = vpop.f32.mrb[0].mxu0
      %v3136 = vadd.f32 %v2994, %v3135
      %v3137 = vpop.f32.mrb[0].mxu0
      %3138 = vmatprep.mubr.bf16.mxu0 %v3054
      %3139 = vmatmul.mubr.bf16.gmra.mrb[0].mxu0 %v2927
      %v3140 = vpop.f32.mrb[0].mxu0
      %v3141 = vadd.f32 %v2994, %v3140
      %v3142 = vpop.f32.mrb[0].mxu0
      %v3143 = vpop.f32.mrb[0].mxu0
      %v3144 = vadd.f32 %v2994, %v3143
      %v3145 = vpop.f32.mrb[0].mxu0
      %3146 = vmatprep.mubr.bf16.mxu0 %v3057
      %3147 = vmatmul.mubr.bf16.gmra.mrb[0].mxu0 %v2930
      %v3148 = vpop.f32.mrb[0].mxu0
      %v3149 = vadd.f32 %v2994, %v3148
      %v3150 = vpop.f32.mrb[0].mxu0
      %v3151 = vpop.f32.mrb[0].mxu0
      %v3152 = vadd.f32 %v2994, %v3151
      %v3153 = vpop.f32.mrb[0].mxu0
      %3154 = vmatprep.mubr.bf16.mxu0 %v3060
      %3155 = vmatmul.mubr.bf16.gmra.mrb[0].mxu0 %v2933
      %v3156 = vpop.f32.mrb[0].mxu0
      %v3157 = vadd.f32 %v2994, %v3156
      %v3158 = vpop.f32.mrb[0].mxu0
      %v3159 = vpop.f32.mrb[0].mxu0
      %v3160 = vadd.f32 %v2994, %v3159
      %v3161 = vpop.f32.mrb[0].mxu0
      %3162 = vmatprep.mubr.bf16.mxu0 %v3063
      %3163 = vmatmul.mubr.bf16.gmra.mrb[0].mxu0 %v2936
      %v3164 = vpop.f32.mrb[0].mxu0
      %v3165 = vadd.f32 %v2994, %v3164
      %v3166 = vpop.f32.mrb[0].mxu0
      %v3167 = vpop.f32.mrb[0].mxu0
      %v3168 = vadd.f32 %v2994, %v3167
      %v3169 = vpop.f32.mrb[0].mxu0
      %3170 = vmatprep.mubr.bf16.mxu0 %v3066
      %3171 = vmatmul.mubr.bf16.gmra.mrb[0].mxu0 %v2939
      %v3172 = vpop.f32.mrb[0].mxu0
      %v3173 = vadd.f32 %v2994, %v3172
      %v3174 = vpop.f32.mrb[0].mxu0
      %v3175 = vpop.f32.mrb[0].mxu0
      %v3176 = vadd.f32 %v2994, %v3175
      %v3177 = vpop.f32.mrb[0].mxu0
      %3178 = vmatprep.mubr.bf16.mxu0 %v3069
      %3179 = vmatmul.mubr.bf16.gmra.mrb[0].mxu0 %v2942
      %v3180 = vpop.f32.mrb[0].mxu0
      %v3181 = vadd.f32 %v2994, %v3180
      %v3182 = vpop.f32.mrb[0].mxu0
      %v3183 = vpop.f32.mrb[0].mxu0
      %v3184 = vadd.f32 %v2994, %v3183
      %v3185 = vpop.f32.mrb[0].mxu0
      %3186 = vmatprep.mubr.bf16.mxu0 %v3072
      %3187 = vmatmul.mubr.bf16.gmra.mrb[0].mxu0 %v2945
      %v3188 = vpop.f32.mrb[0].mxu0
      %v3189 = vadd.f32 %v2994, %v3188
      %v3190 = vpop.f32.mrb[0].mxu0
      %v3191 = vpop.f32.mrb[0].mxu0
      %v3192 = vadd.f32 %v2994, %v3191
      %v3193 = vpop.f32.mrb[0].mxu0
      %3194 = vmatprep.mubr.bf16.mxu0 %v3075
      %3195 = vmatmul.mubr.bf16.gmra.mrb[0].mxu0 %v2948
      %v3196 = vpop.f32.mrb[0].mxu0
      %v3197 = vadd.f32 %v2994, %v3196
      %v3198 = vpop.f32.mrb[0].mxu0
      %v3199 = vpop.f32.mrb[0].mxu0
      %v3200 = vadd.f32 %v2994, %v3199
      %v3201 = vpop.f32.mrb[0].mxu0
      %3202 = vmatprep.mubr.bf16.mxu0 %v3078
      %3203 = vmatmul.mubr.bf16.gmra.mrb[0].mxu0 %v2951
      %v3204 = vpop.f32.mrb[0].mxu0
      %v3205 = vadd.f32 %v2994, %v3204
      %v3206 = vpop.f32.mrb[0].mxu0
      %v3207 = vpop.f32.mrb[0].mxu0
      %v3208 = vadd.f32 %v2994, %v3207
      %v3209 = vpop.f32.mrb[0].mxu0
      %3210 = vmatprep.mubr.bf16.mxu0 %v3081
      %3211 = vmatmul.mubr.bf16.gmra.mrb[0].mxu0 %v2954
      %v3212 = vpop.f32.mrb[0].mxu0
      %v3213 = vadd.f32 %v2994, %v3212
      %v3214 = vpop.f32.mrb[0].mxu0
      %v3215 = vpop.f32.mrb[0].mxu0
      %v3216 = vadd.f32 %v2994, %v3215
      %v3217 = vpop.f32.mrb[0].mxu0
      %3218 = vmatprep.mubr.bf16.mxu0 %v3084
      %3219 = vmatmul.mubr.bf16.gmra.mrb[0].mxu0 %v2957
      %v3220 = vpop.f32.mrb[0].mxu0
      %v3221 = vadd.f32 %v2994, %v3220
      %v3222 = vpop.f32.mrb[0].mxu0
      %v3223 = vpop.f32.mrb[0].mxu0
      %v3224 = vadd.f32 %v2994, %v3223
      %v3225 = vpop.f32.mrb[0].mxu0
      %3226 = vmatprep.mubr.bf16.mxu0 %v3087
      %3227 = vmatmul.mubr.bf16.gmra.mrb[0].mxu0 %v2960
      %v3228 = vpop.f32.mrb[0].mxu0
      %v3229 = vadd.f32 %v2994, %v3228
      %v3230 = vpop.f32.mrb[0].mxu0
      %v3231 = vpop.f32.mrb[0].mxu0
      %v3232 = vadd.f32 %v2994, %v3231
      %v3233 = vpop.f32.mrb[0].mxu0
      %3234 = vmatprep.mubr.bf16.mxu0 %v3090
      %3235 = vmatmul.mubr.bf16.gmra.mrb[0].mxu0 %v2963
      %v3236 = vpop.f32.mrb[0].mxu0
      %v3237 = vadd.f32 %v2994, %v3236
      %v3238 = vpop.f32.mrb[0].mxu0
      %v3239 = vpop.f32.mrb[0].mxu0
      %v3240 = vadd.f32 %v2994, %v3239
      %v3241 = vpop.f32.mrb[0].mxu0
      %3242 = vmatprep.mubr.bf16.mxu0 %v3093
      %3243 = vmatmul.mubr.bf16.gmra.mrb[0].mxu0 %v2966
      %v3244 = vpop.f32.mrb[0].mxu0
      %v3245 = vadd.f32 %v2994, %v3244
      %v3246 = vpop.f32.mrb[0].mxu0
      %v3247 = vpop.f32.mrb[0].mxu0
      %v3248 = vadd.f32 %v2994, %v3247
      %v3249 = vpop.f32.mrb[0].mxu0
      %3250 = vmatprep.mubr.bf16.mxu0 %v3096
      %3251 = vmatmul.mubr.bf16.gmra.mrb[0].mxu0 %v2969
      %v3252 = vpop.f32.mrb[0].mxu0
      %v3253 = vadd.f32 %v2994, %v3252
      %v3254 = vpop.f32.mrb[0].mxu0
      %v3255 = vpop.f32.mrb[0].mxu0
      %v3256 = vadd.f32 %v2994, %v3255
      %v3257 = vpop.f32.mrb[0].mxu0
      %3258 = vdwg.mxu0
      %3259 = vst.msk [vmem:[%s170] sm:$0xff] %vm2708, %v3133
      %3260 = vst.msk [vmem:[%s170 + $0x8] sm:$0xff] %vm2708, %v3136
      %3261 = vst.msk [vmem:[%s170 + $0x10] sm:$0xff] %vm2708, %v3141
      %3262 = vst.msk [vmem:[%s170 + $0x18] sm:$0xff] %vm2708, %v3144
      %3263 = vst.msk [vmem:[%s170 + $0x20] sm:$0xff] %vm2708, %v3149
      %3264 = vst.msk [vmem:[%s170 + $0x28] sm:$0xff] %vm2708, %v3152
      %3265 = vst.msk [vmem:[%s170 + $0x30] sm:$0xff] %vm2708, %v3157
      %3266 = vst.msk [vmem:[%s170 + $0x38] sm:$0xff] %vm2708, %v3160
      %3267 = vst.msk [vmem:[%s170 + $0x40] sm:$0xff] %vm2708, %v3165
      %3268 = vst.msk [vmem:[%s170 + $0x48] sm:$0xff] %vm2708, %v3168
      %3269 = vst.msk [vmem:[%s170 + $0x50] sm:$0xff] %vm2708, %v3173
      %3270 = vst.msk [vmem:[%s170 + $0x58] sm:$0xff] %vm2708, %v3176
      %3271 = vst.msk [vmem:[%s170 + $0x60] sm:$0xff] %vm2708, %v3181
      %3272 = vst.msk [vmem:[%s170 + $0x68] sm:$0xff] %vm2708, %v3184
      %3273 = vst.msk [vmem:[%s170 + $0x70] sm:$0xff] %vm2708, %v3189
      %3274 = vst.msk [vmem:[%s170 + $0x78] sm:$0xff] %vm2708, %v3192
      %3275 = vst.msk [vmem:[%s170 + $0x80] sm:$0xff] %vm2708, %v3197
      %3276 = vst.msk [vmem:[%s170 + $0x88] sm:$0xff] %vm2708, %v3200
      %3277 = vst.msk [vmem:[%s170 + $0x90] sm:$0xff] %vm2708, %v3205
      %3278 = vst.msk [vmem:[%s170 + $0x98] sm:$0xff] %vm2708, %v3208
      %3279 = vst.msk [vmem:[%s170 + $0xa0] sm:$0xff] %vm2708, %v3213
      %3280 = vst.msk [vmem:[%s170 + $0xa8] sm:$0xff] %vm2708, %v3216
      %3281 = vst.msk [vmem:[%s170 + $0xb0] sm:$0xff] %vm2708, %v3221
      %3282 = vst.msk [vmem:[%s170 + $0xb8] sm:$0xff] %vm2708, %v3224
      %3283 = vst.msk [vmem:[%s170 + $0xc0] sm:$0xff] %vm2708, %v3229
      %3284 = vst.msk [vmem:[%s170 + $0xc8] sm:$0xff] %vm2708, %v3232
      %3285 = vst.msk [vmem:[%s170 + $0xd0] sm:$0xff] %vm2708, %v3237
      %3286 = vst.msk [vmem:[%s170 + $0xd8] sm:$0xff] %vm2708, %v3240
      %3287 = vst.msk [vmem:[%s170 + $0xe0] sm:$0xff] %vm2708, %v3245
      %3288 = vst.msk [vmem:[%s170 + $0xe8] sm:$0xff] %vm2708, %v3248
      %3289 = vst.msk [vmem:[%s170 + $0xf0] sm:$0xff] %vm2708, %v3253
      %3290 = vst.msk [vmem:[%s170 + $0xf8] sm:$0xff] %vm2708, %v3256
      %p3291 = scmp.lt.s32.totalorder %s14, 3
      %s3292 = scalar_select %p3291, %s14, 3
      %s3293 = smul.addr %s3292, 32
      %s3294 = smul.addr %s3293, 8
      %s3295 = scalar_lea.vmem %s3, %s3294
      // Predicated region
      $region33: #{perceptual_loss.8} parent=31 // pred_check
        %p3296 = pneg %p100
      $region34: #{perceptual_loss.8} parent=31 // pred_check_branch
        %3298 = sbr.rel (%p3296) target = $region36
      $region35: #{perceptual_loss.8} parent=31 // pred_region
        _
      $region36: #{perceptual_loss.8} parent=31 // pred_fallthru
        _
    $region32: #{perceptual_loss.8} parent=5 // pred_fallthru
      _
    %p3299 = scmp.le.s32.totalorder 2, %s9
    // Predicated region
    $region37: #{perceptual_loss.8} parent=5 // pred_check
      %p3300 = pneg %p3299
    $region38: #{perceptual_loss.8} parent=5 // pred_check_branch
      %3302 = sbr.rel (%p3300) target = $region40
    $region39: #{perceptual_loss.8} parent=5 // pred_region
      %s3303 = ssub.s32 %s9, 2
      // Predicated region
      $region41: #{perceptual_loss.8} parent=39 // pred_check
        %p3304 = pneg %p106
      $region42: #{perceptual_loss.8} parent=39 // pred_check_branch
        %3306 = sbr.rel (%p3304) target = $region44
      $region43: #{perceptual_loss.8} parent=39 // pred_region
        %p3307 = scmp.lt.s32.totalorder %s15, 3
        %s3308 = scalar_select %p3307, %s15, 3
        %s3309 = smul.addr %s3308, 32
        %s3310 = smul.addr %s3309, 8
        %s3311 = scalar_lea.vmem %s3, %s3310
      $region44: #{perceptual_loss.8} parent=39 // pred_fallthru
        _
    $region40: #{perceptual_loss.8} parent=5 // pred_fallthru
      _
  $region6: #{perceptual_loss.8} parent=0 // loop_footer
    %s13 = sadd.s32 1, %s9
  $region7: #{perceptual_loss.8} parent=0 // loop_footer_branch
    %8 = sbr.rel target = $region3
  $region8: #{perceptual_loss.8} parent=0 // loop_exit
    _

// kernel: perceptual_loss.11
$region0: #{perceptual_loss.11}
  #allocation0 [shape = 'u32[]', space=smem, size = 0x4, offset = 0x4, fixed_abs, tag = 'smem constant byte address 0x4 - core index']
  #allocation1 [shape = 'u32[144,128]{1,0:T(1,128)}', space=vmem, size = 0x12000, scoped, tag = 'internal scratch']
  %s0 = inlined_call_operand.vmem [shape: bf16[4,10,10,32], index: 0, kind: input, shape index: {}]
  %s1 = inlined_call_operand.vmem [shape: bf16[288,32], index: 1, kind: input, shape index: {}]
  %s2 = inlined_call_operand.vmem [shape: f32[1,32], index: 2, kind: input, shape index: {}]
  %s3 = inlined_call_operand.vmem [shape: f32[4,64,32], index: 3, kind: output, shape index: {}]
  %s4 = sld [smem:[#allocation0]]
  $region45: #{perceptual_loss.11} parent=0
    _
  %s6 = ssub.s32 1, %s4
  %s7 = scalar_select 0, %s6, %s4
  loop: start=0, step=1, limit=6
  $region2: #{perceptual_loss.11} parent=0 // loop_pre_header
    _
  $region3: #{perceptual_loss.11} parent=0 // loop_header
    %s9 = sphi 0, %s13
    %p10 = scmp.ge.s32.totalorder %s9, 6
    %s19 = sphi 0, %s21
    %s22 = sphi 0, %s19
    %s23 = sphi 0, %s22
    %s39 = sphi 0, %s23
    %s43 = sphi 0, %s43
    %s45 = sphi 0, %s43
    %s46 = sphi 0, %s45
    %s60 = sphi 0, %s46
    %s64 = sphi 0, %s64
    %s66 = sphi 0, %s64
    %s67 = sphi 0, %s66
    %s81 = sphi 0, %s67
    %s87 = sphi 0, %s89
    %s90 = sphi 0, %s87
    %s91 = sphi 0, %s90
    %s107 = sphi 0, %s91
  $region4: #{perceptual_loss.11} parent=0 // loop_header_branch
    %12 = sbr.rel (%p10) target = $region8
  $region5: #{perceptual_loss.11} parent=0 // loop_body
    %s14 = ssub.s32 %s9, 1
    %s15 = ssub.s32 %s9, 2
    %s16 = sadd.s32 %s9, 1
    %s17 = ssub.s32 %s9, %s16
    %p18 = scmp.eq.s32.totalorder %s17, 0
    %s20 = sadd.s32 %s19, 1
    %s21 = scalar_select %p18, %s19, %s20
    %p24 = pneg %p18
    %p25 = scmp.eq.s32.totalorder %s9, 3
    %p26 = por %p24, %p25
    %p27 = scmp.ne.s32.totalorder %s19, %s22
    %p28 = scmp.eq.s32.totalorder %s9, 0
    %p29 = por %p27, %p28
    %p30 = scmp.ne.s32.totalorder %s19, %s22
    %p31 = scmp.eq.s32.totalorder %s14, 3
    %p32 = por %p30, %p31
    %p33 = scmp.ne.s32.totalorder %s22, %s23
    %p34 = scmp.eq.s32.totalorder %s14, 0
    %p35 = por %p33, %p34
    %p36 = scmp.ne.s32.totalorder %s22, %s23
    %p37 = scmp.eq.s32.totalorder %s15, 3
    %p38 = por %p36, %p37
    %p40 = scmp.ne.s32.totalorder %s23, %s39
    %p41 = scmp.eq.s32.totalorder %s15, 0
    %p42 = por %p40, %p41
    %s44 = sadd.s32 %s43, 1
    %p47 = scmp.eq.s32.totalorder %s9, 3
    %p48 = scmp.ne.s32.totalorder %s43, %s45
    %p49 = scmp.eq.s32.totalorder %s9, 0
    %p50 = por %p48, %p49
    %p51 = scmp.ne.s32.totalorder %s43, %s45
    %p52 = scmp.eq.s32.totalorder %s14, 3
    %p53 = por %p51, %p52
    %p54 = scmp.ne.s32.totalorder %s45, %s46
    %p55 = scmp.eq.s32.totalorder %s14, 0
    %p56 = por %p54, %p55
    %p57 = scmp.ne.s32.totalorder %s45, %s46
    %p58 = scmp.eq.s32.totalorder %s15, 3
    %p59 = por %p57, %p58
    %p61 = scmp.ne.s32.totalorder %s46, %s60
    %p62 = scmp.eq.s32.totalorder %s15, 0
    %p63 = por %p61, %p62
    %s65 = sadd.s32 %s64, 1
    %p68 = scmp.eq.s32.totalorder %s9, 3
    %p69 = scmp.ne.s32.totalorder %s64, %s66
    %p70 = scmp.eq.s32.totalorder %s9, 0
    %p71 = por %p69, %p70
    %p72 = scmp.ne.s32.totalorder %s64, %s66
    %p73 = scmp.eq.s32.totalorder %s14, 3
    %p74 = por %p72, %p73
    %p75 = scmp.ne.s32.totalorder %s66, %s67
    %p76 = scmp.eq.s32.totalorder %s14, 0
    %p77 = por %p75, %p76
    %p78 = scmp.ne.s32.totalorder %s66, %s67
    %p79 = scmp.eq.s32.totalorder %s15, 3
    %p80 = por %p78, %p79
    %p82 = scmp.ne.s32.totalorder %s67, %s81
    %p83 = scmp.eq.s32.totalorder %s15, 0
    %p84 = por %p82, %p83
    %s85 = ssub.s32 %s9, %s16
    %p86 = scmp.eq.s32.totalorder %s85, 0
    %s88 = sadd.s32 %s87, 1
    %s89 = scalar_select %p86, %s87, %s88
    %p92 = pneg %p86
    %p93 = scmp.eq.s32.totalorder %s9, 3
    %p94 = por %p92, %p93
    %p95 = scmp.ne.s32.totalorder %s87, %s90
    %p96 = scmp.eq.s32.totalorder %s9, 0
    %p97 = por %p95, %p96
    %p98 = scmp.ne.s32.totalorder %s87, %s90
    %p99 = scmp.eq.s32.totalorder %s14, 3
    %p100 = por %p98, %p99
    %p101 = scmp.ne.s32.totalorder %s90, %s91
    %p102 = scmp.eq.s32.totalorder %s14, 0
    %p103 = por %p101, %p102
    %p104 = scmp.ne.s32.totalorder %s90, %s91
    %p105 = scmp.eq.s32.totalorder %s15, 3
    %p106 = por %p104, %p105
    %p108 = scmp.ne.s32.totalorder %s91, %s107
    %p109 = scmp.eq.s32.totalorder %s15, 0
    %p110 = por %p108, %p109
    %p111 = scmp.le.s32.totalorder 1, %s9
    %p112 = scmp.lt.s32.totalorder %s9, 5
    %p113 = pnand %p111, %p112
    %p114 = pneg %p113
    // Predicated region
    $region9: #{perceptual_loss.11} parent=5 // pred_check
      _
    $region10: #{perceptual_loss.11} parent=5 // pred_check_branch
      %116 = sbr.rel (%p113) target = $region12
    $region11: #{perceptual_loss.11} parent=5 // pred_region
      %s117 = ssub.s32 %s9, 1
      // Predicated region
      $region13: #{perceptual_loss.11} parent=11 // pred_check
        %p118 = pneg %p56
      $region14: #{perceptual_loss.11} parent=11 // pred_check_branch
        %120 = sbr.rel (%p118) target = $region16
      $region15: #{perceptual_loss.11} parent=11 // pred_region
        _
      $region16: #{perceptual_loss.11} parent=11 // pred_fallthru
        _
      // Predicated region
      $region17: #{perceptual_loss.11} parent=11 // pred_check
        %p121 = pneg %p77
      $region18: #{perceptual_loss.11} parent=11 // pred_check_branch
        %123 = sbr.rel (%p121) target = $region20
      $region19: #{perceptual_loss.11} parent=11 // pred_region
        _
      $region20: #{perceptual_loss.11} parent=11 // pred_fallthru
        _
    $region12: #{perceptual_loss.11} parent=5 // pred_fallthru
      _
    %p124 = scmp.lt.s32.totalorder %s9, 4
    // Predicated region
    $region21: #{perceptual_loss.11} parent=5 // pred_check
      %p125 = pneg %p124
    $region22: #{perceptual_loss.11} parent=5 // pred_check_branch
      %127 = sbr.rel (%p125) target = $region24
    $region23: #{perceptual_loss.11} parent=5 // pred_region
      // Predicated region
      $region25: #{perceptual_loss.11} parent=23 // pred_check
        %p128 = pneg %p29
      $region26: #{perceptual_loss.11} parent=23 // pred_check_branch
        %130 = sbr.rel (%p128) target = $region28
      $region27: #{perceptual_loss.11} parent=23 // pred_region
        %p131 = scmp.lt.s32.totalorder %s9, 3
        %s132 = scalar_select %p131, %s9, 3
        %s133 = smul.addr %s132, 20
        %s134 = smul.addr %s133, 4
        %s135 = scalar_lea.vmem %s0, %s134
      $region28: #{perceptual_loss.11} parent=23 // pred_fallthru
        _
    $region24: #{perceptual_loss.11} parent=5 // pred_fallthru
      _
    %p136 = scmp.le.s32.totalorder 1, %s9
    %p137 = scmp.lt.s32.totalorder %s9, 5
    %p138 = pnand %p136, %p137
    %p139 = pneg %p138
    // Predicated region
    $region29: #{perceptual_loss.11} parent=5 // pred_check
      _
    $region30: #{perceptual_loss.11} parent=5 // pred_check_branch
      %141 = sbr.rel (%p138) target = $region32
    $region31: #{perceptual_loss.11} parent=5 // pred_region
      %s142 = ssub.s32 %s9, 1
      %p143 = scmp.lt.s32.totalorder %s14, 3
      %s144 = scalar_select %p143, %s14, 3
      %s145 = smul.addr %s144, 20
      %s146 = smul.addr %s145, 4
      %s147 = scalar_lea.vmem %s0, %s146
      %p148 = pneg %p35
      %p149 = pneg %p32
      %p150 = pneg %p56
      %p151 = pneg %p53
      %p152 = pneg %p77
      %p153 = pneg %p74
      %p154 = pneg %p103
      %p155 = pneg %p100
      %p156 = scmp.lt.s32.totalorder %s14, 3
      %s157 = scalar_select %p156, %s14, 3
      %s158 = smul.addr %s157, 8
      %s159 = smul.addr %s158, 8
      %s160 = scalar_lea.vmem %s3, %s159
      %p161 = scmp.lt.s32.totalorder %s14, 3
      %s162 = scalar_select %p161, %s14, 3
      %s163 = smul.addr %s162, 20
      %s164 = smul.addr %s163, 4
      %s165 = scalar_lea.vmem %s0, %s164
      %p166 = scmp.lt.s32.totalorder %s14, 3
      %s167 = scalar_select %p166, %s14, 3
      %s168 = smul.addr %s167, 8
      %s169 = smul.addr %s168, 8
      %s170 = scalar_lea.vmem %s3, %s169
      %v172 = vld [vmem:[%s165] sm:$0xf]
      %v173 = vld [vmem:[%s165 + $0x8] sm:$0xf]
      %v174 = vld [vmem:[%s165 + $0x10] sm:$0xf]
      %v175 = vld [vmem:[%s165 + $0x18] sm:$0xf]
      %v176 = vld [vmem:[%s165 + $0x20] sm:$0xf]
      %v177 = vld [vmem:[%s165 + $0x28] sm:$0xf]
      %v178 = vld [vmem:[%s165 + $0x30] sm:$0xf]
      %v179 = vld [vmem:[%s165 + $0x38] sm:$0xf]
      %v180 = vld [vmem:[%s165 + $0x4] sm:$0x1]
      %v181 = vld [vmem:[%s165 + $0xc] sm:$0x1]
      %v182 = vld [vmem:[%s165 + $0x14] sm:$0x1]
      %v183 = vld [vmem:[%s165 + $0x1c] sm:$0x1]
      %v184 = vld [vmem:[%s165 + $0x24] sm:$0x1]
      %v185 = vld [vmem:[%s165 + $0x2c] sm:$0x1]
      %v186 = vld [vmem:[%s165 + $0x34] sm:$0x1]
      %v187 = vld [vmem:[%s165 + $0x3c] sm:$0x1]
      %vm188 = vsmask.f32 3328
      %vm189 = vsmask.f32 7440
      %vm190 = vmor %vm188, %vm189
      %v192 = vshrl.u32 %v172, 16
      %v194 = vrot.slane %v192, 4
      %v195 = vshll.u32 %v172, 16
      %v197 = vrot.slane %v195, 5
      %v198 = vor.u32 %v194, %v197
      %v199 = vrot.slane %v198, 4
      %v201 = vshll.u32 %v180, 16
      %v203 = vrot.slane %v201, 5
      %v204 = vsel %vm190, %v199, %v203
      %v206 = vshrl.u32 %v173, 16
      %v208 = vrot.slane %v206, 4
      %v209 = vshll.u32 %v173, 16
      %v211 = vrot.slane %v209, 5
      %v212 = vor.u32 %v208, %v211
      %v213 = vrot.slane %v212, 4
      %v215 = vshll.u32 %v181, 16
      %v217 = vrot.slane %v215, 5
      %v218 = vsel %vm190, %v213, %v217
      %v220 = vshrl.u32 %v174, 16
      %v222 = vrot.slane %v220, 4
      %v223 = vshll.u32 %v174, 16
      %v225 = vrot.slane %v223, 5
      %v226 = vor.u32 %v222, %v225
      %v227 = vrot.slane %v226, 4
      %v229 = vshll.u32 %v182, 16
      %v231 = vrot.slane %v229, 5
      %v232 = vsel %vm190, %v227, %v231
      %v234 = vshrl.u32 %v175, 16
      %v236 = vrot.slane %v234, 4
      %v237 = vshll.u32 %v175, 16
      %v239 = vrot.slane %v237, 5
      %v240 = vor.u32 %v236, %v239
      %v241 = vrot.slane %v240, 4
      %v243 = vshll.u32 %v183, 16
      %v245 = vrot.slane %v243, 5
      %v246 = vsel %vm190, %v241, %v245
      %v248 = vshrl.u32 %v176, 16
      %v250 = vrot.slane %v248, 4
      %v251 = vshll.u32 %v176, 16
      %v253 = vrot.slane %v251, 5
      %v254 = vor.u32 %v250, %v253
      %v255 = vrot.slane %v254, 4
      %v257 = vshll.u32 %v184, 16
      %v259 = vrot.slane %v257, 5
      %v260 = vsel %vm190, %v255, %v259
      %v262 = vshrl.u32 %v177, 16
      %v264 = vrot.slane %v262, 4
      %v265 = vshll.u32 %v177, 16
      %v267 = vrot.slane %v265, 5
      %v268 = vor.u32 %v264, %v267
      %v269 = vrot.slane %v268, 4
      %v271 = vshll.u32 %v185, 16
      %v273 = vrot.slane %v271, 5
      %v274 = vsel %vm190, %v269, %v273
      %v276 = vshrl.u32 %v178, 16
      %v278 = vrot.slane %v276, 4
      %v279 = vshll.u32 %v178, 16
      %v281 = vrot.slane %v279, 5
      %v282 = vor.u32 %v278, %v281
      %v283 = vrot.slane %v282, 4
      %v285 = vshll.u32 %v186, 16
      %v287 = vrot.slane %v285, 5
      %v288 = vsel %vm190, %v283, %v287
      %v290 = vshrl.u32 %v179, 16
      %v292 = vrot.slane %v290, 4
      %v293 = vshll.u32 %v179, 16
      %v295 = vrot.slane %v293, 5
      %v296 = vor.u32 %v292, %v295
      %v297 = vrot.slane %v296, 4
      %v299 = vshll.u32 %v187, 16
      %v301 = vrot.slane %v299, 5
      %v302 = vsel %vm190, %v297, %v301
      %v303 = vld [vmem:[%s165] sm:$0xe]
      %v304 = vld [vmem:[%s165 + $0x8] sm:$0xe]
      %v305 = vld [vmem:[%s165 + $0x10] sm:$0xe]
      %v306 = vld [vmem:[%s165 + $0x18] sm:$0xe]
      %v307 = vld [vmem:[%s165 + $0x20] sm:$0xe]
      %v308 = vld [vmem:[%s165 + $0x28] sm:$0xe]
      %v309 = vld [vmem:[%s165 + $0x30] sm:$0xe]
      %v310 = vld [vmem:[%s165 + $0x38] sm:$0xe]
      %vm327 = vcmask 1042432
      %vm328 = vcmask 1046532
      %vm329 = vmor %vm327, %vm328
      %v330 = vrot.slane %v303, 5
      %v331 = vrot.slane %v330, 4
      %v332 = vrot.slane %v180, 5
      %v333 = vsel %vm329, %v331, %v332
      %v334 = vrot.slane %v304, 5
      %v335 = vrot.slane %v334, 4
      %v336 = vrot.slane %v181, 5
      %v337 = vsel %vm329, %v335, %v336
      %v338 = vrot.slane %v305, 5
      %v339 = vrot.slane %v338, 4
      %v340 = vrot.slane %v182, 5
      %v341 = vsel %vm329, %v339, %v340
      %v342 = vrot.slane %v306, 5
      %v343 = vrot.slane %v342, 4
      %v344 = vrot.slane %v183, 5
      %v345 = vsel %vm329, %v343, %v344
      %v346 = vrot.slane %v307, 5
      %v347 = vrot.slane %v346, 4
      %v348 = vrot.slane %v184, 5
      %v349 = vsel %vm329, %v347, %v348
      %v350 = vrot.slane %v308, 5
      %v351 = vrot.slane %v350, 4
      %v352 = vrot.slane %v185, 5
      %v353 = vsel %vm329, %v351, %v352
      %v354 = vrot.slane %v309, 5
      %v355 = vrot.slane %v354, 4
      %v356 = vrot.slane %v186, 5
      %v357 = vsel %vm329, %v355, %v356
      %v358 = vrot.slane %v310, 5
      %v359 = vrot.slane %v358, 4
      %v360 = vrot.slane %v187, 5
      %v361 = vsel %vm329, %v359, %v360
      %s362 = scalar_lea.vmem %s165, 8
      %v363 = vld [vmem:[%s362] sm:$0xf]
      %v364 = vld [vmem:[%s362 + $0x8] sm:$0xf]
      %v365 = vld [vmem:[%s362 + $0x10] sm:$0xf]
      %v366 = vld [vmem:[%s362 + $0x18] sm:$0xf]
      %v367 = vld [vmem:[%s362 + $0x20] sm:$0xf]
      %v368 = vld [vmem:[%s362 + $0x28] sm:$0xf]
      %v369 = vld [vmem:[%s362 + $0x30] sm:$0xf]
      %v370 = vld [vmem:[%s362 + $0x38] sm:$0xf]
      %v371 = vld [vmem:[%s362 + $0x4] sm:$0x1]
      %v372 = vld [vmem:[%s362 + $0xc] sm:$0x1]
      %v373 = vld [vmem:[%s362 + $0x14] sm:$0x1]
      %v374 = vld [vmem:[%s362 + $0x1c] sm:$0x1]
      %v375 = vld [vmem:[%s362 + $0x24] sm:$0x1]
      %v376 = vld [vmem:[%s362 + $0x2c] sm:$0x1]
      %v377 = vld [vmem:[%s362 + $0x34] sm:$0x1]
      %v378 = vld [vmem:[%s362 + $0x3c] sm:$0x1]
      %v380 = vshrl.u32 %v363, 16
      %v382 = vrot.slane %v380, 4
      %v383 = vshll.u32 %v363, 16
      %v385 = vrot.slane %v383, 5
      %v386 = vor.u32 %v382, %v385
      %v387 = vrot.slane %v386, 4
      %v389 = vshll.u32 %v371, 16
      %v391 = vrot.slane %v389, 5
      %v392 = vsel %vm190, %v387, %v391
      %v394 = vshrl.u32 %v364, 16
      %v396 = vrot.slane %v394, 4
      %v397 = vshll.u32 %v364, 16
      %v399 = vrot.slane %v397, 5
      %v400 = vor.u32 %v396, %v399
      %v401 = vrot.slane %v400, 4
      %v403 = vshll.u32 %v372, 16
      %v405 = vrot.slane %v403, 5
      %v406 = vsel %vm190, %v401, %v405
      %v408 = vshrl.u32 %v365, 16
      %v410 = vrot.slane %v408, 4
      %v411 = vshll.u32 %v365, 16
      %v413 = vrot.slane %v411, 5
      %v414 = vor.u32 %v410, %v413
      %v415 = vrot.slane %v414, 4
      %v417 = vshll.u32 %v373, 16
      %v419 = vrot.slane %v417, 5
      %v420 = vsel %vm190, %v415, %v419
      %v422 = vshrl.u32 %v366, 16
      %v424 = vrot.slane %v422, 4
      %v425 = vshll.u32 %v366, 16
      %v427 = vrot.slane %v425, 5
      %v428 = vor.u32 %v424, %v427
      %v429 = vrot.slane %v428, 4
      %v431 = vshll.u32 %v374, 16
      %v433 = vrot.slane %v431, 5
      %v434 = vsel %vm190, %v429, %v433
      %v436 = vshrl.u32 %v367, 16
      %v438 = vrot.slane %v436, 4
      %v439 = vshll.u32 %v367, 16
      %v441 = vrot.slane %v439, 5
      %v442 = vor.u32 %v438, %v441
      %v443 = vrot.slane %v442, 4
      %v445 = vshll.u32 %v375, 16
      %v447 = vrot.slane %v445, 5
      %v448 = vsel %vm190, %v443, %v447
      %v450 = vshrl.u32 %v368, 16
      %v452 = vrot.slane %v450, 4
      %v453 = vshll.u32 %v368, 16
      %v455 = vrot.slane %v453, 5
      %v456 = vor.u32 %v452, %v455
      %v457 = vrot.slane %v456, 4
      %v459 = vshll.u32 %v376, 16
      %v461 = vrot.slane %v459, 5
      %v462 = vsel %vm190, %v457, %v461
      %v464 = vshrl.u32 %v369, 16
      %v466 = vrot.slane %v464, 4
      %v467 = vshll.u32 %v369, 16
      %v469 = vrot.slane %v467, 5
      %v470 = vor.u32 %v466, %v469
      %v471 = vrot.slane %v470, 4
      %v473 = vshll.u32 %v377, 16
      %v475 = vrot.slane %v473, 5
      %v476 = vsel %vm190, %v471, %v475
      %v478 = vshrl.u32 %v370, 16
      %v480 = vrot.slane %v478, 4
      %v481 = vshll.u32 %v370, 16
      %v483 = vrot.slane %v481, 5
      %v484 = vor.u32 %v480, %v483
      %v485 = vrot.slane %v484, 4
      %v487 = vshll.u32 %v378, 16
      %v489 = vrot.slane %v487, 5
      %v490 = vsel %vm190, %v485, %v489
      %v491 = vld [vmem:[%s362] sm:$0xe]
      %v492 = vld [vmem:[%s362 + $0x8] sm:$0xe]
      %v493 = vld [vmem:[%s362 + $0x10] sm:$0xe]
      %v494 = vld [vmem:[%s362 + $0x18] sm:$0xe]
      %v495 = vld [vmem:[%s362 + $0x20] sm:$0xe]
      %v496 = vld [vmem:[%s362 + $0x28] sm:$0xe]
      %v497 = vld [vmem:[%s362 + $0x30] sm:$0xe]
      %v498 = vld [vmem:[%s362 + $0x38] sm:$0xe]
      %v515 = vrot.slane %v491, 5
      %v516 = vrot.slane %v515, 4
      %v517 = vrot.slane %v371, 5
      %v518 = vsel %vm329, %v516, %v517
      %v519 = vrot.slane %v492, 5
      %v520 = vrot.slane %v519, 4
      %v521 = vrot.slane %v372, 5
      %v522 = vsel %vm329, %v520, %v521
      %v523 = vrot.slane %v493, 5
      %v524 = vrot.slane %v523, 4
      %v525 = vrot.slane %v373, 5
      %v526 = vsel %vm329, %v524, %v525
      %v527 = vrot.slane %v494, 5
      %v528 = vrot.slane %v527, 4
      %v529 = vrot.slane %v374, 5
      %v530 = vsel %vm329, %v528, %v529
      %v531 = vrot.slane %v495, 5
      %v532 = vrot.slane %v531, 4
      %v533 = vrot.slane %v375, 5
      %v534 = vsel %vm329, %v532, %v533
      %v535 = vrot.slane %v496, 5
      %v536 = vrot.slane %v535, 4
      %v537 = vrot.slane %v376, 5
      %v538 = vsel %vm329, %v536, %v537
      %v539 = vrot.slane %v497, 5
      %v540 = vrot.slane %v539, 4
      %v541 = vrot.slane %v377, 5
      %v542 = vsel %vm329, %v540, %v541
      %v543 = vrot.slane %v498, 5
      %v544 = vrot.slane %v543, 4
      %v545 = vrot.slane %v378, 5
      %v546 = vsel %vm329, %v544, %v545
      %s547 = scalar_lea.vmem %s165, 16
      %v548 = vld [vmem:[%s547] sm:$0xf]
      %v549 = vld [vmem:[%s547 + $0x8] sm:$0xf]
      %v550 = vld [vmem:[%s547 + $0x10] sm:$0xf]
      %v551 = vld [vmem:[%s547 + $0x18] sm:$0xf]
      %v552 = vld [vmem:[%s547 + $0x20] sm:$0xf]
      %v553 = vld [vmem:[%s547 + $0x28] sm:$0xf]
      %v554 = vld [vmem:[%s547 + $0x30] sm:$0xf]
      %v555 = vld [vmem:[%s547 + $0x38] sm:$0xf]
      %v556 = vld [vmem:[%s547 + $0x4] sm:$0x1]
      %v557 = vld [vmem:[%s547 + $0xc] sm:$0x1]
      %v558 = vld [vmem:[%s547 + $0x14] sm:$0x1]
      %v559 = vld [vmem:[%s547 + $0x1c] sm:$0x1]
      %v560 = vld [vmem:[%s547 + $0x24] sm:$0x1]
      %v561 = vld [vmem:[%s547 + $0x2c] sm:$0x1]
      %v562 = vld [vmem:[%s547 + $0x34] sm:$0x1]
      %v563 = vld [vmem:[%s547 + $0x3c] sm:$0x1]
      %v565 = vshrl.u32 %v548, 16
      %v567 = vrot.slane %v565, 4
      %v568 = vshll.u32 %v548, 16
      %v570 = vrot.slane %v568, 5
      %v571 = vor.u32 %v567, %v570
      %v572 = vrot.slane %v571, 4
      %v574 = vshll.u32 %v556, 16
      %v576 = vrot.slane %v574, 5
      %v577 = vsel %vm190, %v572, %v576
      %v579 = vshrl.u32 %v549, 16
      %v581 = vrot.slane %v579, 4
      %v582 = vshll.u32 %v549, 16
      %v584 = vrot.slane %v582, 5
      %v585 = vor.u32 %v581, %v584
      %v586 = vrot.slane %v585, 4
      %v588 = vshll.u32 %v557, 16
      %v590 = vrot.slane %v588, 5
      %v591 = vsel %vm190, %v586, %v590
      %v593 = vshrl.u32 %v550, 16
      %v595 = vrot.slane %v593, 4
      %v596 = vshll.u32 %v550, 16
      %v598 = vrot.slane %v596, 5
      %v599 = vor.u32 %v595, %v598
      %v600 = vrot.slane %v599, 4
      %v602 = vshll.u32 %v558, 16
      %v604 = vrot.slane %v602, 5
      %v605 = vsel %vm190, %v600, %v604
      %v607 = vshrl.u32 %v551, 16
      %v609 = vrot.slane %v607, 4
      %v610 = vshll.u32 %v551, 16
      %v612 = vrot.slane %v610, 5
      %v613 = vor.u32 %v609, %v612
      %v614 = vrot.slane %v613, 4
      %v616 = vshll.u32 %v559, 16
      %v618 = vrot.slane %v616, 5
      %v619 = vsel %vm190, %v614, %v618
      %v621 = vshrl.u32 %v552, 16
      %v623 = vrot.slane %v621, 4
      %v624 = vshll.u32 %v552, 16
      %v626 = vrot.slane %v624, 5
      %v627 = vor.u32 %v623, %v626
      %v628 = vrot.slane %v627, 4
      %v630 = vshll.u32 %v560, 16
      %v632 = vrot.slane %v630, 5
      %v633 = vsel %vm190, %v628, %v632
      %v635 = vshrl.u32 %v553, 16
      %v637 = vrot.slane %v635, 4
      %v638 = vshll.u32 %v553, 16
      %v640 = vrot.slane %v638, 5
      %v641 = vor.u32 %v637, %v640
      %v642 = vrot.slane %v641, 4
      %v644 = vshll.u32 %v561, 16
      %v646 = vrot.slane %v644, 5
      %v647 = vsel %vm190, %v642, %v646
      %v649 = vshrl.u32 %v554, 16
      %v651 = vrot.slane %v649, 4
      %v652 = vshll.u32 %v554, 16
      %v654 = vrot.slane %v652, 5
      %v655 = vor.u32 %v651, %v654
      %v656 = vrot.slane %v655, 4
      %v658 = vshll.u32 %v562, 16
      %v660 = vrot.slane %v658, 5
      %v661 = vsel %vm190, %v656, %v660
      %v663 = vshrl.u32 %v555, 16
      %v665 = vrot.slane %v663, 4
      %v666 = vshll.u32 %v555, 16
      %v668 = vrot.slane %v666, 5
      %v669 = vor.u32 %v665, %v668
      %v670 = vrot.slane %v669, 4
      %v672 = vshll.u32 %v563, 16
      %v674 = vrot.slane %v672, 5
      %v675 = vsel %vm190, %v670, %v674
      %v676 = vld [vmem:[%s547] sm:$0xe]
      %v677 = vld [vmem:[%s547 + $0x8] sm:$0xe]
      %v678 = vld [vmem:[%s547 + $0x10] sm:$0xe]
      %v679 = vld [vmem:[%s547 + $0x18] sm:$0xe]
      %v680 = vld [vmem:[%s547 + $0x20] sm:$0xe]
      %v681 = vld [vmem:[%s547 + $0x28] sm:$0xe]
      %v682 = vld [vmem:[%s547 + $0x30] sm:$0xe]
      %v683 = vld [vmem:[%s547 + $0x38] sm:$0xe]
      %v700 = vrot.slane %v676, 5
      %v701 = vrot.slane %v700, 4
      %v702 = vrot.slane %v556, 5
      %v703 = vsel %vm329, %v701, %v702
      %v704 = vrot.slane %v677, 5
      %v705 = vrot.slane %v704, 4
      %v706 = vrot.slane %v557, 5
      %v707 = vsel %vm329, %v705, %v706
      %v708 = vrot.slane %v678, 5
      %v709 = vrot.slane %v708, 4
      %v710 = vrot.slane %v558, 5
      %v711 = vsel %vm329, %v709, %v710
      %v712 = vrot.slane %v679, 5
      %v713 = vrot.slane %v712, 4
      %v714 = vrot.slane %v559, 5
      %v715 = vsel %vm329, %v713, %v714
      %v716 = vrot.slane %v680, 5
      %v717 = vrot.slane %v716, 4
      %v718 = vrot.slane %v560, 5
      %v719 = vsel %vm329, %v717, %v718
      %v720 = vrot.slane %v681, 5
      %v721 = vrot.slane %v720, 4
      %v722 = vrot.slane %v561, 5
      %v723 = vsel %vm329, %v721, %v722
      %v724 = vrot.slane %v682, 5
      %v725 = vrot.slane %v724, 4
      %v726 = vrot.slane %v562, 5
      %v727 = vsel %vm329, %v725, %v726
      %v728 = vrot.slane %v683, 5
      %v729 = vrot.slane %v728, 4
      %v730 = vrot.slane %v563, 5
      %v731 = vsel %vm329, %v729, %v730
      %v740 = vunpack.c.l.b16 %v172
      %v741 = vunpack.c.l.b16 %v173
      %v742 = vunpack.c.l.b16 %v174
      %v743 = vunpack.c.l.b16 %v175
      %v744 = vunpack.c.l.b16 %v176
      %v745 = vunpack.c.l.b16 %v177
      %v746 = vunpack.c.l.b16 %v178
      %v747 = vunpack.c.l.b16 %v179
      %v748 = vpack.c.b16 %v741, %v740
      %v749 = vpack.c.b16 %v743, %v742
      %v750 = vpack.c.b16 %v745, %v744
      %v751 = vpack.c.b16 %v747, %v746
      %v752 = vunpack.c.l.b16 %v204
      %v753 = vunpack.c.l.b16 %v218
      %v754 = vunpack.c.l.b16 %v232
      %v755 = vunpack.c.l.b16 %v246
      %v756 = vunpack.c.l.b16 %v260
      %v757 = vunpack.c.l.b16 %v274
      %v758 = vunpack.c.l.b16 %v288
      %v759 = vunpack.c.l.b16 %v302
      %v760 = vpack.c.b16 %v753, %v752
      %v761 = vpack.c.b16 %v755, %v754
      %v762 = vpack.c.b16 %v757, %v756
      %v763 = vpack.c.b16 %v759, %v758
      %764 = vrot.lane.b32.xlu0 %v760, 32
      %v765 = vpop.permute.xlu0 %764
      %766 = vrot.lane.b32.xlu0 %v761, 32
      %v767 = vpop.permute.xlu0 %766
      %768 = vrot.lane.b32.xlu0 %v762, 32
      %v769 = vpop.permute.xlu0 %768
      %770 = vrot.lane.b32.xlu0 %v763, 32
      %v771 = vpop.permute.xlu0 %770
      %v772 = vunpack.c.l.b16 %v333
      %v773 = vunpack.c.l.b16 %v337
      %v774 = vunpack.c.l.b16 %v341
      %v775 = vunpack.c.l.b16 %v345
      %v776 = vunpack.c.l.b16 %v349
      %v777 = vunpack.c.l.b16 %v353
      %v778 = vunpack.c.l.b16 %v357
      %v779 = vunpack.c.l.b16 %v361
      %v780 = vpack.c.b16 %v773, %v772
      %v781 = vpack.c.b16 %v775, %v774
      %v782 = vpack.c.b16 %v777, %v776
      %v783 = vpack.c.b16 %v779, %v778
      %784 = vrot.lane.b32.xlu0 %v780, 64
      %v785 = vpop.permute.xlu0 %784
      %786 = vrot.lane.b32.xlu0 %v781, 64
      %v787 = vpop.permute.xlu0 %786
      %788 = vrot.lane.b32.xlu0 %v782, 64
      %v789 = vpop.permute.xlu0 %788
      %790 = vrot.lane.b32.xlu0 %v783, 64
      %v791 = vpop.permute.xlu0 %790
      %v800 = vunpack.c.l.b16 %v363
      %v801 = vunpack.c.l.b16 %v364
      %v802 = vunpack.c.l.b16 %v365
      %v803 = vunpack.c.l.b16 %v366
      %v804 = vunpack.c.l.b16 %v367
      %v805 = vunpack.c.l.b16 %v368
      %v806 = vunpack.c.l.b16 %v369
      %v807 = vunpack.c.l.b16 %v370
      %v808 = vpack.c.b16 %v801, %v800
      %v809 = vpack.c.b16 %v803, %v802
      %v810 = vpack.c.b16 %v805, %v804
      %v811 = vpack.c.b16 %v807, %v806
      %812 = vrot.lane.b32.xlu0 %v808, 96
      %v813 = vpop.permute.xlu0 %812
      %814 = vrot.lane.b32.xlu0 %v809, 96
      %v815 = vpop.permute.xlu0 %814
      %816 = vrot.lane.b32.xlu0 %v810, 96
      %v817 = vpop.permute.xlu0 %816
      %818 = vrot.lane.b32.xlu0 %v811, 96
      %v819 = vpop.permute.xlu0 %818
      %v820 = vunpack.c.l.b16 %v392
      %v821 = vunpack.c.l.b16 %v406
      %v822 = vunpack.c.l.b16 %v420
      %v823 = vunpack.c.l.b16 %v434
      %v824 = vunpack.c.l.b16 %v448
      %v825 = vunpack.c.l.b16 %v462
      %v826 = vunpack.c.l.b16 %v476
      %v827 = vunpack.c.l.b16 %v490
      %v828 = vpack.c.b16 %v821, %v820
      %v829 = vpack.c.b16 %v823, %v822
      %v830 = vpack.c.b16 %v825, %v824
      %v831 = vpack.c.b16 %v827, %v826
      %v832 = vunpack.c.l.b16 %v518
      %v833 = vunpack.c.l.b16 %v522
      %v834 = vunpack.c.l.b16 %v526
      %v835 = vunpack.c.l.b16 %v530
      %v836 = vunpack.c.l.b16 %v534
      %v837 = vunpack.c.l.b16 %v538
      %v838 = vunpack.c.l.b16 %v542
      %v839 = vunpack.c.l.b16 %v546
      %v840 = vpack.c.b16 %v833, %v832
      %v841 = vpack.c.b16 %v835, %v834
      %v842 = vpack.c.b16 %v837, %v836
      %v843 = vpack.c.b16 %v839, %v838
      %844 = vrot.lane.b32.xlu0 %v840, 32
      %v845 = vpop.permute.xlu0 %844
      %846 = vrot.lane.b32.xlu0 %v841, 32
      %v847 = vpop.permute.xlu0 %846
      %848 = vrot.lane.b32.xlu0 %v842, 32
      %v849 = vpop.permute.xlu0 %848
      %850 = vrot.lane.b32.xlu0 %v843, 32
      %v851 = vpop.permute.xlu0 %850
      %v860 = vunpack.c.l.b16 %v548
      %v861 = vunpack.c.l.b16 %v549
      %v862 = vunpack.c.l.b16 %v550
      %v863 = vunpack.c.l.b16 %v551
      %v864 = vunpack.c.l.b16 %v552
      %v865 = vunpack.c.l.b16 %v553
      %v866 = vunpack.c.l.b16 %v554
      %v867 = vunpack.c.l.b16 %v555
      %v868 = vpack.c.b16 %v861, %v860
      %v869 = vpack.c.b16 %v863, %v862
      %v870 = vpack.c.b16 %v865, %v864
      %v871 = vpack.c.b16 %v867, %v866
      %872 = vrot.lane.b32.xlu0 %v868, 64
      %v873 = vpop.permute.xlu0 %872
      %874 = vrot.lane.b32.xlu0 %v869, 64
      %v875 = vpop.permute.xlu0 %874
      %876 = vrot.lane.b32.xlu0 %v870, 64
      %v877 = vpop.permute.xlu0 %876
      %878 = vrot.lane.b32.xlu0 %v871, 64
      %v879 = vpop.permute.xlu0 %878
      %v880 = vunpack.c.l.b16 %v577
      %v881 = vunpack.c.l.b16 %v591
      %v882 = vunpack.c.l.b16 %v605
      %v883 = vunpack.c.l.b16 %v619
      %v884 = vunpack.c.l.b16 %v633
      %v885 = vunpack.c.l.b16 %v647
      %v886 = vunpack.c.l.b16 %v661
      %v887 = vunpack.c.l.b16 %v675
      %v888 = vpack.c.b16 %v881, %v880
      %v889 = vpack.c.b16 %v883, %v882
      %v890 = vpack.c.b16 %v885, %v884
      %v891 = vpack.c.b16 %v887, %v886
      %892 = vrot.lane.b32.xlu0 %v888, 96
      %v893 = vpop.permute.xlu0 %892
      %894 = vrot.lane.b32.xlu0 %v889, 96
      %v895 = vpop.permute.xlu0 %894
      %896 = vrot.lane.b32.xlu0 %v890, 96
      %v897 = vpop.permute.xlu0 %896
      %898 = vrot.lane.b32.xlu0 %v891, 96
      %v899 = vpop.permute.xlu0 %898
      %v900 = vunpack.c.l.b16 %v703
      %v901 = vunpack.c.l.b16 %v707
      %v902 = vunpack.c.l.b16 %v711
      %v903 = vunpack.c.l.b16 %v715
      %v904 = vunpack.c.l.b16 %v719
      %v905 = vunpack.c.l.b16 %v723
      %v906 = vunpack.c.l.b16 %v727
      %v907 = vunpack.c.l.b16 %v731
      %v908 = vpack.c.b16 %v901, %v900
      %v909 = vpack.c.b16 %v903, %v902
      %v910 = vpack.c.b16 %v905, %v904
      %v911 = vpack.c.b16 %v907, %v906
      %vm912 = vcmask 261120
      %v915 = vsel %vm912, %v748, %v765
      %v918 = vsel %vm912, %v749, %v767
      %v921 = vsel %vm912, %v750, %v769
      %v924 = vsel %vm912, %v751, %v771
      %vm925 = vcmask 523264
      %v927 = vsel %vm925, %v915, %v785
      %v929 = vsel %vm925, %v918, %v787
      %v931 = vsel %vm925, %v921, %v789
      %v933 = vsel %vm925, %v924, %v791
      %vm934 = vcmask 785408
      %v936 = vsel %vm934, %v927, %v813
      %v939 = vsel %vm934, %v929, %v815
      %v942 = vsel %vm934, %v931, %v817
      %v945 = vsel %vm934, %v933, %v819
      %v949 = vsel %vm912, %v828, %v845
      %v952 = vsel %vm912, %v829, %v847
      %v955 = vsel %vm912, %v830, %v849
      %v958 = vsel %vm912, %v831, %v851
      %v960 = vsel %vm925, %v949, %v873
      %v962 = vsel %vm925, %v952, %v875
      %v964 = vsel %vm925, %v955, %v877
      %v966 = vsel %vm925, %v958, %v879
      %v968 = vsel %vm934, %v960, %v893
      %v971 = vsel %vm934, %v962, %v895
      %v974 = vsel %vm934, %v964, %v897
      %v977 = vsel %vm934, %v966, %v899
      %v979 = vld [vmem:[%s1] sm:$0xf]
      %v980 = vld [vmem:[%s1 + $0x4] sm:$0xf]
      %v981 = vld [vmem:[%s1 + $0x8] sm:$0xf]
      %v982 = vld [vmem:[%s1 + $0xc] sm:$0xf]
      %v983 = vld [vmem:[%s1 + $0x10] sm:$0xf]
      %v984 = vld [vmem:[%s1 + $0x14] sm:$0xf]
      %v985 = vld [vmem:[%s1 + $0x18] sm:$0xf]
      %v986 = vld [vmem:[%s1 + $0x1c] sm:$0xf]
      %v987 = vld [vmem:[%s1 + $0x20] sm:$0xf]
      %v988 = vld [vmem:[%s1 + $0x24] sm:$0xf]
      %v989 = vld [vmem:[%s1 + $0x28] sm:$0xf]
      %v990 = vld [vmem:[%s1 + $0x2c] sm:$0xf]
      %v991 = vld [vmem:[%s1 + $0x30] sm:$0xf]
      %v992 = vld [vmem:[%s1 + $0x34] sm:$0xf]
      %v993 = vld [vmem:[%s1 + $0x38] sm:$0xf]
      %v994 = vld [vmem:[%s1 + $0x3c] sm:$0xf]
      %v995 = vld [vmem:[%s1 + $0x40] sm:$0xf]
      %v996 = vld [vmem:[%s1 + $0x44] sm:$0xf]
      %v997 = vld [vmem:[%s1 + $0x48] sm:$0xf]
      %v998 = vld [vmem:[%s1 + $0x4c] sm:$0xf]
      %v999 = vld [vmem:[%s1 + $0x50] sm:$0xf]
      %v1000 = vld [vmem:[%s1 + $0x54] sm:$0xf]
      %v1001 = vld [vmem:[%s1 + $0x58] sm:$0xf]
      %v1002 = vld [vmem:[%s1 + $0x5c] sm:$0xf]
      %v1003 = vld [vmem:[%s1 + $0x60] sm:$0xf]
      %v1004 = vld [vmem:[%s1 + $0x64] sm:$0xf]
      %v1005 = vld [vmem:[%s1 + $0x68] sm:$0xf]
      %v1006 = vld [vmem:[%s1 + $0x6c] sm:$0xf]
      %v1007 = vld [vmem:[%s1 + $0x70] sm:$0xf]
      %v1008 = vld [vmem:[%s1 + $0x74] sm:$0xf]
      %v1009 = vld [vmem:[%s1 + $0x78] sm:$0xf]
      %v1010 = vld [vmem:[%s1 + $0x7c] sm:$0xf]
      %v1011 = vld [vmem:[%s1 + $0x80] sm:$0xf]
      %v1012 = vld [vmem:[%s1 + $0x84] sm:$0xf]
      %v1013 = vld [vmem:[%s1 + $0x88] sm:$0xf]
      %v1014 = vld [vmem:[%s1 + $0x8c] sm:$0xf]
      %v1015 = vld [vmem:[%s2] sm:$0x1]
      %v1017 = vlaneseq
      %v1018 = vshrl.u32 %v1017, 7
      %v1019 = vsub.s32 0, %v1018
      %v1020 = vrot.slane %v1015, %v1019
      %v1058 = vunpack.c.l.b16 %v979
      %v1059 = vunpack.c.l.b16 %v980
      %v1060 = vunpack.c.l.b16 %v981
      %v1061 = vunpack.c.l.b16 %v982
      %v1062 = vunpack.c.l.b16 %v983
      %v1063 = vunpack.c.l.b16 %v984
      %v1064 = vunpack.c.l.b16 %v985
      %v1065 = vunpack.c.l.b16 %v986
      %v1066 = vunpack.c.l.b16 %v987
      %v1067 = vunpack.c.l.b16 %v988
      %v1068 = vunpack.c.l.b16 %v989
      %v1069 = vunpack.c.l.b16 %v990
      %v1070 = vunpack.c.l.b16 %v991
      %v1071 = vunpack.c.l.b16 %v992
      %v1072 = vunpack.c.l.b16 %v993
      %v1073 = vunpack.c.l.b16 %v994
      %v1074 = vunpack.c.l.b16 %v995
      %v1075 = vunpack.c.l.b16 %v996
      %v1076 = vunpack.c.l.b16 %v997
      %v1077 = vunpack.c.l.b16 %v998
      %v1078 = vunpack.c.l.b16 %v999
      %v1079 = vunpack.c.l.b16 %v1000
      %v1080 = vunpack.c.l.b16 %v1001
      %v1081 = vunpack.c.l.b16 %v1002
      %v1082 = vunpack.c.l.b16 %v1003
      %v1083 = vunpack.c.l.b16 %v1004
      %v1084 = vunpack.c.l.b16 %v1005
      %v1085 = vunpack.c.l.b16 %v1006
      %v1086 = vunpack.c.l.b16 %v1007
      %v1087 = vunpack.c.l.b16 %v1008
      %v1088 = vunpack.c.l.b16 %v1009
      %v1089 = vunpack.c.l.b16 %v1010
      %v1090 = vunpack.c.l.b16 %v1011
      %v1091 = vunpack.c.l.b16 %v1012
      %v1092 = vunpack.c.l.b16 %v1013
      %v1093 = vunpack.c.l.b16 %v1014
      %v1094 = vpack.c.b16 %v1059, %v1058
      %v1095 = vpack.c.b16 %v1061, %v1060
      %v1096 = vpack.c.b16 %v1063, %v1062
      %v1097 = vpack.c.b16 %v1065, %v1064
      %v1098 = vpack.c.b16 %v1067, %v1066
      %v1099 = vpack.c.b16 %v1069, %v1068
      %v1100 = vpack.c.b16 %v1071, %v1070
      %v1101 = vpack.c.b16 %v1073, %v1072
      %v1102 = vpack.c.b16 %v1075, %v1074
      %v1103 = vpack.c.b16 %v1077, %v1076
      %v1104 = vpack.c.b16 %v1079, %v1078
      %v1105 = vpack.c.b16 %v1081, %v1080
      %v1106 = vpack.c.b16 %v1083, %v1082
      %v1107 = vpack.c.b16 %v1085, %v1084
      %v1108 = vpack.c.b16 %v1087, %v1086
      %v1109 = vpack.c.b16 %v1089, %v1088
      %v1110 = vpack.c.b16 %v1091, %v1090
      %v1111 = vpack.c.b16 %v1093, %v1092
      %v1131 = vsel %vm912, %v908, 0
      %v1134 = vsel %vm912, %v909, 0
      %v1137 = vsel %vm912, %v910, 0
      %v1140 = vsel %vm912, %v911, 0
      %1142 = vmatprep.subr.bf16.mxu0 0
      %1143 = vmatpush1.bf16.msra.mxu0 %v1094
      %1144 = vmatprep.subr.bf16.mxu0 0
      %1145 = vmatpush1.bf16.msra.mxu0 %v1095
      %1146 = vmatprep.subr.bf16.mxu0 0
      %1147 = vmatpush1.bf16.msra.mxu0 %v1096
      %1148 = vmatprep.subr.bf16.mxu0 0
      %1149 = vmatpush1.bf16.msra.mxu0 %v1097
      %1150 = vmatprep.subr.bf16.mxu0 0
      %1151 = vmatpush1.bf16.msra.mxu0 %v1098
      %1152 = vmatprep.subr.bf16.mxu0 0
      %1153 = vmatpush1.bf16.msra.mxu0 %v1099
      %1154 = vmatprep.subr.bf16.mxu0 0
      %1155 = vmatpush1.bf16.msra.mxu0 %v1100
      %1156 = vmatprep.subr.bf16.mxu0 0
      %1157 = vmatpush1.bf16.msra.mxu0 %v1101
      %1158 = vmatprep.subr.bf16.mxu0 0
      %1159 = vmatpush1.bf16.msra.mxu0 %v1102
      %1160 = vmatprep.subr.bf16.mxu0 0
      %1161 = vmatpush1.bf16.msra.mxu0 %v1103
      %1162 = vmatprep.subr.bf16.mxu0 0
      %1163 = vmatpush1.bf16.msra.mxu0 %v1104
      %1164 = vmatprep.subr.bf16.mxu0 0
      %1165 = vmatpush1.bf16.msra.mxu0 %v1105
      %1166 = vmatprep.subr.bf16.mxu0 0
      %1167 = vmatpush1.bf16.msra.mxu0 %v1106
      %1168 = vmatprep.subr.bf16.mxu0 0
      %1169 = vmatpush1.bf16.msra.mxu0 %v1107
      %1170 = vmatprep.subr.bf16.mxu0 0
      %1171 = vmatpush1.bf16.msra.mxu0 %v1108
      %1172 = vmatprep.subr.bf16.mxu0 0
      %1173 = vmatpush1.bf16.msra.mxu0 %v1109
      %1174 = vmatprep.mubr.bf16.mxu0 %v968
      %1175 = vmatmul.mubr.bf16.gmra.mrb[0].mxu0 %v936
      %v1176 = vpop.f32.mrb[0].mxu0
      %v1177 = vadd.f32 %v1020, %v1176
      %v1178 = vpop.f32.mrb[0].mxu0
      %v1179 = vpop.f32.mrb[0].mxu0
      %v1180 = vadd.f32 %v1020, %v1179
      %v1181 = vpop.f32.mrb[0].mxu0
      %1182 = vmatprep.mubr.bf16.mxu0 %v971
      %1183 = vmatmul.mubr.bf16.gmra.mrb[0].mxu0 %v939
      %v1184 = vpop.f32.mrb[0].mxu0
      %v1185 = vadd.f32 %v1020, %v1184
      %v1186 = vpop.f32.mrb[0].mxu0
      %v1187 = vpop.f32.mrb[0].mxu0
      %v1188 = vadd.f32 %v1020, %v1187
      %v1189 = vpop.f32.mrb[0].mxu0
      %1190 = vmatprep.mubr.bf16.mxu0 %v974
      %1191 = vmatmul.mubr.bf16.gmra.mrb[0].mxu0 %v942
      %v1192 = vpop.f32.mrb[0].mxu0
      %v1193 = vadd.f32 %v1020, %v1192
      %v1194 = vpop.f32.mrb[0].mxu0
      %v1195 = vpop.f32.mrb[0].mxu0
      %v1196 = vadd.f32 %v1020, %v1195
      %v1197 = vpop.f32.mrb[0].mxu0
      %1198 = vmatprep.mubr.bf16.mxu0 %v977
      %1199 = vmatmul.mubr.bf16.gmra.mrb[0].mxu0 %v945
      %v1200 = vpop.f32.mrb[0].mxu0
      %v1201 = vadd.f32 %v1020, %v1200
      %v1202 = vpop.f32.mrb[0].mxu0
      %v1203 = vpop.f32.mrb[0].mxu0
      %v1204 = vadd.f32 %v1020, %v1203
      %v1205 = vpop.f32.mrb[0].mxu0
      %1206 = vdwg.mxu0
      %1207 = vmatprep.subr.bf16.mxu0 0
      %1208 = vmatpush1.bf16.msra.mxu0 %v1110
      %1209 = vmatprep.subr.bf16.mxu0 0
      %1210 = vmatpush1.bf16.msra.mxu0 %v1111
      %1211 = vmatprep.subr.bf16.mxu0 0
      %1212 = vmatpush1.bf16.msra.mxu0 0
      %1213 = vmatprep.subr.bf16.mxu0 0
      %1214 = vmatpush1.bf16.msra.mxu0 0
      %1215 = vmatprep.subr.bf16.mxu0 0
      %1216 = vmatpush1.bf16.msra.mxu0 0
      %1217 = vmatprep.subr.bf16.mxu0 0
      %1218 = vmatpush1.bf16.msra.mxu0 0
      %1219 = vmatprep.subr.bf16.mxu0 0
      %1220 = vmatpush1.bf16.msra.mxu0 0
      %1221 = vmatprep.subr.bf16.mxu0 0
      %1222 = vmatpush1.bf16.msra.mxu0 0
      %1223 = vmatprep.subr.bf16.mxu0 0
      %1224 = vmatpush1.bf16.msra.mxu0 0
      %1225 = vmatprep.subr.bf16.mxu0 0
      %1226 = vmatpush1.bf16.msra.mxu0 0
      %1227 = vmatprep.subr.bf16.mxu0 0
      %1228 = vmatpush1.bf16.msra.mxu0 0
      %1229 = vmatprep.subr.bf16.mxu0 0
      %1230 = vmatpush1.bf16.msra.mxu0 0
      %1231 = vmatprep.subr.bf16.mxu0 0
      %1232 = vmatpush1.bf16.msra.mxu0 0
      %1233 = vmatprep.subr.bf16.mxu0 0
      %1234 = vmatpush1.bf16.msra.mxu0 0
      %1235 = vmatprep.subr.bf16.mxu0 0
      %1236 = vmatpush1.bf16.msra.mxu0 0
      %1237 = vmatprep.subr.bf16.mxu0 0
      %1238 = vmatpush1.bf16.msra.mxu0 0
      %1239 = vmatprep.mubr.bf16.mxu0 0
      %1240 = vmatmul.mubr.bf16.gmra.mrb[0].mxu0 %v1131
      %v1241 = vpop.f32.mrb[0].mxu0
      %v1242 = vadd.f32 %v1177, %v1241
      %v1243 = vpop.f32.mrb[0].mxu0
      %v1244 = vpop.f32.mrb[0].mxu0
      %v1245 = vadd.f32 %v1180, %v1244
      %v1246 = vpop.f32.mrb[0].mxu0
      %1247 = vmatprep.mubr.bf16.mxu0 0
      %1248 = vmatmul.mubr.bf16.gmra.mrb[0].mxu0 %v1134
      %v1249 = vpop.f32.mrb[0].mxu0
      %v1250 = vadd.f32 %v1185, %v1249
      %v1251 = vpop.f32.mrb[0].mxu0
      %v1252 = vpop.f32.mrb[0].mxu0
      %v1253 = vadd.f32 %v1188, %v1252
      %v1254 = vpop.f32.mrb[0].mxu0
      %1255 = vmatprep.mubr.bf16.mxu0 0
      %1256 = vmatmul.mubr.bf16.gmra.mrb[0].mxu0 %v1137
      %v1257 = vpop.f32.mrb[0].mxu0
      %v1258 = vadd.f32 %v1193, %v1257
      %v1259 = vpop.f32.mrb[0].mxu0
      %v1260 = vpop.f32.mrb[0].mxu0
      %v1261 = vadd.f32 %v1196, %v1260
      %v1262 = vpop.f32.mrb[0].mxu0
      %1263 = vmatprep.mubr.bf16.mxu0 0
      %1264 = vmatmul.mubr.bf16.gmra.mrb[0].mxu0 %v1140
      %v1265 = vpop.f32.mrb[0].mxu0
      %v1266 = vadd.f32 %v1201, %v1265
      %v1267 = vpop.f32.mrb[0].mxu0
      %v1268 = vpop.f32.mrb[0].mxu0
      %v1269 = vadd.f32 %v1204, %v1268
      %v1270 = vpop.f32.mrb[0].mxu0
      %1271 = vdwg.mxu0
      %1272 = vst.msk [vmem:[%s170] sm:$0xff] %vm912, %v1242
      %1273 = vst.msk [vmem:[%s170 + $0x8] sm:$0xff] %vm912, %v1245
      %1274 = vst.msk [vmem:[%s170 + $0x10] sm:$0xff] %vm912, %v1250
      %1275 = vst.msk [vmem:[%s170 + $0x18] sm:$0xff] %vm912, %v1253
      %1276 = vst.msk [vmem:[%s170 + $0x20] sm:$0xff] %vm912, %v1258
      %1277 = vst.msk [vmem:[%s170 + $0x28] sm:$0xff] %vm912, %v1261
      %1278 = vst.msk [vmem:[%s170 + $0x30] sm:$0xff] %vm912, %v1266
      %1279 = vst.msk [vmem:[%s170 + $0x38] sm:$0xff] %vm912, %v1269
      %p1280 = scmp.lt.s32.totalorder %s14, 3
      %s1281 = scalar_select %p1280, %s14, 3
      %s1282 = smul.addr %s1281, 8
      %s1283 = smul.addr %s1282, 8
      %s1284 = scalar_lea.vmem %s3, %s1283
      // Predicated region
      $region33: #{perceptual_loss.11} parent=31 // pred_check
        %p1285 = pneg %p100
      $region34: #{perceptual_loss.11} parent=31 // pred_check_branch
        %1287 = sbr.rel (%p1285) target = $region36
      $region35: #{perceptual_loss.11} parent=31 // pred_region
        _
      $region36: #{perceptual_loss.11} parent=31 // pred_fallthru
        _
    $region32: #{perceptual_loss.11} parent=5 // pred_fallthru
      _
    %p1288 = scmp.le.s32.totalorder 2, %s9
    // Predicated region
    $region37: #{perceptual_loss.11} parent=5 // pred_check
      %p1289 = pneg %p1288
    $region38: #{perceptual_loss.11} parent=5 // pred_check_branch
      %1291 = sbr.rel (%p1289) target = $region40
    $region39: #{perceptual_loss.11} parent=5 // pred_region
      %s1292 = ssub.s32 %s9, 2
      // Predicated region
      $region41: #{perceptual_loss.11} parent=39 // pred_check
        %p1293 = pneg %p106
      $region42: #{perceptual_loss.11} parent=39 // pred_check_branch
        %1295 = sbr.rel (%p1293) target = $region44
      $region43: #{perceptual_loss.11} parent=39 // pred_region
        %p1296 = scmp.lt.s32.totalorder %s15, 3
        %s1297 = scalar_select %p1296, %s15, 3
        %s1298 = smul.addr %s1297, 8
        %s1299 = smul.addr %s1298, 8
        %s1300 = scalar_lea.vmem %s3, %s1299
      $region44: #{perceptual_loss.11} parent=39 // pred_fallthru
        _
    $region40: #{perceptual_loss.11} parent=5 // pred_fallthru
      _
  $region6: #{perceptual_loss.11} parent=0 // loop_footer
    %s13 = sadd.s32 1, %s9
  $region7: #{perceptual_loss.11} parent=0 // loop_footer_branch
    %8 = sbr.rel target = $region3
  $region8: #{perceptual_loss.11} parent=0 // loop_exit
    _

// kernel: perceptual_loss.13
$region0: #{perceptual_loss.13}
  #allocation0 [shape = 'u32[]', space=smem, size = 0x4, offset = 0x4, fixed_abs, tag = 'smem constant byte address 0x4 - core index']
  #allocation1 [shape = 'u32[144,128]{1,0:T(1,128)}', space=vmem, size = 0x12000, scoped, tag = 'internal scratch']
  #allocation2 [shape = 'f32[32,32]{1,0:T(8,128)}', space=vmem, size = 0x4000, scoped, tag = 'scratch operand']
  #allocation3 [shape = 'f32[32,32]{1,0:T(8,128)}', space=vmem, size = 0x4000, scoped, tag = 'scratch operand']
  %s0 = inlined_call_operand.vmem [shape: f32[2,64,32], index: 0, kind: input, shape index: {}]
  %s1 = inlined_call_operand.vmem [shape: f32[2,64,32], index: 1, kind: input, shape index: {}]
  %s2 = inlined_call_operand.vmem [shape: f32[2,1,1], index: 2, kind: output, shape index: {0}]
  %s3 = inlined_call_operand.vmem [shape: f32[2,1,1], index: 3, kind: output, shape index: {1}]
  %4 = xla_tuple %s2, %s3
  %s5 = sld [smem:[#allocation0]]
  $region57: #{perceptual_loss.13} parent=0
    _
  %s7 = ssub.s32 1, %s5
  %s8 = scalar_select 0, %s7, %s5
  loop: start=0, step=1, limit=4
  $region2: #{perceptual_loss.13} parent=0 // loop_pre_header
    _
  $region3: #{perceptual_loss.13} parent=0 // loop_header
    %s10 = sphi 0, %s14
    %p11 = scmp.ge.s32.totalorder %s10, 4
    %s17 = sphi 0, %s29
    %s18 = sphi 0, %s25
    %s19 = sphi 0, %s17
    %s20 = sphi 0, %s18
    %s21 = sphi 0, %s19
    %s22 = sphi 0, %s20
    %s34 = sphi 0, %s36
    %s37 = sphi 0, %s34
    %s38 = sphi 0, %s37
    %s54 = sphi 0, %s38
    %s62 = sphi 0, %s64
    %s65 = sphi 0, %s62
    %s66 = sphi 0, %s65
    %s82 = sphi 0, %s66
    %s88 = sphi 0, %s90
    %s91 = sphi 0, %s88
    %s92 = sphi 0, %s91
    %s108 = sphi 0, %s92
    %s114 = sphi 0, %s116
    %s117 = sphi 0, %s114
    %s118 = sphi 0, %s117
    %s134 = sphi 0, %s118
  $region4: #{perceptual_loss.13} parent=0 // loop_header_branch
    %13 = sbr.rel (%p11) target = $region8
  $region5: #{perceptual_loss.13} parent=0 // loop_body
    %s15 = ssub.s32 %s10, 1
    %s16 = ssub.s32 %s10, 2
    %s23 = sadd.s32 1, %s18
    %p24 = scmp.ge.s32.totalorder %s23, 1
    %s25 = scalar_select %p24, 0, %s23
    %s26 = sadd.s32 1, %s17
    %s27 = scalar_select %p24, %s26, %s17
    %p28 = scmp.ge.s32.totalorder %s27, 2
    %s29 = scalar_select %p28, 0, %s27
    %s30 = ssub.s32 %s17, %s29
    %s31 = ssub.s32 %s18, %s25
    %s32 = sor.u32 %s30, %s31
    %p33 = scmp.eq.s32.totalorder %s32, 0
    %s35 = sadd.s32 %s34, 1
    %s36 = scalar_select %p33, %s34, %s35
    %p39 = pneg %p33
    %p40 = scmp.eq.s32.totalorder %s10, 1
    %p41 = por %p39, %p40
    %p42 = scmp.ne.s32.totalorder %s34, %s37
    %p43 = scmp.eq.s32.totalorder %s10, 0
    %p44 = por %p42, %p43
    %p45 = scmp.ne.s32.totalorder %s34, %s37
    %p46 = scmp.eq.s32.totalorder %s15, 1
    %p47 = por %p45, %p46
    %p48 = scmp.ne.s32.totalorder %s37, %s38
    %p49 = scmp.eq.s32.totalorder %s15, 0
    %p50 = por %p48, %p49
    %p51 = scmp.ne.s32.totalorder %s37, %s38
    %p52 = scmp.eq.s32.totalorder %s16, 1
    %p53 = por %p51, %p52
    %p55 = scmp.ne.s32.totalorder %s38, %s54
    %p56 = scmp.eq.s32.totalorder %s16, 0
    %p57 = por %p55, %p56
    %s58 = ssub.s32 %s17, %s29
    %s59 = ssub.s32 %s18, %s25
    %s60 = sor.u32 %s58, %s59
    %p61 = scmp.eq.s32.totalorder %s60, 0
    %s63 = sadd.s32 %s62, 1
    %s64 = scalar_select %p61, %s62, %s63
    %p67 = pneg %p61
    %p68 = scmp.eq.s32.totalorder %s10, 1
    %p69 = por %p67, %p68
    %p70 = scmp.ne.s32.totalorder %s62, %s65
    %p71 = scmp.eq.s32.totalorder %s10, 0
    %p72 = por %p70, %p71
    %p73 = scmp.ne.s32.totalorder %s62, %s65
    %p74 = scmp.eq.s32.totalorder %s15, 1
    %p75 = por %p73, %p74
    %p76 = scmp.ne.s32.totalorder %s65, %s66
    %p77 = scmp.eq.s32.totalorder %s15, 0
    %p78 = por %p76, %p77
    %p79 = scmp.ne.s32.totalorder %s65, %s66
    %p80 = scmp.eq.s32.totalorder %s16, 1
    %p81 = por %p79, %p80
    %p83 = scmp.ne.s32.totalorder %s66, %s82
    %p84 = scmp.eq.s32.totalorder %s16, 0
    %p85 = por %p83, %p84
    %s86 = ssub.s32 %s17, %s29
    %p87 = scmp.eq.s32.totalorder %s86, 0
    %s89 = sadd.s32 %s88, 1
    %s90 = scalar_select %p87, %s88, %s89
    %p93 = pneg %p87
    %p94 = scmp.eq.s32.totalorder %s10, 1
    %p95 = por %p93, %p94
    %p96 = scmp.ne.s32.totalorder %s88, %s91
    %p97 = scmp.eq.s32.totalorder %s10, 0
    %p98 = por %p96, %p97
    %p99 = scmp.ne.s32.totalorder %s88, %s91
    %p100 = scmp.eq.s32.totalorder %s15, 1
    %p101 = por %p99, %p100
    %p102 = scmp.ne.s32.totalorder %s91, %s92
    %p103 = scmp.eq.s32.totalorder %s15, 0
    %p104 = por %p102, %p103
    %p105 = scmp.ne.s32.totalorder %s91, %s92
    %p106 = scmp.eq.s32.totalorder %s16, 1
    %p107 = por %p105, %p106
    %p109 = scmp.ne.s32.totalorder %s92, %s108
    %p110 = scmp.eq.s32.totalorder %s16, 0
    %p111 = por %p109, %p110
    %s112 = ssub.s32 %s17, %s29
    %p113 = scmp.eq.s32.totalorder %s112, 0
    %s115 = sadd.s32 %s114, 1
    %s116 = scalar_select %p113, %s114, %s115
    %p119 = pneg %p113
    %p120 = scmp.eq.s32.totalorder %s10, 1
    %p121 = por %p119, %p120
    %p122 = scmp.ne.s32.totalorder %s114, %s117
    %p123 = scmp.eq.s32.totalorder %s10, 0
    %p124 = por %p122, %p123
    %p125 = scmp.ne.s32.totalorder %s114, %s117
    %p126 = scmp.eq.s32.totalorder %s15, 1
    %p127 = por %p125, %p126
    %p128 = scmp.ne.s32.totalorder %s117, %s118
    %p129 = scmp.eq.s32.totalorder %s15, 0
    %p130 = por %p128, %p129
    %p131 = scmp.ne.s32.totalorder %s117, %s118
    %p132 = scmp.eq.s32.totalorder %s16, 1
    %p133 = por %p131, %p132
    %p135 = scmp.ne.s32.totalorder %s118, %s134
    %p136 = scmp.eq.s32.totalorder %s16, 0
    %p137 = por %p135, %p136
    %p138 = scmp.le.s32.totalorder 1, %s10
    %p139 = scmp.lt.s32.totalorder %s10, 3
    %p140 = pnand %p138, %p139
    %p141 = pneg %p140
    // Predicated region
    $region9: #{perceptual_loss.13} parent=5 // pred_check
      _
    $region10: #{perceptual_loss.13} parent=5 // pred_check_branch
      %143 = sbr.rel (%p140) target = $region12
    $region11: #{perceptual_loss.13} parent=5 // pred_region
      %s144 = ssub.s32 %s10, 1
    $region12: #{perceptual_loss.13} parent=5 // pred_fallthru
      _
    %p145 = scmp.lt.s32.totalorder %s10, 2
    // Predicated region
    $region13: #{perceptual_loss.13} parent=5 // pred_check
      %p146 = pneg %p145
    $region14: #{perceptual_loss.13} parent=5 // pred_check_branch
      %148 = sbr.rel (%p146) target = $region16
    $region15: #{perceptual_loss.13} parent=5 // pred_region
      // Predicated region
      $region17: #{perceptual_loss.13} parent=15 // pred_check
        %p149 = pneg %p44
      $region18: #{perceptual_loss.13} parent=15 // pred_check_branch
        %151 = sbr.rel (%p149) target = $region20
      $region19: #{perceptual_loss.13} parent=15 // pred_region
        %s152 = smul.u32 8, %s18
        %p153 = scmp.lt.s32.totalorder %s17, 1
        %s154 = scalar_select %p153, %s17, 1
        %p155 = scmp.lt.s32.totalorder %s152, 7
        %s156 = scalar_select %p155, %s152, 7
        %s157 = smul.addr %s154, 8
        %s158 = sadd.s32 %s156, %s157
        %s159 = smul.addr %s158, 8
        %s160 = scalar_lea.vmem %s0, %s159
        %s161 = smul.u32 8, %s18
      $region20: #{perceptual_loss.13} parent=15 // pred_fallthru
        _
      // Predicated region
      $region21: #{perceptual_loss.13} parent=15 // pred_check
        %p162 = pneg %p72
      $region22: #{perceptual_loss.13} parent=15 // pred_check_branch
        %164 = sbr.rel (%p162) target = $region24
      $region23: #{perceptual_loss.13} parent=15 // pred_region
        %s165 = smul.u32 8, %s18
        %p166 = scmp.lt.s32.totalorder %s17, 1
        %s167 = scalar_select %p166, %s17, 1
        %p168 = scmp.lt.s32.totalorder %s165, 7
        %s169 = scalar_select %p168, %s165, 7
        %s170 = smul.addr %s167, 8
        %s171 = sadd.s32 %s169, %s170
        %s172 = smul.addr %s171, 8
        %s173 = scalar_lea.vmem %s1, %s172
        %s174 = smul.u32 8, %s18
      $region24: #{perceptual_loss.13} parent=15 // pred_fallthru
        _
    $region16: #{perceptual_loss.13} parent=5 // pred_fallthru
      _
    %p175 = scmp.le.s32.totalorder 1, %s10
    %p176 = scmp.lt.s32.totalorder %s10, 3
    %p177 = pnand %p175, %p176
    %p178 = pneg %p177
    // Predicated region
    $region25: #{perceptual_loss.13} parent=5 // pred_check
      _
    $region26: #{perceptual_loss.13} parent=5 // pred_check_branch
      %180 = sbr.rel (%p177) target = $region28
    $region27: #{perceptual_loss.13} parent=5 // pred_region
      %s181 = ssub.s32 %s10, 1
      %s182 = smul.u32 8, %s20
      %p183 = scmp.lt.s32.totalorder %s19, 1
      %s184 = scalar_select %p183, %s19, 1
      %p185 = scmp.lt.s32.totalorder %s182, 7
      %s186 = scalar_select %p185, %s182, 7
      %s187 = smul.addr %s184, 8
      %s188 = sadd.s32 %s186, %s187
      %s189 = smul.addr %s188, 8
      %s190 = scalar_lea.vmem %s0, %s189
      %p191 = pneg %p50
      %p192 = pneg %p47
      %s193 = smul.u32 8, %s20
      %p194 = scmp.lt.s32.totalorder %s19, 1
      %s195 = scalar_select %p194, %s19, 1
      %p196 = scmp.lt.s32.totalorder %s193, 7
      %s197 = scalar_select %p196, %s193, 7
      %s198 = smul.addr %s195, 8
      %s199 = sadd.s32 %s197, %s198
      %s200 = smul.addr %s199, 8
      %s201 = scalar_lea.vmem %s1, %s200
      %p202 = pneg %p78
      %p203 = pneg %p75
      %p204 = pneg %p104
      %p205 = pneg %p101
      %p206 = scmp.lt.s32.totalorder %s19, 1
      %s207 = scalar_select %p206, %s19, 1
      %s208 = scalar_lea.vmem %s2, %s207
      %p209 = pneg %p130
      %p210 = pneg %p127
      %p211 = scmp.lt.s32.totalorder %s19, 1
      %s212 = scalar_select %p211, %s19, 1
      %s213 = scalar_lea.vmem %s3, %s212
      %s214 = smul.u32 8, %s20
      %p215 = scmp.lt.s32.totalorder %s19, 1
      %s216 = scalar_select %p215, %s19, 1
      %p217 = scmp.lt.s32.totalorder %s214, 7
      %s218 = scalar_select %p217, %s214, 7
      %s219 = smul.addr %s216, 8
      %s220 = sadd.s32 %s218, %s219
      %s221 = smul.addr %s220, 8
      %s222 = scalar_lea.vmem %s0, %s221
      %s223 = smul.u32 8, %s20
      %s224 = smul.u32 8, %s20
      %p225 = scmp.lt.s32.totalorder %s19, 1
      %s226 = scalar_select %p225, %s19, 1
      %p227 = scmp.lt.s32.totalorder %s224, 7
      %s228 = scalar_select %p227, %s224, 7
      %s229 = smul.addr %s226, 8
      %s230 = sadd.s32 %s228, %s229
      %s231 = smul.addr %s230, 8
      %s232 = scalar_lea.vmem %s1, %s231
      %s233 = smul.u32 8, %s20
      %p234 = scmp.lt.s32.totalorder %s19, 1
      %s235 = scalar_select %p234, %s19, 1
      %s236 = scalar_lea.vmem %s2, %s235
      %p237 = scmp.lt.s32.totalorder %s19, 1
      %s238 = scalar_select %p237, %s19, 1
      %s239 = scalar_lea.vmem %s3, %s238
      %p241 = scmp.eq.s32.totalorder %s20, 0
      // Predicated region
      $region29: #{perceptual_loss.13} parent=27 // pred_check
        %p242 = pneg %p241
      $region30: #{perceptual_loss.13} parent=27 // pred_check_branch
        %244 = sbr.rel (%p242) target = $region32
      $region31: #{perceptual_loss.13} parent=27 // pred_region
        %vm245 = vcmask 0
        %246 = vst.msk [vmem:[%s236] sm:$0x1] %vm245, 0.0
        %247 = vst.msk [vmem:[%s239] sm:$0x1] %vm245, 0.0
        %vm248 = vcmask 261120
        %249 = vst.msk [vmem:[#allocation2] sm:$0xff] %vm248, 0.0
        %250 = vst.msk [vmem:[#allocation2 + $0x8] sm:$0xff] %vm248, 0.0
        %251 = vst.msk [vmem:[#allocation2 + $0x10] sm:$0xff] %vm248, 0.0
        %252 = vst.msk [vmem:[#allocation2 + $0x18] sm:$0xff] %vm248, 0.0
        %253 = vst.msk [vmem:[#allocation3] sm:$0xff] %vm248, 0.0
        %254 = vst.msk [vmem:[#allocation3 + $0x8] sm:$0xff] %vm248, 0.0
        %255 = vst.msk [vmem:[#allocation3 + $0x10] sm:$0xff] %vm248, 0.0
        %256 = vst.msk [vmem:[#allocation3 + $0x18] sm:$0xff] %vm248, 0.0
      $region32: #{perceptual_loss.13} parent=27 // pred_fallthru
        _
      %v257 = vld [vmem:[%s222] sm:$0xff]
      %v258 = vld [vmem:[%s222 + $0x8] sm:$0xff]
      %v259 = vld [vmem:[%s222 + $0x10] sm:$0xff]
      %v260 = vld [vmem:[%s222 + $0x18] sm:$0xff]
      %v261 = vld [vmem:[%s222 + $0x20] sm:$0xff]
      %v262 = vld [vmem:[%s222 + $0x28] sm:$0xff]
      %v263 = vld [vmem:[%s222 + $0x30] sm:$0xff]
      %v264 = vld [vmem:[%s222 + $0x38] sm:$0xff]
      %v265 = vld [vmem:[%s232] sm:$0xff]
      %v266 = vld [vmem:[%s232 + $0x8] sm:$0xff]
      %v267 = vld [vmem:[%s232 + $0x10] sm:$0xff]
      %v268 = vld [vmem:[%s232 + $0x18] sm:$0xff]
      %v269 = vld [vmem:[%s232 + $0x20] sm:$0xff]
      %v270 = vld [vmem:[%s232 + $0x28] sm:$0xff]
      %v271 = vld [vmem:[%s232 + $0x30] sm:$0xff]
      %v272 = vld [vmem:[%s232 + $0x38] sm:$0xff]
      %v273 = vld [vmem:[%s236] sm:$0x1]
      %v274 = vsub.f32 %v257, %v265
      %v275 = vsub.f32 %v258, %v266
      %v276 = vsub.f32 %v259, %v267
      %v277 = vsub.f32 %v260, %v268
      %v278 = vsub.f32 %v261, %v269
      %v279 = vsub.f32 %v262, %v270
      %v280 = vsub.f32 %v263, %v271
      %v281 = vsub.f32 %v264, %v272
      %v282 = vand.u32 2147483647, %v274
      %v283 = vand.u32 2147483647, %v275
      %v284 = vand.u32 2147483647, %v276
      %v285 = vand.u32 2147483647, %v277
      %v286 = vand.u32 2147483647, %v278
      %v287 = vand.u32 2147483647, %v279
      %v288 = vand.u32 2147483647, %v280
      %v289 = vand.u32 2147483647, %v281
      %vm290 = vcmask 261120
      %v291 = vsel %vm290, %v282, 0.0
      %v292 = vsel %vm290, %v283, 0.0
      %v293 = vadd.f32 %v291, %v292
      %v294 = vsel %vm290, %v284, 0.0
      %v295 = vadd.f32 %v293, %v294
      %v296 = vsel %vm290, %v285, 0.0
      %v297 = vadd.f32 %v295, %v296
      %v298 = vsel %vm290, %v286, 0.0
      %v299 = vadd.f32 %v297, %v298
      %v300 = vsel %vm290, %v287, 0.0
      %v301 = vadd.f32 %v299, %v300
      %v302 = vsel %vm290, %v288, 0.0
      %v303 = vadd.f32 %v301, %v302
      %v304 = vsel %vm290, %v289, 0.0
      %v305 = vadd.f32 %v303, %v304
      %306 = vadd.xlane.f32.xlu0 %v305
      %v307 = vpop.xlane.xlu0 %306
      %v308 = vrot.slane %v307, 4
      %v309 = vadd.f32 %v307, %v308
      %v310 = vrot.slane %v309, 2
      %v311 = vadd.f32 %v309, %v310
      %v312 = vrot.slane %v311, 1
      %v313 = vadd.f32 %v311, %v312
      %s314 = vtos %v313
      %v315 = vstv %s314
      %v316 = vadd.f32 %v273, %v315
      %vm317 = vcmask 0
      %318 = vst.msk [vmem:[%s236] sm:$0x1] %vm317, %v316
      %v319 = vpack.c.bf16 %v258, %v257
      %v320 = vpack.c.bf16 %v260, %v259
      %v321 = vpack.c.bf16 %v262, %v261
      %v322 = vpack.c.bf16 %v264, %v263
      %v323 = vpack.c.bf16 %v266, %v265
      %v324 = vpack.c.bf16 %v268, %v267
      %v325 = vpack.c.bf16 %v270, %v269
      %v326 = vpack.c.bf16 %v272, %v271
      %v327 = vld [vmem:[#allocation2] sm:$0xff]
      %v328 = vld [vmem:[#allocation2 + $0x8] sm:$0xff]
      %v329 = vld [vmem:[#allocation2 + $0x10] sm:$0xff]
      %v330 = vld [vmem:[#allocation2 + $0x18] sm:$0xff]
      %331 = vxpose.xlu0.c.b16.start [1/8] %v319, 128
      %332 = vxpose.xlu0.c.b16.cont [2/8] %v320, 128
      %333 = vxpose.xlu0.c.b16.cont [3/8] %v321, 128
      %334 = vxpose.xlu0.c.b16.cont [4/8] %v322, 128
      %335 = vxpose.xlu0.c.b16.cont [5/8] 0, 128
      %336 = vxpose.xlu0.c.b16.cont [6/8] 0, 128
      %337 = vxpose.xlu0.c.b16.cont [7/8] 0, 128
      %338 = vxpose.xlu0.c.b16.end [8/8] 0, 128
      %v339 = vpop.trf.xlu0
      %v340 = vpop.trf.xlu0
      %v341 = vpop.trf.xlu0
      %v342 = vpop.trf.xlu0
      %v343 = vpop.trf.xlu0
      %v344 = vpop.trf.xlu0
      %v345 = vpop.trf.xlu0
      %v346 = vpop.trf.xlu0
      %vm347 = vcmask 523264
      %v349 = vsel %vm347, %v339, 0
      %v352 = vsel %vm347, %v340, 0
      %354 = vmatprep.subr.bf16.mxu0 0
      %355 = vmatpush1.bf16.msra.mxu0 %v319
      %356 = vmatprep.subr.bf16.mxu0 0
      %357 = vmatpush1.bf16.msra.mxu0 %v320
      %358 = vmatprep.subr.bf16.mxu0 0
      %359 = vmatpush1.bf16.msra.mxu0 %v321
      %360 = vmatprep.subr.bf16.mxu0 0
      %361 = vmatpush1.bf16.msra.mxu0 %v322
      %362 = vmatprep.subr.bf16.mxu0 0
      %363 = vmatpush1.bf16.msra.mxu0 0
      %364 = vmatprep.subr.bf16.mxu0 0
      %365 = vmatpush1.bf16.msra.mxu0 0
      %366 = vmatprep.subr.bf16.mxu0 0
      %367 = vmatpush1.bf16.msra.mxu0 0
      %368 = vmatprep.subr.bf16.mxu0 0
      %369 = vmatpush1.bf16.msra.mxu0 0
      %370 = vmatprep.subr.bf16.mxu0 0
      %371 = vmatpush1.bf16.msra.mxu0 0
      %372 = vmatprep.subr.bf16.mxu0 0
      %373 = vmatpush1.bf16.msra.mxu0 0
      %374 = vmatprep.subr.bf16.mxu0 0
      %375 = vmatpush1.bf16.msra.mxu0 0
      %376 = vmatprep.subr.bf16.mxu0 0
      %377 = vmatpush1.bf16.msra.mxu0 0
      %378 = vmatprep.subr.bf16.mxu0 0
      %379 = vmatpush1.bf16.msra.mxu0 0
      %380 = vmatprep.subr.bf16.mxu0 0
      %381 = vmatpush1.bf16.msra.mxu0 0
      %382 = vmatprep.subr.bf16.mxu0 0
      %383 = vmatpush1.bf16.msra.mxu0 0
      %384 = vmatprep.subr.bf16.mxu0 0
      %385 = vmatpush1.bf16.msra.mxu0 0
      %386 = vmatprep.mubr.bf16.mxu0 0
      %387 = vmatmul.mubr.bf16.gmra.mrb[0].mxu0 %v349
      %v388 = vpop.f32.mrb[0].mxu0
      %v389 = vadd.f32 0.0, %v388
      %v390 = vpop.f32.mrb[0].mxu0
      %v391 = vpop.f32.mrb[0].mxu0
      %v392 = vadd.f32 0.0, %v391
      %v393 = vpop.f32.mrb[0].mxu0
      %394 = vmatprep.mubr.bf16.mxu0 0
      %395 = vmatmul.mubr.bf16.gmra.mrb[0].mxu0 %v352
      %v396 = vpop.f32.mrb[0].mxu0
      %v397 = vadd.f32 0.0, %v396
      %v398 = vpop.f32.mrb[0].mxu0
      %v399 = vpop.f32.mrb[0].mxu0
      %v400 = vadd.f32 0.0, %v399
      %v401 = vpop.f32.mrb[0].mxu0
      %402 = vdwg.mxu0
      %v403 = vadd.f32 %v327, %v389
      %v404 = vadd.f32 %v328, %v392
      %v405 = vadd.f32 %v329, %v397
      %v406 = vadd.f32 %v330, %v400
      %407 = vst.msk [vmem:[#allocation2] sm:$0xff] %vm290, %v403
      %408 = vst.msk [vmem:[#allocation2 + $0x8] sm:$0xff] %vm290, %v404
      %409 = vst.msk [vmem:[#allocation2 + $0x10] sm:$0xff] %vm290, %v405
      %410 = vst.msk [vmem:[#allocation2 + $0x18] sm:$0xff] %vm290, %v406
      %v411 = vld [vmem:[#allocation3] sm:$0xff]
      %v412 = vld [vmem:[#allocation3 + $0x8] sm:$0xff]
      %v413 = vld [vmem:[#allocation3 + $0x10] sm:$0xff]
      %v414 = vld [vmem:[#allocation3 + $0x18] sm:$0xff]
      %415 = vxpose.xlu0.c.b16.start [1/8] %v323, 128
      %416 = vxpose.xlu0.c.b16.cont [2/8] %v324, 128
      %417 = vxpose.xlu0.c.b16.cont [3/8] %v325, 128
      %418 = vxpose.xlu0.c.b16.cont [4/8] %v326, 128
      %419 = vxpose.xlu0.c.b16.cont [5/8] 0, 128
      %420 = vxpose.xlu0.c.b16.cont [6/8] 0, 128
      %421 = vxpose.xlu0.c.b16.cont [7/8] 0, 128
      %422 = vxpose.xlu0.c.b16.end [8/8] 0, 128
      %v423 = vpop.trf.xlu0
      %v424 = vpop.trf.xlu0
      %v425 = vpop.trf.xlu0
      %v426 = vpop.trf.xlu0
      %v427 = vpop.trf.xlu0
      %v428 = vpop.trf.xlu0
      %v429 = vpop.trf.xlu0
      %v430 = vpop.trf.xlu0
      %v432 = vsel %vm347, %v423, 0
      %v435 = vsel %vm347, %v424, 0
      %437 = vmatprep.subr.bf16.mxu0 0
      %438 = vmatpush1.bf16.msra.mxu0 %v323
      %439 = vmatprep.subr.bf16.mxu0 0
      %440 = vmatpush1.bf16.msra.mxu0 %v324
      %441 = vmatprep.subr.bf16.mxu0 0
      %442 = vmatpush1.bf16.msra.mxu0 %v325
      %443 = vmatprep.subr.bf16.mxu0 0
      %444 = vmatpush1.bf16.msra.mxu0 %v326
      %445 = vmatprep.subr.bf16.mxu0 0
      %446 = vmatpush1.bf16.msra.mxu0 0
      %447 = vmatprep.subr.bf16.mxu0 0
      %448 = vmatpush1.bf16.msra.mxu0 0
      %449 = vmatprep.subr.bf16.mxu0 0
      %450 = vmatpush1.bf16.msra.mxu0 0
      %451 = vmatprep.subr.bf16.mxu0 0
      %452 = vmatpush1.bf16.msra.mxu0 0
      %453 = vmatprep.subr.bf16.mxu0 0
      %454 = vmatpush1.bf16.msra.mxu0 0
      %455 = vmatprep.subr.bf16.mxu0 0
      %456 = vmatpush1.bf16.msra.mxu0 0
      %457 = vmatprep.subr.bf16.mxu0 0
      %458 = vmatpush1.bf16.msra.mxu0 0
      %459 = vmatprep.subr.bf16.mxu0 0
      %460 = vmatpush1.bf16.msra.mxu0 0
      %461 = vmatprep.subr.bf16.mxu0 0
      %462 = vmatpush1.bf16.msra.mxu0 0
      %463 = vmatprep.subr.bf16.mxu0 0
      %464 = vmatpush1.bf16.msra.mxu0 0
      %465 = vmatprep.subr.bf16.mxu0 0
      %466 = vmatpush1.bf16.msra.mxu0 0
      %467 = vmatprep.subr.bf16.mxu0 0
      %468 = vmatpush1.bf16.msra.mxu0 0
      %469 = vmatprep.mubr.bf16.mxu0 0
      %470 = vmatmul.mubr.bf16.gmra.mrb[0].mxu0 %v432
      %v471 = vpop.f32.mrb[0].mxu0
      %v472 = vadd.f32 0.0, %v471
      %v473 = vpop.f32.mrb[0].mxu0
      %v474 = vpop.f32.mrb[0].mxu0
      %v475 = vadd.f32 0.0, %v474
      %v476 = vpop.f32.mrb[0].mxu0
      %477 = vmatprep.mubr.bf16.mxu0 0
      %478 = vmatmul.mubr.bf16.gmra.mrb[0].mxu0 %v435
      %v479 = vpop.f32.mrb[0].mxu0
      %v480 = vadd.f32 0.0, %v479
      %v481 = vpop.f32.mrb[0].mxu0
      %v482 = vpop.f32.mrb[0].mxu0
      %v483 = vadd.f32 0.0, %v482
      %v484 = vpop.f32.mrb[0].mxu0
      %485 = vdwg.mxu0
      %v486 = vadd.f32 %v411, %v472
      %v487 = vadd.f32 %v412, %v475
      %v488 = vadd.f32 %v413, %v480
      %v489 = vadd.f32 %v414, %v483
      %490 = vst.msk [vmem:[#allocation3] sm:$0xff] %vm290, %v486
      %491 = vst.msk [vmem:[#allocation3 + $0x8] sm:$0xff] %vm290, %v487
      %492 = vst.msk [vmem:[#allocation3 + $0x10] sm:$0xff] %vm290, %v488
      %493 = vst.msk [vmem:[#allocation3 + $0x18] sm:$0xff] %vm290, %v489
      // Predicated region
      $region33: #{perceptual_loss.13} parent=27 // pred_check
        %p494 = pneg %p241
      $region34: #{perceptual_loss.13} parent=27 // pred_check_branch
        %496 = sbr.rel (%p494) target = $region36
      $region35: #{perceptual_loss.13} parent=27 // pred_region
        %v497 = vld [vmem:[%s239] sm:$0x1]
        %v498 = vld [vmem:[#allocation2] sm:$0xff]
        %v499 = vld [vmem:[#allocation2 + $0x8] sm:$0xff]
        %v500 = vld [vmem:[#allocation2 + $0x10] sm:$0xff]
        %v501 = vld [vmem:[#allocation2 + $0x18] sm:$0xff]
        %v502 = vld [vmem:[#allocation3] sm:$0xff]
        %v503 = vld [vmem:[#allocation3 + $0x8] sm:$0xff]
        %v504 = vld [vmem:[#allocation3 + $0x10] sm:$0xff]
        %v505 = vld [vmem:[#allocation3 + $0x18] sm:$0xff]
        %v506 = vsub.f32 %v498, %v502
        %v507 = vsub.f32 %v499, %v503
        %v508 = vsub.f32 %v500, %v504
        %v509 = vsub.f32 %v501, %v505
        %v510 = vand.u32 2147483647, %v506
        %v511 = vand.u32 2147483647, %v507
        %v512 = vand.u32 2147483647, %v508
        %v513 = vand.u32 2147483647, %v509
        %v514 = vsel %vm290, %v510, 0.0
        %v515 = vsel %vm290, %v511, 0.0
        %v516 = vadd.f32 %v514, %v515
        %v517 = vsel %vm290, %v512, 0.0
        %v518 = vadd.f32 %v516, %v517
        %v519 = vsel %vm290, %v513, 0.0
        %v520 = vadd.f32 %v518, %v519
        %521 = vadd.xlane.f32.xlu0 %v520
        %v522 = vpop.xlane.xlu0 %521
        %v523 = vrot.slane %v522, 4
        %v524 = vadd.f32 %v522, %v523
        %v525 = vrot.slane %v524, 2
        %v526 = vadd.f32 %v524, %v525
        %v527 = vrot.slane %v526, 1
        %v528 = vadd.f32 %v526, %v527
        %s529 = vtos %v528
        %v530 = vstv %s529
        %v531 = vadd.f32 %v497, %v530
        %532 = vst.msk [vmem:[%s239] sm:$0x1] %vm317, %v531
      $region36: #{perceptual_loss.13} parent=27 // pred_fallthru
        _
      %p533 = scmp.lt.s32.totalorder %s19, 1
      %s534 = scalar_select %p533, %s19, 1
      %s535 = scalar_lea.vmem %s2, %s534
      %p536 = scmp.lt.s32.totalorder %s19, 1
      %s537 = scalar_select %p536, %s19, 1
      %s538 = scalar_lea.vmem %s3, %s537
      // Predicated region
      $region37: #{perceptual_loss.13} parent=27 // pred_check
        %p539 = pneg %p101
      $region38: #{perceptual_loss.13} parent=27 // pred_check_branch
        %541 = sbr.rel (%p539) target = $region40
      $region39: #{perceptual_loss.13} parent=27 // pred_region
        _
      $region40: #{perceptual_loss.13} parent=27 // pred_fallthru
        _
      // Predicated region
      $region41: #{perceptual_loss.13} parent=27 // pred_check
        %p542 = pneg %p127
      $region42: #{perceptual_loss.13} parent=27 // pred_check_branch
        %544 = sbr.rel (%p542) target = $region44
      $region43: #{perceptual_loss.13} parent=27 // pred_region
        _
      $region44: #{perceptual_loss.13} parent=27 // pred_fallthru
        _
    $region28: #{perceptual_loss.13} parent=5 // pred_fallthru
      _
    %p545 = scmp.le.s32.totalorder 2, %s10
    // Predicated region
    $region45: #{perceptual_loss.13} parent=5 // pred_check
      %p546 = pneg %p545
    $region46: #{perceptual_loss.13} parent=5 // pred_check_branch
      %548 = sbr.rel (%p546) target = $region48
    $region47: #{perceptual_loss.13} parent=5 // pred_region
      %s549 = ssub.s32 %s10, 2
      // Predicated region
      $region49: #{perceptual_loss.13} parent=47 // pred_check
        %p550 = pneg %p107
      $region50: #{perceptual_loss.13} parent=47 // pred_check_branch
        %552 = sbr.rel (%p550) target = $region52
      $region51: #{perceptual_loss.13} parent=47 // pred_region
        %p553 = scmp.lt.s32.totalorder %s21, 1
        %s554 = scalar_select %p553, %s21, 1
        %s555 = scalar_lea.vmem %s2, %s554
      $region52: #{perceptual_loss.13} parent=47 // pred_fallthru
        _
      // Predicated region
      $region53: #{perceptual_loss.13} parent=47 // pred_check
        %p556 = pneg %p133
      $region54: #{perceptual_loss.13} parent=47 // pred_check_branch
        %558 = sbr.rel (%p556) target = $region56
      $region55: #{perceptual_loss.13} parent=47 // pred_region
        %p559 = scmp.lt.s32.totalorder %s21, 1
        %s560 = scalar_select %p559, %s21, 1
        %s561 = scalar_lea.vmem %s3, %s560
      $region56: #{perceptual_loss.13} parent=47 // pred_fallthru
        _
    $region48: #{perceptual_loss.13} parent=5 // pred_fallthru
      _
  $region6: #{perceptual_loss.13} parent=0 // loop_footer
    %s14 = sadd.s32 1, %s10
  $region7: #{perceptual_loss.13} parent=0 // loop_footer_branch
    %9 = sbr.rel target = $region3
  $region8: #{perceptual_loss.13} parent=0 // loop_exit
    _

// kernel: perceptual_loss.12
$region0: #{perceptual_loss.12}
  #allocation0 [shape = 'u32[]', space=smem, size = 0x4, offset = 0x4, fixed_abs, tag = 'smem constant byte address 0x4 - core index']
  #allocation1 [shape = 'u32[144,128]{1,0:T(1,128)}', space=vmem, size = 0x12000, scoped, tag = 'internal scratch']
  #allocation2 [shape = 'f32[16,16]{1,0:T(8,128)}', space=vmem, size = 0x2000, scoped, tag = 'scratch operand']
  #allocation3 [shape = 'f32[16,16]{1,0:T(8,128)}', space=vmem, size = 0x2000, scoped, tag = 'scratch operand']
  %s0 = inlined_call_operand.vmem [shape: f32[2,256,16], index: 0, kind: input, shape index: {}]
  %s1 = inlined_call_operand.vmem [shape: f32[2,256,16], index: 1, kind: input, shape index: {}]
  %s2 = inlined_call_operand.vmem [shape: f32[2,1,1], index: 2, kind: output, shape index: {0}]
  %s3 = inlined_call_operand.vmem [shape: f32[2,1,1], index: 3, kind: output, shape index: {1}]
  %4 = xla_tuple %s2, %s3
  %s5 = sld [smem:[#allocation0]]
  $region57: #{perceptual_loss.12} parent=0
    _
  %s7 = ssub.s32 1, %s5
  %s8 = scalar_select 0, %s7, %s5
  loop: start=0, step=1, limit=4
  $region2: #{perceptual_loss.12} parent=0 // loop_pre_header
    _
  $region3: #{perceptual_loss.12} parent=0 // loop_header
    %s10 = sphi 0, %s14
    %p11 = scmp.ge.s32.totalorder %s10, 4
    %s17 = sphi 0, %s29
    %s18 = sphi 0, %s25
    %s19 = sphi 0, %s17
    %s20 = sphi 0, %s18
    %s21 = sphi 0, %s19
    %s22 = sphi 0, %s20
    %s34 = sphi 0, %s36
    %s37 = sphi 0, %s34
    %s38 = sphi 0, %s37
    %s54 = sphi 0, %s38
    %s62 = sphi 0, %s64
    %s65 = sphi 0, %s62
    %s66 = sphi 0, %s65
    %s82 = sphi 0, %s66
    %s88 = sphi 0, %s90
    %s91 = sphi 0, %s88
    %s92 = sphi 0, %s91
    %s108 = sphi 0, %s92
    %s114 = sphi 0, %s116
    %s117 = sphi 0, %s114
    %s118 = sphi 0, %s117
    %s134 = sphi 0, %s118
  $region4: #{perceptual_loss.12} parent=0 // loop_header_branch
    %13 = sbr.rel (%p11) target = $region8
  $region5: #{perceptual_loss.12} parent=0 // loop_body
    %s15 = ssub.s32 %s10, 1
    %s16 = ssub.s32 %s10, 2
    %s23 = sadd.s32 1, %s18
    %p24 = scmp.ge.s32.totalorder %s23, 1
    %s25 = scalar_select %p24, 0, %s23
    %s26 = sadd.s32 1, %s17
    %s27 = scalar_select %p24, %s26, %s17
    %p28 = scmp.ge.s32.totalorder %s27, 2
    %s29 = scalar_select %p28, 0, %s27
    %s30 = ssub.s32 %s17, %s29
    %s31 = ssub.s32 %s18, %s25
    %s32 = sor.u32 %s30, %s31
    %p33 = scmp.eq.s32.totalorder %s32, 0
    %s35 = sadd.s32 %s34, 1
    %s36 = scalar_select %p33, %s34, %s35
    %p39 = pneg %p33
    %p40 = scmp.eq.s32.totalorder %s10, 1
    %p41 = por %p39, %p40
    %p42 = scmp.ne.s32.totalorder %s34, %s37
    %p43 = scmp.eq.s32.totalorder %s10, 0
    %p44 = por %p42, %p43
    %p45 = scmp.ne.s32.totalorder %s34, %s37
    %p46 = scmp.eq.s32.totalorder %s15, 1
    %p47 = por %p45, %p46
    %p48 = scmp.ne.s32.totalorder %s37, %s38
    %p49 = scmp.eq.s32.totalorder %s15, 0
    %p50 = por %p48, %p49
    %p51 = scmp.ne.s32.totalorder %s37, %s38
    %p52 = scmp.eq.s32.totalorder %s16, 1
    %p53 = por %p51, %p52
    %p55 = scmp.ne.s32.totalorder %s38, %s54
    %p56 = scmp.eq.s32.totalorder %s16, 0
    %p57 = por %p55, %p56
    %s58 = ssub.s32 %s17, %s29
    %s59 = ssub.s32 %s18, %s25
    %s60 = sor.u32 %s58, %s59
    %p61 = scmp.eq.s32.totalorder %s60, 0
    %s63 = sadd.s32 %s62, 1
    %s64 = scalar_select %p61, %s62, %s63
    %p67 = pneg %p61
    %p68 = scmp.eq.s32.totalorder %s10, 1
    %p69 = por %p67, %p68
    %p70 = scmp.ne.s32.totalorder %s62, %s65
    %p71 = scmp.eq.s32.totalorder %s10, 0
    %p72 = por %p70, %p71
    %p73 = scmp.ne.s32.totalorder %s62, %s65
    %p74 = scmp.eq.s32.totalorder %s15, 1
    %p75 = por %p73, %p74
    %p76 = scmp.ne.s32.totalorder %s65, %s66
    %p77 = scmp.eq.s32.totalorder %s15, 0
    %p78 = por %p76, %p77
    %p79 = scmp.ne.s32.totalorder %s65, %s66
    %p80 = scmp.eq.s32.totalorder %s16, 1
    %p81 = por %p79, %p80
    %p83 = scmp.ne.s32.totalorder %s66, %s82
    %p84 = scmp.eq.s32.totalorder %s16, 0
    %p85 = por %p83, %p84
    %s86 = ssub.s32 %s17, %s29
    %p87 = scmp.eq.s32.totalorder %s86, 0
    %s89 = sadd.s32 %s88, 1
    %s90 = scalar_select %p87, %s88, %s89
    %p93 = pneg %p87
    %p94 = scmp.eq.s32.totalorder %s10, 1
    %p95 = por %p93, %p94
    %p96 = scmp.ne.s32.totalorder %s88, %s91
    %p97 = scmp.eq.s32.totalorder %s10, 0
    %p98 = por %p96, %p97
    %p99 = scmp.ne.s32.totalorder %s88, %s91
    %p100 = scmp.eq.s32.totalorder %s15, 1
    %p101 = por %p99, %p100
    %p102 = scmp.ne.s32.totalorder %s91, %s92
    %p103 = scmp.eq.s32.totalorder %s15, 0
    %p104 = por %p102, %p103
    %p105 = scmp.ne.s32.totalorder %s91, %s92
    %p106 = scmp.eq.s32.totalorder %s16, 1
    %p107 = por %p105, %p106
    %p109 = scmp.ne.s32.totalorder %s92, %s108
    %p110 = scmp.eq.s32.totalorder %s16, 0
    %p111 = por %p109, %p110
    %s112 = ssub.s32 %s17, %s29
    %p113 = scmp.eq.s32.totalorder %s112, 0
    %s115 = sadd.s32 %s114, 1
    %s116 = scalar_select %p113, %s114, %s115
    %p119 = pneg %p113
    %p120 = scmp.eq.s32.totalorder %s10, 1
    %p121 = por %p119, %p120
    %p122 = scmp.ne.s32.totalorder %s114, %s117
    %p123 = scmp.eq.s32.totalorder %s10, 0
    %p124 = por %p122, %p123
    %p125 = scmp.ne.s32.totalorder %s114, %s117
    %p126 = scmp.eq.s32.totalorder %s15, 1
    %p127 = por %p125, %p126
    %p128 = scmp.ne.s32.totalorder %s117, %s118
    %p129 = scmp.eq.s32.totalorder %s15, 0
    %p130 = por %p128, %p129
    %p131 = scmp.ne.s32.totalorder %s117, %s118
    %p132 = scmp.eq.s32.totalorder %s16, 1
    %p133 = por %p131, %p132
    %p135 = scmp.ne.s32.totalorder %s118, %s134
    %p136 = scmp.eq.s32.totalorder %s16, 0
    %p137 = por %p135, %p136
    %p138 = scmp.le.s32.totalorder 1, %s10
    %p139 = scmp.lt.s32.totalorder %s10, 3
    %p140 = pnand %p138, %p139
    %p141 = pneg %p140
    // Predicated region
    $region9: #{perceptual_loss.12} parent=5 // pred_check
      _
    $region10: #{perceptual_loss.12} parent=5 // pred_check_branch
      %143 = sbr.rel (%p140) target = $region12
    $region11: #{perceptual_loss.12} parent=5 // pred_region
      %s144 = ssub.s32 %s10, 1
    $region12: #{perceptual_loss.12} parent=5 // pred_fallthru
      _
    %p145 = scmp.lt.s32.totalorder %s10, 2
    // Predicated region
    $region13: #{perceptual_loss.12} parent=5 // pred_check
      %p146 = pneg %p145
    $region14: #{perceptual_loss.12} parent=5 // pred_check_branch
      %148 = sbr.rel (%p146) target = $region16
    $region15: #{perceptual_loss.12} parent=5 // pred_region
      // Predicated region
      $region17: #{perceptual_loss.12} parent=15 // pred_check
        %p149 = pneg %p44
      $region18: #{perceptual_loss.12} parent=15 // pred_check_branch
        %151 = sbr.rel (%p149) target = $region20
      $region19: #{perceptual_loss.12} parent=15 // pred_region
        %s152 = smul.u32 32, %s18
        %p153 = scmp.lt.s32.totalorder %s17, 1
        %s154 = scalar_select %p153, %s17, 1
        %p155 = scmp.lt.s32.totalorder %s152, 31
        %s156 = scalar_select %p155, %s152, 31
        %s157 = smul.addr %s154, 32
        %s158 = sadd.s32 %s156, %s157
        %s159 = smul.addr %s158, 8
        %s160 = scalar_lea.vmem %s0, %s159
        %s161 = smul.u32 32, %s18
      $region20: #{perceptual_loss.12} parent=15 // pred_fallthru
        _
      // Predicated region
      $region21: #{perceptual_loss.12} parent=15 // pred_check
        %p162 = pneg %p72
      $region22: #{perceptual_loss.12} parent=15 // pred_check_branch
        %164 = sbr.rel (%p162) target = $region24
      $region23: #{perceptual_loss.12} parent=15 // pred_region
        %s165 = smul.u32 32, %s18
        %p166 = scmp.lt.s32.totalorder %s17, 1
        %s167 = scalar_select %p166, %s17, 1
        %p168 = scmp.lt.s32.totalorder %s165, 31
        %s169 = scalar_select %p168, %s165, 31
        %s170 = smul.addr %s167, 32
        %s171 = sadd.s32 %s169, %s170
        %s172 = smul.addr %s171, 8
        %s173 = scalar_lea.vmem %s1, %s172
        %s174 = smul.u32 32, %s18
      $region24: #{perceptual_loss.12} parent=15 // pred_fallthru
        _
    $region16: #{perceptual_loss.12} parent=5 // pred_fallthru
      _
    %p175 = scmp.le.s32.totalorder 1, %s10
    %p176 = scmp.lt.s32.totalorder %s10, 3
    %p177 = pnand %p175, %p176
    %p178 = pneg %p177
    // Predicated region
    $region25: #{perceptual_loss.12} parent=5 // pred_check
      _
    $region26: #{perceptual_loss.12} parent=5 // pred_check_branch
      %180 = sbr.rel (%p177) target = $region28
    $region27: #{perceptual_loss.12} parent=5 // pred_region
      %s181 = ssub.s32 %s10, 1
      %s182 = smul.u32 32, %s20
      %p183 = scmp.lt.s32.totalorder %s19, 1
      %s184 = scalar_select %p183, %s19, 1
      %p185 = scmp.lt.s32.totalorder %s182, 31
      %s186 = scalar_select %p185, %s182, 31
      %s187 = smul.addr %s184, 32
      %s188 = sadd.s32 %s186, %s187
      %s189 = smul.addr %s188, 8
      %s190 = scalar_lea.vmem %s0, %s189
      %p191 = pneg %p50
      %p192 = pneg %p47
      %s193 = smul.u32 32, %s20
      %p194 = scmp.lt.s32.totalorder %s19, 1
      %s195 = scalar_select %p194, %s19, 1
      %p196 = scmp.lt.s32.totalorder %s193, 31
      %s197 = scalar_select %p196, %s193, 31
      %s198 = smul.addr %s195, 32
      %s199 = sadd.s32 %s197, %s198
      %s200 = smul.addr %s199, 8
      %s201 = scalar_lea.vmem %s1, %s200
      %p202 = pneg %p78
      %p203 = pneg %p75
      %p204 = pneg %p104
      %p205 = pneg %p101
      %p206 = scmp.lt.s32.totalorder %s19, 1
      %s207 = scalar_select %p206, %s19, 1
      %s208 = scalar_lea.vmem %s2, %s207
      %p209 = pneg %p130
      %p210 = pneg %p127
      %p211 = scmp.lt.s32.totalorder %s19, 1
      %s212 = scalar_select %p211, %s19, 1
      %s213 = scalar_lea.vmem %s3, %s212
      %s214 = smul.u32 32, %s20
      %p215 = scmp.lt.s32.totalorder %s19, 1
      %s216 = scalar_select %p215, %s19, 1
      %p217 = scmp.lt.s32.totalorder %s214, 31
      %s218 = scalar_select %p217, %s214, 31
      %s219 = smul.addr %s216, 32
      %s220 = sadd.s32 %s218, %s219
      %s221 = smul.addr %s220, 8
      %s222 = scalar_lea.vmem %s0, %s221
      %s223 = smul.u32 32, %s20
      %s224 = smul.u32 32, %s20
      %p225 = scmp.lt.s32.totalorder %s19, 1
      %s226 = scalar_select %p225, %s19, 1
      %p227 = scmp.lt.s32.totalorder %s224, 31
      %s228 = scalar_select %p227, %s224, 31
      %s229 = smul.addr %s226, 32
      %s230 = sadd.s32 %s228, %s229
      %s231 = smul.addr %s230, 8
      %s232 = scalar_lea.vmem %s1, %s231
      %s233 = smul.u32 32, %s20
      %p234 = scmp.lt.s32.totalorder %s19, 1
      %s235 = scalar_select %p234, %s19, 1
      %s236 = scalar_lea.vmem %s2, %s235
      %p237 = scmp.lt.s32.totalorder %s19, 1
      %s238 = scalar_select %p237, %s19, 1
      %s239 = scalar_lea.vmem %s3, %s238
      %p241 = scmp.eq.s32.totalorder %s20, 0
      // Predicated region
      $region29: #{perceptual_loss.12} parent=27 // pred_check
        %p242 = pneg %p241
      $region30: #{perceptual_loss.12} parent=27 // pred_check_branch
        %244 = sbr.rel (%p242) target = $region32
      $region31: #{perceptual_loss.12} parent=27 // pred_region
        %vm245 = vcmask 0
        %246 = vst.msk [vmem:[%s236] sm:$0x1] %vm245, 0.0
        %247 = vst.msk [vmem:[%s239] sm:$0x1] %vm245, 0.0
        %vm248 = vcmask 130048
        %249 = vst.msk [vmem:[#allocation2] sm:$0xff] %vm248, 0.0
        %250 = vst.msk [vmem:[#allocation2 + $0x8] sm:$0xff] %vm248, 0.0
        %251 = vst.msk [vmem:[#allocation3] sm:$0xff] %vm248, 0.0
        %252 = vst.msk [vmem:[#allocation3 + $0x8] sm:$0xff] %vm248, 0.0
      $region32: #{perceptual_loss.12} parent=27 // pred_fallthru
        _
      %v253 = vld [vmem:[%s222] sm:$0xff]
      %v254 = vld [vmem:[%s222 + $0x8] sm:$0xff]
      %v255 = vld [vmem:[%s222 + $0x10] sm:$0xff]
      %v256 = vld [vmem:[%s222 + $0x18] sm:$0xff]
      %v257 = vld [vmem:[%s222 + $0x20] sm:$0xff]
      %v258 = vld [vmem:[%s222 + $0x28] sm:$0xff]
      %v259 = vld [vmem:[%s222 + $0x30] sm:$0xff]
      %v260 = vld [vmem:[%s222 + $0x38] sm:$0xff]
      %v261 = vld [vmem:[%s222 + $0x40] sm:$0xff]
      %v262 = vld [vmem:[%s222 + $0x48] sm:$0xff]
      %v263 = vld [vmem:[%s222 + $0x50] sm:$0xff]
      %v264 = vld [vmem:[%s222 + $0x58] sm:$0xff]
      %v265 = vld [vmem:[%s222 + $0x60] sm:$0xff]
      %v266 = vld [vmem:[%s222 + $0x68] sm:$0xff]
      %v267 = vld [vmem:[%s222 + $0x70] sm:$0xff]
      %v268 = vld [vmem:[%s222 + $0x78] sm:$0xff]
      %v269 = vld [vmem:[%s222 + $0x80] sm:$0xff]
      %v270 = vld [vmem:[%s222 + $0x88] sm:$0xff]
      %v271 = vld [vmem:[%s222 + $0x90] sm:$0xff]
      %v272 = vld [vmem:[%s222 + $0x98] sm:$0xff]
      %v273 = vld [vmem:[%s222 + $0xa0] sm:$0xff]
      %v274 = vld [vmem:[%s222 + $0xa8] sm:$0xff]
      %v275 = vld [vmem:[%s222 + $0xb0] sm:$0xff]
      %v276 = vld [vmem:[%s222 + $0xb8] sm:$0xff]
      %v277 = vld [vmem:[%s222 + $0xc0] sm:$0xff]
      %v278 = vld [vmem:[%s222 + $0xc8] sm:$0xff]
      %v279 = vld [vmem:[%s222 + $0xd0] sm:$0xff]
      %v280 = vld [vmem:[%s222 + $0xd8] sm:$0xff]
      %v281 = vld [vmem:[%s222 + $0xe0] sm:$0xff]
      %v282 = vld [vmem:[%s222 + $0xe8] sm:$0xff]
      %v283 = vld [vmem:[%s222 + $0xf0] sm:$0xff]
      %v284 = vld [vmem:[%s222 + $0xf8] sm:$0xff]
      %v285 = vld [vmem:[%s232] sm:$0xff]
      %v286 = vld [vmem:[%s232 + $0x8] sm:$0xff]
      %v287 = vld [vmem:[%s232 + $0x10] sm:$0xff]
      %v288 = vld [vmem:[%s232 + $0x18] sm:$0xff]
      %v289 = vld [vmem:[%s232 + $0x20] sm:$0xff]
      %v290 = vld [vmem:[%s232 + $0x28] sm:$0xff]
      %v291 = vld [vmem:[%s232 + $0x30] sm:$0xff]
      %v292 = vld [vmem:[%s232 + $0x38] sm:$0xff]
      %v293 = vld [vmem:[%s232 + $0x40] sm:$0xff]
      %v294 = vld [vmem:[%s232 + $0x48] sm:$0xff]
      %v295 = vld [vmem:[%s232 + $0x50] sm:$0xff]
      %v296 = vld [vmem:[%s232 + $0x58] sm:$0xff]
      %v297 = vld [vmem:[%s232 + $0x60] sm:$0xff]
      %v298 = vld [vmem:[%s232 + $0x68] sm:$0xff]
      %v299 = vld [vmem:[%s232 + $0x70] sm:$0xff]
      %v300 = vld [vmem:[%s232 + $0x78] sm:$0xff]
      %v301 = vld [vmem:[%s232 + $0x80] sm:$0xff]
      %v302 = vld [vmem:[%s232 + $0x88] sm:$0xff]
      %v303 = vld [vmem:[%s232 + $0x90] sm:$0xff]
      %v304 = vld [vmem:[%s232 + $0x98] sm:$0xff]
      %v305 = vld [vmem:[%s232 + $0xa0] sm:$0xff]
      %v306 = vld [vmem:[%s232 + $0xa8] sm:$0xff]
      %v307 = vld [vmem:[%s232 + $0xb0] sm:$0xff]
      %v308 = vld [vmem:[%s232 + $0xb8] sm:$0xff]
      %v309 = vld [vmem:[%s232 + $0xc0] sm:$0xff]
      %v310 = vld [vmem:[%s232 + $0xc8] sm:$0xff]
      %v311 = vld [vmem:[%s232 + $0xd0] sm:$0xff]
      %v312 = vld [vmem:[%s232 + $0xd8] sm:$0xff]
      %v313 = vld [vmem:[%s232 + $0xe0] sm:$0xff]
      %v314 = vld [vmem:[%s232 + $0xe8] sm:$0xff]
      %v315 = vld [vmem:[%s232 + $0xf0] sm:$0xff]
      %v316 = vld [vmem:[%s232 + $0xf8] sm:$0xff]
      %v317 = vld [vmem:[%s236] sm:$0x1]
      %v318 = vsub.f32 %v253, %v285
      %v319 = vsub.f32 %v254, %v286
      %v320 = vsub.f32 %v255, %v287
      %v321 = vsub.f32 %v256, %v288
      %v322 = vsub.f32 %v257, %v289
      %v323 = vsub.f32 %v258, %v290
      %v324 = vsub.f32 %v259, %v291
      %v325 = vsub.f32 %v260, %v292
      %v326 = vsub.f32 %v261, %v293
      %v327 = vsub.f32 %v262, %v294
      %v328 = vsub.f32 %v263, %v295
      %v329 = vsub.f32 %v264, %v296
      %v330 = vsub.f32 %v265, %v297
      %v331 = vsub.f32 %v266, %v298
      %v332 = vsub.f32 %v267, %v299
      %v333 = vsub.f32 %v268, %v300
      %v334 = vsub.f32 %v269, %v301
      %v335 = vsub.f32 %v270, %v302
      %v336 = vsub.f32 %v271, %v303
      %v337 = vsub.f32 %v272, %v304
      %v338 = vsub.f32 %v273, %v305
      %v339 = vsub.f32 %v274, %v306
      %v340 = vsub.f32 %v275, %v307
      %v341 = vsub.f32 %v276, %v308
      %v342 = vsub.f32 %v277, %v309
      %v343 = vsub.f32 %v278, %v310
      %v344 = vsub.f32 %v279, %v311
      %v345 = vsub.f32 %v280, %v312
      %v346 = vsub.f32 %v281, %v313
      %v347 = vsub.f32 %v282, %v314
      %v348 = vsub.f32 %v283, %v315
      %v349 = vsub.f32 %v284, %v316
      %v350 = vand.u32 2147483647, %v318
      %v351 = vand.u32 2147483647, %v319
      %v352 = vand.u32 2147483647, %v320
      %v353 = vand.u32 2147483647, %v321
      %v354 = vand.u32 2147483647, %v322
      %v355 = vand.u32 2147483647, %v323
      %v356 = vand.u32 2147483647, %v324
      %v357 = vand.u32 2147483647, %v325
      %v358 = vand.u32 2147483647, %v326
      %v359 = vand.u32 2147483647, %v327
      %v360 = vand.u32 2147483647, %v328
      %v361 = vand.u32 2147483647, %v329
      %v362 = vand.u32 2147483647, %v330
      %v363 = vand.u32 2147483647, %v331
      %v364 = vand.u32 2147483647, %v332
      %v365 = vand.u32 2147483647, %v333
      %v366 = vand.u32 2147483647, %v334
      %v367 = vand.u32 2147483647, %v335
      %v368 = vand.u32 2147483647, %v336
      %v369 = vand.u32 2147483647, %v337
      %v370 = vand.u32 2147483647, %v338
      %v371 = vand.u32 2147483647, %v339
      %v372 = vand.u32 2147483647, %v340
      %v373 = vand.u32 2147483647, %v341
      %v374 = vand.u32 2147483647, %v342
      %v375 = vand.u32 2147483647, %v343
      %v376 = vand.u32 2147483647, %v344
      %v377 = vand.u32 2147483647, %v345
      %v378 = vand.u32 2147483647, %v346
      %v379 = vand.u32 2147483647, %v347
      %v380 = vand.u32 2147483647, %v348
      %v381 = vand.u32 2147483647, %v349
      %vm382 = vcmask 130048
      %v383 = vsel %vm382, %v350, 0.0
      %v384 = vsel %vm382, %v351, 0.0
      %v385 = vadd.f32 %v383, %v384
      %v386 = vsel %vm382, %v352, 0.0
      %v387 = vadd.f32 %v385, %v386
      %v388 = vsel %vm382, %v353, 0.0
      %v389 = vadd.f32 %v387, %v388
      %v390 = vsel %vm382, %v354, 0.0
      %v391 = vadd.f32 %v389, %v390
      %v392 = vsel %vm382, %v355, 0.0
      %v393 = vadd.f32 %v391, %v392
      %v394 = vsel %vm382, %v356, 0.0
      %v395 = vadd.f32 %v393, %v394
      %v396 = vsel %vm382, %v357, 0.0
      %v397 = vadd.f32 %v395, %v396
      %v398 = vsel %vm382, %v358, 0.0
      %v399 = vadd.f32 %v397, %v398
      %v400 = vsel %vm382, %v359, 0.0
      %v401 = vadd.f32 %v399, %v400
      %v402 = vsel %vm382, %v360, 0.0
      %v403 = vadd.f32 %v401, %v402
      %v404 = vsel %vm382, %v361, 0.0
      %v405 = vadd.f32 %v403, %v404
      %v406 = vsel %vm382, %v362, 0.0
      %v407 = vadd.f32 %v405, %v406
      %v408 = vsel %vm382, %v363, 0.0
      %v409 = vadd.f32 %v407, %v408
      %v410 = vsel %vm382, %v364, 0.0
      %v411 = vadd.f32 %v409, %v410
      %v412 = vsel %vm382, %v365, 0.0
      %v413 = vadd.f32 %v411, %v412
      %v414 = vsel %vm382, %v366, 0.0
      %v415 = vadd.f32 %v413, %v414
      %v416 = vsel %vm382, %v367, 0.0
      %v417 = vadd.f32 %v415, %v416
      %v418 = vsel %vm382, %v368, 0.0
      %v419 = vadd.f32 %v417, %v418
      %v420 = vsel %vm382, %v369, 0.0
      %v421 = vadd.f32 %v419, %v420
      %v422 = vsel %vm382, %v370, 0.0
      %v423 = vadd.f32 %v421, %v422
      %v424 = vsel %vm382, %v371, 0.0
      %v425 = vadd.f32 %v423, %v424
      %v426 = vsel %vm382, %v372, 0.0
      %v427 = vadd.f32 %v425, %v426
      %v428 = vsel %vm382, %v373, 0.0
      %v429 = vadd.f32 %v427, %v428
      %v430 = vsel %vm382, %v374, 0.0
      %v431 = vadd.f32 %v429, %v430
      %v432 = vsel %vm382, %v375, 0.0
      %v433 = vadd.f32 %v431, %v432
      %v434 = vsel %vm382, %v376, 0.0
      %v435 = vadd.f32 %v433, %v434
      %v436 = vsel %vm382, %v377, 0.0
      %v437 = vadd.f32 %v435, %v436
      %v438 = vsel %vm382, %v378, 0.0
      %v439 = vadd.f32 %v437, %v438
      %v440 = vsel %vm382, %v379, 0.0
      %v441 = vadd.f32 %v439, %v440
      %v442 = vsel %vm382, %v380, 0.0
      %v443 = vadd.f32 %v441, %v442
      %v444 = vsel %vm382, %v381, 0.0
      %v445 = vadd.f32 %v443, %v444
      %446 = vadd.xlane.f32.xlu0 %v445
      %v447 = vpop.xlane.xlu0 %446
      %v448 = vrot.slane %v447, 4
      %v449 = vadd.f32 %v447, %v448
      %v450 = vrot.slane %v449, 2
      %v451 = vadd.f32 %v449, %v450
      %v452 = vrot.slane %v451, 1
      %v453 = vadd.f32 %v451, %v452
      %s454 = vtos %v453
      %v455 = vstv %s454
      %v456 = vadd.f32 %v317, %v455
      %vm457 = vcmask 0
      %458 = vst.msk [vmem:[%s236] sm:$0x1] %vm457, %v456
      %v459 = vpack.c.bf16 %v254, %v253
      %v460 = vpack.c.bf16 %v256, %v255
      %v461 = vpack.c.bf16 %v258, %v257
      %v462 = vpack.c.bf16 %v260, %v259
      %v463 = vpack.c.bf16 %v262, %v261
      %v464 = vpack.c.bf16 %v264, %v263
      %v465 = vpack.c.bf16 %v266, %v265
      %v466 = vpack.c.bf16 %v268, %v267
      %v467 = vpack.c.bf16 %v270, %v269
      %v468 = vpack.c.bf16 %v272, %v271
      %v469 = vpack.c.bf16 %v274, %v273
      %v470 = vpack.c.bf16 %v276, %v275
      %v471 = vpack.c.bf16 %v278, %v277
      %v472 = vpack.c.bf16 %v280, %v279
      %v473 = vpack.c.bf16 %v282, %v281
      %v474 = vpack.c.bf16 %v284, %v283
      %v475 = vpack.c.bf16 %v286, %v285
      %v476 = vpack.c.bf16 %v288, %v287
      %v477 = vpack.c.bf16 %v290, %v289
      %v478 = vpack.c.bf16 %v292, %v291
      %v479 = vpack.c.bf16 %v294, %v293
      %v480 = vpack.c.bf16 %v296, %v295
      %v481 = vpack.c.bf16 %v298, %v297
      %v482 = vpack.c.bf16 %v300, %v299
      %v483 = vpack.c.bf16 %v302, %v301
      %v484 = vpack.c.bf16 %v304, %v303
      %v485 = vpack.c.bf16 %v306, %v305
      %v486 = vpack.c.bf16 %v308, %v307
      %v487 = vpack.c.bf16 %v310, %v309
      %v488 = vpack.c.bf16 %v312, %v311
      %v489 = vpack.c.bf16 %v314, %v313
      %v490 = vpack.c.bf16 %v316, %v315
      %v491 = vld [vmem:[#allocation2] sm:$0xff]
      %v492 = vld [vmem:[#allocation2 + $0x8] sm:$0xff]
      %493 = vxpose.xlu0.c.b16.start [1/8] %v459, 128
      %494 = vxpose.xlu0.c.b16.cont [2/8] %v460, 128
      %495 = vxpose.xlu0.c.b16.cont [3/8] %v461, 128
      %496 = vxpose.xlu0.c.b16.cont [4/8] %v462, 128
      %497 = vxpose.xlu0.c.b16.cont [5/8] %v463, 128
      %498 = vxpose.xlu0.c.b16.cont [6/8] %v464, 128
      %499 = vxpose.xlu0.c.b16.cont [7/8] %v465, 128
      %500 = vxpose.xlu0.c.b16.end [8/8] %v466, 128
      %v501 = vpop.trf.xlu0
      %v502 = vpop.trf.xlu0
      %v503 = vpop.trf.xlu0
      %v504 = vpop.trf.xlu0
      %v505 = vpop.trf.xlu0
      %v506 = vpop.trf.xlu0
      %v507 = vpop.trf.xlu0
      %v508 = vpop.trf.xlu0
      %509 = vxpose.xlu0.c.b16.start [1/8] %v467, 128
      %510 = vxpose.xlu0.c.b16.cont [2/8] %v468, 128
      %511 = vxpose.xlu0.c.b16.cont [3/8] %v469, 128
      %512 = vxpose.xlu0.c.b16.cont [4/8] %v470, 128
      %513 = vxpose.xlu0.c.b16.cont [5/8] %v471, 128
      %514 = vxpose.xlu0.c.b16.cont [6/8] %v472, 128
      %515 = vxpose.xlu0.c.b16.cont [7/8] %v473, 128
      %516 = vxpose.xlu0.c.b16.end [8/8] %v474, 128
      %v517 = vpop.trf.xlu0
      %v518 = vpop.trf.xlu0
      %v519 = vpop.trf.xlu0
      %v520 = vpop.trf.xlu0
      %v521 = vpop.trf.xlu0
      %v522 = vpop.trf.xlu0
      %v523 = vpop.trf.xlu0
      %v524 = vpop.trf.xlu0
      %525 = vmatprep.subr.bf16.mxu0 0
      %526 = vmatpush1.bf16.msra.mxu0 %v459
      %527 = vmatprep.subr.bf16.mxu0 0
      %528 = vmatpush1.bf16.msra.mxu0 %v460
      %529 = vmatprep.subr.bf16.mxu0 0
      %530 = vmatpush1.bf16.msra.mxu0 %v461
      %531 = vmatprep.subr.bf16.mxu0 0
      %532 = vmatpush1.bf16.msra.mxu0 %v462
      %533 = vmatprep.subr.bf16.mxu0 0
      %534 = vmatpush1.bf16.msra.mxu0 %v463
      %535 = vmatprep.subr.bf16.mxu0 0
      %536 = vmatpush1.bf16.msra.mxu0 %v464
      %537 = vmatprep.subr.bf16.mxu0 0
      %538 = vmatpush1.bf16.msra.mxu0 %v465
      %539 = vmatprep.subr.bf16.mxu0 0
      %540 = vmatpush1.bf16.msra.mxu0 %v466
      %541 = vmatprep.subr.bf16.mxu0 0
      %542 = vmatpush1.bf16.msra.mxu0 %v467
      %543 = vmatprep.subr.bf16.mxu0 0
      %544 = vmatpush1.bf16.msra.mxu0 %v468
      %545 = vmatprep.subr.bf16.mxu0 0
      %546 = vmatpush1.bf16.msra.mxu0 %v469
      %547 = vmatprep.subr.bf16.mxu0 0
      %548 = vmatpush1.bf16.msra.mxu0 %v470
      %549 = vmatprep.subr.bf16.mxu0 0
      %550 = vmatpush1.bf16.msra.mxu0 %v471
      %551 = vmatprep.subr.bf16.mxu0 0
      %552 = vmatpush1.bf16.msra.mxu0 %v472
      %553 = vmatprep.subr.bf16.mxu0 0
      %554 = vmatpush1.bf16.msra.mxu0 %v473
      %555 = vmatprep.subr.bf16.mxu0 0
      %556 = vmatpush1.bf16.msra.mxu0 %v474
      %557 = vmatprep.mubr.bf16.mxu0 %v517
      %558 = vmatmul.mubr.bf16.gmra.mrb[0].mxu0 %v501
      %v559 = vpop.f32.mrb[0].mxu0
      %v560 = vadd.f32 0.0, %v559
      %v561 = vpop.f32.mrb[0].mxu0
      %v562 = vpop.f32.mrb[0].mxu0
      %v563 = vadd.f32 0.0, %v562
      %v564 = vpop.f32.mrb[0].mxu0
      %565 = vdwg.mxu0
      %v566 = vadd.f32 %v491, %v560
      %v567 = vadd.f32 %v492, %v563
      %568 = vst.msk [vmem:[#allocation2] sm:$0xff] %vm382, %v566
      %569 = vst.msk [vmem:[#allocation2 + $0x8] sm:$0xff] %vm382, %v567
      %v570 = vld [vmem:[#allocation3] sm:$0xff]
      %v571 = vld [vmem:[#allocation3 + $0x8] sm:$0xff]
      %572 = vxpose.xlu0.c.b16.start [1/8] %v475, 128
      %573 = vxpose.xlu0.c.b16.cont [2/8] %v476, 128
      %574 = vxpose.xlu0.c.b16.cont [3/8] %v477, 128
      %575 = vxpose.xlu0.c.b16.cont [4/8] %v478, 128
      %576 = vxpose.xlu0.c.b16.cont [5/8] %v479, 128
      %577 = vxpose.xlu0.c.b16.cont [6/8] %v480, 128
      %578 = vxpose.xlu0.c.b16.cont [7/8] %v481, 128
      %579 = vxpose.xlu0.c.b16.end [8/8] %v482, 128
      %v580 = vpop.trf.xlu0
      %v581 = vpop.trf.xlu0
      %v582 = vpop.trf.xlu0
      %v583 = vpop.trf.xlu0
      %v584 = vpop.trf.xlu0
      %v585 = vpop.trf.xlu0
      %v586 = vpop.trf.xlu0
      %v587 = vpop.trf.xlu0
      %588 = vxpose.xlu0.c.b16.start [1/8] %v483, 128
      %589 = vxpose.xlu0.c.b16.cont [2/8] %v484, 128
      %590 = vxpose.xlu0.c.b16.cont [3/8] %v485, 128
      %591 = vxpose.xlu0.c.b16.cont [4/8] %v486, 128
      %592 = vxpose.xlu0.c.b16.cont [5/8] %v487, 128
      %593 = vxpose.xlu0.c.b16.cont [6/8] %v488, 128
      %594 = vxpose.xlu0.c.b16.cont [7/8] %v489, 128
      %595 = vxpose.xlu0.c.b16.end [8/8] %v490, 128
      %v596 = vpop.trf.xlu0
      %v597 = vpop.trf.xlu0
      %v598 = vpop.trf.xlu0
      %v599 = vpop.trf.xlu0
      %v600 = vpop.trf.xlu0
      %v601 = vpop.trf.xlu0
      %v602 = vpop.trf.xlu0
      %v603 = vpop.trf.xlu0
      %604 = vmatprep.subr.bf16.mxu0 0
      %605 = vmatpush1.bf16.msra.mxu0 %v475
      %606 = vmatprep.subr.bf16.mxu0 0
      %607 = vmatpush1.bf16.msra.mxu0 %v476
      %608 = vmatprep.subr.bf16.mxu0 0
      %609 = vmatpush1.bf16.msra.mxu0 %v477
      %610 = vmatprep.subr.bf16.mxu0 0
      %611 = vmatpush1.bf16.msra.mxu0 %v478
      %612 = vmatprep.subr.bf16.mxu0 0
      %613 = vmatpush1.bf16.msra.mxu0 %v479
      %614 = vmatprep.subr.bf16.mxu0 0
      %615 = vmatpush1.bf16.msra.mxu0 %v480
      %616 = vmatprep.subr.bf16.mxu0 0
      %617 = vmatpush1.bf16.msra.mxu0 %v481
      %618 = vmatprep.subr.bf16.mxu0 0
      %619 = vmatpush1.bf16.msra.mxu0 %v482
      %620 = vmatprep.subr.bf16.mxu0 0
      %621 = vmatpush1.bf16.msra.mxu0 %v483
      %622 = vmatprep.subr.bf16.mxu0 0
      %623 = vmatpush1.bf16.msra.mxu0 %v484
      %624 = vmatprep.subr.bf16.mxu0 0
      %625 = vmatpush1.bf16.msra.mxu0 %v485
      %626 = vmatprep.subr.bf16.mxu0 0
      %627 = vmatpush1.bf16.msra.mxu0 %v486
      %628 = vmatprep.subr.bf16.mxu0 0
      %629 = vmatpush1.bf16.msra.mxu0 %v487
      %630 = vmatprep.subr.bf16.mxu0 0
      %631 = vmatpush1.bf16.msra.mxu0 %v488
      %632 = vmatprep.subr.bf16.mxu0 0
      %633 = vmatpush1.bf16.msra.mxu0 %v489
      %634 = vmatprep.subr.bf16.mxu0 0
      %635 = vmatpush1.bf16.msra.mxu0 %v490
      %636 = vmatprep.mubr.bf16.mxu0 %v596
      %637 = vmatmul.mubr.bf16.gmra.mrb[0].mxu0 %v580
      %v638 = vpop.f32.mrb[0].mxu0
      %v639 = vadd.f32 0.0, %v638
      %v640 = vpop.f32.mrb[0].mxu0
      %v641 = vpop.f32.mrb[0].mxu0
      %v642 = vadd.f32 0.0, %v641
      %v643 = vpop.f32.mrb[0].mxu0
      %644 = vdwg.mxu0
      %v645 = vadd.f32 %v570, %v639
      %v646 = vadd.f32 %v571, %v642
      %647 = vst.msk [vmem:[#allocation3] sm:$0xff] %vm382, %v645
      %648 = vst.msk [vmem:[#allocation3 + $0x8] sm:$0xff] %vm382, %v646
      // Predicated region
      $region33: #{perceptual_loss.12} parent=27 // pred_check
        %p649 = pneg %p241
      $region34: #{perceptual_loss.12} parent=27 // pred_check_branch
        %651 = sbr.rel (%p649) target = $region36
      $region35: #{perceptual_loss.12} parent=27 // pred_region
        %v652 = vld [vmem:[%s239] sm:$0x1]
        %v653 = vld [vmem:[#allocation2] sm:$0xff]
        %v654 = vld [vmem:[#allocation2 + $0x8] sm:$0xff]
        %v655 = vld [vmem:[#allocation3] sm:$0xff]
        %v656 = vld [vmem:[#allocation3 + $0x8] sm:$0xff]
        %v657 = vsub.f32 %v653, %v655
        %v658 = vsub.f32 %v654, %v656
        %v659 = vand.u32 2147483647, %v657
        %v660 = vand.u32 2147483647, %v658
        %v661 = vsel %vm382, %v659, 0.0
        %v662 = vsel %vm382, %v660, 0.0
        %v663 = vadd.f32 %v661, %v662
        %664 = vadd.xlane.f32.xlu0 %v663
        %v665 = vpop.xlane.xlu0 %664
        %v666 = vrot.slane %v665, 4
        %v667 = vadd.f32 %v665, %v666
        %v668 = vrot.slane %v667, 2
        %v669 = vadd.f32 %v667, %v668
        %v670 = vrot.slane %v669, 1
        %v671 = vadd.f32 %v669, %v670
        %s672 = vtos %v671
        %v673 = vstv %s672
        %v674 = vadd.f32 %v652, %v673
        %675 = vst.msk [vmem:[%s239] sm:$0x1] %vm457, %v674
      $region36: #{perceptual_loss.12} parent=27 // pred_fallthru
        _
      %p676 = scmp.lt.s32.totalorder %s19, 1
      %s677 = scalar_select %p676, %s19, 1
      %s678 = scalar_lea.vmem %s2, %s677
      %p679 = scmp.lt.s32.totalorder %s19, 1
      %s680 = scalar_select %p679, %s19, 1
      %s681 = scalar_lea.vmem %s3, %s680
      // Predicated region
      $region37: #{perceptual_loss.12} parent=27 // pred_check
        %p682 = pneg %p101
      $region38: #{perceptual_loss.12} parent=27 // pred_check_branch
        %684 = sbr.rel (%p682) target = $region40
      $region39: #{perceptual_loss.12} parent=27 // pred_region
        _
      $region40: #{perceptual_loss.12} parent=27 // pred_fallthru
        _
      // Predicated region
      $region41: #{perceptual_loss.12} parent=27 // pred_check
        %p685 = pneg %p127
      $region42: #{perceptual_loss.12} parent=27 // pred_check_branch
        %687 = sbr.rel (%p685) target = $region44
      $region43: #{perceptual_loss.12} parent=27 // pred_region
        _
      $region44: #{perceptual_loss.12} parent=27 // pred_fallthru
        _
    $region28: #{perceptual_loss.12} parent=5 // pred_fallthru
      _
    %p688 = scmp.le.s32.totalorder 2, %s10
    // Predicated region
    $region45: #{perceptual_loss.12} parent=5 // pred_check
      %p689 = pneg %p688
    $region46: #{perceptual_loss.12} parent=5 // pred_check_branch
      %691 = sbr.rel (%p689) target = $region48
    $region47: #{perceptual_loss.12} parent=5 // pred_region
      %s692 = ssub.s32 %s10, 2
      // Predicated region
      $region49: #{perceptual_loss.12} parent=47 // pred_check
        %p693 = pneg %p107
      $region50: #{perceptual_loss.12} parent=47 // pred_check_branch
        %695 = sbr.rel (%p693) target = $region52
      $region51: #{perceptual_loss.12} parent=47 // pred_region
        %p696 = scmp.lt.s32.totalorder %s21, 1
        %s697 = scalar_select %p696, %s21, 1
        %s698 = scalar_lea.vmem %s2, %s697
      $region52: #{perceptual_loss.12} parent=47 // pred_fallthru
        _
      // Predicated region
      $region53: #{perceptual_loss.12} parent=47 // pred_check
        %p699 = pneg %p133
      $region54: #{perceptual_loss.12} parent=47 // pred_check_branch
        %701 = sbr.rel (%p699) target = $region56
      $region55: #{perceptual_loss.12} parent=47 // pred_region
        %p702 = scmp.lt.s32.totalorder %s21, 1
        %s703 = scalar_select %p702, %s21, 1
        %s704 = scalar_lea.vmem %s3, %s703
      $region56: #{perceptual_loss.12} parent=47 // pred_fallthru
        _
    $region48: #{perceptual_loss.12} parent=5 // pred_fallthru
      _
  $region6: #{perceptual_loss.12} parent=0 // loop_footer
    %s14 = sadd.s32 1, %s10
  $region7: #{perceptual_loss.12} parent=0 // loop_footer_branch
    %9 = sbr.rel target = $region3
  $region8: #{perceptual_loss.12} parent=0 // loop_exit
    _

</llo_original>
